<compile_context>
chip_gen: v5e
topology: v5e:2x2
jax: 0.10.0
libtpu: 0.0.40
codegen_flags: <defaults>
</compile_context>

<pallas_src>
import jax
import jax.numpy as jnp
from jax.experimental import pallas as pl
from jax.experimental.pallas import tpu as pltpu

P_DROP = 0.1
HIDDEN = 1024


def mlp_kernel(x_ref, mask_ref,
               w1_ref, b1_ref, w2_ref, b2_ref,
               w3_ref, b3_ref, w4_ref, b4_ref,
               o_ref):
    x = x_ref[...]

    # fc1 + relu  (bf16 operands on the MXU, f32 accumulate / elementwise)
    h = jnp.dot(x.astype(jnp.bfloat16), w1_ref[...],
                preferred_element_type=jnp.float32) + b1_ref[...]
    h = jnp.maximum(h, 0.0)

    # fc2 + relu
    h = jnp.dot(h.astype(jnp.bfloat16), w2_ref[...],
                preferred_element_type=jnp.float32) + b2_ref[...]
    h = jnp.maximum(h, 0.0)

    # fc3 + relu
    h = jnp.dot(h.astype(jnp.bfloat16), w3_ref[...],
                preferred_element_type=jnp.float32) + b3_ref[...]
    h = jnp.maximum(h, 0.0)

    # Dropout (training semantics) fused into the fc4 reduction:
    #   out = (1/(1-p)) * sum_k( h * keep_mask * w4_row )[k] + b4
    # fc4 has a single output feature, so a lane reduction (XLU) beats an
    # N=1 MXU matmul.
    w4_row = w4_ref[...].astype(jnp.float32)                 # (1, HIDDEN)
    s = jnp.sum(h * mask_ref[...] * w4_row, axis=-1, keepdims=True)
    out = s * jnp.float32(1.0 / (1.0 - P_DROP)) + b4_ref[0]
    o_ref[...] = out.astype(o_ref.dtype)


def mlp_3h_drop(x, params, dropout_key):
    """x: (B, D_in) float32.  params: bf16 (in,out) weights, f32 biases."""
    B, d_in = x.shape

    # Deterministic training-mode dropout mask ({0,1} f32), generated once on
    # host so the kernel needs no TPU-only PRNG primitives.
    keep = jax.random.bernoulli(dropout_key, 1.0 - P_DROP, (B, HIDDEN))
    mask = keep.astype(jnp.float32)

    tile_m = B if B <= 256 else 256
    grid = (pl.cdiv(B, tile_m),)

    resident = lambda shape: pl.BlockSpec(shape, lambda i: (0, 0))
    streamed = lambda shape: pl.BlockSpec(shape, lambda i: (i, 0))

    return pl.pallas_call(
        mlp_kernel,
        out_shape=jax.ShapeDtypeStruct((B, 1), jnp.float32),
        grid=grid,
        in_specs=[
            streamed((tile_m, d_in)),            # x tile
            streamed((tile_m, HIDDEN)),          # dropout mask tile
            resident((d_in, HIDDEN)),            # w1 (VMEM-resident)
            resident((1, HIDDEN)),               # b1
            resident((HIDDEN, HIDDEN)),          # w2
            resident((1, HIDDEN)),               # b2
            resident((HIDDEN, HIDDEN)),          # w3
            resident((1, HIDDEN)),               # b3
            resident((1, HIDDEN)),               # w4 (as a row vector)
            pl.BlockSpec(memory_space=pltpu.MemorySpace.SMEM),  # b4 scalar
        ],
        out_specs=streamed((tile_m, 1)),
        compiler_params=pltpu.CompilerParams(
            dimension_semantics=("parallel",)),
    )(x, mask,
      params["w1"], params["b1"],
      params["w2"], params["b2"],
      params["w3"], params["b3"],
      params["w4"], params["b4"])


def init_params(key, input_size):
    """Parameter shapes matching PyTorch nn.Linear, stored transposed (in,out).

    Weights are kept in bf16 (MXU-native, half the HBM traffic); biases in f32.
    """
    dims = [(input_size, HIDDEN), (HIDDEN, HIDDEN), (HIDDEN, HIDDEN), (HIDDEN, 1)]
    params = {}
    for i, (din, dout) in enumerate(dims, start=1):
        key, kw, kb = jax.random.split(key, 3)
        bound = 1.0 / float(din) ** 0.5          # U(-1/sqrt(in), 1/sqrt(in))
        w = jax.random.uniform(kw, (din, dout), jnp.float32, -bound, bound)
        b = jax.random.uniform(kb, (dout,), jnp.float32, -bound, bound)
        if i < 4:
            params[f"w{i}"] = w.astype(jnp.bfloat16)          # (in, out)
            params[f"b{i}"] = b.reshape(1, dout)              # (1, out) f32
        else:
            params["w4"] = w.reshape(1, din).astype(jnp.bfloat16)  # (1, 1024)
            params["b4"] = b.reshape(1)                              # (1,) f32 (SMEM)
    return params


if __name__ == "__main__":
    key = jax.random.PRNGKey(0)
    k_param, k_x, k_drop = jax.random.split(key, 3)

    batch = 8
    input_size = 32

    params = init_params(k_param, input_size)
    x = jax.random.normal(k_x, (batch, input_size), dtype=jnp.float32)

    out = mlp_3h_drop(x, params, dropout_key=k_drop)
    out = jax.block_until_ready(out)

    assert out.shape == (batch, 1), out.shape
    assert out.dtype == jnp.float32
    assert bool(jnp.all(jnp.isfinite(out)))
    print("KERNEL_OK")
</pallas_src>

<mosaic_0001>
module attributes {stable_mosaic.version = 11 : i64} {
  func.func @mlp_kernel(%arg0: i32, %arg1: memref<8x32xf32, #tpu.memory_space<vmem>>, %arg2: memref<8x1024xf32, #tpu.memory_space<vmem>>, %arg3: memref<32x1024xbf16, #tpu.memory_space<vmem>>, %arg4: memref<1x1024xf32, #tpu.memory_space<vmem>>, %arg5: memref<1024x1024xbf16, #tpu.memory_space<vmem>>, %arg6: memref<1x1024xf32, #tpu.memory_space<vmem>>, %arg7: memref<1024x1024xbf16, #tpu.memory_space<vmem>>, %arg8: memref<1x1024xf32, #tpu.memory_space<vmem>>, %arg9: memref<1x1024xbf16, #tpu.memory_space<vmem>>, %arg10: memref<1xf32, #tpu.memory_space<smem>>, %arg11: memref<8x1xf32, #tpu.memory_space<vmem>>) attributes {dimension_semantics = [#tpu.dimension_semantics<parallel>], iteration_bounds = array<i64: 1>, scalar_prefetch = 0 : i64, scratch_operands = 0 : i64, tpu.core_type = #tpu.core_type<tc>, window_params = [{transform_indices = @transform_0, window_bounds = array<i64: 8, 32>}, {transform_indices = @transform_1, window_bounds = array<i64: 8, 1024>}, {pipeline_mode = #tpu.pipeline_mode<synchronous>, transform_indices = @transform_2, window_bounds = array<i64: 32, 1024>}, {pipeline_mode = #tpu.pipeline_mode<synchronous>, transform_indices = @transform_3, window_bounds = array<i64: 1, 1024>}, {pipeline_mode = #tpu.pipeline_mode<synchronous>, transform_indices = @transform_4, window_bounds = array<i64: 1024, 1024>}, {pipeline_mode = #tpu.pipeline_mode<synchronous>, transform_indices = @transform_5, window_bounds = array<i64: 1, 1024>}, {pipeline_mode = #tpu.pipeline_mode<synchronous>, transform_indices = @transform_6, window_bounds = array<i64: 1024, 1024>}, {pipeline_mode = #tpu.pipeline_mode<synchronous>, transform_indices = @transform_7, window_bounds = array<i64: 1, 1024>}, {pipeline_mode = #tpu.pipeline_mode<synchronous>, transform_indices = @transform_8, window_bounds = array<i64: 1, 1024>}, {transform_indices = @transform_9, window_bounds = array<i64: 1>}, {transform_indices = @transform_10, window_bounds = array<i64: 8, 1>}]} {
    %c0 = arith.constant 0 : index
    %c0_0 = arith.constant 0 : index
    %0 = vector.load %arg1[%c0, %c0_0] : memref<8x32xf32, #tpu.memory_space<vmem>>, vector<8x32xf32>
    %1 = arith.truncf %0 : vector<8x32xf32> to vector<8x32xbf16>
    %c0_1 = arith.constant 0 : index
    %c0_2 = arith.constant 0 : index
    %2 = vector.load %arg3[%c0_1, %c0_2] : memref<32x1024xbf16, #tpu.memory_space<vmem>>, vector<32x1024xbf16>
    %cst = arith.constant dense<0.000000e+00> : vector<8x1024xf32>
    %3 = tpu.matmul %1, %2, %cst {dimension_numbers = #tpu.dot_dimension_numbers<[1], [0], [0], [1], [0, 0, 1, 1], [], []>} : vector<8x32xbf16>, vector<32x1024xbf16>, vector<8x1024xf32> -> vector<8x1024xf32>
    %c0_3 = arith.constant 0 : index
    %c0_4 = arith.constant 0 : index
    %4 = vector.load %arg4[%c0_3, %c0_4] : memref<1x1024xf32, #tpu.memory_space<vmem>>, vector<1x1024xf32>
    %5 = vector.broadcast %4 : vector<1x1024xf32> to vector<8x1024xf32>
    %6 = arith.addf %3, %5 : vector<8x1024xf32>
    %cst_5 = arith.constant 0.000000e+00 : f32
    %7 = vector.broadcast %cst_5 : f32 to vector<8x1024xf32>
    %8 = arith.maximumf %6, %7 : vector<8x1024xf32>
    %9 = arith.truncf %8 : vector<8x1024xf32> to vector<8x1024xbf16>
    %c0_6 = arith.constant 0 : index
    %c0_7 = arith.constant 0 : index
    %10 = vector.load %arg5[%c0_6, %c0_7] : memref<1024x1024xbf16, #tpu.memory_space<vmem>>, vector<1024x1024xbf16>
    %cst_8 = arith.constant dense<0.000000e+00> : vector<8x1024xf32>
    %11 = tpu.matmul %9, %10, %cst_8 {dimension_numbers = #tpu.dot_dimension_numbers<[1], [0], [0], [1], [0, 0, 1, 1], [], []>} : vector<8x1024xbf16>, vector<1024x1024xbf16>, vector<8x1024xf32> -> vector<8x1024xf32>
    %c0_9 = arith.constant 0 : index
    %c0_10 = arith.constant 0 : index
    %12 = vector.load %arg6[%c0_9, %c0_10] : memref<1x1024xf32, #tpu.memory_space<vmem>>, vector<1x1024xf32>
    %13 = vector.broadcast %12 : vector<1x1024xf32> to vector<8x1024xf32>
    %14 = arith.addf %11, %13 : vector<8x1024xf32>
    %cst_11 = arith.constant 0.000000e+00 : f32
    %15 = vector.broadcast %cst_11 : f32 to vector<8x1024xf32>
    %16 = arith.maximumf %14, %15 : vector<8x1024xf32>
    %17 = arith.truncf %16 : vector<8x1024xf32> to vector<8x1024xbf16>
    %c0_12 = arith.constant 0 : index
    %c0_13 = arith.constant 0 : index
    %18 = vector.load %arg7[%c0_12, %c0_13] : memref<1024x1024xbf16, #tpu.memory_space<vmem>>, vector<1024x1024xbf16>
    %cst_14 = arith.constant dense<0.000000e+00> : vector<8x1024xf32>
    %19 = tpu.matmul %17, %18, %cst_14 {dimension_numbers = #tpu.dot_dimension_numbers<[1], [0], [0], [1], [0, 0, 1, 1], [], []>} : vector<8x1024xbf16>, vector<1024x1024xbf16>, vector<8x1024xf32> -> vector<8x1024xf32>
    %c0_15 = arith.constant 0 : index
    %c0_16 = arith.constant 0 : index
    %20 = vector.load %arg8[%c0_15, %c0_16] : memref<1x1024xf32, #tpu.memory_space<vmem>>, vector<1x1024xf32>
    %21 = vector.broadcast %20 : vector<1x1024xf32> to vector<8x1024xf32>
    %22 = arith.addf %19, %21 : vector<8x1024xf32>
    %cst_17 = arith.constant 0.000000e+00 : f32
    %23 = vector.broadcast %cst_17 : f32 to vector<8x1024xf32>
    %24 = arith.maximumf %22, %23 : vector<8x1024xf32>
    %c0_18 = arith.constant 0 : index
    %c0_19 = arith.constant 0 : index
    %25 = vector.load %arg9[%c0_18, %c0_19] : memref<1x1024xbf16, #tpu.memory_space<vmem>>, vector<1x1024xbf16>
    %26 = arith.extf %25 : vector<1x1024xbf16> to vector<1x1024xf32>
    %c0_20 = arith.constant 0 : index
    %c0_21 = arith.constant 0 : index
    %27 = vector.load %arg2[%c0_20, %c0_21] : memref<8x1024xf32, #tpu.memory_space<vmem>>, vector<8x1024xf32>
    %28 = arith.mulf %24, %27 : vector<8x1024xf32>
    %29 = vector.broadcast %26 : vector<1x1024xf32> to vector<8x1024xf32>
    %30 = arith.mulf %28, %29 : vector<8x1024xf32>
    %cst_22 = arith.constant dense<0.000000e+00> : vector<8xf32>
    %31 = vector.multi_reduction <add>, %30, %cst_22 [1] : vector<8x1024xf32> to vector<8xf32>
    %32 = vector.shape_cast %31 : vector<8xf32> to vector<8x1xf32>
    %cst_23 = arith.constant 1.11111116 : f32
    %33 = vector.broadcast %cst_23 : f32 to vector<8x1xf32>
    %34 = arith.mulf %32, %33 : vector<8x1xf32>
    %c0_24 = arith.constant 0 : index
    %35 = memref.load %arg10[%c0_24] : memref<1xf32, #tpu.memory_space<smem>>
    %36 = vector.broadcast %35 : f32 to vector<8x1xf32>
    %37 = arith.addf %34, %36 : vector<8x1xf32>
    %c0_25 = arith.constant 0 : index
    %c0_26 = arith.constant 0 : index
    %38 = vector.load %arg11[%c0_25, %c0_26] : memref<8x1xf32, #tpu.memory_space<vmem>>, vector<8x1xf32>
    tpu.vector_store %arg11[%c0_25, %c0_26], %37 {strides = array<i32>} : memref<8x1xf32, #tpu.memory_space<vmem>>, vector<8x1xf32>,
    return
  }
  func.func @transform_0(%arg0: i32) -> (i32, i32) {
    %c0_i32 = arith.constant 0 : i32
    %c0_i32_0 = arith.constant 0 : i32
    return %arg0, %c0_i32 : i32, i32
  }
  func.func @transform_1(%arg0: i32) -> (i32, i32) {
    %c0_i32 = arith.constant 0 : i32
    %c0_i32_0 = arith.constant 0 : i32
    return %arg0, %c0_i32 : i32, i32
  }
  func.func @transform_2(%arg0: i32) -> (i32, i32) {
    %c0_i32 = arith.constant 0 : i32
    %c0_i32_0 = arith.constant 0 : i32
    %c0_i32_1 = arith.constant 0 : i32
    return %c0_i32, %c0_i32_0 : i32, i32
  }
  func.func @transform_3(%arg0: i32) -> (i32, i32) {
    %c0_i32 = arith.constant 0 : i32
    %c0_i32_0 = arith.constant 0 : i32
    %c0_i32_1 = arith.constant 0 : i32
    return %c0_i32, %c0_i32_0 : i32, i32
  }
  func.func @transform_4(%arg0: i32) -> (i32, i32) {
    %c0_i32 = arith.constant 0 : i32
    %c0_i32_0 = arith.constant 0 : i32
    %c0_i32_1 = arith.constant 0 : i32
    return %c0_i32, %c0_i32_0 : i32, i32
  }
  func.func @transform_5(%arg0: i32) -> (i32, i32) {
    %c0_i32 = arith.constant 0 : i32
    %c0_i32_0 = arith.constant 0 : i32
    %c0_i32_1 = arith.constant 0 : i32
    return %c0_i32, %c0_i32_0 : i32, i32
  }
  func.func @transform_6(%arg0: i32) -> (i32, i32) {
    %c0_i32 = arith.constant 0 : i32
    %c0_i32_0 = arith.constant 0 : i32
    %c0_i32_1 = arith.constant 0 : i32
    return %c0_i32, %c0_i32_0 : i32, i32
  }
  func.func @transform_7(%arg0: i32) -> (i32, i32) {
    %c0_i32 = arith.constant 0 : i32
    %c0_i32_0 = arith.constant 0 : i32
    %c0_i32_1 = arith.constant 0 : i32
    return %c0_i32, %c0_i32_0 : i32, i32
  }
  func.func @transform_8(%arg0: i32) -> (i32, i32) {
    %c0_i32 = arith.constant 0 : i32
    %c0_i32_0 = arith.constant 0 : i32
    %c0_i32_1 = arith.constant 0 : i32
    return %c0_i32, %c0_i32_0 : i32, i32
  }
  func.func @transform_9(%arg0: i32) -> i32 {
    %c0_i32 = arith.constant 0 : i32
    %c0_i32_0 = arith.constant 0 : i32
    return %c0_i32 : i32
  }
  func.func @transform_10(%arg0: i32) -> (i32, i32) {
    %c0_i32 = arith.constant 0 : i32
    %c0_i32_0 = arith.constant 0 : i32
    return %arg0, %c0_i32 : i32, i32
  }
}

</mosaic_0001>

<llo_original>
// kernel: tpu_custom_call.1
$region0: #{tpu_custom_call.1}
  #allocation0 [shape = 'u32[]', space=smem, size = 0x4, offset = 0x4, fixed_abs, tag = 'smem constant byte address 0x4 - core index']
  #allocation1 [shape = 'u32[72,128]{1,0:T(1,128)}', space=vmem, size = 0x9000, scoped, tag = 'internal scratch']
  #allocation2 [shape = 'f32[1]{0:T(128)S(6)}', space=smem, size = 0x200, scoped, tag = 'scoped memory for tpu_custom_call.1']
  %s0 = inlined_call_operand.hbm [shape: f32[8,32], index: 0, kind: input, shape index: {}]
  %s1 = inlined_call_operand.hbm [shape: f32[8,1024], index: 1, kind: input, shape index: {}]
  %s2 = inlined_call_operand.hbm [shape: bf16[32,1024], index: 2, kind: input, shape index: {}]
  %s3 = inlined_call_operand.hbm [shape: f32[1,1024], index: 3, kind: input, shape index: {}]
  %s4 = inlined_call_operand.hbm [shape: bf16[1024,1024], index: 4, kind: input, shape index: {}]
  %s5 = inlined_call_operand.hbm [shape: f32[1,1024], index: 5, kind: input, shape index: {}]
  %s6 = inlined_call_operand.hbm [shape: bf16[1024,1024], index: 6, kind: input, shape index: {}]
  %s7 = inlined_call_operand.hbm [shape: f32[1,1024], index: 7, kind: input, shape index: {}]
  %s8 = inlined_call_operand.hbm [shape: bf16[1,1024], index: 8, kind: input, shape index: {}]
  %s9 = inlined_call_operand.<no memory space> [shape: f32[1], index: 9, kind: input, shape index: {}]
  %s10 = inlined_call_operand.vmem [shape: f32[8,1], index: 10, kind: output, shape index: {}]
  %s11 = sld [smem:[#allocation0]]
  $region86: #{tpu_custom_call.1} parent=0
    _
  %s13 = ssub.s32 1, %s11
  %s14 = scalar_select 0, %s13, %s11
  %15 = sst [smem:[#allocation2]] %s9
  $region1: #{tpu_custom_call.1} parent=0
    #allocation3 [shape = 'u8[4096]{0}', space=vmem, size = 0x1000, scoped, tag = 'input window, operand 0, single buffered']
    #allocation4 [shape = 's32[1]{0}', space=sflag, size = 0x4, scoped, tag = 'scoped memory for tpu_custom_call.1']
    #allocation5 [shape = 'u8[32768]{0}', space=vmem, size = 0x8000, scoped, tag = 'input window, operand 1, single buffered']
    #allocation6 [shape = 's32[1]{0}', space=sflag, size = 0x4, scoped, tag = 'scoped memory for tpu_custom_call.1']
    #allocation7 [shape = 'u8[65536]{0}', space=vmem, size = 0x10000, scoped, tag = 'input window, operand 2, single buffered']
    #allocation8 [shape = 'u8[4096]{0}', space=vmem, size = 0x1000, scoped, tag = 'input window, operand 3, single buffered']
    #allocation9 [shape = 's32[1]{0}', space=sflag, size = 0x4, scoped, tag = 'scoped memory for tpu_custom_call.1']
    #allocation10 [shape = 'u8[2097152]{0}', space=vmem, size = 0x200000, scoped, tag = 'input window, operand 4, single buffered']
    #allocation11 [shape = 'u8[4096]{0}', space=vmem, size = 0x1000, scoped, tag = 'input window, operand 5, single buffered']
    #allocation12 [shape = 's32[1]{0}', space=sflag, size = 0x4, scoped, tag = 'scoped memory for tpu_custom_call.1']
    #allocation13 [shape = 'u8[2097152]{0}', space=vmem, size = 0x200000, scoped, tag = 'input window, operand 6, single buffered']
    #allocation14 [shape = 'u8[4096]{0}', space=vmem, size = 0x1000, scoped, tag = 'input window, operand 7, single buffered']
    #allocation15 [shape = 's32[1]{0}', space=sflag, size = 0x4, scoped, tag = 'scoped memory for tpu_custom_call.1']
    #allocation16 [shape = 'u8[4096]{0}', space=vmem, size = 0x1000, scoped, tag = 'input window, operand 8, single buffered']
    %16 = vsyncpa [#allocation4], 0
    %17 = vsyncpa [#allocation6], 0
    %18 = vsyncpa [#allocation9], 0
    %19 = vsyncpa [#allocation12], 0
    %20 = vsyncpa [#allocation15], 0
    // Predicated region
    $region2: #{tpu_custom_call.1} parent=1 // pred_check
      _
    $region3: #{tpu_custom_call.1} parent=1 // pred_check_branch
      %22 = sbr.rel (0) target = $region5
    $region4: #{tpu_custom_call.1} parent=1 // pred_region
      %24 = vsyncadd [#allocation4], 0
      %s26 = sshll.u32 %s0, 4
      %s27 = int_to_ptr.hbm [resolvable:$true] %s26
      %s28 = sshll.u32 [#allocation3], 4
      %s29 = int_to_ptr.vmem [resolvable:$true] %s28
      %31 = dma.hbm_to_vmem [thread:$0]  %s27, 128, %s29, [#allocation4]
    $region5: #{tpu_custom_call.1} parent=1 // pred_fallthru
      _
    // Predicated region
    $region6: #{tpu_custom_call.1} parent=1 // pred_check
      _
    $region7: #{tpu_custom_call.1} parent=1 // pred_check_branch
      %33 = sbr.rel (0) target = $region9
    $region8: #{tpu_custom_call.1} parent=1 // pred_region
      %35 = vsyncadd [#allocation6], 0
      %s37 = sshll.u32 %s1, 4
      %s38 = int_to_ptr.hbm [resolvable:$true] %s37
      %s39 = sshll.u32 [#allocation5], 4
      %s40 = int_to_ptr.vmem [resolvable:$true] %s39
      %42 = dma.hbm_to_vmem [thread:$0]  %s38, 1024, %s40, [#allocation6]
    $region9: #{tpu_custom_call.1} parent=1 // pred_fallthru
      _
    // Predicated region
    $region10: #{tpu_custom_call.1} parent=1 // pred_check
      _
    $region11: #{tpu_custom_call.1} parent=1 // pred_check_branch
      %44 = sbr.rel (0) target = $region13
    $region12: #{tpu_custom_call.1} parent=1 // pred_region
      %46 = vsyncadd [#allocation6], 0
      %s47 = sshll.u32 %s2, 4
      %s48 = int_to_ptr.hbm [resolvable:$true] %s47
      %s49 = sshll.u32 [#allocation7], 4
      %s50 = int_to_ptr.vmem [resolvable:$true] %s49
      %55 = dma.hbm_to_vmem [thread:$0]  %s48, 2048, %s50, [#allocation6], 512, 512, 32
    $region13: #{tpu_custom_call.1} parent=1 // pred_fallthru
      _
    // Predicated region
    $region14: #{tpu_custom_call.1} parent=1 // pred_check
      _
    $region15: #{tpu_custom_call.1} parent=1 // pred_check_branch
      %57 = sbr.rel (0) target = $region17
    $region16: #{tpu_custom_call.1} parent=1 // pred_region
      %59 = vsyncadd [#allocation9], 0
      %s61 = sshll.u32 %s3, 4
      %s62 = int_to_ptr.hbm [resolvable:$true] %s61
      %s63 = sshll.u32 [#allocation8], 4
      %s64 = int_to_ptr.vmem [resolvable:$true] %s63
      %66 = dma.hbm_to_vmem [thread:$0]  %s62, 128, %s64, [#allocation9]
    $region17: #{tpu_custom_call.1} parent=1 // pred_fallthru
      _
    // Predicated region
    $region18: #{tpu_custom_call.1} parent=1 // pred_check
      _
    $region19: #{tpu_custom_call.1} parent=1 // pred_check_branch
      %68 = sbr.rel (0) target = $region21
    $region20: #{tpu_custom_call.1} parent=1 // pred_region
      %70 = vsyncadd [#allocation9], 0
      %s71 = sshll.u32 %s4, 4
      %s72 = int_to_ptr.hbm [resolvable:$true] %s71
      %s73 = sshll.u32 [#allocation10], 4
      %s74 = int_to_ptr.vmem [resolvable:$true] %s73
      %79 = dma.hbm_to_vmem [thread:$0]  %s72, 65536, %s74, [#allocation9], 512, 512, 32
    $region21: #{tpu_custom_call.1} parent=1 // pred_fallthru
      _
    // Predicated region
    $region22: #{tpu_custom_call.1} parent=1 // pred_check
      _
    $region23: #{tpu_custom_call.1} parent=1 // pred_check_branch
      %81 = sbr.rel (0) target = $region25
    $region24: #{tpu_custom_call.1} parent=1 // pred_region
      %83 = vsyncadd [#allocation12], 0
      %s85 = sshll.u32 %s5, 4
      %s86 = int_to_ptr.hbm [resolvable:$true] %s85
      %s87 = sshll.u32 [#allocation11], 4
      %s88 = int_to_ptr.vmem [resolvable:$true] %s87
      %90 = dma.hbm_to_vmem [thread:$0]  %s86, 128, %s88, [#allocation12]
    $region25: #{tpu_custom_call.1} parent=1 // pred_fallthru
      _
    // Predicated region
    $region26: #{tpu_custom_call.1} parent=1 // pred_check
      _
    $region27: #{tpu_custom_call.1} parent=1 // pred_check_branch
      %92 = sbr.rel (0) target = $region29
    $region28: #{tpu_custom_call.1} parent=1 // pred_region
      %94 = vsyncadd [#allocation12], 0
      %s95 = sshll.u32 %s6, 4
      %s96 = int_to_ptr.hbm [resolvable:$true] %s95
      %s97 = sshll.u32 [#allocation13], 4
      %s98 = int_to_ptr.vmem [resolvable:$true] %s97
      %103 = dma.hbm_to_vmem [thread:$0]  %s96, 65536, %s98, [#allocation12], 512, 512, 32
    $region29: #{tpu_custom_call.1} parent=1 // pred_fallthru
      _
    // Predicated region
    $region30: #{tpu_custom_call.1} parent=1 // pred_check
      _
    $region31: #{tpu_custom_call.1} parent=1 // pred_check_branch
      %105 = sbr.rel (0) target = $region33
    $region32: #{tpu_custom_call.1} parent=1 // pred_region
      %107 = vsyncadd [#allocation15], 0
      %s109 = sshll.u32 %s7, 4
      %s110 = int_to_ptr.hbm [resolvable:$true] %s109
      %s111 = sshll.u32 [#allocation14], 4
      %s112 = int_to_ptr.vmem [resolvable:$true] %s111
      %114 = dma.hbm_to_vmem [thread:$0]  %s110, 128, %s112, [#allocation15]
    $region33: #{tpu_custom_call.1} parent=1 // pred_fallthru
      _
    // Predicated region
    $region34: #{tpu_custom_call.1} parent=1 // pred_check
      _
    $region35: #{tpu_custom_call.1} parent=1 // pred_check_branch
      %116 = sbr.rel (0) target = $region37
    $region36: #{tpu_custom_call.1} parent=1 // pred_region
      %118 = vsyncadd [#allocation15], 0
      %s120 = sshll.u32 %s8, 4
      %s121 = int_to_ptr.hbm [resolvable:$true] %s120
      %s122 = sshll.u32 [#allocation16], 4
      %s123 = int_to_ptr.vmem [resolvable:$true] %s122
      %125 = dma.hbm_to_vmem [thread:$0]  %s121, 128, %s123, [#allocation15]
    $region37: #{tpu_custom_call.1} parent=1 // pred_fallthru
      _
    // Predicated region
    $region38: #{tpu_custom_call.1} parent=1 // pred_check
      _
    $region39: #{tpu_custom_call.1} parent=1 // pred_check_branch
      %127 = sbr.rel (0) target = $region41
    $region40: #{tpu_custom_call.1} parent=1 // pred_region
      _
    $region41: #{tpu_custom_call.1} parent=1 // pred_fallthru
      _
    // Predicated region
    $region42: #{tpu_custom_call.1} parent=1 // pred_check
      _
    $region43: #{tpu_custom_call.1} parent=1 // pred_check_branch
      %129 = sbr.rel (0) target = $region45
    $region44: #{tpu_custom_call.1} parent=1 // pred_region
      %131 = dma.done [#allocation4], 128
    $region45: #{tpu_custom_call.1} parent=1 // pred_fallthru
      _
    // Predicated region
    $region46: #{tpu_custom_call.1} parent=1 // pred_check
      _
    $region47: #{tpu_custom_call.1} parent=1 // pred_check_branch
      %133 = sbr.rel (0) target = $region49
    $region48: #{tpu_custom_call.1} parent=1 // pred_region
      %135 = dma.done [#allocation6], 1024
    $region49: #{tpu_custom_call.1} parent=1 // pred_fallthru
      _
    // Predicated region
    $region50: #{tpu_custom_call.1} parent=1 // pred_check
      _
    $region51: #{tpu_custom_call.1} parent=1 // pred_check_branch
      %137 = sbr.rel (0) target = $region53
    $region52: #{tpu_custom_call.1} parent=1 // pred_region
      %139 = dma.done [#allocation6], 2048
    $region53: #{tpu_custom_call.1} parent=1 // pred_fallthru
      _
    // Predicated region
    $region54: #{tpu_custom_call.1} parent=1 // pred_check
      _
    $region55: #{tpu_custom_call.1} parent=1 // pred_check_branch
      %141 = sbr.rel (0) target = $region57
    $region56: #{tpu_custom_call.1} parent=1 // pred_region
      %143 = dma.done [#allocation9], 128
    $region57: #{tpu_custom_call.1} parent=1 // pred_fallthru
      _
    // Predicated region
    $region58: #{tpu_custom_call.1} parent=1 // pred_check
      _
    $region59: #{tpu_custom_call.1} parent=1 // pred_check_branch
      %145 = sbr.rel (0) target = $region61
    $region60: #{tpu_custom_call.1} parent=1 // pred_region
      %147 = dma.done [#allocation9], 65536
    $region61: #{tpu_custom_call.1} parent=1 // pred_fallthru
      _
    // Predicated region
    $region62: #{tpu_custom_call.1} parent=1 // pred_check
      _
    $region63: #{tpu_custom_call.1} parent=1 // pred_check_branch
      %149 = sbr.rel (0) target = $region65
    $region64: #{tpu_custom_call.1} parent=1 // pred_region
      %151 = dma.done [#allocation12], 128
    $region65: #{tpu_custom_call.1} parent=1 // pred_fallthru
      _
    // Predicated region
    $region66: #{tpu_custom_call.1} parent=1 // pred_check
      _
    $region67: #{tpu_custom_call.1} parent=1 // pred_check_branch
      %153 = sbr.rel (0) target = $region69
    $region68: #{tpu_custom_call.1} parent=1 // pred_region
      %155 = dma.done [#allocation12], 65536
    $region69: #{tpu_custom_call.1} parent=1 // pred_fallthru
      _
    // Predicated region
    $region70: #{tpu_custom_call.1} parent=1 // pred_check
      _
    $region71: #{tpu_custom_call.1} parent=1 // pred_check_branch
      %157 = sbr.rel (0) target = $region73
    $region72: #{tpu_custom_call.1} parent=1 // pred_region
      %159 = dma.done [#allocation15], 128
    $region73: #{tpu_custom_call.1} parent=1 // pred_fallthru
      _
    // Predicated region
    $region74: #{tpu_custom_call.1} parent=1 // pred_check
      _
    $region75: #{tpu_custom_call.1} parent=1 // pred_check_branch
      %161 = sbr.rel (0) target = $region77
    $region76: #{tpu_custom_call.1} parent=1 // pred_region
      %163 = dma.done [#allocation15], 128
    $region77: #{tpu_custom_call.1} parent=1 // pred_fallthru
      _
    %v165 = vld [vmem:[#allocation3] sm:$0xff]
    %v166 = vpack.c.bf16 %v165, %v165
    %v167 = vld [vmem:[#allocation7] sm:$0xff]
    %v168 = vld [vmem:[#allocation7 + $0x8] sm:$0xff]
    %v169 = vld [vmem:[#allocation7 + $0x10] sm:$0xff]
    %v170 = vld [vmem:[#allocation7 + $0x18] sm:$0xff]
    %v171 = vld [vmem:[#allocation7 + $0x20] sm:$0xff]
    %v172 = vld [vmem:[#allocation7 + $0x28] sm:$0xff]
    %v173 = vld [vmem:[#allocation7 + $0x30] sm:$0xff]
    %v174 = vld [vmem:[#allocation7 + $0x38] sm:$0xff]
    %v175 = vld [vmem:[#allocation7 + $0x40] sm:$0xff]
    %v176 = vld [vmem:[#allocation7 + $0x48] sm:$0xff]
    %v177 = vld [vmem:[#allocation7 + $0x50] sm:$0xff]
    %v178 = vld [vmem:[#allocation7 + $0x58] sm:$0xff]
    %v179 = vld [vmem:[#allocation7 + $0x60] sm:$0xff]
    %v180 = vld [vmem:[#allocation7 + $0x68] sm:$0xff]
    %v181 = vld [vmem:[#allocation7 + $0x70] sm:$0xff]
    %v182 = vld [vmem:[#allocation7 + $0x78] sm:$0xff]
    %v183 = vld [vmem:[#allocation8] sm:$0xff]
    %v185 = vperm.slane %v183, 0
    %v186 = vperm.slane %v183, 1
    %v187 = vperm.slane %v183, 2
    %v188 = vperm.slane %v183, 3
    %v189 = vperm.slane %v183, 4
    %v190 = vperm.slane %v183, 5
    %v191 = vperm.slane %v183, 6
    %v192 = vperm.slane %v183, 7
    %v217 = vunpack.c.l.b16 %v167
    %v218 = vunpack.c.h.b16 %v167
    %v219 = vunpack.c.l.b16 %v168
    %v220 = vunpack.c.h.b16 %v168
    %v221 = vunpack.c.l.b16 %v169
    %v222 = vunpack.c.h.b16 %v169
    %v223 = vunpack.c.l.b16 %v170
    %v224 = vunpack.c.h.b16 %v170
    %v225 = vunpack.c.l.b16 %v171
    %v226 = vunpack.c.h.b16 %v171
    %v227 = vunpack.c.l.b16 %v172
    %v228 = vunpack.c.h.b16 %v172
    %v229 = vunpack.c.l.b16 %v173
    %v230 = vunpack.c.h.b16 %v173
    %v231 = vunpack.c.l.b16 %v174
    %v232 = vunpack.c.h.b16 %v174
    %v233 = vunpack.c.l.b16 %v175
    %v234 = vunpack.c.h.b16 %v175
    %v235 = vunpack.c.l.b16 %v176
    %v236 = vunpack.c.h.b16 %v176
    %v237 = vunpack.c.l.b16 %v177
    %v238 = vunpack.c.h.b16 %v177
    %v239 = vunpack.c.l.b16 %v178
    %v240 = vunpack.c.h.b16 %v178
    %v241 = vunpack.c.l.b16 %v179
    %v242 = vunpack.c.h.b16 %v179
    %v243 = vunpack.c.l.b16 %v180
    %v244 = vunpack.c.h.b16 %v180
    %v245 = vunpack.c.l.b16 %v181
    %v246 = vunpack.c.h.b16 %v181
    %v247 = vunpack.c.l.b16 %v182
    %v248 = vunpack.c.h.b16 %v182
    %v249 = vpack.c.b16 %v225, %v217
    %v250 = vpack.c.b16 %v226, %v218
    %v251 = vpack.c.b16 %v227, %v219
    %v252 = vpack.c.b16 %v228, %v220
    %v253 = vpack.c.b16 %v229, %v221
    %v254 = vpack.c.b16 %v230, %v222
    %v255 = vpack.c.b16 %v231, %v223
    %v256 = vpack.c.b16 %v232, %v224
    %v257 = vpack.c.b16 %v241, %v233
    %v258 = vpack.c.b16 %v242, %v234
    %v259 = vpack.c.b16 %v243, %v235
    %v260 = vpack.c.b16 %v244, %v236
    %v261 = vpack.c.b16 %v245, %v237
    %v262 = vpack.c.b16 %v246, %v238
    %v263 = vpack.c.b16 %v247, %v239
    %v264 = vpack.c.b16 %v248, %v240
    %vm281 = vcmask 261120
    %v283 = vsel %vm281, %v166, 0
    %285 = vmatpush.bf16.msra.mxu0 0
    %286 = vmatpush.bf16.msra.mxu0 0
    %287 = vmatpush.bf16.msra.mxu0 0
    %288 = vmatpush.bf16.msra.mxu0 0
    %289 = vmatpush.bf16.msra.mxu0 0
    %290 = vmatpush.bf16.msra.mxu0 0
    %291 = vmatpush.bf16.msra.mxu0 %v257
    %292 = vmatpush.bf16.msra.mxu0 %v249
    %293 = vmatmul.bf16.gmra.mxu0 %v283
    %v294 = vpop.f32.mrf.mxu0
    %v295 = vadd.f32 %v185, %v294
    %v296 = vpop.f32.mrf.mxu0
    %297 = vdwg.mxu0
    %298 = vmatpush.bf16.msra.mxu0 0
    %299 = vmatpush.bf16.msra.mxu0 0
    %300 = vmatpush.bf16.msra.mxu0 0
    %301 = vmatpush.bf16.msra.mxu0 0
    %302 = vmatpush.bf16.msra.mxu0 0
    %303 = vmatpush.bf16.msra.mxu0 0
    %304 = vmatpush.bf16.msra.mxu0 %v258
    %305 = vmatpush.bf16.msra.mxu0 %v250
    %306 = vmatmul.bf16.gmra.mxu0 %v283
    %v307 = vpop.f32.mrf.mxu0
    %v308 = vadd.f32 %v186, %v307
    %v309 = vpop.f32.mrf.mxu0
    %310 = vdwg.mxu0
    %311 = vmatpush.bf16.msra.mxu0 0
    %312 = vmatpush.bf16.msra.mxu0 0
    %313 = vmatpush.bf16.msra.mxu0 0
    %314 = vmatpush.bf16.msra.mxu0 0
    %315 = vmatpush.bf16.msra.mxu0 0
    %316 = vmatpush.bf16.msra.mxu0 0
    %317 = vmatpush.bf16.msra.mxu0 %v259
    %318 = vmatpush.bf16.msra.mxu0 %v251
    %319 = vmatmul.bf16.gmra.mxu0 %v283
    %v320 = vpop.f32.mrf.mxu0
    %v321 = vadd.f32 %v187, %v320
    %v322 = vpop.f32.mrf.mxu0
    %323 = vdwg.mxu0
    %324 = vmatpush.bf16.msra.mxu0 0
    %325 = vmatpush.bf16.msra.mxu0 0
    %326 = vmatpush.bf16.msra.mxu0 0
    %327 = vmatpush.bf16.msra.mxu0 0
    %328 = vmatpush.bf16.msra.mxu0 0
    %329 = vmatpush.bf16.msra.mxu0 0
    %330 = vmatpush.bf16.msra.mxu0 %v260
    %331 = vmatpush.bf16.msra.mxu0 %v252
    %332 = vmatmul.bf16.gmra.mxu0 %v283
    %v333 = vpop.f32.mrf.mxu0
    %v334 = vadd.f32 %v188, %v333
    %v335 = vpop.f32.mrf.mxu0
    %336 = vdwg.mxu0
    %337 = vmatpush.bf16.msra.mxu0 0
    %338 = vmatpush.bf16.msra.mxu0 0
    %339 = vmatpush.bf16.msra.mxu0 0
    %340 = vmatpush.bf16.msra.mxu0 0
    %341 = vmatpush.bf16.msra.mxu0 0
    %342 = vmatpush.bf16.msra.mxu0 0
    %343 = vmatpush.bf16.msra.mxu0 %v261
    %344 = vmatpush.bf16.msra.mxu0 %v253
    %345 = vmatmul.bf16.gmra.mxu0 %v283
    %v346 = vpop.f32.mrf.mxu0
    %v347 = vadd.f32 %v189, %v346
    %v348 = vpop.f32.mrf.mxu0
    %349 = vdwg.mxu0
    %350 = vmatpush.bf16.msra.mxu0 0
    %351 = vmatpush.bf16.msra.mxu0 0
    %352 = vmatpush.bf16.msra.mxu0 0
    %353 = vmatpush.bf16.msra.mxu0 0
    %354 = vmatpush.bf16.msra.mxu0 0
    %355 = vmatpush.bf16.msra.mxu0 0
    %356 = vmatpush.bf16.msra.mxu0 %v262
    %357 = vmatpush.bf16.msra.mxu0 %v254
    %358 = vmatmul.bf16.gmra.mxu0 %v283
    %v359 = vpop.f32.mrf.mxu0
    %v360 = vadd.f32 %v190, %v359
    %v361 = vpop.f32.mrf.mxu0
    %362 = vdwg.mxu0
    %363 = vmatpush.bf16.msra.mxu0 0
    %364 = vmatpush.bf16.msra.mxu0 0
    %365 = vmatpush.bf16.msra.mxu0 0
    %366 = vmatpush.bf16.msra.mxu0 0
    %367 = vmatpush.bf16.msra.mxu0 0
    %368 = vmatpush.bf16.msra.mxu0 0
    %369 = vmatpush.bf16.msra.mxu0 %v263
    %370 = vmatpush.bf16.msra.mxu0 %v255
    %371 = vmatmul.bf16.gmra.mxu0 %v283
    %v372 = vpop.f32.mrf.mxu0
    %v373 = vadd.f32 %v191, %v372
    %v374 = vpop.f32.mrf.mxu0
    %375 = vdwg.mxu0
    %376 = vmatpush.bf16.msra.mxu0 0
    %377 = vmatpush.bf16.msra.mxu0 0
    %378 = vmatpush.bf16.msra.mxu0 0
    %379 = vmatpush.bf16.msra.mxu0 0
    %380 = vmatpush.bf16.msra.mxu0 0
    %381 = vmatpush.bf16.msra.mxu0 0
    %382 = vmatpush.bf16.msra.mxu0 %v264
    %383 = vmatpush.bf16.msra.mxu0 %v256
    %384 = vmatmul.bf16.gmra.mxu0 %v283
    %v385 = vpop.f32.mrf.mxu0
    %v386 = vadd.f32 %v192, %v385
    %v387 = vpop.f32.mrf.mxu0
    %388 = vdwg.mxu0
    %v389 = vmax.f32 %v295, 0.0
    %v390 = vmax.f32 %v308, 0.0
    %v391 = vmax.f32 %v321, 0.0
    %v392 = vmax.f32 %v334, 0.0
    %v393 = vmax.f32 %v347, 0.0
    %v394 = vmax.f32 %v360, 0.0
    %v395 = vmax.f32 %v373, 0.0
    %v396 = vmax.f32 %v386, 0.0
    %v397 = vpack.c.bf16 %v389, %v389
    %v398 = vpack.c.bf16 %v390, %v390
    %v399 = vpack.c.bf16 %v391, %v391
    %v400 = vpack.c.bf16 %v392, %v392
    %v401 = vpack.c.bf16 %v393, %v393
    %v402 = vpack.c.bf16 %v394, %v394
    %v403 = vpack.c.bf16 %v395, %v395
    %v404 = vpack.c.bf16 %v396, %v396
    %v405 = vld [vmem:[#allocation10] sm:$0xff]
    %v406 = vld [vmem:[#allocation10 + $0x8] sm:$0xff]
    %v407 = vld [vmem:[#allocation10 + $0x10] sm:$0xff]
    %v408 = vld [vmem:[#allocation10 + $0x18] sm:$0xff]
    %v409 = vld [vmem:[#allocation10 + $0x20] sm:$0xff]
    %v410 = vld [vmem:[#allocation10 + $0x28] sm:$0xff]
    %v411 = vld [vmem:[#allocation10 + $0x30] sm:$0xff]
    %v412 = vld [vmem:[#allocation10 + $0x38] sm:$0xff]
    %v413 = vld [vmem:[#allocation10 + $0x40] sm:$0xff]
    %v414 = vld [vmem:[#allocation10 + $0x48] sm:$0xff]
    %v415 = vld [vmem:[#allocation10 + $0x50] sm:$0xff]
    %v416 = vld [vmem:[#allocation10 + $0x58] sm:$0xff]
    %v417 = vld [vmem:[#allocation10 + $0x60] sm:$0xff]
    %v418 = vld [vmem:[#allocation10 + $0x68] sm:$0xff]
    %v419 = vld [vmem:[#allocation10 + $0x70] sm:$0xff]
    %v420 = vld [vmem:[#allocation10 + $0x78] sm:$0xff]
    %v421 = vld [vmem:[#allocation10 + $0x80] sm:$0xff]
    %v422 = vld [vmem:[#allocation10 + $0x88] sm:$0xff]
    %v423 = vld [vmem:[#allocation10 + $0x90] sm:$0xff]
    %v424 = vld [vmem:[#allocation10 + $0x98] sm:$0xff]
    %v425 = vld [vmem:[#allocation10 + $0xa0] sm:$0xff]
    %v426 = vld [vmem:[#allocation10 + $0xa8] sm:$0xff]
    %v427 = vld [vmem:[#allocation10 + $0xb0] sm:$0xff]
    %v428 = vld [vmem:[#allocation10 + $0xb8] sm:$0xff]
    %v429 = vld [vmem:[#allocation10 + $0xc0] sm:$0xff]
    %v430 = vld [vmem:[#allocation10 + $0xc8] sm:$0xff]
    %v431 = vld [vmem:[#allocation10 + $0xd0] sm:$0xff]
    %v432 = vld [vmem:[#allocation10 + $0xd8] sm:$0xff]
    %v433 = vld [vmem:[#allocation10 + $0xe0] sm:$0xff]
    %v434 = vld [vmem:[#allocation10 + $0xe8] sm:$0xff]
    %v435 = vld [vmem:[#allocation10 + $0xf0] sm:$0xff]
    %v436 = vld [vmem:[#allocation10 + $0xf8] sm:$0xff]
    %v437 = vld [vmem:[#allocation10 + $0x100] sm:$0xff]
    %v438 = vld [vmem:[#allocation10 + $0x108] sm:$0xff]
    %v439 = vld [vmem:[#allocation10 + $0x110] sm:$0xff]
    %v440 = vld [vmem:[#allocation10 + $0x118] sm:$0xff]
    %v441 = vld [vmem:[#allocation10 + $0x120] sm:$0xff]
    %v442 = vld [vmem:[#allocation10 + $0x128] sm:$0xff]
    %v443 = vld [vmem:[#allocation10 + $0x130] sm:$0xff]
    %v444 = vld [vmem:[#allocation10 + $0x138] sm:$0xff]
    %v445 = vld [vmem:[#allocation10 + $0x140] sm:$0xff]
    %v446 = vld [vmem:[#allocation10 + $0x148] sm:$0xff]
    %v447 = vld [vmem:[#allocation10 + $0x150] sm:$0xff]
    %v448 = vld [vmem:[#allocation10 + $0x158] sm:$0xff]
    %v449 = vld [vmem:[#allocation10 + $0x160] sm:$0xff]
    %v450 = vld [vmem:[#allocation10 + $0x168] sm:$0xff]
    %v451 = vld [vmem:[#allocation10 + $0x170] sm:$0xff]
    %v452 = vld [vmem:[#allocation10 + $0x178] sm:$0xff]
    %v453 = vld [vmem:[#allocation10 + $0x180] sm:$0xff]
    %v454 = vld [vmem:[#allocation10 + $0x188] sm:$0xff]
    %v455 = vld [vmem:[#allocation10 + $0x190] sm:$0xff]
    %v456 = vld [vmem:[#allocation10 + $0x198] sm:$0xff]
    %v457 = vld [vmem:[#allocation10 + $0x1a0] sm:$0xff]
    %v458 = vld [vmem:[#allocation10 + $0x1a8] sm:$0xff]
    %v459 = vld [vmem:[#allocation10 + $0x1b0] sm:$0xff]
    %v460 = vld [vmem:[#allocation10 + $0x1b8] sm:$0xff]
    %v461 = vld [vmem:[#allocation10 + $0x1c0] sm:$0xff]
    %v462 = vld [vmem:[#allocation10 + $0x1c8] sm:$0xff]
    %v463 = vld [vmem:[#allocation10 + $0x1d0] sm:$0xff]
    %v464 = vld [vmem:[#allocation10 + $0x1d8] sm:$0xff]
    %v465 = vld [vmem:[#allocation10 + $0x1e0] sm:$0xff]
    %v466 = vld [vmem:[#allocation10 + $0x1e8] sm:$0xff]
    %v467 = vld [vmem:[#allocation10 + $0x1f0] sm:$0xff]
    %v468 = vld [vmem:[#allocation10 + $0x1f8] sm:$0xff]
    %v469 = vld [vmem:[#allocation10 + $0x200] sm:$0xff]
    %v470 = vld [vmem:[#allocation10 + $0x208] sm:$0xff]
    %v471 = vld [vmem:[#allocation10 + $0x210] sm:$0xff]
    %v472 = vld [vmem:[#allocation10 + $0x218] sm:$0xff]
    %v473 = vld [vmem:[#allocation10 + $0x220] sm:$0xff]
    %v474 = vld [vmem:[#allocation10 + $0x228] sm:$0xff]
    %v475 = vld [vmem:[#allocation10 + $0x230] sm:$0xff]
    %v476 = vld [vmem:[#allocation10 + $0x238] sm:$0xff]
    %v477 = vld [vmem:[#allocation10 + $0x240] sm:$0xff]
    %v478 = vld [vmem:[#allocation10 + $0x248] sm:$0xff]
    %v479 = vld [vmem:[#allocation10 + $0x250] sm:$0xff]
    %v480 = vld [vmem:[#allocation10 + $0x258] sm:$0xff]
    %v481 = vld [vmem:[#allocation10 + $0x260] sm:$0xff]
    %v482 = vld [vmem:[#allocation10 + $0x268] sm:$0xff]
    %v483 = vld [vmem:[#allocation10 + $0x270] sm:$0xff]
    %v484 = vld [vmem:[#allocation10 + $0x278] sm:$0xff]
    %v485 = vld [vmem:[#allocation10 + $0x280] sm:$0xff]
    %v486 = vld [vmem:[#allocation10 + $0x288] sm:$0xff]
    %v487 = vld [vmem:[#allocation10 + $0x290] sm:$0xff]
    %v488 = vld [vmem:[#allocation10 + $0x298] sm:$0xff]
    %v489 = vld [vmem:[#allocation10 + $0x2a0] sm:$0xff]
    %v490 = vld [vmem:[#allocation10 + $0x2a8] sm:$0xff]
    %v491 = vld [vmem:[#allocation10 + $0x2b0] sm:$0xff]
    %v492 = vld [vmem:[#allocation10 + $0x2b8] sm:$0xff]
    %v493 = vld [vmem:[#allocation10 + $0x2c0] sm:$0xff]
    %v494 = vld [vmem:[#allocation10 + $0x2c8] sm:$0xff]
    %v495 = vld [vmem:[#allocation10 + $0x2d0] sm:$0xff]
    %v496 = vld [vmem:[#allocation10 + $0x2d8] sm:$0xff]
    %v497 = vld [vmem:[#allocation10 + $0x2e0] sm:$0xff]
    %v498 = vld [vmem:[#allocation10 + $0x2e8] sm:$0xff]
    %v499 = vld [vmem:[#allocation10 + $0x2f0] sm:$0xff]
    %v500 = vld [vmem:[#allocation10 + $0x2f8] sm:$0xff]
    %v501 = vld [vmem:[#allocation10 + $0x300] sm:$0xff]
    %v502 = vld [vmem:[#allocation10 + $0x308] sm:$0xff]
    %v503 = vld [vmem:[#allocation10 + $0x310] sm:$0xff]
    %v504 = vld [vmem:[#allocation10 + $0x318] sm:$0xff]
    %v505 = vld [vmem:[#allocation10 + $0x320] sm:$0xff]
    %v506 = vld [vmem:[#allocation10 + $0x328] sm:$0xff]
    %v507 = vld [vmem:[#allocation10 + $0x330] sm:$0xff]
    %v508 = vld [vmem:[#allocation10 + $0x338] sm:$0xff]
    %v509 = vld [vmem:[#allocation10 + $0x340] sm:$0xff]
    %v510 = vld [vmem:[#allocation10 + $0x348] sm:$0xff]
    %v511 = vld [vmem:[#allocation10 + $0x350] sm:$0xff]
    %v512 = vld [vmem:[#allocation10 + $0x358] sm:$0xff]
    %v513 = vld [vmem:[#allocation10 + $0x360] sm:$0xff]
    %v514 = vld [vmem:[#allocation10 + $0x368] sm:$0xff]
    %v515 = vld [vmem:[#allocation10 + $0x370] sm:$0xff]
    %v516 = vld [vmem:[#allocation10 + $0x378] sm:$0xff]
    %v517 = vld [vmem:[#allocation10 + $0x380] sm:$0xff]
    %v518 = vld [vmem:[#allocation10 + $0x388] sm:$0xff]
    %v519 = vld [vmem:[#allocation10 + $0x390] sm:$0xff]
    %v520 = vld [vmem:[#allocation10 + $0x398] sm:$0xff]
    %v521 = vld [vmem:[#allocation10 + $0x3a0] sm:$0xff]
    %v522 = vld [vmem:[#allocation10 + $0x3a8] sm:$0xff]
    %v523 = vld [vmem:[#allocation10 + $0x3b0] sm:$0xff]
    %v524 = vld [vmem:[#allocation10 + $0x3b8] sm:$0xff]
    %v525 = vld [vmem:[#allocation10 + $0x3c0] sm:$0xff]
    %v526 = vld [vmem:[#allocation10 + $0x3c8] sm:$0xff]
    %v527 = vld [vmem:[#allocation10 + $0x3d0] sm:$0xff]
    %v528 = vld [vmem:[#allocation10 + $0x3d8] sm:$0xff]
    %v529 = vld [vmem:[#allocation10 + $0x3e0] sm:$0xff]
    %v530 = vld [vmem:[#allocation10 + $0x3e8] sm:$0xff]
    %v531 = vld [vmem:[#allocation10 + $0x3f0] sm:$0xff]
    %v532 = vld [vmem:[#allocation10 + $0x3f8] sm:$0xff]
    %v533 = vld [vmem:[#allocation10 + $0x400] sm:$0xff]
    %v534 = vld [vmem:[#allocation10 + $0x408] sm:$0xff]
    %v535 = vld [vmem:[#allocation10 + $0x410] sm:$0xff]
    %v536 = vld [vmem:[#allocation10 + $0x418] sm:$0xff]
    %v537 = vld [vmem:[#allocation10 + $0x420] sm:$0xff]
    %v538 = vld [vmem:[#allocation10 + $0x428] sm:$0xff]
    %v539 = vld [vmem:[#allocation10 + $0x430] sm:$0xff]
    %v540 = vld [vmem:[#allocation10 + $0x438] sm:$0xff]
    %v541 = vld [vmem:[#allocation10 + $0x440] sm:$0xff]
    %v542 = vld [vmem:[#allocation10 + $0x448] sm:$0xff]
    %v543 = vld [vmem:[#allocation10 + $0x450] sm:$0xff]
    %v544 = vld [vmem:[#allocation10 + $0x458] sm:$0xff]
    %v545 = vld [vmem:[#allocation10 + $0x460] sm:$0xff]
    %v546 = vld [vmem:[#allocation10 + $0x468] sm:$0xff]
    %v547 = vld [vmem:[#allocation10 + $0x470] sm:$0xff]
    %v548 = vld [vmem:[#allocation10 + $0x478] sm:$0xff]
    %v549 = vld [vmem:[#allocation10 + $0x480] sm:$0xff]
    %v550 = vld [vmem:[#allocation10 + $0x488] sm:$0xff]
    %v551 = vld [vmem:[#allocation10 + $0x490] sm:$0xff]
    %v552 = vld [vmem:[#allocation10 + $0x498] sm:$0xff]
    %v553 = vld [vmem:[#allocation10 + $0x4a0] sm:$0xff]
    %v554 = vld [vmem:[#allocation10 + $0x4a8] sm:$0xff]
    %v555 = vld [vmem:[#allocation10 + $0x4b0] sm:$0xff]
    %v556 = vld [vmem:[#allocation10 + $0x4b8] sm:$0xff]
    %v557 = vld [vmem:[#allocation10 + $0x4c0] sm:$0xff]
    %v558 = vld [vmem:[#allocation10 + $0x4c8] sm:$0xff]
    %v559 = vld [vmem:[#allocation10 + $0x4d0] sm:$0xff]
    %v560 = vld [vmem:[#allocation10 + $0x4d8] sm:$0xff]
    %v561 = vld [vmem:[#allocation10 + $0x4e0] sm:$0xff]
    %v562 = vld [vmem:[#allocation10 + $0x4e8] sm:$0xff]
    %v563 = vld [vmem:[#allocation10 + $0x4f0] sm:$0xff]
    %v564 = vld [vmem:[#allocation10 + $0x4f8] sm:$0xff]
    %v565 = vld [vmem:[#allocation10 + $0x500] sm:$0xff]
    %v566 = vld [vmem:[#allocation10 + $0x508] sm:$0xff]
    %v567 = vld [vmem:[#allocation10 + $0x510] sm:$0xff]
    %v568 = vld [vmem:[#allocation10 + $0x518] sm:$0xff]
    %v569 = vld [vmem:[#allocation10 + $0x520] sm:$0xff]
    %v570 = vld [vmem:[#allocation10 + $0x528] sm:$0xff]
    %v571 = vld [vmem:[#allocation10 + $0x530] sm:$0xff]
    %v572 = vld [vmem:[#allocation10 + $0x538] sm:$0xff]
    %v573 = vld [vmem:[#allocation10 + $0x540] sm:$0xff]
    %v574 = vld [vmem:[#allocation10 + $0x548] sm:$0xff]
    %v575 = vld [vmem:[#allocation10 + $0x550] sm:$0xff]
    %v576 = vld [vmem:[#allocation10 + $0x558] sm:$0xff]
    %v577 = vld [vmem:[#allocation10 + $0x560] sm:$0xff]
    %v578 = vld [vmem:[#allocation10 + $0x568] sm:$0xff]
    %v579 = vld [vmem:[#allocation10 + $0x570] sm:$0xff]
    %v580 = vld [vmem:[#allocation10 + $0x578] sm:$0xff]
    %v581 = vld [vmem:[#allocation10 + $0x580] sm:$0xff]
    %v582 = vld [vmem:[#allocation10 + $0x588] sm:$0xff]
    %v583 = vld [vmem:[#allocation10 + $0x590] sm:$0xff]
    %v584 = vld [vmem:[#allocation10 + $0x598] sm:$0xff]
    %v585 = vld [vmem:[#allocation10 + $0x5a0] sm:$0xff]
    %v586 = vld [vmem:[#allocation10 + $0x5a8] sm:$0xff]
    %v587 = vld [vmem:[#allocation10 + $0x5b0] sm:$0xff]
    %v588 = vld [vmem:[#allocation10 + $0x5b8] sm:$0xff]
    %v589 = vld [vmem:[#allocation10 + $0x5c0] sm:$0xff]
    %v590 = vld [vmem:[#allocation10 + $0x5c8] sm:$0xff]
    %v591 = vld [vmem:[#allocation10 + $0x5d0] sm:$0xff]
    %v592 = vld [vmem:[#allocation10 + $0x5d8] sm:$0xff]
    %v593 = vld [vmem:[#allocation10 + $0x5e0] sm:$0xff]
    %v594 = vld [vmem:[#allocation10 + $0x5e8] sm:$0xff]
    %v595 = vld [vmem:[#allocation10 + $0x5f0] sm:$0xff]
    %v596 = vld [vmem:[#allocation10 + $0x5f8] sm:$0xff]
    %v597 = vld [vmem:[#allocation10 + $0x600] sm:$0xff]
    %v598 = vld [vmem:[#allocation10 + $0x608] sm:$0xff]
    %v599 = vld [vmem:[#allocation10 + $0x610] sm:$0xff]
    %v600 = vld [vmem:[#allocation10 + $0x618] sm:$0xff]
    %v601 = vld [vmem:[#allocation10 + $0x620] sm:$0xff]
    %v602 = vld [vmem:[#allocation10 + $0x628] sm:$0xff]
    %v603 = vld [vmem:[#allocation10 + $0x630] sm:$0xff]
    %v604 = vld [vmem:[#allocation10 + $0x638] sm:$0xff]
    %v605 = vld [vmem:[#allocation10 + $0x640] sm:$0xff]
    %v606 = vld [vmem:[#allocation10 + $0x648] sm:$0xff]
    %v607 = vld [vmem:[#allocation10 + $0x650] sm:$0xff]
    %v608 = vld [vmem:[#allocation10 + $0x658] sm:$0xff]
    %v609 = vld [vmem:[#allocation10 + $0x660] sm:$0xff]
    %v610 = vld [vmem:[#allocation10 + $0x668] sm:$0xff]
    %v611 = vld [vmem:[#allocation10 + $0x670] sm:$0xff]
    %v612 = vld [vmem:[#allocation10 + $0x678] sm:$0xff]
    %v613 = vld [vmem:[#allocation10 + $0x680] sm:$0xff]
    %v614 = vld [vmem:[#allocation10 + $0x688] sm:$0xff]
    %v615 = vld [vmem:[#allocation10 + $0x690] sm:$0xff]
    %v616 = vld [vmem:[#allocation10 + $0x698] sm:$0xff]
    %v617 = vld [vmem:[#allocation10 + $0x6a0] sm:$0xff]
    %v618 = vld [vmem:[#allocation10 + $0x6a8] sm:$0xff]
    %v619 = vld [vmem:[#allocation10 + $0x6b0] sm:$0xff]
    %v620 = vld [vmem:[#allocation10 + $0x6b8] sm:$0xff]
    %v621 = vld [vmem:[#allocation10 + $0x6c0] sm:$0xff]
    %v622 = vld [vmem:[#allocation10 + $0x6c8] sm:$0xff]
    %v623 = vld [vmem:[#allocation10 + $0x6d0] sm:$0xff]
    %v624 = vld [vmem:[#allocation10 + $0x6d8] sm:$0xff]
    %v625 = vld [vmem:[#allocation10 + $0x6e0] sm:$0xff]
    %v626 = vld [vmem:[#allocation10 + $0x6e8] sm:$0xff]
    %v627 = vld [vmem:[#allocation10 + $0x6f0] sm:$0xff]
    %v628 = vld [vmem:[#allocation10 + $0x6f8] sm:$0xff]
    %v629 = vld [vmem:[#allocation10 + $0x700] sm:$0xff]
    %v630 = vld [vmem:[#allocation10 + $0x708] sm:$0xff]
    %v631 = vld [vmem:[#allocation10 + $0x710] sm:$0xff]
    %v632 = vld [vmem:[#allocation10 + $0x718] sm:$0xff]
    %v633 = vld [vmem:[#allocation10 + $0x720] sm:$0xff]
    %v634 = vld [vmem:[#allocation10 + $0x728] sm:$0xff]
    %v635 = vld [vmem:[#allocation10 + $0x730] sm:$0xff]
    %v636 = vld [vmem:[#allocation10 + $0x738] sm:$0xff]
    %v637 = vld [vmem:[#allocation10 + $0x740] sm:$0xff]
    %v638 = vld [vmem:[#allocation10 + $0x748] sm:$0xff]
    %v639 = vld [vmem:[#allocation10 + $0x750] sm:$0xff]
    %v640 = vld [vmem:[#allocation10 + $0x758] sm:$0xff]
    %v641 = vld [vmem:[#allocation10 + $0x760] sm:$0xff]
    %v642 = vld [vmem:[#allocation10 + $0x768] sm:$0xff]
    %v643 = vld [vmem:[#allocation10 + $0x770] sm:$0xff]
    %v644 = vld [vmem:[#allocation10 + $0x778] sm:$0xff]
    %v645 = vld [vmem:[#allocation10 + $0x780] sm:$0xff]
    %v646 = vld [vmem:[#allocation10 + $0x788] sm:$0xff]
    %v647 = vld [vmem:[#allocation10 + $0x790] sm:$0xff]
    %v648 = vld [vmem:[#allocation10 + $0x798] sm:$0xff]
    %v649 = vld [vmem:[#allocation10 + $0x7a0] sm:$0xff]
    %v650 = vld [vmem:[#allocation10 + $0x7a8] sm:$0xff]
    %v651 = vld [vmem:[#allocation10 + $0x7b0] sm:$0xff]
    %v652 = vld [vmem:[#allocation10 + $0x7b8] sm:$0xff]
    %v653 = vld [vmem:[#allocation10 + $0x7c0] sm:$0xff]
    %v654 = vld [vmem:[#allocation10 + $0x7c8] sm:$0xff]
    %v655 = vld [vmem:[#allocation10 + $0x7d0] sm:$0xff]
    %v656 = vld [vmem:[#allocation10 + $0x7d8] sm:$0xff]
    %v657 = vld [vmem:[#allocation10 + $0x7e0] sm:$0xff]
    %v658 = vld [vmem:[#allocation10 + $0x7e8] sm:$0xff]
    %v659 = vld [vmem:[#allocation10 + $0x7f0] sm:$0xff]
    %v660 = vld [vmem:[#allocation10 + $0x7f8] sm:$0xff]
    %v661 = vld [vmem:[#allocation10 + $0x800] sm:$0xff]
    %v662 = vld [vmem:[#allocation10 + $0x808] sm:$0xff]
    %v663 = vld [vmem:[#allocation10 + $0x810] sm:$0xff]
    %v664 = vld [vmem:[#allocation10 + $0x818] sm:$0xff]
    %v665 = vld [vmem:[#allocation10 + $0x820] sm:$0xff]
    %v666 = vld [vmem:[#allocation10 + $0x828] sm:$0xff]
    %v667 = vld [vmem:[#allocation10 + $0x830] sm:$0xff]
    %v668 = vld [vmem:[#allocation10 + $0x838] sm:$0xff]
    %v669 = vld [vmem:[#allocation10 + $0x840] sm:$0xff]
    %v670 = vld [vmem:[#allocation10 + $0x848] sm:$0xff]
    %v671 = vld [vmem:[#allocation10 + $0x850] sm:$0xff]
    %v672 = vld [vmem:[#allocation10 + $0x858] sm:$0xff]
    %v673 = vld [vmem:[#allocation10 + $0x860] sm:$0xff]
    %v674 = vld [vmem:[#allocation10 + $0x868] sm:$0xff]
    %v675 = vld [vmem:[#allocation10 + $0x870] sm:$0xff]
    %v676 = vld [vmem:[#allocation10 + $0x878] sm:$0xff]
    %v677 = vld [vmem:[#allocation10 + $0x880] sm:$0xff]
    %v678 = vld [vmem:[#allocation10 + $0x888] sm:$0xff]
    %v679 = vld [vmem:[#allocation10 + $0x890] sm:$0xff]
    %v680 = vld [vmem:[#allocation10 + $0x898] sm:$0xff]
    %v681 = vld [vmem:[#allocation10 + $0x8a0] sm:$0xff]
    %v682 = vld [vmem:[#allocation10 + $0x8a8] sm:$0xff]
    %v683 = vld [vmem:[#allocation10 + $0x8b0] sm:$0xff]
    %v684 = vld [vmem:[#allocation10 + $0x8b8] sm:$0xff]
    %v685 = vld [vmem:[#allocation10 + $0x8c0] sm:$0xff]
    %v686 = vld [vmem:[#allocation10 + $0x8c8] sm:$0xff]
    %v687 = vld [vmem:[#allocation10 + $0x8d0] sm:$0xff]
    %v688 = vld [vmem:[#allocation10 + $0x8d8] sm:$0xff]
    %v689 = vld [vmem:[#allocation10 + $0x8e0] sm:$0xff]
    %v690 = vld [vmem:[#allocation10 + $0x8e8] sm:$0xff]
    %v691 = vld [vmem:[#allocation10 + $0x8f0] sm:$0xff]
    %v692 = vld [vmem:[#allocation10 + $0x8f8] sm:$0xff]
    %v693 = vld [vmem:[#allocation10 + $0x900] sm:$0xff]
    %v694 = vld [vmem:[#allocation10 + $0x908] sm:$0xff]
    %v695 = vld [vmem:[#allocation10 + $0x910] sm:$0xff]
    %v696 = vld [vmem:[#allocation10 + $0x918] sm:$0xff]
    %v697 = vld [vmem:[#allocation10 + $0x920] sm:$0xff]
    %v698 = vld [vmem:[#allocation10 + $0x928] sm:$0xff]
    %v699 = vld [vmem:[#allocation10 + $0x930] sm:$0xff]
    %v700 = vld [vmem:[#allocation10 + $0x938] sm:$0xff]
    %v701 = vld [vmem:[#allocation10 + $0x940] sm:$0xff]
    %v702 = vld [vmem:[#allocation10 + $0x948] sm:$0xff]
    %v703 = vld [vmem:[#allocation10 + $0x950] sm:$0xff]
    %v704 = vld [vmem:[#allocation10 + $0x958] sm:$0xff]
    %v705 = vld [vmem:[#allocation10 + $0x960] sm:$0xff]
    %v706 = vld [vmem:[#allocation10 + $0x968] sm:$0xff]
    %v707 = vld [vmem:[#allocation10 + $0x970] sm:$0xff]
    %v708 = vld [vmem:[#allocation10 + $0x978] sm:$0xff]
    %v709 = vld [vmem:[#allocation10 + $0x980] sm:$0xff]
    %v710 = vld [vmem:[#allocation10 + $0x988] sm:$0xff]
    %v711 = vld [vmem:[#allocation10 + $0x990] sm:$0xff]
    %v712 = vld [vmem:[#allocation10 + $0x998] sm:$0xff]
    %v713 = vld [vmem:[#allocation10 + $0x9a0] sm:$0xff]
    %v714 = vld [vmem:[#allocation10 + $0x9a8] sm:$0xff]
    %v715 = vld [vmem:[#allocation10 + $0x9b0] sm:$0xff]
    %v716 = vld [vmem:[#allocation10 + $0x9b8] sm:$0xff]
    %v717 = vld [vmem:[#allocation10 + $0x9c0] sm:$0xff]
    %v718 = vld [vmem:[#allocation10 + $0x9c8] sm:$0xff]
    %v719 = vld [vmem:[#allocation10 + $0x9d0] sm:$0xff]
    %v720 = vld [vmem:[#allocation10 + $0x9d8] sm:$0xff]
    %v721 = vld [vmem:[#allocation10 + $0x9e0] sm:$0xff]
    %v722 = vld [vmem:[#allocation10 + $0x9e8] sm:$0xff]
    %v723 = vld [vmem:[#allocation10 + $0x9f0] sm:$0xff]
    %v724 = vld [vmem:[#allocation10 + $0x9f8] sm:$0xff]
    %v725 = vld [vmem:[#allocation10 + $0xa00] sm:$0xff]
    %v726 = vld [vmem:[#allocation10 + $0xa08] sm:$0xff]
    %v727 = vld [vmem:[#allocation10 + $0xa10] sm:$0xff]
    %v728 = vld [vmem:[#allocation10 + $0xa18] sm:$0xff]
    %v729 = vld [vmem:[#allocation10 + $0xa20] sm:$0xff]
    %v730 = vld [vmem:[#allocation10 + $0xa28] sm:$0xff]
    %v731 = vld [vmem:[#allocation10 + $0xa30] sm:$0xff]
    %v732 = vld [vmem:[#allocation10 + $0xa38] sm:$0xff]
    %v733 = vld [vmem:[#allocation10 + $0xa40] sm:$0xff]
    %v734 = vld [vmem:[#allocation10 + $0xa48] sm:$0xff]
    %v735 = vld [vmem:[#allocation10 + $0xa50] sm:$0xff]
    %v736 = vld [vmem:[#allocation10 + $0xa58] sm:$0xff]
    %v737 = vld [vmem:[#allocation10 + $0xa60] sm:$0xff]
    %v738 = vld [vmem:[#allocation10 + $0xa68] sm:$0xff]
    %v739 = vld [vmem:[#allocation10 + $0xa70] sm:$0xff]
    %v740 = vld [vmem:[#allocation10 + $0xa78] sm:$0xff]
    %v741 = vld [vmem:[#allocation10 + $0xa80] sm:$0xff]
    %v742 = vld [vmem:[#allocation10 + $0xa88] sm:$0xff]
    %v743 = vld [vmem:[#allocation10 + $0xa90] sm:$0xff]
    %v744 = vld [vmem:[#allocation10 + $0xa98] sm:$0xff]
    %v745 = vld [vmem:[#allocation10 + $0xaa0] sm:$0xff]
    %v746 = vld [vmem:[#allocation10 + $0xaa8] sm:$0xff]
    %v747 = vld [vmem:[#allocation10 + $0xab0] sm:$0xff]
    %v748 = vld [vmem:[#allocation10 + $0xab8] sm:$0xff]
    %v749 = vld [vmem:[#allocation10 + $0xac0] sm:$0xff]
    %v750 = vld [vmem:[#allocation10 + $0xac8] sm:$0xff]
    %v751 = vld [vmem:[#allocation10 + $0xad0] sm:$0xff]
    %v752 = vld [vmem:[#allocation10 + $0xad8] sm:$0xff]
    %v753 = vld [vmem:[#allocation10 + $0xae0] sm:$0xff]
    %v754 = vld [vmem:[#allocation10 + $0xae8] sm:$0xff]
    %v755 = vld [vmem:[#allocation10 + $0xaf0] sm:$0xff]
    %v756 = vld [vmem:[#allocation10 + $0xaf8] sm:$0xff]
    %v757 = vld [vmem:[#allocation10 + $0xb00] sm:$0xff]
    %v758 = vld [vmem:[#allocation10 + $0xb08] sm:$0xff]
    %v759 = vld [vmem:[#allocation10 + $0xb10] sm:$0xff]
    %v760 = vld [vmem:[#allocation10 + $0xb18] sm:$0xff]
    %v761 = vld [vmem:[#allocation10 + $0xb20] sm:$0xff]
    %v762 = vld [vmem:[#allocation10 + $0xb28] sm:$0xff]
    %v763 = vld [vmem:[#allocation10 + $0xb30] sm:$0xff]
    %v764 = vld [vmem:[#allocation10 + $0xb38] sm:$0xff]
    %v765 = vld [vmem:[#allocation10 + $0xb40] sm:$0xff]
    %v766 = vld [vmem:[#allocation10 + $0xb48] sm:$0xff]
    %v767 = vld [vmem:[#allocation10 + $0xb50] sm:$0xff]
    %v768 = vld [vmem:[#allocation10 + $0xb58] sm:$0xff]
    %v769 = vld [vmem:[#allocation10 + $0xb60] sm:$0xff]
    %v770 = vld [vmem:[#allocation10 + $0xb68] sm:$0xff]
    %v771 = vld [vmem:[#allocation10 + $0xb70] sm:$0xff]
    %v772 = vld [vmem:[#allocation10 + $0xb78] sm:$0xff]
    %v773 = vld [vmem:[#allocation10 + $0xb80] sm:$0xff]
    %v774 = vld [vmem:[#allocation10 + $0xb88] sm:$0xff]
    %v775 = vld [vmem:[#allocation10 + $0xb90] sm:$0xff]
    %v776 = vld [vmem:[#allocation10 + $0xb98] sm:$0xff]
    %v777 = vld [vmem:[#allocation10 + $0xba0] sm:$0xff]
    %v778 = vld [vmem:[#allocation10 + $0xba8] sm:$0xff]
    %v779 = vld [vmem:[#allocation10 + $0xbb0] sm:$0xff]
    %v780 = vld [vmem:[#allocation10 + $0xbb8] sm:$0xff]
    %v781 = vld [vmem:[#allocation10 + $0xbc0] sm:$0xff]
    %v782 = vld [vmem:[#allocation10 + $0xbc8] sm:$0xff]
    %v783 = vld [vmem:[#allocation10 + $0xbd0] sm:$0xff]
    %v784 = vld [vmem:[#allocation10 + $0xbd8] sm:$0xff]
    %v785 = vld [vmem:[#allocation10 + $0xbe0] sm:$0xff]
    %v786 = vld [vmem:[#allocation10 + $0xbe8] sm:$0xff]
    %v787 = vld [vmem:[#allocation10 + $0xbf0] sm:$0xff]
    %v788 = vld [vmem:[#allocation10 + $0xbf8] sm:$0xff]
    %v789 = vld [vmem:[#allocation10 + $0xc00] sm:$0xff]
    %v790 = vld [vmem:[#allocation10 + $0xc08] sm:$0xff]
    %v791 = vld [vmem:[#allocation10 + $0xc10] sm:$0xff]
    %v792 = vld [vmem:[#allocation10 + $0xc18] sm:$0xff]
    %v793 = vld [vmem:[#allocation10 + $0xc20] sm:$0xff]
    %v794 = vld [vmem:[#allocation10 + $0xc28] sm:$0xff]
    %v795 = vld [vmem:[#allocation10 + $0xc30] sm:$0xff]
    %v796 = vld [vmem:[#allocation10 + $0xc38] sm:$0xff]
    %v797 = vld [vmem:[#allocation10 + $0xc40] sm:$0xff]
    %v798 = vld [vmem:[#allocation10 + $0xc48] sm:$0xff]
    %v799 = vld [vmem:[#allocation10 + $0xc50] sm:$0xff]
    %v800 = vld [vmem:[#allocation10 + $0xc58] sm:$0xff]
    %v801 = vld [vmem:[#allocation10 + $0xc60] sm:$0xff]
    %v802 = vld [vmem:[#allocation10 + $0xc68] sm:$0xff]
    %v803 = vld [vmem:[#allocation10 + $0xc70] sm:$0xff]
    %v804 = vld [vmem:[#allocation10 + $0xc78] sm:$0xff]
    %v805 = vld [vmem:[#allocation10 + $0xc80] sm:$0xff]
    %v806 = vld [vmem:[#allocation10 + $0xc88] sm:$0xff]
    %v807 = vld [vmem:[#allocation10 + $0xc90] sm:$0xff]
    %v808 = vld [vmem:[#allocation10 + $0xc98] sm:$0xff]
    %v809 = vld [vmem:[#allocation10 + $0xca0] sm:$0xff]
    %v810 = vld [vmem:[#allocation10 + $0xca8] sm:$0xff]
    %v811 = vld [vmem:[#allocation10 + $0xcb0] sm:$0xff]
    %v812 = vld [vmem:[#allocation10 + $0xcb8] sm:$0xff]
    %v813 = vld [vmem:[#allocation10 + $0xcc0] sm:$0xff]
    %v814 = vld [vmem:[#allocation10 + $0xcc8] sm:$0xff]
    %v815 = vld [vmem:[#allocation10 + $0xcd0] sm:$0xff]
    %v816 = vld [vmem:[#allocation10 + $0xcd8] sm:$0xff]
    %v817 = vld [vmem:[#allocation10 + $0xce0] sm:$0xff]
    %v818 = vld [vmem:[#allocation10 + $0xce8] sm:$0xff]
    %v819 = vld [vmem:[#allocation10 + $0xcf0] sm:$0xff]
    %v820 = vld [vmem:[#allocation10 + $0xcf8] sm:$0xff]
    %v821 = vld [vmem:[#allocation10 + $0xd00] sm:$0xff]
    %v822 = vld [vmem:[#allocation10 + $0xd08] sm:$0xff]
    %v823 = vld [vmem:[#allocation10 + $0xd10] sm:$0xff]
    %v824 = vld [vmem:[#allocation10 + $0xd18] sm:$0xff]
    %v825 = vld [vmem:[#allocation10 + $0xd20] sm:$0xff]
    %v826 = vld [vmem:[#allocation10 + $0xd28] sm:$0xff]
    %v827 = vld [vmem:[#allocation10 + $0xd30] sm:$0xff]
    %v828 = vld [vmem:[#allocation10 + $0xd38] sm:$0xff]
    %v829 = vld [vmem:[#allocation10 + $0xd40] sm:$0xff]
    %v830 = vld [vmem:[#allocation10 + $0xd48] sm:$0xff]
    %v831 = vld [vmem:[#allocation10 + $0xd50] sm:$0xff]
    %v832 = vld [vmem:[#allocation10 + $0xd58] sm:$0xff]
    %v833 = vld [vmem:[#allocation10 + $0xd60] sm:$0xff]
    %v834 = vld [vmem:[#allocation10 + $0xd68] sm:$0xff]
    %v835 = vld [vmem:[#allocation10 + $0xd70] sm:$0xff]
    %v836 = vld [vmem:[#allocation10 + $0xd78] sm:$0xff]
    %v837 = vld [vmem:[#allocation10 + $0xd80] sm:$0xff]
    %v838 = vld [vmem:[#allocation10 + $0xd88] sm:$0xff]
    %v839 = vld [vmem:[#allocation10 + $0xd90] sm:$0xff]
    %v840 = vld [vmem:[#allocation10 + $0xd98] sm:$0xff]
    %v841 = vld [vmem:[#allocation10 + $0xda0] sm:$0xff]
    %v842 = vld [vmem:[#allocation10 + $0xda8] sm:$0xff]
    %v843 = vld [vmem:[#allocation10 + $0xdb0] sm:$0xff]
    %v844 = vld [vmem:[#allocation10 + $0xdb8] sm:$0xff]
    %v845 = vld [vmem:[#allocation10 + $0xdc0] sm:$0xff]
    %v846 = vld [vmem:[#allocation10 + $0xdc8] sm:$0xff]
    %v847 = vld [vmem:[#allocation10 + $0xdd0] sm:$0xff]
    %v848 = vld [vmem:[#allocation10 + $0xdd8] sm:$0xff]
    %v849 = vld [vmem:[#allocation10 + $0xde0] sm:$0xff]
    %v850 = vld [vmem:[#allocation10 + $0xde8] sm:$0xff]
    %v851 = vld [vmem:[#allocation10 + $0xdf0] sm:$0xff]
    %v852 = vld [vmem:[#allocation10 + $0xdf8] sm:$0xff]
    %v853 = vld [vmem:[#allocation10 + $0xe00] sm:$0xff]
    %v854 = vld [vmem:[#allocation10 + $0xe08] sm:$0xff]
    %v855 = vld [vmem:[#allocation10 + $0xe10] sm:$0xff]
    %v856 = vld [vmem:[#allocation10 + $0xe18] sm:$0xff]
    %v857 = vld [vmem:[#allocation10 + $0xe20] sm:$0xff]
    %v858 = vld [vmem:[#allocation10 + $0xe28] sm:$0xff]
    %v859 = vld [vmem:[#allocation10 + $0xe30] sm:$0xff]
    %v860 = vld [vmem:[#allocation10 + $0xe38] sm:$0xff]
    %v861 = vld [vmem:[#allocation10 + $0xe40] sm:$0xff]
    %v862 = vld [vmem:[#allocation10 + $0xe48] sm:$0xff]
    %v863 = vld [vmem:[#allocation10 + $0xe50] sm:$0xff]
    %v864 = vld [vmem:[#allocation10 + $0xe58] sm:$0xff]
    %v865 = vld [vmem:[#allocation10 + $0xe60] sm:$0xff]
    %v866 = vld [vmem:[#allocation10 + $0xe68] sm:$0xff]
    %v867 = vld [vmem:[#allocation10 + $0xe70] sm:$0xff]
    %v868 = vld [vmem:[#allocation10 + $0xe78] sm:$0xff]
    %v869 = vld [vmem:[#allocation10 + $0xe80] sm:$0xff]
    %v870 = vld [vmem:[#allocation10 + $0xe88] sm:$0xff]
    %v871 = vld [vmem:[#allocation10 + $0xe90] sm:$0xff]
    %v872 = vld [vmem:[#allocation10 + $0xe98] sm:$0xff]
    %v873 = vld [vmem:[#allocation10 + $0xea0] sm:$0xff]
    %v874 = vld [vmem:[#allocation10 + $0xea8] sm:$0xff]
    %v875 = vld [vmem:[#allocation10 + $0xeb0] sm:$0xff]
    %v876 = vld [vmem:[#allocation10 + $0xeb8] sm:$0xff]
    %v877 = vld [vmem:[#allocation10 + $0xec0] sm:$0xff]
    %v878 = vld [vmem:[#allocation10 + $0xec8] sm:$0xff]
    %v879 = vld [vmem:[#allocation10 + $0xed0] sm:$0xff]
    %v880 = vld [vmem:[#allocation10 + $0xed8] sm:$0xff]
    %v881 = vld [vmem:[#allocation10 + $0xee0] sm:$0xff]
    %v882 = vld [vmem:[#allocation10 + $0xee8] sm:$0xff]
    %v883 = vld [vmem:[#allocation10 + $0xef0] sm:$0xff]
    %v884 = vld [vmem:[#allocation10 + $0xef8] sm:$0xff]
    %v885 = vld [vmem:[#allocation10 + $0xf00] sm:$0xff]
    %v886 = vld [vmem:[#allocation10 + $0xf08] sm:$0xff]
    %v887 = vld [vmem:[#allocation10 + $0xf10] sm:$0xff]
    %v888 = vld [vmem:[#allocation10 + $0xf18] sm:$0xff]
    %v889 = vld [vmem:[#allocation10 + $0xf20] sm:$0xff]
    %v890 = vld [vmem:[#allocation10 + $0xf28] sm:$0xff]
    %v891 = vld [vmem:[#allocation10 + $0xf30] sm:$0xff]
    %v892 = vld [vmem:[#allocation10 + $0xf38] sm:$0xff]
    %v893 = vld [vmem:[#allocation10 + $0xf40] sm:$0xff]
    %v894 = vld [vmem:[#allocation10 + $0xf48] sm:$0xff]
    %v895 = vld [vmem:[#allocation10 + $0xf50] sm:$0xff]
    %v896 = vld [vmem:[#allocation10 + $0xf58] sm:$0xff]
    %v897 = vld [vmem:[#allocation10 + $0xf60] sm:$0xff]
    %v898 = vld [vmem:[#allocation10 + $0xf68] sm:$0xff]
    %v899 = vld [vmem:[#allocation10 + $0xf70] sm:$0xff]
    %v900 = vld [vmem:[#allocation10 + $0xf78] sm:$0xff]
    %v901 = vld [vmem:[#allocation10 + $0xf80] sm:$0xff]
    %v902 = vld [vmem:[#allocation10 + $0xf88] sm:$0xff]
    %v903 = vld [vmem:[#allocation10 + $0xf90] sm:$0xff]
    %v904 = vld [vmem:[#allocation10 + $0xf98] sm:$0xff]
    %v905 = vld [vmem:[#allocation10 + $0xfa0] sm:$0xff]
    %v906 = vld [vmem:[#allocation10 + $0xfa8] sm:$0xff]
    %v907 = vld [vmem:[#allocation10 + $0xfb0] sm:$0xff]
    %v908 = vld [vmem:[#allocation10 + $0xfb8] sm:$0xff]
    %v909 = vld [vmem:[#allocation10 + $0xfc0] sm:$0xff]
    %v910 = vld [vmem:[#allocation10 + $0xfc8] sm:$0xff]
    %v911 = vld [vmem:[#allocation10 + $0xfd0] sm:$0xff]
    %v912 = vld [vmem:[#allocation10 + $0xfd8] sm:$0xff]
    %v913 = vld [vmem:[#allocation10 + $0xfe0] sm:$0xff]
    %v914 = vld [vmem:[#allocation10 + $0xfe8] sm:$0xff]
    %v915 = vld [vmem:[#allocation10 + $0xff0] sm:$0xff]
    %v916 = vld [vmem:[#allocation10 + $0xff8] sm:$0xff]
    %v917 = vld [vmem:[#allocation11] sm:$0xff]
    %v919 = vperm.slane %v917, 0
    %v920 = vperm.slane %v917, 1
    %v921 = vperm.slane %v917, 2
    %v922 = vperm.slane %v917, 3
    %v923 = vperm.slane %v917, 4
    %v924 = vperm.slane %v917, 5
    %v925 = vperm.slane %v917, 6
    %v926 = vperm.slane %v917, 7
    %v1447 = vunpack.c.l.b16 %v405
    %v1448 = vunpack.c.h.b16 %v405
    %v1449 = vunpack.c.l.b16 %v406
    %v1450 = vunpack.c.h.b16 %v406
    %v1451 = vunpack.c.l.b16 %v407
    %v1452 = vunpack.c.h.b16 %v407
    %v1453 = vunpack.c.l.b16 %v408
    %v1454 = vunpack.c.h.b16 %v408
    %v1455 = vunpack.c.l.b16 %v409
    %v1456 = vunpack.c.h.b16 %v409
    %v1457 = vunpack.c.l.b16 %v410
    %v1458 = vunpack.c.h.b16 %v410
    %v1459 = vunpack.c.l.b16 %v411
    %v1460 = vunpack.c.h.b16 %v411
    %v1461 = vunpack.c.l.b16 %v412
    %v1462 = vunpack.c.h.b16 %v412
    %v1463 = vunpack.c.l.b16 %v413
    %v1464 = vunpack.c.h.b16 %v413
    %v1465 = vunpack.c.l.b16 %v414
    %v1466 = vunpack.c.h.b16 %v414
    %v1467 = vunpack.c.l.b16 %v415
    %v1468 = vunpack.c.h.b16 %v415
    %v1469 = vunpack.c.l.b16 %v416
    %v1470 = vunpack.c.h.b16 %v416
    %v1471 = vunpack.c.l.b16 %v417
    %v1472 = vunpack.c.h.b16 %v417
    %v1473 = vunpack.c.l.b16 %v418
    %v1474 = vunpack.c.h.b16 %v418
    %v1475 = vunpack.c.l.b16 %v419
    %v1476 = vunpack.c.h.b16 %v419
    %v1477 = vunpack.c.l.b16 %v420
    %v1478 = vunpack.c.h.b16 %v420
    %v1479 = vunpack.c.l.b16 %v421
    %v1480 = vunpack.c.h.b16 %v421
    %v1481 = vunpack.c.l.b16 %v422
    %v1482 = vunpack.c.h.b16 %v422
    %v1483 = vunpack.c.l.b16 %v423
    %v1484 = vunpack.c.h.b16 %v423
    %v1485 = vunpack.c.l.b16 %v424
    %v1486 = vunpack.c.h.b16 %v424
    %v1487 = vunpack.c.l.b16 %v425
    %v1488 = vunpack.c.h.b16 %v425
    %v1489 = vunpack.c.l.b16 %v426
    %v1490 = vunpack.c.h.b16 %v426
    %v1491 = vunpack.c.l.b16 %v427
    %v1492 = vunpack.c.h.b16 %v427
    %v1493 = vunpack.c.l.b16 %v428
    %v1494 = vunpack.c.h.b16 %v428
    %v1495 = vunpack.c.l.b16 %v429
    %v1496 = vunpack.c.h.b16 %v429
    %v1497 = vunpack.c.l.b16 %v430
    %v1498 = vunpack.c.h.b16 %v430
    %v1499 = vunpack.c.l.b16 %v431
    %v1500 = vunpack.c.h.b16 %v431
    %v1501 = vunpack.c.l.b16 %v432
    %v1502 = vunpack.c.h.b16 %v432
    %v1503 = vunpack.c.l.b16 %v433
    %v1504 = vunpack.c.h.b16 %v433
    %v1505 = vunpack.c.l.b16 %v434
    %v1506 = vunpack.c.h.b16 %v434
    %v1507 = vunpack.c.l.b16 %v435
    %v1508 = vunpack.c.h.b16 %v435
    %v1509 = vunpack.c.l.b16 %v436
    %v1510 = vunpack.c.h.b16 %v436
    %v1511 = vunpack.c.l.b16 %v437
    %v1512 = vunpack.c.h.b16 %v437
    %v1513 = vunpack.c.l.b16 %v438
    %v1514 = vunpack.c.h.b16 %v438
    %v1515 = vunpack.c.l.b16 %v439
    %v1516 = vunpack.c.h.b16 %v439
    %v1517 = vunpack.c.l.b16 %v440
    %v1518 = vunpack.c.h.b16 %v440
    %v1519 = vunpack.c.l.b16 %v441
    %v1520 = vunpack.c.h.b16 %v441
    %v1521 = vunpack.c.l.b16 %v442
    %v1522 = vunpack.c.h.b16 %v442
    %v1523 = vunpack.c.l.b16 %v443
    %v1524 = vunpack.c.h.b16 %v443
    %v1525 = vunpack.c.l.b16 %v444
    %v1526 = vunpack.c.h.b16 %v444
    %v1527 = vunpack.c.l.b16 %v445
    %v1528 = vunpack.c.h.b16 %v445
    %v1529 = vunpack.c.l.b16 %v446
    %v1530 = vunpack.c.h.b16 %v446
    %v1531 = vunpack.c.l.b16 %v447
    %v1532 = vunpack.c.h.b16 %v447
    %v1533 = vunpack.c.l.b16 %v448
    %v1534 = vunpack.c.h.b16 %v448
    %v1535 = vunpack.c.l.b16 %v449
    %v1536 = vunpack.c.h.b16 %v449
    %v1537 = vunpack.c.l.b16 %v450
    %v1538 = vunpack.c.h.b16 %v450
    %v1539 = vunpack.c.l.b16 %v451
    %v1540 = vunpack.c.h.b16 %v451
    %v1541 = vunpack.c.l.b16 %v452
    %v1542 = vunpack.c.h.b16 %v452
    %v1543 = vunpack.c.l.b16 %v453
    %v1544 = vunpack.c.h.b16 %v453
    %v1545 = vunpack.c.l.b16 %v454
    %v1546 = vunpack.c.h.b16 %v454
    %v1547 = vunpack.c.l.b16 %v455
    %v1548 = vunpack.c.h.b16 %v455
    %v1549 = vunpack.c.l.b16 %v456
    %v1550 = vunpack.c.h.b16 %v456
    %v1551 = vunpack.c.l.b16 %v457
    %v1552 = vunpack.c.h.b16 %v457
    %v1553 = vunpack.c.l.b16 %v458
    %v1554 = vunpack.c.h.b16 %v458
    %v1555 = vunpack.c.l.b16 %v459
    %v1556 = vunpack.c.h.b16 %v459
    %v1557 = vunpack.c.l.b16 %v460
    %v1558 = vunpack.c.h.b16 %v460
    %v1559 = vunpack.c.l.b16 %v461
    %v1560 = vunpack.c.h.b16 %v461
    %v1561 = vunpack.c.l.b16 %v462
    %v1562 = vunpack.c.h.b16 %v462
    %v1563 = vunpack.c.l.b16 %v463
    %v1564 = vunpack.c.h.b16 %v463
    %v1565 = vunpack.c.l.b16 %v464
    %v1566 = vunpack.c.h.b16 %v464
    %v1567 = vunpack.c.l.b16 %v465
    %v1568 = vunpack.c.h.b16 %v465
    %v1569 = vunpack.c.l.b16 %v466
    %v1570 = vunpack.c.h.b16 %v466
    %v1571 = vunpack.c.l.b16 %v467
    %v1572 = vunpack.c.h.b16 %v467
    %v1573 = vunpack.c.l.b16 %v468
    %v1574 = vunpack.c.h.b16 %v468
    %v1575 = vunpack.c.l.b16 %v469
    %v1576 = vunpack.c.h.b16 %v469
    %v1577 = vunpack.c.l.b16 %v470
    %v1578 = vunpack.c.h.b16 %v470
    %v1579 = vunpack.c.l.b16 %v471
    %v1580 = vunpack.c.h.b16 %v471
    %v1581 = vunpack.c.l.b16 %v472
    %v1582 = vunpack.c.h.b16 %v472
    %v1583 = vunpack.c.l.b16 %v473
    %v1584 = vunpack.c.h.b16 %v473
    %v1585 = vunpack.c.l.b16 %v474
    %v1586 = vunpack.c.h.b16 %v474
    %v1587 = vunpack.c.l.b16 %v475
    %v1588 = vunpack.c.h.b16 %v475
    %v1589 = vunpack.c.l.b16 %v476
    %v1590 = vunpack.c.h.b16 %v476
    %v1591 = vunpack.c.l.b16 %v477
    %v1592 = vunpack.c.h.b16 %v477
    %v1593 = vunpack.c.l.b16 %v478
    %v1594 = vunpack.c.h.b16 %v478
    %v1595 = vunpack.c.l.b16 %v479
    %v1596 = vunpack.c.h.b16 %v479
    %v1597 = vunpack.c.l.b16 %v480
    %v1598 = vunpack.c.h.b16 %v480
    %v1599 = vunpack.c.l.b16 %v481
    %v1600 = vunpack.c.h.b16 %v481
    %v1601 = vunpack.c.l.b16 %v482
    %v1602 = vunpack.c.h.b16 %v482
    %v1603 = vunpack.c.l.b16 %v483
    %v1604 = vunpack.c.h.b16 %v483
    %v1605 = vunpack.c.l.b16 %v484
    %v1606 = vunpack.c.h.b16 %v484
    %v1607 = vunpack.c.l.b16 %v485
    %v1608 = vunpack.c.h.b16 %v485
    %v1609 = vunpack.c.l.b16 %v486
    %v1610 = vunpack.c.h.b16 %v486
    %v1611 = vunpack.c.l.b16 %v487
    %v1612 = vunpack.c.h.b16 %v487
    %v1613 = vunpack.c.l.b16 %v488
    %v1614 = vunpack.c.h.b16 %v488
    %v1615 = vunpack.c.l.b16 %v489
    %v1616 = vunpack.c.h.b16 %v489
    %v1617 = vunpack.c.l.b16 %v490
    %v1618 = vunpack.c.h.b16 %v490
    %v1619 = vunpack.c.l.b16 %v491
    %v1620 = vunpack.c.h.b16 %v491
    %v1621 = vunpack.c.l.b16 %v492
    %v1622 = vunpack.c.h.b16 %v492
    %v1623 = vunpack.c.l.b16 %v493
    %v1624 = vunpack.c.h.b16 %v493
    %v1625 = vunpack.c.l.b16 %v494
    %v1626 = vunpack.c.h.b16 %v494
    %v1627 = vunpack.c.l.b16 %v495
    %v1628 = vunpack.c.h.b16 %v495
    %v1629 = vunpack.c.l.b16 %v496
    %v1630 = vunpack.c.h.b16 %v496
    %v1631 = vunpack.c.l.b16 %v497
    %v1632 = vunpack.c.h.b16 %v497
    %v1633 = vunpack.c.l.b16 %v498
    %v1634 = vunpack.c.h.b16 %v498
    %v1635 = vunpack.c.l.b16 %v499
    %v1636 = vunpack.c.h.b16 %v499
    %v1637 = vunpack.c.l.b16 %v500
    %v1638 = vunpack.c.h.b16 %v500
    %v1639 = vunpack.c.l.b16 %v501
    %v1640 = vunpack.c.h.b16 %v501
    %v1641 = vunpack.c.l.b16 %v502
    %v1642 = vunpack.c.h.b16 %v502
    %v1643 = vunpack.c.l.b16 %v503
    %v1644 = vunpack.c.h.b16 %v503
    %v1645 = vunpack.c.l.b16 %v504
    %v1646 = vunpack.c.h.b16 %v504
    %v1647 = vunpack.c.l.b16 %v505
    %v1648 = vunpack.c.h.b16 %v505
    %v1649 = vunpack.c.l.b16 %v506
    %v1650 = vunpack.c.h.b16 %v506
    %v1651 = vunpack.c.l.b16 %v507
    %v1652 = vunpack.c.h.b16 %v507
    %v1653 = vunpack.c.l.b16 %v508
    %v1654 = vunpack.c.h.b16 %v508
    %v1655 = vunpack.c.l.b16 %v509
    %v1656 = vunpack.c.h.b16 %v509
    %v1657 = vunpack.c.l.b16 %v510
    %v1658 = vunpack.c.h.b16 %v510
    %v1659 = vunpack.c.l.b16 %v511
    %v1660 = vunpack.c.h.b16 %v511
    %v1661 = vunpack.c.l.b16 %v512
    %v1662 = vunpack.c.h.b16 %v512
    %v1663 = vunpack.c.l.b16 %v513
    %v1664 = vunpack.c.h.b16 %v513
    %v1665 = vunpack.c.l.b16 %v514
    %v1666 = vunpack.c.h.b16 %v514
    %v1667 = vunpack.c.l.b16 %v515
    %v1668 = vunpack.c.h.b16 %v515
    %v1669 = vunpack.c.l.b16 %v516
    %v1670 = vunpack.c.h.b16 %v516
    %v1671 = vunpack.c.l.b16 %v517
    %v1672 = vunpack.c.h.b16 %v517
    %v1673 = vunpack.c.l.b16 %v518
    %v1674 = vunpack.c.h.b16 %v518
    %v1675 = vunpack.c.l.b16 %v519
    %v1676 = vunpack.c.h.b16 %v519
    %v1677 = vunpack.c.l.b16 %v520
    %v1678 = vunpack.c.h.b16 %v520
    %v1679 = vunpack.c.l.b16 %v521
    %v1680 = vunpack.c.h.b16 %v521
    %v1681 = vunpack.c.l.b16 %v522
    %v1682 = vunpack.c.h.b16 %v522
    %v1683 = vunpack.c.l.b16 %v523
    %v1684 = vunpack.c.h.b16 %v523
    %v1685 = vunpack.c.l.b16 %v524
    %v1686 = vunpack.c.h.b16 %v524
    %v1687 = vunpack.c.l.b16 %v525
    %v1688 = vunpack.c.h.b16 %v525
    %v1689 = vunpack.c.l.b16 %v526
    %v1690 = vunpack.c.h.b16 %v526
    %v1691 = vunpack.c.l.b16 %v527
    %v1692 = vunpack.c.h.b16 %v527
    %v1693 = vunpack.c.l.b16 %v528
    %v1694 = vunpack.c.h.b16 %v528
    %v1695 = vunpack.c.l.b16 %v529
    %v1696 = vunpack.c.h.b16 %v529
    %v1697 = vunpack.c.l.b16 %v530
    %v1698 = vunpack.c.h.b16 %v530
    %v1699 = vunpack.c.l.b16 %v531
    %v1700 = vunpack.c.h.b16 %v531
    %v1701 = vunpack.c.l.b16 %v532
    %v1702 = vunpack.c.h.b16 %v532
    %v1703 = vunpack.c.l.b16 %v533
    %v1704 = vunpack.c.h.b16 %v533
    %v1705 = vunpack.c.l.b16 %v534
    %v1706 = vunpack.c.h.b16 %v534
    %v1707 = vunpack.c.l.b16 %v535
    %v1708 = vunpack.c.h.b16 %v535
    %v1709 = vunpack.c.l.b16 %v536
    %v1710 = vunpack.c.h.b16 %v536
    %v1711 = vunpack.c.l.b16 %v537
    %v1712 = vunpack.c.h.b16 %v537
    %v1713 = vunpack.c.l.b16 %v538
    %v1714 = vunpack.c.h.b16 %v538
    %v1715 = vunpack.c.l.b16 %v539
    %v1716 = vunpack.c.h.b16 %v539
    %v1717 = vunpack.c.l.b16 %v540
    %v1718 = vunpack.c.h.b16 %v540
    %v1719 = vunpack.c.l.b16 %v541
    %v1720 = vunpack.c.h.b16 %v541
    %v1721 = vunpack.c.l.b16 %v542
    %v1722 = vunpack.c.h.b16 %v542
    %v1723 = vunpack.c.l.b16 %v543
    %v1724 = vunpack.c.h.b16 %v543
    %v1725 = vunpack.c.l.b16 %v544
    %v1726 = vunpack.c.h.b16 %v544
    %v1727 = vunpack.c.l.b16 %v545
    %v1728 = vunpack.c.h.b16 %v545
    %v1729 = vunpack.c.l.b16 %v546
    %v1730 = vunpack.c.h.b16 %v546
    %v1731 = vunpack.c.l.b16 %v547
    %v1732 = vunpack.c.h.b16 %v547
    %v1733 = vunpack.c.l.b16 %v548
    %v1734 = vunpack.c.h.b16 %v548
    %v1735 = vunpack.c.l.b16 %v549
    %v1736 = vunpack.c.h.b16 %v549
    %v1737 = vunpack.c.l.b16 %v550
    %v1738 = vunpack.c.h.b16 %v550
    %v1739 = vunpack.c.l.b16 %v551
    %v1740 = vunpack.c.h.b16 %v551
    %v1741 = vunpack.c.l.b16 %v552
    %v1742 = vunpack.c.h.b16 %v552
    %v1743 = vunpack.c.l.b16 %v553
    %v1744 = vunpack.c.h.b16 %v553
    %v1745 = vunpack.c.l.b16 %v554
    %v1746 = vunpack.c.h.b16 %v554
    %v1747 = vunpack.c.l.b16 %v555
    %v1748 = vunpack.c.h.b16 %v555
    %v1749 = vunpack.c.l.b16 %v556
    %v1750 = vunpack.c.h.b16 %v556
    %v1751 = vunpack.c.l.b16 %v557
    %v1752 = vunpack.c.h.b16 %v557
    %v1753 = vunpack.c.l.b16 %v558
    %v1754 = vunpack.c.h.b16 %v558
    %v1755 = vunpack.c.l.b16 %v559
    %v1756 = vunpack.c.h.b16 %v559
    %v1757 = vunpack.c.l.b16 %v560
    %v1758 = vunpack.c.h.b16 %v560
    %v1759 = vunpack.c.l.b16 %v561
    %v1760 = vunpack.c.h.b16 %v561
    %v1761 = vunpack.c.l.b16 %v562
    %v1762 = vunpack.c.h.b16 %v562
    %v1763 = vunpack.c.l.b16 %v563
    %v1764 = vunpack.c.h.b16 %v563
    %v1765 = vunpack.c.l.b16 %v564
    %v1766 = vunpack.c.h.b16 %v564
    %v1767 = vunpack.c.l.b16 %v565
    %v1768 = vunpack.c.h.b16 %v565
    %v1769 = vunpack.c.l.b16 %v566
    %v1770 = vunpack.c.h.b16 %v566
    %v1771 = vunpack.c.l.b16 %v567
    %v1772 = vunpack.c.h.b16 %v567
    %v1773 = vunpack.c.l.b16 %v568
    %v1774 = vunpack.c.h.b16 %v568
    %v1775 = vunpack.c.l.b16 %v569
    %v1776 = vunpack.c.h.b16 %v569
    %v1777 = vunpack.c.l.b16 %v570
    %v1778 = vunpack.c.h.b16 %v570
    %v1779 = vunpack.c.l.b16 %v571
    %v1780 = vunpack.c.h.b16 %v571
    %v1781 = vunpack.c.l.b16 %v572
    %v1782 = vunpack.c.h.b16 %v572
    %v1783 = vunpack.c.l.b16 %v573
    %v1784 = vunpack.c.h.b16 %v573
    %v1785 = vunpack.c.l.b16 %v574
    %v1786 = vunpack.c.h.b16 %v574
    %v1787 = vunpack.c.l.b16 %v575
    %v1788 = vunpack.c.h.b16 %v575
    %v1789 = vunpack.c.l.b16 %v576
    %v1790 = vunpack.c.h.b16 %v576
    %v1791 = vunpack.c.l.b16 %v577
    %v1792 = vunpack.c.h.b16 %v577
    %v1793 = vunpack.c.l.b16 %v578
    %v1794 = vunpack.c.h.b16 %v578
    %v1795 = vunpack.c.l.b16 %v579
    %v1796 = vunpack.c.h.b16 %v579
    %v1797 = vunpack.c.l.b16 %v580
    %v1798 = vunpack.c.h.b16 %v580
    %v1799 = vunpack.c.l.b16 %v581
    %v1800 = vunpack.c.h.b16 %v581
    %v1801 = vunpack.c.l.b16 %v582
    %v1802 = vunpack.c.h.b16 %v582
    %v1803 = vunpack.c.l.b16 %v583
    %v1804 = vunpack.c.h.b16 %v583
    %v1805 = vunpack.c.l.b16 %v584
    %v1806 = vunpack.c.h.b16 %v584
    %v1807 = vunpack.c.l.b16 %v585
    %v1808 = vunpack.c.h.b16 %v585
    %v1809 = vunpack.c.l.b16 %v586
    %v1810 = vunpack.c.h.b16 %v586
    %v1811 = vunpack.c.l.b16 %v587
    %v1812 = vunpack.c.h.b16 %v587
    %v1813 = vunpack.c.l.b16 %v588
    %v1814 = vunpack.c.h.b16 %v588
    %v1815 = vunpack.c.l.b16 %v589
    %v1816 = vunpack.c.h.b16 %v589
    %v1817 = vunpack.c.l.b16 %v590
    %v1818 = vunpack.c.h.b16 %v590
    %v1819 = vunpack.c.l.b16 %v591
    %v1820 = vunpack.c.h.b16 %v591
    %v1821 = vunpack.c.l.b16 %v592
    %v1822 = vunpack.c.h.b16 %v592
    %v1823 = vunpack.c.l.b16 %v593
    %v1824 = vunpack.c.h.b16 %v593
    %v1825 = vunpack.c.l.b16 %v594
    %v1826 = vunpack.c.h.b16 %v594
    %v1827 = vunpack.c.l.b16 %v595
    %v1828 = vunpack.c.h.b16 %v595
    %v1829 = vunpack.c.l.b16 %v596
    %v1830 = vunpack.c.h.b16 %v596
    %v1831 = vunpack.c.l.b16 %v597
    %v1832 = vunpack.c.h.b16 %v597
    %v1833 = vunpack.c.l.b16 %v598
    %v1834 = vunpack.c.h.b16 %v598
    %v1835 = vunpack.c.l.b16 %v599
    %v1836 = vunpack.c.h.b16 %v599
    %v1837 = vunpack.c.l.b16 %v600
    %v1838 = vunpack.c.h.b16 %v600
    %v1839 = vunpack.c.l.b16 %v601
    %v1840 = vunpack.c.h.b16 %v601
    %v1841 = vunpack.c.l.b16 %v602
    %v1842 = vunpack.c.h.b16 %v602
    %v1843 = vunpack.c.l.b16 %v603
    %v1844 = vunpack.c.h.b16 %v603
    %v1845 = vunpack.c.l.b16 %v604
    %v1846 = vunpack.c.h.b16 %v604
    %v1847 = vunpack.c.l.b16 %v605
    %v1848 = vunpack.c.h.b16 %v605
    %v1849 = vunpack.c.l.b16 %v606
    %v1850 = vunpack.c.h.b16 %v606
    %v1851 = vunpack.c.l.b16 %v607
    %v1852 = vunpack.c.h.b16 %v607
    %v1853 = vunpack.c.l.b16 %v608
    %v1854 = vunpack.c.h.b16 %v608
    %v1855 = vunpack.c.l.b16 %v609
    %v1856 = vunpack.c.h.b16 %v609
    %v1857 = vunpack.c.l.b16 %v610
    %v1858 = vunpack.c.h.b16 %v610
    %v1859 = vunpack.c.l.b16 %v611
    %v1860 = vunpack.c.h.b16 %v611
    %v1861 = vunpack.c.l.b16 %v612
    %v1862 = vunpack.c.h.b16 %v612
    %v1863 = vunpack.c.l.b16 %v613
    %v1864 = vunpack.c.h.b16 %v613
    %v1865 = vunpack.c.l.b16 %v614
    %v1866 = vunpack.c.h.b16 %v614
    %v1867 = vunpack.c.l.b16 %v615
    %v1868 = vunpack.c.h.b16 %v615
    %v1869 = vunpack.c.l.b16 %v616
    %v1870 = vunpack.c.h.b16 %v616
    %v1871 = vunpack.c.l.b16 %v617
    %v1872 = vunpack.c.h.b16 %v617
    %v1873 = vunpack.c.l.b16 %v618
    %v1874 = vunpack.c.h.b16 %v618
    %v1875 = vunpack.c.l.b16 %v619
    %v1876 = vunpack.c.h.b16 %v619
    %v1877 = vunpack.c.l.b16 %v620
    %v1878 = vunpack.c.h.b16 %v620
    %v1879 = vunpack.c.l.b16 %v621
    %v1880 = vunpack.c.h.b16 %v621
    %v1881 = vunpack.c.l.b16 %v622
    %v1882 = vunpack.c.h.b16 %v622
    %v1883 = vunpack.c.l.b16 %v623
    %v1884 = vunpack.c.h.b16 %v623
    %v1885 = vunpack.c.l.b16 %v624
    %v1886 = vunpack.c.h.b16 %v624
    %v1887 = vunpack.c.l.b16 %v625
    %v1888 = vunpack.c.h.b16 %v625
    %v1889 = vunpack.c.l.b16 %v626
    %v1890 = vunpack.c.h.b16 %v626
    %v1891 = vunpack.c.l.b16 %v627
    %v1892 = vunpack.c.h.b16 %v627
    %v1893 = vunpack.c.l.b16 %v628
    %v1894 = vunpack.c.h.b16 %v628
    %v1895 = vunpack.c.l.b16 %v629
    %v1896 = vunpack.c.h.b16 %v629
    %v1897 = vunpack.c.l.b16 %v630
    %v1898 = vunpack.c.h.b16 %v630
    %v1899 = vunpack.c.l.b16 %v631
    %v1900 = vunpack.c.h.b16 %v631
    %v1901 = vunpack.c.l.b16 %v632
    %v1902 = vunpack.c.h.b16 %v632
    %v1903 = vunpack.c.l.b16 %v633
    %v1904 = vunpack.c.h.b16 %v633
    %v1905 = vunpack.c.l.b16 %v634
    %v1906 = vunpack.c.h.b16 %v634
    %v1907 = vunpack.c.l.b16 %v635
    %v1908 = vunpack.c.h.b16 %v635
    %v1909 = vunpack.c.l.b16 %v636
    %v1910 = vunpack.c.h.b16 %v636
    %v1911 = vunpack.c.l.b16 %v637
    %v1912 = vunpack.c.h.b16 %v637
    %v1913 = vunpack.c.l.b16 %v638
    %v1914 = vunpack.c.h.b16 %v638
    %v1915 = vunpack.c.l.b16 %v639
    %v1916 = vunpack.c.h.b16 %v639
    %v1917 = vunpack.c.l.b16 %v640
    %v1918 = vunpack.c.h.b16 %v640
    %v1919 = vunpack.c.l.b16 %v641
    %v1920 = vunpack.c.h.b16 %v641
    %v1921 = vunpack.c.l.b16 %v642
    %v1922 = vunpack.c.h.b16 %v642
    %v1923 = vunpack.c.l.b16 %v643
    %v1924 = vunpack.c.h.b16 %v643
    %v1925 = vunpack.c.l.b16 %v644
    %v1926 = vunpack.c.h.b16 %v644
    %v1927 = vunpack.c.l.b16 %v645
    %v1928 = vunpack.c.h.b16 %v645
    %v1929 = vunpack.c.l.b16 %v646
    %v1930 = vunpack.c.h.b16 %v646
    %v1931 = vunpack.c.l.b16 %v647
    %v1932 = vunpack.c.h.b16 %v647
    %v1933 = vunpack.c.l.b16 %v648
    %v1934 = vunpack.c.h.b16 %v648
    %v1935 = vunpack.c.l.b16 %v649
    %v1936 = vunpack.c.h.b16 %v649
    %v1937 = vunpack.c.l.b16 %v650
    %v1938 = vunpack.c.h.b16 %v650
    %v1939 = vunpack.c.l.b16 %v651
    %v1940 = vunpack.c.h.b16 %v651
    %v1941 = vunpack.c.l.b16 %v652
    %v1942 = vunpack.c.h.b16 %v652
    %v1943 = vunpack.c.l.b16 %v653
    %v1944 = vunpack.c.h.b16 %v653
    %v1945 = vunpack.c.l.b16 %v654
    %v1946 = vunpack.c.h.b16 %v654
    %v1947 = vunpack.c.l.b16 %v655
    %v1948 = vunpack.c.h.b16 %v655
    %v1949 = vunpack.c.l.b16 %v656
    %v1950 = vunpack.c.h.b16 %v656
    %v1951 = vunpack.c.l.b16 %v657
    %v1952 = vunpack.c.h.b16 %v657
    %v1953 = vunpack.c.l.b16 %v658
    %v1954 = vunpack.c.h.b16 %v658
    %v1955 = vunpack.c.l.b16 %v659
    %v1956 = vunpack.c.h.b16 %v659
    %v1957 = vunpack.c.l.b16 %v660
    %v1958 = vunpack.c.h.b16 %v660
    %v1959 = vunpack.c.l.b16 %v661
    %v1960 = vunpack.c.h.b16 %v661
    %v1961 = vunpack.c.l.b16 %v662
    %v1962 = vunpack.c.h.b16 %v662
    %v1963 = vunpack.c.l.b16 %v663
    %v1964 = vunpack.c.h.b16 %v663
    %v1965 = vunpack.c.l.b16 %v664
    %v1966 = vunpack.c.h.b16 %v664
    %v1967 = vunpack.c.l.b16 %v665
    %v1968 = vunpack.c.h.b16 %v665
    %v1969 = vunpack.c.l.b16 %v666
    %v1970 = vunpack.c.h.b16 %v666
    %v1971 = vunpack.c.l.b16 %v667
    %v1972 = vunpack.c.h.b16 %v667
    %v1973 = vunpack.c.l.b16 %v668
    %v1974 = vunpack.c.h.b16 %v668
    %v1975 = vunpack.c.l.b16 %v669
    %v1976 = vunpack.c.h.b16 %v669
    %v1977 = vunpack.c.l.b16 %v670
    %v1978 = vunpack.c.h.b16 %v670
    %v1979 = vunpack.c.l.b16 %v671
    %v1980 = vunpack.c.h.b16 %v671
    %v1981 = vunpack.c.l.b16 %v672
    %v1982 = vunpack.c.h.b16 %v672
    %v1983 = vunpack.c.l.b16 %v673
    %v1984 = vunpack.c.h.b16 %v673
    %v1985 = vunpack.c.l.b16 %v674
    %v1986 = vunpack.c.h.b16 %v674
    %v1987 = vunpack.c.l.b16 %v675
    %v1988 = vunpack.c.h.b16 %v675
    %v1989 = vunpack.c.l.b16 %v676
    %v1990 = vunpack.c.h.b16 %v676
    %v1991 = vunpack.c.l.b16 %v677
    %v1992 = vunpack.c.h.b16 %v677
    %v1993 = vunpack.c.l.b16 %v678
    %v1994 = vunpack.c.h.b16 %v678
    %v1995 = vunpack.c.l.b16 %v679
    %v1996 = vunpack.c.h.b16 %v679
    %v1997 = vunpack.c.l.b16 %v680
    %v1998 = vunpack.c.h.b16 %v680
    %v1999 = vunpack.c.l.b16 %v681
    %v2000 = vunpack.c.h.b16 %v681
    %v2001 = vunpack.c.l.b16 %v682
    %v2002 = vunpack.c.h.b16 %v682
    %v2003 = vunpack.c.l.b16 %v683
    %v2004 = vunpack.c.h.b16 %v683
    %v2005 = vunpack.c.l.b16 %v684
    %v2006 = vunpack.c.h.b16 %v684
    %v2007 = vunpack.c.l.b16 %v685
    %v2008 = vunpack.c.h.b16 %v685
    %v2009 = vunpack.c.l.b16 %v686
    %v2010 = vunpack.c.h.b16 %v686
    %v2011 = vunpack.c.l.b16 %v687
    %v2012 = vunpack.c.h.b16 %v687
    %v2013 = vunpack.c.l.b16 %v688
    %v2014 = vunpack.c.h.b16 %v688
    %v2015 = vunpack.c.l.b16 %v689
    %v2016 = vunpack.c.h.b16 %v689
    %v2017 = vunpack.c.l.b16 %v690
    %v2018 = vunpack.c.h.b16 %v690
    %v2019 = vunpack.c.l.b16 %v691
    %v2020 = vunpack.c.h.b16 %v691
    %v2021 = vunpack.c.l.b16 %v692
    %v2022 = vunpack.c.h.b16 %v692
    %v2023 = vunpack.c.l.b16 %v693
    %v2024 = vunpack.c.h.b16 %v693
    %v2025 = vunpack.c.l.b16 %v694
    %v2026 = vunpack.c.h.b16 %v694
    %v2027 = vunpack.c.l.b16 %v695
    %v2028 = vunpack.c.h.b16 %v695
    %v2029 = vunpack.c.l.b16 %v696
    %v2030 = vunpack.c.h.b16 %v696
    %v2031 = vunpack.c.l.b16 %v697
    %v2032 = vunpack.c.h.b16 %v697
    %v2033 = vunpack.c.l.b16 %v698
    %v2034 = vunpack.c.h.b16 %v698
    %v2035 = vunpack.c.l.b16 %v699
    %v2036 = vunpack.c.h.b16 %v699
    %v2037 = vunpack.c.l.b16 %v700
    %v2038 = vunpack.c.h.b16 %v700
    %v2039 = vunpack.c.l.b16 %v701
    %v2040 = vunpack.c.h.b16 %v701
    %v2041 = vunpack.c.l.b16 %v702
    %v2042 = vunpack.c.h.b16 %v702
    %v2043 = vunpack.c.l.b16 %v703
    %v2044 = vunpack.c.h.b16 %v703
    %v2045 = vunpack.c.l.b16 %v704
    %v2046 = vunpack.c.h.b16 %v704
    %v2047 = vunpack.c.l.b16 %v705
    %v2048 = vunpack.c.h.b16 %v705
    %v2049 = vunpack.c.l.b16 %v706
    %v2050 = vunpack.c.h.b16 %v706
    %v2051 = vunpack.c.l.b16 %v707
    %v2052 = vunpack.c.h.b16 %v707
    %v2053 = vunpack.c.l.b16 %v708
    %v2054 = vunpack.c.h.b16 %v708
    %v2055 = vunpack.c.l.b16 %v709
    %v2056 = vunpack.c.h.b16 %v709
    %v2057 = vunpack.c.l.b16 %v710
    %v2058 = vunpack.c.h.b16 %v710
    %v2059 = vunpack.c.l.b16 %v711
    %v2060 = vunpack.c.h.b16 %v711
    %v2061 = vunpack.c.l.b16 %v712
    %v2062 = vunpack.c.h.b16 %v712
    %v2063 = vunpack.c.l.b16 %v713
    %v2064 = vunpack.c.h.b16 %v713
    %v2065 = vunpack.c.l.b16 %v714
    %v2066 = vunpack.c.h.b16 %v714
    %v2067 = vunpack.c.l.b16 %v715
    %v2068 = vunpack.c.h.b16 %v715
    %v2069 = vunpack.c.l.b16 %v716
    %v2070 = vunpack.c.h.b16 %v716
    %v2071 = vunpack.c.l.b16 %v717
    %v2072 = vunpack.c.h.b16 %v717
    %v2073 = vunpack.c.l.b16 %v718
    %v2074 = vunpack.c.h.b16 %v718
    %v2075 = vunpack.c.l.b16 %v719
    %v2076 = vunpack.c.h.b16 %v719
    %v2077 = vunpack.c.l.b16 %v720
    %v2078 = vunpack.c.h.b16 %v720
    %v2079 = vunpack.c.l.b16 %v721
    %v2080 = vunpack.c.h.b16 %v721
    %v2081 = vunpack.c.l.b16 %v722
    %v2082 = vunpack.c.h.b16 %v722
    %v2083 = vunpack.c.l.b16 %v723
    %v2084 = vunpack.c.h.b16 %v723
    %v2085 = vunpack.c.l.b16 %v724
    %v2086 = vunpack.c.h.b16 %v724
    %v2087 = vunpack.c.l.b16 %v725
    %v2088 = vunpack.c.h.b16 %v725
    %v2089 = vunpack.c.l.b16 %v726
    %v2090 = vunpack.c.h.b16 %v726
    %v2091 = vunpack.c.l.b16 %v727
    %v2092 = vunpack.c.h.b16 %v727
    %v2093 = vunpack.c.l.b16 %v728
    %v2094 = vunpack.c.h.b16 %v728
    %v2095 = vunpack.c.l.b16 %v729
    %v2096 = vunpack.c.h.b16 %v729
    %v2097 = vunpack.c.l.b16 %v730
    %v2098 = vunpack.c.h.b16 %v730
    %v2099 = vunpack.c.l.b16 %v731
    %v2100 = vunpack.c.h.b16 %v731
    %v2101 = vunpack.c.l.b16 %v732
    %v2102 = vunpack.c.h.b16 %v732
    %v2103 = vunpack.c.l.b16 %v733
    %v2104 = vunpack.c.h.b16 %v733
    %v2105 = vunpack.c.l.b16 %v734
    %v2106 = vunpack.c.h.b16 %v734
    %v2107 = vunpack.c.l.b16 %v735
    %v2108 = vunpack.c.h.b16 %v735
    %v2109 = vunpack.c.l.b16 %v736
    %v2110 = vunpack.c.h.b16 %v736
    %v2111 = vunpack.c.l.b16 %v737
    %v2112 = vunpack.c.h.b16 %v737
    %v2113 = vunpack.c.l.b16 %v738
    %v2114 = vunpack.c.h.b16 %v738
    %v2115 = vunpack.c.l.b16 %v739
    %v2116 = vunpack.c.h.b16 %v739
    %v2117 = vunpack.c.l.b16 %v740
    %v2118 = vunpack.c.h.b16 %v740
    %v2119 = vunpack.c.l.b16 %v741
    %v2120 = vunpack.c.h.b16 %v741
    %v2121 = vunpack.c.l.b16 %v742
    %v2122 = vunpack.c.h.b16 %v742
    %v2123 = vunpack.c.l.b16 %v743
    %v2124 = vunpack.c.h.b16 %v743
    %v2125 = vunpack.c.l.b16 %v744
    %v2126 = vunpack.c.h.b16 %v744
    %v2127 = vunpack.c.l.b16 %v745
    %v2128 = vunpack.c.h.b16 %v745
    %v2129 = vunpack.c.l.b16 %v746
    %v2130 = vunpack.c.h.b16 %v746
    %v2131 = vunpack.c.l.b16 %v747
    %v2132 = vunpack.c.h.b16 %v747
    %v2133 = vunpack.c.l.b16 %v748
    %v2134 = vunpack.c.h.b16 %v748
    %v2135 = vunpack.c.l.b16 %v749
    %v2136 = vunpack.c.h.b16 %v749
    %v2137 = vunpack.c.l.b16 %v750
    %v2138 = vunpack.c.h.b16 %v750
    %v2139 = vunpack.c.l.b16 %v751
    %v2140 = vunpack.c.h.b16 %v751
    %v2141 = vunpack.c.l.b16 %v752
    %v2142 = vunpack.c.h.b16 %v752
    %v2143 = vunpack.c.l.b16 %v753
    %v2144 = vunpack.c.h.b16 %v753
    %v2145 = vunpack.c.l.b16 %v754
    %v2146 = vunpack.c.h.b16 %v754
    %v2147 = vunpack.c.l.b16 %v755
    %v2148 = vunpack.c.h.b16 %v755
    %v2149 = vunpack.c.l.b16 %v756
    %v2150 = vunpack.c.h.b16 %v756
    %v2151 = vunpack.c.l.b16 %v757
    %v2152 = vunpack.c.h.b16 %v757
    %v2153 = vunpack.c.l.b16 %v758
    %v2154 = vunpack.c.h.b16 %v758
    %v2155 = vunpack.c.l.b16 %v759
    %v2156 = vunpack.c.h.b16 %v759
    %v2157 = vunpack.c.l.b16 %v760
    %v2158 = vunpack.c.h.b16 %v760
    %v2159 = vunpack.c.l.b16 %v761
    %v2160 = vunpack.c.h.b16 %v761
    %v2161 = vunpack.c.l.b16 %v762
    %v2162 = vunpack.c.h.b16 %v762
    %v2163 = vunpack.c.l.b16 %v763
    %v2164 = vunpack.c.h.b16 %v763
    %v2165 = vunpack.c.l.b16 %v764
    %v2166 = vunpack.c.h.b16 %v764
    %v2167 = vunpack.c.l.b16 %v765
    %v2168 = vunpack.c.h.b16 %v765
    %v2169 = vunpack.c.l.b16 %v766
    %v2170 = vunpack.c.h.b16 %v766
    %v2171 = vunpack.c.l.b16 %v767
    %v2172 = vunpack.c.h.b16 %v767
    %v2173 = vunpack.c.l.b16 %v768
    %v2174 = vunpack.c.h.b16 %v768
    %v2175 = vunpack.c.l.b16 %v769
    %v2176 = vunpack.c.h.b16 %v769
    %v2177 = vunpack.c.l.b16 %v770
    %v2178 = vunpack.c.h.b16 %v770
    %v2179 = vunpack.c.l.b16 %v771
    %v2180 = vunpack.c.h.b16 %v771
    %v2181 = vunpack.c.l.b16 %v772
    %v2182 = vunpack.c.h.b16 %v772
    %v2183 = vunpack.c.l.b16 %v773
    %v2184 = vunpack.c.h.b16 %v773
    %v2185 = vunpack.c.l.b16 %v774
    %v2186 = vunpack.c.h.b16 %v774
    %v2187 = vunpack.c.l.b16 %v775
    %v2188 = vunpack.c.h.b16 %v775
    %v2189 = vunpack.c.l.b16 %v776
    %v2190 = vunpack.c.h.b16 %v776
    %v2191 = vunpack.c.l.b16 %v777
    %v2192 = vunpack.c.h.b16 %v777
    %v2193 = vunpack.c.l.b16 %v778
    %v2194 = vunpack.c.h.b16 %v778
    %v2195 = vunpack.c.l.b16 %v779
    %v2196 = vunpack.c.h.b16 %v779
    %v2197 = vunpack.c.l.b16 %v780
    %v2198 = vunpack.c.h.b16 %v780
    %v2199 = vunpack.c.l.b16 %v781
    %v2200 = vunpack.c.h.b16 %v781
    %v2201 = vunpack.c.l.b16 %v782
    %v2202 = vunpack.c.h.b16 %v782
    %v2203 = vunpack.c.l.b16 %v783
    %v2204 = vunpack.c.h.b16 %v783
    %v2205 = vunpack.c.l.b16 %v784
    %v2206 = vunpack.c.h.b16 %v784
    %v2207 = vunpack.c.l.b16 %v785
    %v2208 = vunpack.c.h.b16 %v785
    %v2209 = vunpack.c.l.b16 %v786
    %v2210 = vunpack.c.h.b16 %v786
    %v2211 = vunpack.c.l.b16 %v787
    %v2212 = vunpack.c.h.b16 %v787
    %v2213 = vunpack.c.l.b16 %v788
    %v2214 = vunpack.c.h.b16 %v788
    %v2215 = vunpack.c.l.b16 %v789
    %v2216 = vunpack.c.h.b16 %v789
    %v2217 = vunpack.c.l.b16 %v790
    %v2218 = vunpack.c.h.b16 %v790
    %v2219 = vunpack.c.l.b16 %v791
    %v2220 = vunpack.c.h.b16 %v791
    %v2221 = vunpack.c.l.b16 %v792
    %v2222 = vunpack.c.h.b16 %v792
    %v2223 = vunpack.c.l.b16 %v793
    %v2224 = vunpack.c.h.b16 %v793
    %v2225 = vunpack.c.l.b16 %v794
    %v2226 = vunpack.c.h.b16 %v794
    %v2227 = vunpack.c.l.b16 %v795
    %v2228 = vunpack.c.h.b16 %v795
    %v2229 = vunpack.c.l.b16 %v796
    %v2230 = vunpack.c.h.b16 %v796
    %v2231 = vunpack.c.l.b16 %v797
    %v2232 = vunpack.c.h.b16 %v797
    %v2233 = vunpack.c.l.b16 %v798
    %v2234 = vunpack.c.h.b16 %v798
    %v2235 = vunpack.c.l.b16 %v799
    %v2236 = vunpack.c.h.b16 %v799
    %v2237 = vunpack.c.l.b16 %v800
    %v2238 = vunpack.c.h.b16 %v800
    %v2239 = vunpack.c.l.b16 %v801
    %v2240 = vunpack.c.h.b16 %v801
    %v2241 = vunpack.c.l.b16 %v802
    %v2242 = vunpack.c.h.b16 %v802
    %v2243 = vunpack.c.l.b16 %v803
    %v2244 = vunpack.c.h.b16 %v803
    %v2245 = vunpack.c.l.b16 %v804
    %v2246 = vunpack.c.h.b16 %v804
    %v2247 = vunpack.c.l.b16 %v805
    %v2248 = vunpack.c.h.b16 %v805
    %v2249 = vunpack.c.l.b16 %v806
    %v2250 = vunpack.c.h.b16 %v806
    %v2251 = vunpack.c.l.b16 %v807
    %v2252 = vunpack.c.h.b16 %v807
    %v2253 = vunpack.c.l.b16 %v808
    %v2254 = vunpack.c.h.b16 %v808
    %v2255 = vunpack.c.l.b16 %v809
    %v2256 = vunpack.c.h.b16 %v809
    %v2257 = vunpack.c.l.b16 %v810
    %v2258 = vunpack.c.h.b16 %v810
    %v2259 = vunpack.c.l.b16 %v811
    %v2260 = vunpack.c.h.b16 %v811
    %v2261 = vunpack.c.l.b16 %v812
    %v2262 = vunpack.c.h.b16 %v812
    %v2263 = vunpack.c.l.b16 %v813
    %v2264 = vunpack.c.h.b16 %v813
    %v2265 = vunpack.c.l.b16 %v814
    %v2266 = vunpack.c.h.b16 %v814
    %v2267 = vunpack.c.l.b16 %v815
    %v2268 = vunpack.c.h.b16 %v815
    %v2269 = vunpack.c.l.b16 %v816
    %v2270 = vunpack.c.h.b16 %v816
    %v2271 = vunpack.c.l.b16 %v817
    %v2272 = vunpack.c.h.b16 %v817
    %v2273 = vunpack.c.l.b16 %v818
    %v2274 = vunpack.c.h.b16 %v818
    %v2275 = vunpack.c.l.b16 %v819
    %v2276 = vunpack.c.h.b16 %v819
    %v2277 = vunpack.c.l.b16 %v820
    %v2278 = vunpack.c.h.b16 %v820
    %v2279 = vunpack.c.l.b16 %v821
    %v2280 = vunpack.c.h.b16 %v821
    %v2281 = vunpack.c.l.b16 %v822
    %v2282 = vunpack.c.h.b16 %v822
    %v2283 = vunpack.c.l.b16 %v823
    %v2284 = vunpack.c.h.b16 %v823
    %v2285 = vunpack.c.l.b16 %v824
    %v2286 = vunpack.c.h.b16 %v824
    %v2287 = vunpack.c.l.b16 %v825
    %v2288 = vunpack.c.h.b16 %v825
    %v2289 = vunpack.c.l.b16 %v826
    %v2290 = vunpack.c.h.b16 %v826
    %v2291 = vunpack.c.l.b16 %v827
    %v2292 = vunpack.c.h.b16 %v827
    %v2293 = vunpack.c.l.b16 %v828
    %v2294 = vunpack.c.h.b16 %v828
    %v2295 = vunpack.c.l.b16 %v829
    %v2296 = vunpack.c.h.b16 %v829
    %v2297 = vunpack.c.l.b16 %v830
    %v2298 = vunpack.c.h.b16 %v830
    %v2299 = vunpack.c.l.b16 %v831
    %v2300 = vunpack.c.h.b16 %v831
    %v2301 = vunpack.c.l.b16 %v832
    %v2302 = vunpack.c.h.b16 %v832
    %v2303 = vunpack.c.l.b16 %v833
    %v2304 = vunpack.c.h.b16 %v833
    %v2305 = vunpack.c.l.b16 %v834
    %v2306 = vunpack.c.h.b16 %v834
    %v2307 = vunpack.c.l.b16 %v835
    %v2308 = vunpack.c.h.b16 %v835
    %v2309 = vunpack.c.l.b16 %v836
    %v2310 = vunpack.c.h.b16 %v836
    %v2311 = vunpack.c.l.b16 %v837
    %v2312 = vunpack.c.h.b16 %v837
    %v2313 = vunpack.c.l.b16 %v838
    %v2314 = vunpack.c.h.b16 %v838
    %v2315 = vunpack.c.l.b16 %v839
    %v2316 = vunpack.c.h.b16 %v839
    %v2317 = vunpack.c.l.b16 %v840
    %v2318 = vunpack.c.h.b16 %v840
    %v2319 = vunpack.c.l.b16 %v841
    %v2320 = vunpack.c.h.b16 %v841
    %v2321 = vunpack.c.l.b16 %v842
    %v2322 = vunpack.c.h.b16 %v842
    %v2323 = vunpack.c.l.b16 %v843
    %v2324 = vunpack.c.h.b16 %v843
    %v2325 = vunpack.c.l.b16 %v844
    %v2326 = vunpack.c.h.b16 %v844
    %v2327 = vunpack.c.l.b16 %v845
    %v2328 = vunpack.c.h.b16 %v845
    %v2329 = vunpack.c.l.b16 %v846
    %v2330 = vunpack.c.h.b16 %v846
    %v2331 = vunpack.c.l.b16 %v847
    %v2332 = vunpack.c.h.b16 %v847
    %v2333 = vunpack.c.l.b16 %v848
    %v2334 = vunpack.c.h.b16 %v848
    %v2335 = vunpack.c.l.b16 %v849
    %v2336 = vunpack.c.h.b16 %v849
    %v2337 = vunpack.c.l.b16 %v850
    %v2338 = vunpack.c.h.b16 %v850
    %v2339 = vunpack.c.l.b16 %v851
    %v2340 = vunpack.c.h.b16 %v851
    %v2341 = vunpack.c.l.b16 %v852
    %v2342 = vunpack.c.h.b16 %v852
    %v2343 = vunpack.c.l.b16 %v853
    %v2344 = vunpack.c.h.b16 %v853
    %v2345 = vunpack.c.l.b16 %v854
    %v2346 = vunpack.c.h.b16 %v854
    %v2347 = vunpack.c.l.b16 %v855
    %v2348 = vunpack.c.h.b16 %v855
    %v2349 = vunpack.c.l.b16 %v856
    %v2350 = vunpack.c.h.b16 %v856
    %v2351 = vunpack.c.l.b16 %v857
    %v2352 = vunpack.c.h.b16 %v857
    %v2353 = vunpack.c.l.b16 %v858
    %v2354 = vunpack.c.h.b16 %v858
    %v2355 = vunpack.c.l.b16 %v859
    %v2356 = vunpack.c.h.b16 %v859
    %v2357 = vunpack.c.l.b16 %v860
    %v2358 = vunpack.c.h.b16 %v860
    %v2359 = vunpack.c.l.b16 %v861
    %v2360 = vunpack.c.h.b16 %v861
    %v2361 = vunpack.c.l.b16 %v862
    %v2362 = vunpack.c.h.b16 %v862
    %v2363 = vunpack.c.l.b16 %v863
    %v2364 = vunpack.c.h.b16 %v863
    %v2365 = vunpack.c.l.b16 %v864
    %v2366 = vunpack.c.h.b16 %v864
    %v2367 = vunpack.c.l.b16 %v865
    %v2368 = vunpack.c.h.b16 %v865
    %v2369 = vunpack.c.l.b16 %v866
    %v2370 = vunpack.c.h.b16 %v866
    %v2371 = vunpack.c.l.b16 %v867
    %v2372 = vunpack.c.h.b16 %v867
    %v2373 = vunpack.c.l.b16 %v868
    %v2374 = vunpack.c.h.b16 %v868
    %v2375 = vunpack.c.l.b16 %v869
    %v2376 = vunpack.c.h.b16 %v869
    %v2377 = vunpack.c.l.b16 %v870
    %v2378 = vunpack.c.h.b16 %v870
    %v2379 = vunpack.c.l.b16 %v871
    %v2380 = vunpack.c.h.b16 %v871
    %v2381 = vunpack.c.l.b16 %v872
    %v2382 = vunpack.c.h.b16 %v872
    %v2383 = vunpack.c.l.b16 %v873
    %v2384 = vunpack.c.h.b16 %v873
    %v2385 = vunpack.c.l.b16 %v874
    %v2386 = vunpack.c.h.b16 %v874
    %v2387 = vunpack.c.l.b16 %v875
    %v2388 = vunpack.c.h.b16 %v875
    %v2389 = vunpack.c.l.b16 %v876
    %v2390 = vunpack.c.h.b16 %v876
    %v2391 = vunpack.c.l.b16 %v877
    %v2392 = vunpack.c.h.b16 %v877
    %v2393 = vunpack.c.l.b16 %v878
    %v2394 = vunpack.c.h.b16 %v878
    %v2395 = vunpack.c.l.b16 %v879
    %v2396 = vunpack.c.h.b16 %v879
    %v2397 = vunpack.c.l.b16 %v880
    %v2398 = vunpack.c.h.b16 %v880
    %v2399 = vunpack.c.l.b16 %v881
    %v2400 = vunpack.c.h.b16 %v881
    %v2401 = vunpack.c.l.b16 %v882
    %v2402 = vunpack.c.h.b16 %v882
    %v2403 = vunpack.c.l.b16 %v883
    %v2404 = vunpack.c.h.b16 %v883
    %v2405 = vunpack.c.l.b16 %v884
    %v2406 = vunpack.c.h.b16 %v884
    %v2407 = vunpack.c.l.b16 %v885
    %v2408 = vunpack.c.h.b16 %v885
    %v2409 = vunpack.c.l.b16 %v886
    %v2410 = vunpack.c.h.b16 %v886
    %v2411 = vunpack.c.l.b16 %v887
    %v2412 = vunpack.c.h.b16 %v887
    %v2413 = vunpack.c.l.b16 %v888
    %v2414 = vunpack.c.h.b16 %v888
    %v2415 = vunpack.c.l.b16 %v889
    %v2416 = vunpack.c.h.b16 %v889
    %v2417 = vunpack.c.l.b16 %v890
    %v2418 = vunpack.c.h.b16 %v890
    %v2419 = vunpack.c.l.b16 %v891
    %v2420 = vunpack.c.h.b16 %v891
    %v2421 = vunpack.c.l.b16 %v892
    %v2422 = vunpack.c.h.b16 %v892
    %v2423 = vunpack.c.l.b16 %v893
    %v2424 = vunpack.c.h.b16 %v893
    %v2425 = vunpack.c.l.b16 %v894
    %v2426 = vunpack.c.h.b16 %v894
    %v2427 = vunpack.c.l.b16 %v895
    %v2428 = vunpack.c.h.b16 %v895
    %v2429 = vunpack.c.l.b16 %v896
    %v2430 = vunpack.c.h.b16 %v896
    %v2431 = vunpack.c.l.b16 %v897
    %v2432 = vunpack.c.h.b16 %v897
    %v2433 = vunpack.c.l.b16 %v898
    %v2434 = vunpack.c.h.b16 %v898
    %v2435 = vunpack.c.l.b16 %v899
    %v2436 = vunpack.c.h.b16 %v899
    %v2437 = vunpack.c.l.b16 %v900
    %v2438 = vunpack.c.h.b16 %v900
    %v2439 = vunpack.c.l.b16 %v901
    %v2440 = vunpack.c.h.b16 %v901
    %v2441 = vunpack.c.l.b16 %v902
    %v2442 = vunpack.c.h.b16 %v902
    %v2443 = vunpack.c.l.b16 %v903
    %v2444 = vunpack.c.h.b16 %v903
    %v2445 = vunpack.c.l.b16 %v904
    %v2446 = vunpack.c.h.b16 %v904
    %v2447 = vunpack.c.l.b16 %v905
    %v2448 = vunpack.c.h.b16 %v905
    %v2449 = vunpack.c.l.b16 %v906
    %v2450 = vunpack.c.h.b16 %v906
    %v2451 = vunpack.c.l.b16 %v907
    %v2452 = vunpack.c.h.b16 %v907
    %v2453 = vunpack.c.l.b16 %v908
    %v2454 = vunpack.c.h.b16 %v908
    %v2455 = vunpack.c.l.b16 %v909
    %v2456 = vunpack.c.h.b16 %v909
    %v2457 = vunpack.c.l.b16 %v910
    %v2458 = vunpack.c.h.b16 %v910
    %v2459 = vunpack.c.l.b16 %v911
    %v2460 = vunpack.c.h.b16 %v911
    %v2461 = vunpack.c.l.b16 %v912
    %v2462 = vunpack.c.h.b16 %v912
    %v2463 = vunpack.c.l.b16 %v913
    %v2464 = vunpack.c.h.b16 %v913
    %v2465 = vunpack.c.l.b16 %v914
    %v2466 = vunpack.c.h.b16 %v914
    %v2467 = vunpack.c.l.b16 %v915
    %v2468 = vunpack.c.h.b16 %v915
    %v2469 = vunpack.c.l.b16 %v916
    %v2470 = vunpack.c.h.b16 %v916
    %v2471 = vpack.c.b16 %v1455, %v1447
    %v2472 = vpack.c.b16 %v1456, %v1448
    %v2473 = vpack.c.b16 %v1457, %v1449
    %v2474 = vpack.c.b16 %v1458, %v1450
    %v2475 = vpack.c.b16 %v1459, %v1451
    %v2476 = vpack.c.b16 %v1460, %v1452
    %v2477 = vpack.c.b16 %v1461, %v1453
    %v2478 = vpack.c.b16 %v1462, %v1454
    %v2479 = vpack.c.b16 %v1471, %v1463
    %v2480 = vpack.c.b16 %v1472, %v1464
    %v2481 = vpack.c.b16 %v1473, %v1465
    %v2482 = vpack.c.b16 %v1474, %v1466
    %v2483 = vpack.c.b16 %v1475, %v1467
    %v2484 = vpack.c.b16 %v1476, %v1468
    %v2485 = vpack.c.b16 %v1477, %v1469
    %v2486 = vpack.c.b16 %v1478, %v1470
    %v2487 = vpack.c.b16 %v1487, %v1479
    %v2488 = vpack.c.b16 %v1488, %v1480
    %v2489 = vpack.c.b16 %v1489, %v1481
    %v2490 = vpack.c.b16 %v1490, %v1482
    %v2491 = vpack.c.b16 %v1491, %v1483
    %v2492 = vpack.c.b16 %v1492, %v1484
    %v2493 = vpack.c.b16 %v1493, %v1485
    %v2494 = vpack.c.b16 %v1494, %v1486
    %v2495 = vpack.c.b16 %v1503, %v1495
    %v2496 = vpack.c.b16 %v1504, %v1496
    %v2497 = vpack.c.b16 %v1505, %v1497
    %v2498 = vpack.c.b16 %v1506, %v1498
    %v2499 = vpack.c.b16 %v1507, %v1499
    %v2500 = vpack.c.b16 %v1508, %v1500
    %v2501 = vpack.c.b16 %v1509, %v1501
    %v2502 = vpack.c.b16 %v1510, %v1502
    %v2503 = vpack.c.b16 %v1519, %v1511
    %v2504 = vpack.c.b16 %v1520, %v1512
    %v2505 = vpack.c.b16 %v1521, %v1513
    %v2506 = vpack.c.b16 %v1522, %v1514
    %v2507 = vpack.c.b16 %v1523, %v1515
    %v2508 = vpack.c.b16 %v1524, %v1516
    %v2509 = vpack.c.b16 %v1525, %v1517
    %v2510 = vpack.c.b16 %v1526, %v1518
    %v2511 = vpack.c.b16 %v1535, %v1527
    %v2512 = vpack.c.b16 %v1536, %v1528
    %v2513 = vpack.c.b16 %v1537, %v1529
    %v2514 = vpack.c.b16 %v1538, %v1530
    %v2515 = vpack.c.b16 %v1539, %v1531
    %v2516 = vpack.c.b16 %v1540, %v1532
    %v2517 = vpack.c.b16 %v1541, %v1533
    %v2518 = vpack.c.b16 %v1542, %v1534
    %v2519 = vpack.c.b16 %v1551, %v1543
    %v2520 = vpack.c.b16 %v1552, %v1544
    %v2521 = vpack.c.b16 %v1553, %v1545
    %v2522 = vpack.c.b16 %v1554, %v1546
    %v2523 = vpack.c.b16 %v1555, %v1547
    %v2524 = vpack.c.b16 %v1556, %v1548
    %v2525 = vpack.c.b16 %v1557, %v1549
    %v2526 = vpack.c.b16 %v1558, %v1550
    %v2527 = vpack.c.b16 %v1567, %v1559
    %v2528 = vpack.c.b16 %v1568, %v1560
    %v2529 = vpack.c.b16 %v1569, %v1561
    %v2530 = vpack.c.b16 %v1570, %v1562
    %v2531 = vpack.c.b16 %v1571, %v1563
    %v2532 = vpack.c.b16 %v1572, %v1564
    %v2533 = vpack.c.b16 %v1573, %v1565
    %v2534 = vpack.c.b16 %v1574, %v1566
    %v2535 = vpack.c.b16 %v1583, %v1575
    %v2536 = vpack.c.b16 %v1584, %v1576
    %v2537 = vpack.c.b16 %v1585, %v1577
    %v2538 = vpack.c.b16 %v1586, %v1578
    %v2539 = vpack.c.b16 %v1587, %v1579
    %v2540 = vpack.c.b16 %v1588, %v1580
    %v2541 = vpack.c.b16 %v1589, %v1581
    %v2542 = vpack.c.b16 %v1590, %v1582
    %v2543 = vpack.c.b16 %v1599, %v1591
    %v2544 = vpack.c.b16 %v1600, %v1592
    %v2545 = vpack.c.b16 %v1601, %v1593
    %v2546 = vpack.c.b16 %v1602, %v1594
    %v2547 = vpack.c.b16 %v1603, %v1595
    %v2548 = vpack.c.b16 %v1604, %v1596
    %v2549 = vpack.c.b16 %v1605, %v1597
    %v2550 = vpack.c.b16 %v1606, %v1598
    %v2551 = vpack.c.b16 %v1615, %v1607
    %v2552 = vpack.c.b16 %v1616, %v1608
    %v2553 = vpack.c.b16 %v1617, %v1609
    %v2554 = vpack.c.b16 %v1618, %v1610
    %v2555 = vpack.c.b16 %v1619, %v1611
    %v2556 = vpack.c.b16 %v1620, %v1612
    %v2557 = vpack.c.b16 %v1621, %v1613
    %v2558 = vpack.c.b16 %v1622, %v1614
    %v2559 = vpack.c.b16 %v1631, %v1623
    %v2560 = vpack.c.b16 %v1632, %v1624
    %v2561 = vpack.c.b16 %v1633, %v1625
    %v2562 = vpack.c.b16 %v1634, %v1626
    %v2563 = vpack.c.b16 %v1635, %v1627
    %v2564 = vpack.c.b16 %v1636, %v1628
    %v2565 = vpack.c.b16 %v1637, %v1629
    %v2566 = vpack.c.b16 %v1638, %v1630
    %v2567 = vpack.c.b16 %v1647, %v1639
    %v2568 = vpack.c.b16 %v1648, %v1640
    %v2569 = vpack.c.b16 %v1649, %v1641
    %v2570 = vpack.c.b16 %v1650, %v1642
    %v2571 = vpack.c.b16 %v1651, %v1643
    %v2572 = vpack.c.b16 %v1652, %v1644
    %v2573 = vpack.c.b16 %v1653, %v1645
    %v2574 = vpack.c.b16 %v1654, %v1646
    %v2575 = vpack.c.b16 %v1663, %v1655
    %v2576 = vpack.c.b16 %v1664, %v1656
    %v2577 = vpack.c.b16 %v1665, %v1657
    %v2578 = vpack.c.b16 %v1666, %v1658
    %v2579 = vpack.c.b16 %v1667, %v1659
    %v2580 = vpack.c.b16 %v1668, %v1660
    %v2581 = vpack.c.b16 %v1669, %v1661
    %v2582 = vpack.c.b16 %v1670, %v1662
    %v2583 = vpack.c.b16 %v1679, %v1671
    %v2584 = vpack.c.b16 %v1680, %v1672
    %v2585 = vpack.c.b16 %v1681, %v1673
    %v2586 = vpack.c.b16 %v1682, %v1674
    %v2587 = vpack.c.b16 %v1683, %v1675
    %v2588 = vpack.c.b16 %v1684, %v1676
    %v2589 = vpack.c.b16 %v1685, %v1677
    %v2590 = vpack.c.b16 %v1686, %v1678
    %v2591 = vpack.c.b16 %v1695, %v1687
    %v2592 = vpack.c.b16 %v1696, %v1688
    %v2593 = vpack.c.b16 %v1697, %v1689
    %v2594 = vpack.c.b16 %v1698, %v1690
    %v2595 = vpack.c.b16 %v1699, %v1691
    %v2596 = vpack.c.b16 %v1700, %v1692
    %v2597 = vpack.c.b16 %v1701, %v1693
    %v2598 = vpack.c.b16 %v1702, %v1694
    %v2599 = vpack.c.b16 %v1711, %v1703
    %v2600 = vpack.c.b16 %v1712, %v1704
    %v2601 = vpack.c.b16 %v1713, %v1705
    %v2602 = vpack.c.b16 %v1714, %v1706
    %v2603 = vpack.c.b16 %v1715, %v1707
    %v2604 = vpack.c.b16 %v1716, %v1708
    %v2605 = vpack.c.b16 %v1717, %v1709
    %v2606 = vpack.c.b16 %v1718, %v1710
    %v2607 = vpack.c.b16 %v1727, %v1719
    %v2608 = vpack.c.b16 %v1728, %v1720
    %v2609 = vpack.c.b16 %v1729, %v1721
    %v2610 = vpack.c.b16 %v1730, %v1722
    %v2611 = vpack.c.b16 %v1731, %v1723
    %v2612 = vpack.c.b16 %v1732, %v1724
    %v2613 = vpack.c.b16 %v1733, %v1725
    %v2614 = vpack.c.b16 %v1734, %v1726
    %v2615 = vpack.c.b16 %v1743, %v1735
    %v2616 = vpack.c.b16 %v1744, %v1736
    %v2617 = vpack.c.b16 %v1745, %v1737
    %v2618 = vpack.c.b16 %v1746, %v1738
    %v2619 = vpack.c.b16 %v1747, %v1739
    %v2620 = vpack.c.b16 %v1748, %v1740
    %v2621 = vpack.c.b16 %v1749, %v1741
    %v2622 = vpack.c.b16 %v1750, %v1742
    %v2623 = vpack.c.b16 %v1759, %v1751
    %v2624 = vpack.c.b16 %v1760, %v1752
    %v2625 = vpack.c.b16 %v1761, %v1753
    %v2626 = vpack.c.b16 %v1762, %v1754
    %v2627 = vpack.c.b16 %v1763, %v1755
    %v2628 = vpack.c.b16 %v1764, %v1756
    %v2629 = vpack.c.b16 %v1765, %v1757
    %v2630 = vpack.c.b16 %v1766, %v1758
    %v2631 = vpack.c.b16 %v1775, %v1767
    %v2632 = vpack.c.b16 %v1776, %v1768
    %v2633 = vpack.c.b16 %v1777, %v1769
    %v2634 = vpack.c.b16 %v1778, %v1770
    %v2635 = vpack.c.b16 %v1779, %v1771
    %v2636 = vpack.c.b16 %v1780, %v1772
    %v2637 = vpack.c.b16 %v1781, %v1773
    %v2638 = vpack.c.b16 %v1782, %v1774
    %v2639 = vpack.c.b16 %v1791, %v1783
    %v2640 = vpack.c.b16 %v1792, %v1784
    %v2641 = vpack.c.b16 %v1793, %v1785
    %v2642 = vpack.c.b16 %v1794, %v1786
    %v2643 = vpack.c.b16 %v1795, %v1787
    %v2644 = vpack.c.b16 %v1796, %v1788
    %v2645 = vpack.c.b16 %v1797, %v1789
    %v2646 = vpack.c.b16 %v1798, %v1790
    %v2647 = vpack.c.b16 %v1807, %v1799
    %v2648 = vpack.c.b16 %v1808, %v1800
    %v2649 = vpack.c.b16 %v1809, %v1801
    %v2650 = vpack.c.b16 %v1810, %v1802
    %v2651 = vpack.c.b16 %v1811, %v1803
    %v2652 = vpack.c.b16 %v1812, %v1804
    %v2653 = vpack.c.b16 %v1813, %v1805
    %v2654 = vpack.c.b16 %v1814, %v1806
    %v2655 = vpack.c.b16 %v1823, %v1815
    %v2656 = vpack.c.b16 %v1824, %v1816
    %v2657 = vpack.c.b16 %v1825, %v1817
    %v2658 = vpack.c.b16 %v1826, %v1818
    %v2659 = vpack.c.b16 %v1827, %v1819
    %v2660 = vpack.c.b16 %v1828, %v1820
    %v2661 = vpack.c.b16 %v1829, %v1821
    %v2662 = vpack.c.b16 %v1830, %v1822
    %v2663 = vpack.c.b16 %v1839, %v1831
    %v2664 = vpack.c.b16 %v1840, %v1832
    %v2665 = vpack.c.b16 %v1841, %v1833
    %v2666 = vpack.c.b16 %v1842, %v1834
    %v2667 = vpack.c.b16 %v1843, %v1835
    %v2668 = vpack.c.b16 %v1844, %v1836
    %v2669 = vpack.c.b16 %v1845, %v1837
    %v2670 = vpack.c.b16 %v1846, %v1838
    %v2671 = vpack.c.b16 %v1855, %v1847
    %v2672 = vpack.c.b16 %v1856, %v1848
    %v2673 = vpack.c.b16 %v1857, %v1849
    %v2674 = vpack.c.b16 %v1858, %v1850
    %v2675 = vpack.c.b16 %v1859, %v1851
    %v2676 = vpack.c.b16 %v1860, %v1852
    %v2677 = vpack.c.b16 %v1861, %v1853
    %v2678 = vpack.c.b16 %v1862, %v1854
    %v2679 = vpack.c.b16 %v1871, %v1863
    %v2680 = vpack.c.b16 %v1872, %v1864
    %v2681 = vpack.c.b16 %v1873, %v1865
    %v2682 = vpack.c.b16 %v1874, %v1866
    %v2683 = vpack.c.b16 %v1875, %v1867
    %v2684 = vpack.c.b16 %v1876, %v1868
    %v2685 = vpack.c.b16 %v1877, %v1869
    %v2686 = vpack.c.b16 %v1878, %v1870
    %v2687 = vpack.c.b16 %v1887, %v1879
    %v2688 = vpack.c.b16 %v1888, %v1880
    %v2689 = vpack.c.b16 %v1889, %v1881
    %v2690 = vpack.c.b16 %v1890, %v1882
    %v2691 = vpack.c.b16 %v1891, %v1883
    %v2692 = vpack.c.b16 %v1892, %v1884
    %v2693 = vpack.c.b16 %v1893, %v1885
    %v2694 = vpack.c.b16 %v1894, %v1886
    %v2695 = vpack.c.b16 %v1903, %v1895
    %v2696 = vpack.c.b16 %v1904, %v1896
    %v2697 = vpack.c.b16 %v1905, %v1897
    %v2698 = vpack.c.b16 %v1906, %v1898
    %v2699 = vpack.c.b16 %v1907, %v1899
    %v2700 = vpack.c.b16 %v1908, %v1900
    %v2701 = vpack.c.b16 %v1909, %v1901
    %v2702 = vpack.c.b16 %v1910, %v1902
    %v2703 = vpack.c.b16 %v1919, %v1911
    %v2704 = vpack.c.b16 %v1920, %v1912
    %v2705 = vpack.c.b16 %v1921, %v1913
    %v2706 = vpack.c.b16 %v1922, %v1914
    %v2707 = vpack.c.b16 %v1923, %v1915
    %v2708 = vpack.c.b16 %v1924, %v1916
    %v2709 = vpack.c.b16 %v1925, %v1917
    %v2710 = vpack.c.b16 %v1926, %v1918
    %v2711 = vpack.c.b16 %v1935, %v1927
    %v2712 = vpack.c.b16 %v1936, %v1928
    %v2713 = vpack.c.b16 %v1937, %v1929
    %v2714 = vpack.c.b16 %v1938, %v1930
    %v2715 = vpack.c.b16 %v1939, %v1931
    %v2716 = vpack.c.b16 %v1940, %v1932
    %v2717 = vpack.c.b16 %v1941, %v1933
    %v2718 = vpack.c.b16 %v1942, %v1934
    %v2719 = vpack.c.b16 %v1951, %v1943
    %v2720 = vpack.c.b16 %v1952, %v1944
    %v2721 = vpack.c.b16 %v1953, %v1945
    %v2722 = vpack.c.b16 %v1954, %v1946
    %v2723 = vpack.c.b16 %v1955, %v1947
    %v2724 = vpack.c.b16 %v1956, %v1948
    %v2725 = vpack.c.b16 %v1957, %v1949
    %v2726 = vpack.c.b16 %v1958, %v1950
    %v2727 = vpack.c.b16 %v1967, %v1959
    %v2728 = vpack.c.b16 %v1968, %v1960
    %v2729 = vpack.c.b16 %v1969, %v1961
    %v2730 = vpack.c.b16 %v1970, %v1962
    %v2731 = vpack.c.b16 %v1971, %v1963
    %v2732 = vpack.c.b16 %v1972, %v1964
    %v2733 = vpack.c.b16 %v1973, %v1965
    %v2734 = vpack.c.b16 %v1974, %v1966
    %v2735 = vpack.c.b16 %v1983, %v1975
    %v2736 = vpack.c.b16 %v1984, %v1976
    %v2737 = vpack.c.b16 %v1985, %v1977
    %v2738 = vpack.c.b16 %v1986, %v1978
    %v2739 = vpack.c.b16 %v1987, %v1979
    %v2740 = vpack.c.b16 %v1988, %v1980
    %v2741 = vpack.c.b16 %v1989, %v1981
    %v2742 = vpack.c.b16 %v1990, %v1982
    %v2743 = vpack.c.b16 %v1999, %v1991
    %v2744 = vpack.c.b16 %v2000, %v1992
    %v2745 = vpack.c.b16 %v2001, %v1993
    %v2746 = vpack.c.b16 %v2002, %v1994
    %v2747 = vpack.c.b16 %v2003, %v1995
    %v2748 = vpack.c.b16 %v2004, %v1996
    %v2749 = vpack.c.b16 %v2005, %v1997
    %v2750 = vpack.c.b16 %v2006, %v1998
    %v2751 = vpack.c.b16 %v2015, %v2007
    %v2752 = vpack.c.b16 %v2016, %v2008
    %v2753 = vpack.c.b16 %v2017, %v2009
    %v2754 = vpack.c.b16 %v2018, %v2010
    %v2755 = vpack.c.b16 %v2019, %v2011
    %v2756 = vpack.c.b16 %v2020, %v2012
    %v2757 = vpack.c.b16 %v2021, %v2013
    %v2758 = vpack.c.b16 %v2022, %v2014
    %v2759 = vpack.c.b16 %v2031, %v2023
    %v2760 = vpack.c.b16 %v2032, %v2024
    %v2761 = vpack.c.b16 %v2033, %v2025
    %v2762 = vpack.c.b16 %v2034, %v2026
    %v2763 = vpack.c.b16 %v2035, %v2027
    %v2764 = vpack.c.b16 %v2036, %v2028
    %v2765 = vpack.c.b16 %v2037, %v2029
    %v2766 = vpack.c.b16 %v2038, %v2030
    %v2767 = vpack.c.b16 %v2047, %v2039
    %v2768 = vpack.c.b16 %v2048, %v2040
    %v2769 = vpack.c.b16 %v2049, %v2041
    %v2770 = vpack.c.b16 %v2050, %v2042
    %v2771 = vpack.c.b16 %v2051, %v2043
    %v2772 = vpack.c.b16 %v2052, %v2044
    %v2773 = vpack.c.b16 %v2053, %v2045
    %v2774 = vpack.c.b16 %v2054, %v2046
    %v2775 = vpack.c.b16 %v2063, %v2055
    %v2776 = vpack.c.b16 %v2064, %v2056
    %v2777 = vpack.c.b16 %v2065, %v2057
    %v2778 = vpack.c.b16 %v2066, %v2058
    %v2779 = vpack.c.b16 %v2067, %v2059
    %v2780 = vpack.c.b16 %v2068, %v2060
    %v2781 = vpack.c.b16 %v2069, %v2061
    %v2782 = vpack.c.b16 %v2070, %v2062
    %v2783 = vpack.c.b16 %v2079, %v2071
    %v2784 = vpack.c.b16 %v2080, %v2072
    %v2785 = vpack.c.b16 %v2081, %v2073
    %v2786 = vpack.c.b16 %v2082, %v2074
    %v2787 = vpack.c.b16 %v2083, %v2075
    %v2788 = vpack.c.b16 %v2084, %v2076
    %v2789 = vpack.c.b16 %v2085, %v2077
    %v2790 = vpack.c.b16 %v2086, %v2078
    %v2791 = vpack.c.b16 %v2095, %v2087
    %v2792 = vpack.c.b16 %v2096, %v2088
    %v2793 = vpack.c.b16 %v2097, %v2089
    %v2794 = vpack.c.b16 %v2098, %v2090
    %v2795 = vpack.c.b16 %v2099, %v2091
    %v2796 = vpack.c.b16 %v2100, %v2092
    %v2797 = vpack.c.b16 %v2101, %v2093
    %v2798 = vpack.c.b16 %v2102, %v2094
    %v2799 = vpack.c.b16 %v2111, %v2103
    %v2800 = vpack.c.b16 %v2112, %v2104
    %v2801 = vpack.c.b16 %v2113, %v2105
    %v2802 = vpack.c.b16 %v2114, %v2106
    %v2803 = vpack.c.b16 %v2115, %v2107
    %v2804 = vpack.c.b16 %v2116, %v2108
    %v2805 = vpack.c.b16 %v2117, %v2109
    %v2806 = vpack.c.b16 %v2118, %v2110
    %v2807 = vpack.c.b16 %v2127, %v2119
    %v2808 = vpack.c.b16 %v2128, %v2120
    %v2809 = vpack.c.b16 %v2129, %v2121
    %v2810 = vpack.c.b16 %v2130, %v2122
    %v2811 = vpack.c.b16 %v2131, %v2123
    %v2812 = vpack.c.b16 %v2132, %v2124
    %v2813 = vpack.c.b16 %v2133, %v2125
    %v2814 = vpack.c.b16 %v2134, %v2126
    %v2815 = vpack.c.b16 %v2143, %v2135
    %v2816 = vpack.c.b16 %v2144, %v2136
    %v2817 = vpack.c.b16 %v2145, %v2137
    %v2818 = vpack.c.b16 %v2146, %v2138
    %v2819 = vpack.c.b16 %v2147, %v2139
    %v2820 = vpack.c.b16 %v2148, %v2140
    %v2821 = vpack.c.b16 %v2149, %v2141
    %v2822 = vpack.c.b16 %v2150, %v2142
    %v2823 = vpack.c.b16 %v2159, %v2151
    %v2824 = vpack.c.b16 %v2160, %v2152
    %v2825 = vpack.c.b16 %v2161, %v2153
    %v2826 = vpack.c.b16 %v2162, %v2154
    %v2827 = vpack.c.b16 %v2163, %v2155
    %v2828 = vpack.c.b16 %v2164, %v2156
    %v2829 = vpack.c.b16 %v2165, %v2157
    %v2830 = vpack.c.b16 %v2166, %v2158
    %v2831 = vpack.c.b16 %v2175, %v2167
    %v2832 = vpack.c.b16 %v2176, %v2168
    %v2833 = vpack.c.b16 %v2177, %v2169
    %v2834 = vpack.c.b16 %v2178, %v2170
    %v2835 = vpack.c.b16 %v2179, %v2171
    %v2836 = vpack.c.b16 %v2180, %v2172
    %v2837 = vpack.c.b16 %v2181, %v2173
    %v2838 = vpack.c.b16 %v2182, %v2174
    %v2839 = vpack.c.b16 %v2191, %v2183
    %v2840 = vpack.c.b16 %v2192, %v2184
    %v2841 = vpack.c.b16 %v2193, %v2185
    %v2842 = vpack.c.b16 %v2194, %v2186
    %v2843 = vpack.c.b16 %v2195, %v2187
    %v2844 = vpack.c.b16 %v2196, %v2188
    %v2845 = vpack.c.b16 %v2197, %v2189
    %v2846 = vpack.c.b16 %v2198, %v2190
    %v2847 = vpack.c.b16 %v2207, %v2199
    %v2848 = vpack.c.b16 %v2208, %v2200
    %v2849 = vpack.c.b16 %v2209, %v2201
    %v2850 = vpack.c.b16 %v2210, %v2202
    %v2851 = vpack.c.b16 %v2211, %v2203
    %v2852 = vpack.c.b16 %v2212, %v2204
    %v2853 = vpack.c.b16 %v2213, %v2205
    %v2854 = vpack.c.b16 %v2214, %v2206
    %v2855 = vpack.c.b16 %v2223, %v2215
    %v2856 = vpack.c.b16 %v2224, %v2216
    %v2857 = vpack.c.b16 %v2225, %v2217
    %v2858 = vpack.c.b16 %v2226, %v2218
    %v2859 = vpack.c.b16 %v2227, %v2219
    %v2860 = vpack.c.b16 %v2228, %v2220
    %v2861 = vpack.c.b16 %v2229, %v2221
    %v2862 = vpack.c.b16 %v2230, %v2222
    %v2863 = vpack.c.b16 %v2239, %v2231
    %v2864 = vpack.c.b16 %v2240, %v2232
    %v2865 = vpack.c.b16 %v2241, %v2233
    %v2866 = vpack.c.b16 %v2242, %v2234
    %v2867 = vpack.c.b16 %v2243, %v2235
    %v2868 = vpack.c.b16 %v2244, %v2236
    %v2869 = vpack.c.b16 %v2245, %v2237
    %v2870 = vpack.c.b16 %v2246, %v2238
    %v2871 = vpack.c.b16 %v2255, %v2247
    %v2872 = vpack.c.b16 %v2256, %v2248
    %v2873 = vpack.c.b16 %v2257, %v2249
    %v2874 = vpack.c.b16 %v2258, %v2250
    %v2875 = vpack.c.b16 %v2259, %v2251
    %v2876 = vpack.c.b16 %v2260, %v2252
    %v2877 = vpack.c.b16 %v2261, %v2253
    %v2878 = vpack.c.b16 %v2262, %v2254
    %v2879 = vpack.c.b16 %v2271, %v2263
    %v2880 = vpack.c.b16 %v2272, %v2264
    %v2881 = vpack.c.b16 %v2273, %v2265
    %v2882 = vpack.c.b16 %v2274, %v2266
    %v2883 = vpack.c.b16 %v2275, %v2267
    %v2884 = vpack.c.b16 %v2276, %v2268
    %v2885 = vpack.c.b16 %v2277, %v2269
    %v2886 = vpack.c.b16 %v2278, %v2270
    %v2887 = vpack.c.b16 %v2287, %v2279
    %v2888 = vpack.c.b16 %v2288, %v2280
    %v2889 = vpack.c.b16 %v2289, %v2281
    %v2890 = vpack.c.b16 %v2290, %v2282
    %v2891 = vpack.c.b16 %v2291, %v2283
    %v2892 = vpack.c.b16 %v2292, %v2284
    %v2893 = vpack.c.b16 %v2293, %v2285
    %v2894 = vpack.c.b16 %v2294, %v2286
    %v2895 = vpack.c.b16 %v2303, %v2295
    %v2896 = vpack.c.b16 %v2304, %v2296
    %v2897 = vpack.c.b16 %v2305, %v2297
    %v2898 = vpack.c.b16 %v2306, %v2298
    %v2899 = vpack.c.b16 %v2307, %v2299
    %v2900 = vpack.c.b16 %v2308, %v2300
    %v2901 = vpack.c.b16 %v2309, %v2301
    %v2902 = vpack.c.b16 %v2310, %v2302
    %v2903 = vpack.c.b16 %v2319, %v2311
    %v2904 = vpack.c.b16 %v2320, %v2312
    %v2905 = vpack.c.b16 %v2321, %v2313
    %v2906 = vpack.c.b16 %v2322, %v2314
    %v2907 = vpack.c.b16 %v2323, %v2315
    %v2908 = vpack.c.b16 %v2324, %v2316
    %v2909 = vpack.c.b16 %v2325, %v2317
    %v2910 = vpack.c.b16 %v2326, %v2318
    %v2911 = vpack.c.b16 %v2335, %v2327
    %v2912 = vpack.c.b16 %v2336, %v2328
    %v2913 = vpack.c.b16 %v2337, %v2329
    %v2914 = vpack.c.b16 %v2338, %v2330
    %v2915 = vpack.c.b16 %v2339, %v2331
    %v2916 = vpack.c.b16 %v2340, %v2332
    %v2917 = vpack.c.b16 %v2341, %v2333
    %v2918 = vpack.c.b16 %v2342, %v2334
    %v2919 = vpack.c.b16 %v2351, %v2343
    %v2920 = vpack.c.b16 %v2352, %v2344
    %v2921 = vpack.c.b16 %v2353, %v2345
    %v2922 = vpack.c.b16 %v2354, %v2346
    %v2923 = vpack.c.b16 %v2355, %v2347
    %v2924 = vpack.c.b16 %v2356, %v2348
    %v2925 = vpack.c.b16 %v2357, %v2349
    %v2926 = vpack.c.b16 %v2358, %v2350
    %v2927 = vpack.c.b16 %v2367, %v2359
    %v2928 = vpack.c.b16 %v2368, %v2360
    %v2929 = vpack.c.b16 %v2369, %v2361
    %v2930 = vpack.c.b16 %v2370, %v2362
    %v2931 = vpack.c.b16 %v2371, %v2363
    %v2932 = vpack.c.b16 %v2372, %v2364
    %v2933 = vpack.c.b16 %v2373, %v2365
    %v2934 = vpack.c.b16 %v2374, %v2366
    %v2935 = vpack.c.b16 %v2383, %v2375
    %v2936 = vpack.c.b16 %v2384, %v2376
    %v2937 = vpack.c.b16 %v2385, %v2377
    %v2938 = vpack.c.b16 %v2386, %v2378
    %v2939 = vpack.c.b16 %v2387, %v2379
    %v2940 = vpack.c.b16 %v2388, %v2380
    %v2941 = vpack.c.b16 %v2389, %v2381
    %v2942 = vpack.c.b16 %v2390, %v2382
    %v2943 = vpack.c.b16 %v2399, %v2391
    %v2944 = vpack.c.b16 %v2400, %v2392
    %v2945 = vpack.c.b16 %v2401, %v2393
    %v2946 = vpack.c.b16 %v2402, %v2394
    %v2947 = vpack.c.b16 %v2403, %v2395
    %v2948 = vpack.c.b16 %v2404, %v2396
    %v2949 = vpack.c.b16 %v2405, %v2397
    %v2950 = vpack.c.b16 %v2406, %v2398
    %v2951 = vpack.c.b16 %v2415, %v2407
    %v2952 = vpack.c.b16 %v2416, %v2408
    %v2953 = vpack.c.b16 %v2417, %v2409
    %v2954 = vpack.c.b16 %v2418, %v2410
    %v2955 = vpack.c.b16 %v2419, %v2411
    %v2956 = vpack.c.b16 %v2420, %v2412
    %v2957 = vpack.c.b16 %v2421, %v2413
    %v2958 = vpack.c.b16 %v2422, %v2414
    %v2959 = vpack.c.b16 %v2431, %v2423
    %v2960 = vpack.c.b16 %v2432, %v2424
    %v2961 = vpack.c.b16 %v2433, %v2425
    %v2962 = vpack.c.b16 %v2434, %v2426
    %v2963 = vpack.c.b16 %v2435, %v2427
    %v2964 = vpack.c.b16 %v2436, %v2428
    %v2965 = vpack.c.b16 %v2437, %v2429
    %v2966 = vpack.c.b16 %v2438, %v2430
    %v2967 = vpack.c.b16 %v2447, %v2439
    %v2968 = vpack.c.b16 %v2448, %v2440
    %v2969 = vpack.c.b16 %v2449, %v2441
    %v2970 = vpack.c.b16 %v2450, %v2442
    %v2971 = vpack.c.b16 %v2451, %v2443
    %v2972 = vpack.c.b16 %v2452, %v2444
    %v2973 = vpack.c.b16 %v2453, %v2445
    %v2974 = vpack.c.b16 %v2454, %v2446
    %v2975 = vpack.c.b16 %v2463, %v2455
    %v2976 = vpack.c.b16 %v2464, %v2456
    %v2977 = vpack.c.b16 %v2465, %v2457
    %v2978 = vpack.c.b16 %v2466, %v2458
    %v2979 = vpack.c.b16 %v2467, %v2459
    %v2980 = vpack.c.b16 %v2468, %v2460
    %v2981 = vpack.c.b16 %v2469, %v2461
    %v2982 = vpack.c.b16 %v2470, %v2462
    %3495 = vmatpush.bf16.msra.mxu0 %v2527
    %3496 = vmatpush.bf16.msra.mxu0 %v2519
    %3497 = vmatpush.bf16.msra.mxu0 %v2511
    %3498 = vmatpush.bf16.msra.mxu0 %v2503
    %3499 = vmatpush.bf16.msra.mxu0 %v2495
    %3500 = vmatpush.bf16.msra.mxu0 %v2487
    %3501 = vmatpush.bf16.msra.mxu0 %v2479
    %3502 = vmatpush.bf16.msra.mxu0 %v2471
    %3503 = vmatmul.bf16.gmra.mxu0 %v397
    %v3504 = vpop.f32.mrf.mxu0
    %v3505 = vadd.f32 %v919, %v3504
    %v3506 = vpop.f32.mrf.mxu0
    %3507 = vdwg.mxu0
    %3508 = vmatpush.bf16.msra.mxu0 %v2591
    %3509 = vmatpush.bf16.msra.mxu0 %v2583
    %3510 = vmatpush.bf16.msra.mxu0 %v2575
    %3511 = vmatpush.bf16.msra.mxu0 %v2567
    %3512 = vmatpush.bf16.msra.mxu0 %v2559
    %3513 = vmatpush.bf16.msra.mxu0 %v2551
    %3514 = vmatpush.bf16.msra.mxu0 %v2543
    %3515 = vmatpush.bf16.msra.mxu0 %v2535
    %3516 = vmatmul.bf16.gmra.mxu0 %v398
    %v3517 = vpop.f32.mrf.mxu0
    %v3518 = vadd.f32 %v3505, %v3517
    %v3519 = vpop.f32.mrf.mxu0
    %3520 = vdwg.mxu0
    %3521 = vmatpush.bf16.msra.mxu0 %v2655
    %3522 = vmatpush.bf16.msra.mxu0 %v2647
    %3523 = vmatpush.bf16.msra.mxu0 %v2639
    %3524 = vmatpush.bf16.msra.mxu0 %v2631
    %3525 = vmatpush.bf16.msra.mxu0 %v2623
    %3526 = vmatpush.bf16.msra.mxu0 %v2615
    %3527 = vmatpush.bf16.msra.mxu0 %v2607
    %3528 = vmatpush.bf16.msra.mxu0 %v2599
    %3529 = vmatmul.bf16.gmra.mxu0 %v399
    %v3530 = vpop.f32.mrf.mxu0
    %v3531 = vadd.f32 %v3518, %v3530
    %v3532 = vpop.f32.mrf.mxu0
    %3533 = vdwg.mxu0
    %3534 = vmatpush.bf16.msra.mxu0 %v2719
    %3535 = vmatpush.bf16.msra.mxu0 %v2711
    %3536 = vmatpush.bf16.msra.mxu0 %v2703
    %3537 = vmatpush.bf16.msra.mxu0 %v2695
    %3538 = vmatpush.bf16.msra.mxu0 %v2687
    %3539 = vmatpush.bf16.msra.mxu0 %v2679
    %3540 = vmatpush.bf16.msra.mxu0 %v2671
    %3541 = vmatpush.bf16.msra.mxu0 %v2663
    %3542 = vmatmul.bf16.gmra.mxu0 %v400
    %v3543 = vpop.f32.mrf.mxu0
    %v3544 = vadd.f32 %v3531, %v3543
    %v3545 = vpop.f32.mrf.mxu0
    %3546 = vdwg.mxu0
    %3547 = vmatpush.bf16.msra.mxu0 %v2783
    %3548 = vmatpush.bf16.msra.mxu0 %v2775
    %3549 = vmatpush.bf16.msra.mxu0 %v2767
    %3550 = vmatpush.bf16.msra.mxu0 %v2759
    %3551 = vmatpush.bf16.msra.mxu0 %v2751
    %3552 = vmatpush.bf16.msra.mxu0 %v2743
    %3553 = vmatpush.bf16.msra.mxu0 %v2735
    %3554 = vmatpush.bf16.msra.mxu0 %v2727
    %3555 = vmatmul.bf16.gmra.mxu0 %v401
    %v3556 = vpop.f32.mrf.mxu0
    %v3557 = vadd.f32 %v3544, %v3556
    %v3558 = vpop.f32.mrf.mxu0
    %3559 = vdwg.mxu0
    %3560 = vmatpush.bf16.msra.mxu0 %v2847
    %3561 = vmatpush.bf16.msra.mxu0 %v2839
    %3562 = vmatpush.bf16.msra.mxu0 %v2831
    %3563 = vmatpush.bf16.msra.mxu0 %v2823
    %3564 = vmatpush.bf16.msra.mxu0 %v2815
    %3565 = vmatpush.bf16.msra.mxu0 %v2807
    %3566 = vmatpush.bf16.msra.mxu0 %v2799
    %3567 = vmatpush.bf16.msra.mxu0 %v2791
    %3568 = vmatmul.bf16.gmra.mxu0 %v402
    %v3569 = vpop.f32.mrf.mxu0
    %v3570 = vadd.f32 %v3557, %v3569
    %v3571 = vpop.f32.mrf.mxu0
    %3572 = vdwg.mxu0
    %3573 = vmatpush.bf16.msra.mxu0 %v2911
    %3574 = vmatpush.bf16.msra.mxu0 %v2903
    %3575 = vmatpush.bf16.msra.mxu0 %v2895
    %3576 = vmatpush.bf16.msra.mxu0 %v2887
    %3577 = vmatpush.bf16.msra.mxu0 %v2879
    %3578 = vmatpush.bf16.msra.mxu0 %v2871
    %3579 = vmatpush.bf16.msra.mxu0 %v2863
    %3580 = vmatpush.bf16.msra.mxu0 %v2855
    %3581 = vmatmul.bf16.gmra.mxu0 %v403
    %v3582 = vpop.f32.mrf.mxu0
    %v3583 = vadd.f32 %v3570, %v3582
    %v3584 = vpop.f32.mrf.mxu0
    %3585 = vdwg.mxu0
    %3586 = vmatpush.bf16.msra.mxu0 %v2975
    %3587 = vmatpush.bf16.msra.mxu0 %v2967
    %3588 = vmatpush.bf16.msra.mxu0 %v2959
    %3589 = vmatpush.bf16.msra.mxu0 %v2951
    %3590 = vmatpush.bf16.msra.mxu0 %v2943
    %3591 = vmatpush.bf16.msra.mxu0 %v2935
    %3592 = vmatpush.bf16.msra.mxu0 %v2927
    %3593 = vmatpush.bf16.msra.mxu0 %v2919
    %3594 = vmatmul.bf16.gmra.mxu0 %v404
    %v3595 = vpop.f32.mrf.mxu0
    %v3596 = vadd.f32 %v3583, %v3595
    %v3597 = vpop.f32.mrf.mxu0
    %3598 = vdwg.mxu0
    %3599 = vmatpush.bf16.msra.mxu0 %v2528
    %3600 = vmatpush.bf16.msra.mxu0 %v2520
    %3601 = vmatpush.bf16.msra.mxu0 %v2512
    %3602 = vmatpush.bf16.msra.mxu0 %v2504
    %3603 = vmatpush.bf16.msra.mxu0 %v2496
    %3604 = vmatpush.bf16.msra.mxu0 %v2488
    %3605 = vmatpush.bf16.msra.mxu0 %v2480
    %3606 = vmatpush.bf16.msra.mxu0 %v2472
    %3607 = vmatmul.bf16.gmra.mxu0 %v397
    %v3608 = vpop.f32.mrf.mxu0
    %v3609 = vadd.f32 %v920, %v3608
    %v3610 = vpop.f32.mrf.mxu0
    %3611 = vdwg.mxu0
    %3612 = vmatpush.bf16.msra.mxu0 %v2592
    %3613 = vmatpush.bf16.msra.mxu0 %v2584
    %3614 = vmatpush.bf16.msra.mxu0 %v2576
    %3615 = vmatpush.bf16.msra.mxu0 %v2568
    %3616 = vmatpush.bf16.msra.mxu0 %v2560
    %3617 = vmatpush.bf16.msra.mxu0 %v2552
    %3618 = vmatpush.bf16.msra.mxu0 %v2544
    %3619 = vmatpush.bf16.msra.mxu0 %v2536
    %3620 = vmatmul.bf16.gmra.mxu0 %v398
    %v3621 = vpop.f32.mrf.mxu0
    %v3622 = vadd.f32 %v3609, %v3621
    %v3623 = vpop.f32.mrf.mxu0
    %3624 = vdwg.mxu0
    %3625 = vmatpush.bf16.msra.mxu0 %v2656
    %3626 = vmatpush.bf16.msra.mxu0 %v2648
    %3627 = vmatpush.bf16.msra.mxu0 %v2640
    %3628 = vmatpush.bf16.msra.mxu0 %v2632
    %3629 = vmatpush.bf16.msra.mxu0 %v2624
    %3630 = vmatpush.bf16.msra.mxu0 %v2616
    %3631 = vmatpush.bf16.msra.mxu0 %v2608
    %3632 = vmatpush.bf16.msra.mxu0 %v2600
    %3633 = vmatmul.bf16.gmra.mxu0 %v399
    %v3634 = vpop.f32.mrf.mxu0
    %v3635 = vadd.f32 %v3622, %v3634
    %v3636 = vpop.f32.mrf.mxu0
    %3637 = vdwg.mxu0
    %3638 = vmatpush.bf16.msra.mxu0 %v2720
    %3639 = vmatpush.bf16.msra.mxu0 %v2712
    %3640 = vmatpush.bf16.msra.mxu0 %v2704
    %3641 = vmatpush.bf16.msra.mxu0 %v2696
    %3642 = vmatpush.bf16.msra.mxu0 %v2688
    %3643 = vmatpush.bf16.msra.mxu0 %v2680
    %3644 = vmatpush.bf16.msra.mxu0 %v2672
    %3645 = vmatpush.bf16.msra.mxu0 %v2664
    %3646 = vmatmul.bf16.gmra.mxu0 %v400
    %v3647 = vpop.f32.mrf.mxu0
    %v3648 = vadd.f32 %v3635, %v3647
    %v3649 = vpop.f32.mrf.mxu0
    %3650 = vdwg.mxu0
    %3651 = vmatpush.bf16.msra.mxu0 %v2784
    %3652 = vmatpush.bf16.msra.mxu0 %v2776
    %3653 = vmatpush.bf16.msra.mxu0 %v2768
    %3654 = vmatpush.bf16.msra.mxu0 %v2760
    %3655 = vmatpush.bf16.msra.mxu0 %v2752
    %3656 = vmatpush.bf16.msra.mxu0 %v2744
    %3657 = vmatpush.bf16.msra.mxu0 %v2736
    %3658 = vmatpush.bf16.msra.mxu0 %v2728
    %3659 = vmatmul.bf16.gmra.mxu0 %v401
    %v3660 = vpop.f32.mrf.mxu0
    %v3661 = vadd.f32 %v3648, %v3660
    %v3662 = vpop.f32.mrf.mxu0
    %3663 = vdwg.mxu0
    %3664 = vmatpush.bf16.msra.mxu0 %v2848
    %3665 = vmatpush.bf16.msra.mxu0 %v2840
    %3666 = vmatpush.bf16.msra.mxu0 %v2832
    %3667 = vmatpush.bf16.msra.mxu0 %v2824
    %3668 = vmatpush.bf16.msra.mxu0 %v2816
    %3669 = vmatpush.bf16.msra.mxu0 %v2808
    %3670 = vmatpush.bf16.msra.mxu0 %v2800
    %3671 = vmatpush.bf16.msra.mxu0 %v2792
    %3672 = vmatmul.bf16.gmra.mxu0 %v402
    %v3673 = vpop.f32.mrf.mxu0
    %v3674 = vadd.f32 %v3661, %v3673
    %v3675 = vpop.f32.mrf.mxu0
    %3676 = vdwg.mxu0
    %3677 = vmatpush.bf16.msra.mxu0 %v2912
    %3678 = vmatpush.bf16.msra.mxu0 %v2904
    %3679 = vmatpush.bf16.msra.mxu0 %v2896
    %3680 = vmatpush.bf16.msra.mxu0 %v2888
    %3681 = vmatpush.bf16.msra.mxu0 %v2880
    %3682 = vmatpush.bf16.msra.mxu0 %v2872
    %3683 = vmatpush.bf16.msra.mxu0 %v2864
    %3684 = vmatpush.bf16.msra.mxu0 %v2856
    %3685 = vmatmul.bf16.gmra.mxu0 %v403
    %v3686 = vpop.f32.mrf.mxu0
    %v3687 = vadd.f32 %v3674, %v3686
    %v3688 = vpop.f32.mrf.mxu0
    %3689 = vdwg.mxu0
    %3690 = vmatpush.bf16.msra.mxu0 %v2976
    %3691 = vmatpush.bf16.msra.mxu0 %v2968
    %3692 = vmatpush.bf16.msra.mxu0 %v2960
    %3693 = vmatpush.bf16.msra.mxu0 %v2952
    %3694 = vmatpush.bf16.msra.mxu0 %v2944
    %3695 = vmatpush.bf16.msra.mxu0 %v2936
    %3696 = vmatpush.bf16.msra.mxu0 %v2928
    %3697 = vmatpush.bf16.msra.mxu0 %v2920
    %3698 = vmatmul.bf16.gmra.mxu0 %v404
    %v3699 = vpop.f32.mrf.mxu0
    %v3700 = vadd.f32 %v3687, %v3699
    %v3701 = vpop.f32.mrf.mxu0
    %3702 = vdwg.mxu0
    %3703 = vmatpush.bf16.msra.mxu0 %v2529
    %3704 = vmatpush.bf16.msra.mxu0 %v2521
    %3705 = vmatpush.bf16.msra.mxu0 %v2513
    %3706 = vmatpush.bf16.msra.mxu0 %v2505
    %3707 = vmatpush.bf16.msra.mxu0 %v2497
    %3708 = vmatpush.bf16.msra.mxu0 %v2489
    %3709 = vmatpush.bf16.msra.mxu0 %v2481
    %3710 = vmatpush.bf16.msra.mxu0 %v2473
    %3711 = vmatmul.bf16.gmra.mxu0 %v397
    %v3712 = vpop.f32.mrf.mxu0
    %v3713 = vadd.f32 %v921, %v3712
    %v3714 = vpop.f32.mrf.mxu0
    %3715 = vdwg.mxu0
    %3716 = vmatpush.bf16.msra.mxu0 %v2593
    %3717 = vmatpush.bf16.msra.mxu0 %v2585
    %3718 = vmatpush.bf16.msra.mxu0 %v2577
    %3719 = vmatpush.bf16.msra.mxu0 %v2569
    %3720 = vmatpush.bf16.msra.mxu0 %v2561
    %3721 = vmatpush.bf16.msra.mxu0 %v2553
    %3722 = vmatpush.bf16.msra.mxu0 %v2545
    %3723 = vmatpush.bf16.msra.mxu0 %v2537
    %3724 = vmatmul.bf16.gmra.mxu0 %v398
    %v3725 = vpop.f32.mrf.mxu0
    %v3726 = vadd.f32 %v3713, %v3725
    %v3727 = vpop.f32.mrf.mxu0
    %3728 = vdwg.mxu0
    %3729 = vmatpush.bf16.msra.mxu0 %v2657
    %3730 = vmatpush.bf16.msra.mxu0 %v2649
    %3731 = vmatpush.bf16.msra.mxu0 %v2641
    %3732 = vmatpush.bf16.msra.mxu0 %v2633
    %3733 = vmatpush.bf16.msra.mxu0 %v2625
    %3734 = vmatpush.bf16.msra.mxu0 %v2617
    %3735 = vmatpush.bf16.msra.mxu0 %v2609
    %3736 = vmatpush.bf16.msra.mxu0 %v2601
    %3737 = vmatmul.bf16.gmra.mxu0 %v399
    %v3738 = vpop.f32.mrf.mxu0
    %v3739 = vadd.f32 %v3726, %v3738
    %v3740 = vpop.f32.mrf.mxu0
    %3741 = vdwg.mxu0
    %3742 = vmatpush.bf16.msra.mxu0 %v2721
    %3743 = vmatpush.bf16.msra.mxu0 %v2713
    %3744 = vmatpush.bf16.msra.mxu0 %v2705
    %3745 = vmatpush.bf16.msra.mxu0 %v2697
    %3746 = vmatpush.bf16.msra.mxu0 %v2689
    %3747 = vmatpush.bf16.msra.mxu0 %v2681
    %3748 = vmatpush.bf16.msra.mxu0 %v2673
    %3749 = vmatpush.bf16.msra.mxu0 %v2665
    %3750 = vmatmul.bf16.gmra.mxu0 %v400
    %v3751 = vpop.f32.mrf.mxu0
    %v3752 = vadd.f32 %v3739, %v3751
    %v3753 = vpop.f32.mrf.mxu0
    %3754 = vdwg.mxu0
    %3755 = vmatpush.bf16.msra.mxu0 %v2785
    %3756 = vmatpush.bf16.msra.mxu0 %v2777
    %3757 = vmatpush.bf16.msra.mxu0 %v2769
    %3758 = vmatpush.bf16.msra.mxu0 %v2761
    %3759 = vmatpush.bf16.msra.mxu0 %v2753
    %3760 = vmatpush.bf16.msra.mxu0 %v2745
    %3761 = vmatpush.bf16.msra.mxu0 %v2737
    %3762 = vmatpush.bf16.msra.mxu0 %v2729
    %3763 = vmatmul.bf16.gmra.mxu0 %v401
    %v3764 = vpop.f32.mrf.mxu0
    %v3765 = vadd.f32 %v3752, %v3764
    %v3766 = vpop.f32.mrf.mxu0
    %3767 = vdwg.mxu0
    %3768 = vmatpush.bf16.msra.mxu0 %v2849
    %3769 = vmatpush.bf16.msra.mxu0 %v2841
    %3770 = vmatpush.bf16.msra.mxu0 %v2833
    %3771 = vmatpush.bf16.msra.mxu0 %v2825
    %3772 = vmatpush.bf16.msra.mxu0 %v2817
    %3773 = vmatpush.bf16.msra.mxu0 %v2809
    %3774 = vmatpush.bf16.msra.mxu0 %v2801
    %3775 = vmatpush.bf16.msra.mxu0 %v2793
    %3776 = vmatmul.bf16.gmra.mxu0 %v402
    %v3777 = vpop.f32.mrf.mxu0
    %v3778 = vadd.f32 %v3765, %v3777
    %v3779 = vpop.f32.mrf.mxu0
    %3780 = vdwg.mxu0
    %3781 = vmatpush.bf16.msra.mxu0 %v2913
    %3782 = vmatpush.bf16.msra.mxu0 %v2905
    %3783 = vmatpush.bf16.msra.mxu0 %v2897
    %3784 = vmatpush.bf16.msra.mxu0 %v2889
    %3785 = vmatpush.bf16.msra.mxu0 %v2881
    %3786 = vmatpush.bf16.msra.mxu0 %v2873
    %3787 = vmatpush.bf16.msra.mxu0 %v2865
    %3788 = vmatpush.bf16.msra.mxu0 %v2857
    %3789 = vmatmul.bf16.gmra.mxu0 %v403
    %v3790 = vpop.f32.mrf.mxu0
    %v3791 = vadd.f32 %v3778, %v3790
    %v3792 = vpop.f32.mrf.mxu0
    %3793 = vdwg.mxu0
    %3794 = vmatpush.bf16.msra.mxu0 %v2977
    %3795 = vmatpush.bf16.msra.mxu0 %v2969
    %3796 = vmatpush.bf16.msra.mxu0 %v2961
    %3797 = vmatpush.bf16.msra.mxu0 %v2953
    %3798 = vmatpush.bf16.msra.mxu0 %v2945
    %3799 = vmatpush.bf16.msra.mxu0 %v2937
    %3800 = vmatpush.bf16.msra.mxu0 %v2929
    %3801 = vmatpush.bf16.msra.mxu0 %v2921
    %3802 = vmatmul.bf16.gmra.mxu0 %v404
    %v3803 = vpop.f32.mrf.mxu0
    %v3804 = vadd.f32 %v3791, %v3803
    %v3805 = vpop.f32.mrf.mxu0
    %3806 = vdwg.mxu0
    %3807 = vmatpush.bf16.msra.mxu0 %v2530
    %3808 = vmatpush.bf16.msra.mxu0 %v2522
    %3809 = vmatpush.bf16.msra.mxu0 %v2514
    %3810 = vmatpush.bf16.msra.mxu0 %v2506
    %3811 = vmatpush.bf16.msra.mxu0 %v2498
    %3812 = vmatpush.bf16.msra.mxu0 %v2490
    %3813 = vmatpush.bf16.msra.mxu0 %v2482
    %3814 = vmatpush.bf16.msra.mxu0 %v2474
    %3815 = vmatmul.bf16.gmra.mxu0 %v397
    %v3816 = vpop.f32.mrf.mxu0
    %v3817 = vadd.f32 %v922, %v3816
    %v3818 = vpop.f32.mrf.mxu0
    %3819 = vdwg.mxu0
    %3820 = vmatpush.bf16.msra.mxu0 %v2594
    %3821 = vmatpush.bf16.msra.mxu0 %v2586
    %3822 = vmatpush.bf16.msra.mxu0 %v2578
    %3823 = vmatpush.bf16.msra.mxu0 %v2570
    %3824 = vmatpush.bf16.msra.mxu0 %v2562
    %3825 = vmatpush.bf16.msra.mxu0 %v2554
    %3826 = vmatpush.bf16.msra.mxu0 %v2546
    %3827 = vmatpush.bf16.msra.mxu0 %v2538
    %3828 = vmatmul.bf16.gmra.mxu0 %v398
    %v3829 = vpop.f32.mrf.mxu0
    %v3830 = vadd.f32 %v3817, %v3829
    %v3831 = vpop.f32.mrf.mxu0
    %3832 = vdwg.mxu0
    %3833 = vmatpush.bf16.msra.mxu0 %v2658
    %3834 = vmatpush.bf16.msra.mxu0 %v2650
    %3835 = vmatpush.bf16.msra.mxu0 %v2642
    %3836 = vmatpush.bf16.msra.mxu0 %v2634
    %3837 = vmatpush.bf16.msra.mxu0 %v2626
    %3838 = vmatpush.bf16.msra.mxu0 %v2618
    %3839 = vmatpush.bf16.msra.mxu0 %v2610
    %3840 = vmatpush.bf16.msra.mxu0 %v2602
    %3841 = vmatmul.bf16.gmra.mxu0 %v399
    %v3842 = vpop.f32.mrf.mxu0
    %v3843 = vadd.f32 %v3830, %v3842
    %v3844 = vpop.f32.mrf.mxu0
    %3845 = vdwg.mxu0
    %3846 = vmatpush.bf16.msra.mxu0 %v2722
    %3847 = vmatpush.bf16.msra.mxu0 %v2714
    %3848 = vmatpush.bf16.msra.mxu0 %v2706
    %3849 = vmatpush.bf16.msra.mxu0 %v2698
    %3850 = vmatpush.bf16.msra.mxu0 %v2690
    %3851 = vmatpush.bf16.msra.mxu0 %v2682
    %3852 = vmatpush.bf16.msra.mxu0 %v2674
    %3853 = vmatpush.bf16.msra.mxu0 %v2666
    %3854 = vmatmul.bf16.gmra.mxu0 %v400
    %v3855 = vpop.f32.mrf.mxu0
    %v3856 = vadd.f32 %v3843, %v3855
    %v3857 = vpop.f32.mrf.mxu0
    %3858 = vdwg.mxu0
    %3859 = vmatpush.bf16.msra.mxu0 %v2786
    %3860 = vmatpush.bf16.msra.mxu0 %v2778
    %3861 = vmatpush.bf16.msra.mxu0 %v2770
    %3862 = vmatpush.bf16.msra.mxu0 %v2762
    %3863 = vmatpush.bf16.msra.mxu0 %v2754
    %3864 = vmatpush.bf16.msra.mxu0 %v2746
    %3865 = vmatpush.bf16.msra.mxu0 %v2738
    %3866 = vmatpush.bf16.msra.mxu0 %v2730
    %3867 = vmatmul.bf16.gmra.mxu0 %v401
    %v3868 = vpop.f32.mrf.mxu0
    %v3869 = vadd.f32 %v3856, %v3868
    %v3870 = vpop.f32.mrf.mxu0
    %3871 = vdwg.mxu0
    %3872 = vmatpush.bf16.msra.mxu0 %v2850
    %3873 = vmatpush.bf16.msra.mxu0 %v2842
    %3874 = vmatpush.bf16.msra.mxu0 %v2834
    %3875 = vmatpush.bf16.msra.mxu0 %v2826
    %3876 = vmatpush.bf16.msra.mxu0 %v2818
    %3877 = vmatpush.bf16.msra.mxu0 %v2810
    %3878 = vmatpush.bf16.msra.mxu0 %v2802
    %3879 = vmatpush.bf16.msra.mxu0 %v2794
    %3880 = vmatmul.bf16.gmra.mxu0 %v402
    %v3881 = vpop.f32.mrf.mxu0
    %v3882 = vadd.f32 %v3869, %v3881
    %v3883 = vpop.f32.mrf.mxu0
    %3884 = vdwg.mxu0
    %3885 = vmatpush.bf16.msra.mxu0 %v2914
    %3886 = vmatpush.bf16.msra.mxu0 %v2906
    %3887 = vmatpush.bf16.msra.mxu0 %v2898
    %3888 = vmatpush.bf16.msra.mxu0 %v2890
    %3889 = vmatpush.bf16.msra.mxu0 %v2882
    %3890 = vmatpush.bf16.msra.mxu0 %v2874
    %3891 = vmatpush.bf16.msra.mxu0 %v2866
    %3892 = vmatpush.bf16.msra.mxu0 %v2858
    %3893 = vmatmul.bf16.gmra.mxu0 %v403
    %v3894 = vpop.f32.mrf.mxu0
    %v3895 = vadd.f32 %v3882, %v3894
    %v3896 = vpop.f32.mrf.mxu0
    %3897 = vdwg.mxu0
    %3898 = vmatpush.bf16.msra.mxu0 %v2978
    %3899 = vmatpush.bf16.msra.mxu0 %v2970
    %3900 = vmatpush.bf16.msra.mxu0 %v2962
    %3901 = vmatpush.bf16.msra.mxu0 %v2954
    %3902 = vmatpush.bf16.msra.mxu0 %v2946
    %3903 = vmatpush.bf16.msra.mxu0 %v2938
    %3904 = vmatpush.bf16.msra.mxu0 %v2930
    %3905 = vmatpush.bf16.msra.mxu0 %v2922
    %3906 = vmatmul.bf16.gmra.mxu0 %v404
    %v3907 = vpop.f32.mrf.mxu0
    %v3908 = vadd.f32 %v3895, %v3907
    %v3909 = vpop.f32.mrf.mxu0
    %3910 = vdwg.mxu0
    %3911 = vmatpush.bf16.msra.mxu0 %v2531
    %3912 = vmatpush.bf16.msra.mxu0 %v2523
    %3913 = vmatpush.bf16.msra.mxu0 %v2515
    %3914 = vmatpush.bf16.msra.mxu0 %v2507
    %3915 = vmatpush.bf16.msra.mxu0 %v2499
    %3916 = vmatpush.bf16.msra.mxu0 %v2491
    %3917 = vmatpush.bf16.msra.mxu0 %v2483
    %3918 = vmatpush.bf16.msra.mxu0 %v2475
    %3919 = vmatmul.bf16.gmra.mxu0 %v397
    %v3920 = vpop.f32.mrf.mxu0
    %v3921 = vadd.f32 %v923, %v3920
    %v3922 = vpop.f32.mrf.mxu0
    %3923 = vdwg.mxu0
    %3924 = vmatpush.bf16.msra.mxu0 %v2595
    %3925 = vmatpush.bf16.msra.mxu0 %v2587
    %3926 = vmatpush.bf16.msra.mxu0 %v2579
    %3927 = vmatpush.bf16.msra.mxu0 %v2571
    %3928 = vmatpush.bf16.msra.mxu0 %v2563
    %3929 = vmatpush.bf16.msra.mxu0 %v2555
    %3930 = vmatpush.bf16.msra.mxu0 %v2547
    %3931 = vmatpush.bf16.msra.mxu0 %v2539
    %3932 = vmatmul.bf16.gmra.mxu0 %v398
    %v3933 = vpop.f32.mrf.mxu0
    %v3934 = vadd.f32 %v3921, %v3933
    %v3935 = vpop.f32.mrf.mxu0
    %3936 = vdwg.mxu0
    %3937 = vmatpush.bf16.msra.mxu0 %v2659
    %3938 = vmatpush.bf16.msra.mxu0 %v2651
    %3939 = vmatpush.bf16.msra.mxu0 %v2643
    %3940 = vmatpush.bf16.msra.mxu0 %v2635
    %3941 = vmatpush.bf16.msra.mxu0 %v2627
    %3942 = vmatpush.bf16.msra.mxu0 %v2619
    %3943 = vmatpush.bf16.msra.mxu0 %v2611
    %3944 = vmatpush.bf16.msra.mxu0 %v2603
    %3945 = vmatmul.bf16.gmra.mxu0 %v399
    %v3946 = vpop.f32.mrf.mxu0
    %v3947 = vadd.f32 %v3934, %v3946
    %v3948 = vpop.f32.mrf.mxu0
    %3949 = vdwg.mxu0
    %3950 = vmatpush.bf16.msra.mxu0 %v2723
    %3951 = vmatpush.bf16.msra.mxu0 %v2715
    %3952 = vmatpush.bf16.msra.mxu0 %v2707
    %3953 = vmatpush.bf16.msra.mxu0 %v2699
    %3954 = vmatpush.bf16.msra.mxu0 %v2691
    %3955 = vmatpush.bf16.msra.mxu0 %v2683
    %3956 = vmatpush.bf16.msra.mxu0 %v2675
    %3957 = vmatpush.bf16.msra.mxu0 %v2667
    %3958 = vmatmul.bf16.gmra.mxu0 %v400
    %v3959 = vpop.f32.mrf.mxu0
    %v3960 = vadd.f32 %v3947, %v3959
    %v3961 = vpop.f32.mrf.mxu0
    %3962 = vdwg.mxu0
    %3963 = vmatpush.bf16.msra.mxu0 %v2787
    %3964 = vmatpush.bf16.msra.mxu0 %v2779
    %3965 = vmatpush.bf16.msra.mxu0 %v2771
    %3966 = vmatpush.bf16.msra.mxu0 %v2763
    %3967 = vmatpush.bf16.msra.mxu0 %v2755
    %3968 = vmatpush.bf16.msra.mxu0 %v2747
    %3969 = vmatpush.bf16.msra.mxu0 %v2739
    %3970 = vmatpush.bf16.msra.mxu0 %v2731
    %3971 = vmatmul.bf16.gmra.mxu0 %v401
    %v3972 = vpop.f32.mrf.mxu0
    %v3973 = vadd.f32 %v3960, %v3972
    %v3974 = vpop.f32.mrf.mxu0
    %3975 = vdwg.mxu0
    %3976 = vmatpush.bf16.msra.mxu0 %v2851
    %3977 = vmatpush.bf16.msra.mxu0 %v2843
    %3978 = vmatpush.bf16.msra.mxu0 %v2835
    %3979 = vmatpush.bf16.msra.mxu0 %v2827
    %3980 = vmatpush.bf16.msra.mxu0 %v2819
    %3981 = vmatpush.bf16.msra.mxu0 %v2811
    %3982 = vmatpush.bf16.msra.mxu0 %v2803
    %3983 = vmatpush.bf16.msra.mxu0 %v2795
    %3984 = vmatmul.bf16.gmra.mxu0 %v402
    %v3985 = vpop.f32.mrf.mxu0
    %v3986 = vadd.f32 %v3973, %v3985
    %v3987 = vpop.f32.mrf.mxu0
    %3988 = vdwg.mxu0
    %3989 = vmatpush.bf16.msra.mxu0 %v2915
    %3990 = vmatpush.bf16.msra.mxu0 %v2907
    %3991 = vmatpush.bf16.msra.mxu0 %v2899
    %3992 = vmatpush.bf16.msra.mxu0 %v2891
    %3993 = vmatpush.bf16.msra.mxu0 %v2883
    %3994 = vmatpush.bf16.msra.mxu0 %v2875
    %3995 = vmatpush.bf16.msra.mxu0 %v2867
    %3996 = vmatpush.bf16.msra.mxu0 %v2859
    %3997 = vmatmul.bf16.gmra.mxu0 %v403
    %v3998 = vpop.f32.mrf.mxu0
    %v3999 = vadd.f32 %v3986, %v3998
    %v4000 = vpop.f32.mrf.mxu0
    %4001 = vdwg.mxu0
    %4002 = vmatpush.bf16.msra.mxu0 %v2979
    %4003 = vmatpush.bf16.msra.mxu0 %v2971
    %4004 = vmatpush.bf16.msra.mxu0 %v2963
    %4005 = vmatpush.bf16.msra.mxu0 %v2955
    %4006 = vmatpush.bf16.msra.mxu0 %v2947
    %4007 = vmatpush.bf16.msra.mxu0 %v2939
    %4008 = vmatpush.bf16.msra.mxu0 %v2931
    %4009 = vmatpush.bf16.msra.mxu0 %v2923
    %4010 = vmatmul.bf16.gmra.mxu0 %v404
    %v4011 = vpop.f32.mrf.mxu0
    %v4012 = vadd.f32 %v3999, %v4011
    %v4013 = vpop.f32.mrf.mxu0
    %4014 = vdwg.mxu0
    %4015 = vmatpush.bf16.msra.mxu0 %v2532
    %4016 = vmatpush.bf16.msra.mxu0 %v2524
    %4017 = vmatpush.bf16.msra.mxu0 %v2516
    %4018 = vmatpush.bf16.msra.mxu0 %v2508
    %4019 = vmatpush.bf16.msra.mxu0 %v2500
    %4020 = vmatpush.bf16.msra.mxu0 %v2492
    %4021 = vmatpush.bf16.msra.mxu0 %v2484
    %4022 = vmatpush.bf16.msra.mxu0 %v2476
    %4023 = vmatmul.bf16.gmra.mxu0 %v397
    %v4024 = vpop.f32.mrf.mxu0
    %v4025 = vadd.f32 %v924, %v4024
    %v4026 = vpop.f32.mrf.mxu0
    %4027 = vdwg.mxu0
    %4028 = vmatpush.bf16.msra.mxu0 %v2596
    %4029 = vmatpush.bf16.msra.mxu0 %v2588
    %4030 = vmatpush.bf16.msra.mxu0 %v2580
    %4031 = vmatpush.bf16.msra.mxu0 %v2572
    %4032 = vmatpush.bf16.msra.mxu0 %v2564
    %4033 = vmatpush.bf16.msra.mxu0 %v2556
    %4034 = vmatpush.bf16.msra.mxu0 %v2548
    %4035 = vmatpush.bf16.msra.mxu0 %v2540
    %4036 = vmatmul.bf16.gmra.mxu0 %v398
    %v4037 = vpop.f32.mrf.mxu0
    %v4038 = vadd.f32 %v4025, %v4037
    %v4039 = vpop.f32.mrf.mxu0
    %4040 = vdwg.mxu0
    %4041 = vmatpush.bf16.msra.mxu0 %v2660
    %4042 = vmatpush.bf16.msra.mxu0 %v2652
    %4043 = vmatpush.bf16.msra.mxu0 %v2644
    %4044 = vmatpush.bf16.msra.mxu0 %v2636
    %4045 = vmatpush.bf16.msra.mxu0 %v2628
    %4046 = vmatpush.bf16.msra.mxu0 %v2620
    %4047 = vmatpush.bf16.msra.mxu0 %v2612
    %4048 = vmatpush.bf16.msra.mxu0 %v2604
    %4049 = vmatmul.bf16.gmra.mxu0 %v399
    %v4050 = vpop.f32.mrf.mxu0
    %v4051 = vadd.f32 %v4038, %v4050
    %v4052 = vpop.f32.mrf.mxu0
    %4053 = vdwg.mxu0
    %4054 = vmatpush.bf16.msra.mxu0 %v2724
    %4055 = vmatpush.bf16.msra.mxu0 %v2716
    %4056 = vmatpush.bf16.msra.mxu0 %v2708
    %4057 = vmatpush.bf16.msra.mxu0 %v2700
    %4058 = vmatpush.bf16.msra.mxu0 %v2692
    %4059 = vmatpush.bf16.msra.mxu0 %v2684
    %4060 = vmatpush.bf16.msra.mxu0 %v2676
    %4061 = vmatpush.bf16.msra.mxu0 %v2668
    %4062 = vmatmul.bf16.gmra.mxu0 %v400
    %v4063 = vpop.f32.mrf.mxu0
    %v4064 = vadd.f32 %v4051, %v4063
    %v4065 = vpop.f32.mrf.mxu0
    %4066 = vdwg.mxu0
    %4067 = vmatpush.bf16.msra.mxu0 %v2788
    %4068 = vmatpush.bf16.msra.mxu0 %v2780
    %4069 = vmatpush.bf16.msra.mxu0 %v2772
    %4070 = vmatpush.bf16.msra.mxu0 %v2764
    %4071 = vmatpush.bf16.msra.mxu0 %v2756
    %4072 = vmatpush.bf16.msra.mxu0 %v2748
    %4073 = vmatpush.bf16.msra.mxu0 %v2740
    %4074 = vmatpush.bf16.msra.mxu0 %v2732
    %4075 = vmatmul.bf16.gmra.mxu0 %v401
    %v4076 = vpop.f32.mrf.mxu0
    %v4077 = vadd.f32 %v4064, %v4076
    %v4078 = vpop.f32.mrf.mxu0
    %4079 = vdwg.mxu0
    %4080 = vmatpush.bf16.msra.mxu0 %v2852
    %4081 = vmatpush.bf16.msra.mxu0 %v2844
    %4082 = vmatpush.bf16.msra.mxu0 %v2836
    %4083 = vmatpush.bf16.msra.mxu0 %v2828
    %4084 = vmatpush.bf16.msra.mxu0 %v2820
    %4085 = vmatpush.bf16.msra.mxu0 %v2812
    %4086 = vmatpush.bf16.msra.mxu0 %v2804
    %4087 = vmatpush.bf16.msra.mxu0 %v2796
    %4088 = vmatmul.bf16.gmra.mxu0 %v402
    %v4089 = vpop.f32.mrf.mxu0
    %v4090 = vadd.f32 %v4077, %v4089
    %v4091 = vpop.f32.mrf.mxu0
    %4092 = vdwg.mxu0
    %4093 = vmatpush.bf16.msra.mxu0 %v2916
    %4094 = vmatpush.bf16.msra.mxu0 %v2908
    %4095 = vmatpush.bf16.msra.mxu0 %v2900
    %4096 = vmatpush.bf16.msra.mxu0 %v2892
    %4097 = vmatpush.bf16.msra.mxu0 %v2884
    %4098 = vmatpush.bf16.msra.mxu0 %v2876
    %4099 = vmatpush.bf16.msra.mxu0 %v2868
    %4100 = vmatpush.bf16.msra.mxu0 %v2860
    %4101 = vmatmul.bf16.gmra.mxu0 %v403
    %v4102 = vpop.f32.mrf.mxu0
    %v4103 = vadd.f32 %v4090, %v4102
    %v4104 = vpop.f32.mrf.mxu0
    %4105 = vdwg.mxu0
    %4106 = vmatpush.bf16.msra.mxu0 %v2980
    %4107 = vmatpush.bf16.msra.mxu0 %v2972
    %4108 = vmatpush.bf16.msra.mxu0 %v2964
    %4109 = vmatpush.bf16.msra.mxu0 %v2956
    %4110 = vmatpush.bf16.msra.mxu0 %v2948
    %4111 = vmatpush.bf16.msra.mxu0 %v2940
    %4112 = vmatpush.bf16.msra.mxu0 %v2932
    %4113 = vmatpush.bf16.msra.mxu0 %v2924
    %4114 = vmatmul.bf16.gmra.mxu0 %v404
    %v4115 = vpop.f32.mrf.mxu0
    %v4116 = vadd.f32 %v4103, %v4115
    %v4117 = vpop.f32.mrf.mxu0
    %4118 = vdwg.mxu0
    %4119 = vmatpush.bf16.msra.mxu0 %v2533
    %4120 = vmatpush.bf16.msra.mxu0 %v2525
    %4121 = vmatpush.bf16.msra.mxu0 %v2517
    %4122 = vmatpush.bf16.msra.mxu0 %v2509
    %4123 = vmatpush.bf16.msra.mxu0 %v2501
    %4124 = vmatpush.bf16.msra.mxu0 %v2493
    %4125 = vmatpush.bf16.msra.mxu0 %v2485
    %4126 = vmatpush.bf16.msra.mxu0 %v2477
    %4127 = vmatmul.bf16.gmra.mxu0 %v397
    %v4128 = vpop.f32.mrf.mxu0
    %v4129 = vadd.f32 %v925, %v4128
    %v4130 = vpop.f32.mrf.mxu0
    %4131 = vdwg.mxu0
    %4132 = vmatpush.bf16.msra.mxu0 %v2597
    %4133 = vmatpush.bf16.msra.mxu0 %v2589
    %4134 = vmatpush.bf16.msra.mxu0 %v2581
    %4135 = vmatpush.bf16.msra.mxu0 %v2573
    %4136 = vmatpush.bf16.msra.mxu0 %v2565
    %4137 = vmatpush.bf16.msra.mxu0 %v2557
    %4138 = vmatpush.bf16.msra.mxu0 %v2549
    %4139 = vmatpush.bf16.msra.mxu0 %v2541
    %4140 = vmatmul.bf16.gmra.mxu0 %v398
    %v4141 = vpop.f32.mrf.mxu0
    %v4142 = vadd.f32 %v4129, %v4141
    %v4143 = vpop.f32.mrf.mxu0
    %4144 = vdwg.mxu0
    %4145 = vmatpush.bf16.msra.mxu0 %v2661
    %4146 = vmatpush.bf16.msra.mxu0 %v2653
    %4147 = vmatpush.bf16.msra.mxu0 %v2645
    %4148 = vmatpush.bf16.msra.mxu0 %v2637
    %4149 = vmatpush.bf16.msra.mxu0 %v2629
    %4150 = vmatpush.bf16.msra.mxu0 %v2621
    %4151 = vmatpush.bf16.msra.mxu0 %v2613
    %4152 = vmatpush.bf16.msra.mxu0 %v2605
    %4153 = vmatmul.bf16.gmra.mxu0 %v399
    %v4154 = vpop.f32.mrf.mxu0
    %v4155 = vadd.f32 %v4142, %v4154
    %v4156 = vpop.f32.mrf.mxu0
    %4157 = vdwg.mxu0
    %4158 = vmatpush.bf16.msra.mxu0 %v2725
    %4159 = vmatpush.bf16.msra.mxu0 %v2717
    %4160 = vmatpush.bf16.msra.mxu0 %v2709
    %4161 = vmatpush.bf16.msra.mxu0 %v2701
    %4162 = vmatpush.bf16.msra.mxu0 %v2693
    %4163 = vmatpush.bf16.msra.mxu0 %v2685
    %4164 = vmatpush.bf16.msra.mxu0 %v2677
    %4165 = vmatpush.bf16.msra.mxu0 %v2669
    %4166 = vmatmul.bf16.gmra.mxu0 %v400
    %v4167 = vpop.f32.mrf.mxu0
    %v4168 = vadd.f32 %v4155, %v4167
    %v4169 = vpop.f32.mrf.mxu0
    %4170 = vdwg.mxu0
    %4171 = vmatpush.bf16.msra.mxu0 %v2789
    %4172 = vmatpush.bf16.msra.mxu0 %v2781
    %4173 = vmatpush.bf16.msra.mxu0 %v2773
    %4174 = vmatpush.bf16.msra.mxu0 %v2765
    %4175 = vmatpush.bf16.msra.mxu0 %v2757
    %4176 = vmatpush.bf16.msra.mxu0 %v2749
    %4177 = vmatpush.bf16.msra.mxu0 %v2741
    %4178 = vmatpush.bf16.msra.mxu0 %v2733
    %4179 = vmatmul.bf16.gmra.mxu0 %v401
    %v4180 = vpop.f32.mrf.mxu0
    %v4181 = vadd.f32 %v4168, %v4180
    %v4182 = vpop.f32.mrf.mxu0
    %4183 = vdwg.mxu0
    %4184 = vmatpush.bf16.msra.mxu0 %v2853
    %4185 = vmatpush.bf16.msra.mxu0 %v2845
    %4186 = vmatpush.bf16.msra.mxu0 %v2837
    %4187 = vmatpush.bf16.msra.mxu0 %v2829
    %4188 = vmatpush.bf16.msra.mxu0 %v2821
    %4189 = vmatpush.bf16.msra.mxu0 %v2813
    %4190 = vmatpush.bf16.msra.mxu0 %v2805
    %4191 = vmatpush.bf16.msra.mxu0 %v2797
    %4192 = vmatmul.bf16.gmra.mxu0 %v402
    %v4193 = vpop.f32.mrf.mxu0
    %v4194 = vadd.f32 %v4181, %v4193
    %v4195 = vpop.f32.mrf.mxu0
    %4196 = vdwg.mxu0
    %4197 = vmatpush.bf16.msra.mxu0 %v2917
    %4198 = vmatpush.bf16.msra.mxu0 %v2909
    %4199 = vmatpush.bf16.msra.mxu0 %v2901
    %4200 = vmatpush.bf16.msra.mxu0 %v2893
    %4201 = vmatpush.bf16.msra.mxu0 %v2885
    %4202 = vmatpush.bf16.msra.mxu0 %v2877
    %4203 = vmatpush.bf16.msra.mxu0 %v2869
    %4204 = vmatpush.bf16.msra.mxu0 %v2861
    %4205 = vmatmul.bf16.gmra.mxu0 %v403
    %v4206 = vpop.f32.mrf.mxu0
    %v4207 = vadd.f32 %v4194, %v4206
    %v4208 = vpop.f32.mrf.mxu0
    %4209 = vdwg.mxu0
    %4210 = vmatpush.bf16.msra.mxu0 %v2981
    %4211 = vmatpush.bf16.msra.mxu0 %v2973
    %4212 = vmatpush.bf16.msra.mxu0 %v2965
    %4213 = vmatpush.bf16.msra.mxu0 %v2957
    %4214 = vmatpush.bf16.msra.mxu0 %v2949
    %4215 = vmatpush.bf16.msra.mxu0 %v2941
    %4216 = vmatpush.bf16.msra.mxu0 %v2933
    %4217 = vmatpush.bf16.msra.mxu0 %v2925
    %4218 = vmatmul.bf16.gmra.mxu0 %v404
    %v4219 = vpop.f32.mrf.mxu0
    %v4220 = vadd.f32 %v4207, %v4219
    %v4221 = vpop.f32.mrf.mxu0
    %4222 = vdwg.mxu0
    %4223 = vmatpush.bf16.msra.mxu0 %v2534
    %4224 = vmatpush.bf16.msra.mxu0 %v2526
    %4225 = vmatpush.bf16.msra.mxu0 %v2518
    %4226 = vmatpush.bf16.msra.mxu0 %v2510
    %4227 = vmatpush.bf16.msra.mxu0 %v2502
    %4228 = vmatpush.bf16.msra.mxu0 %v2494
    %4229 = vmatpush.bf16.msra.mxu0 %v2486
    %4230 = vmatpush.bf16.msra.mxu0 %v2478
    %4231 = vmatmul.bf16.gmra.mxu0 %v397
    %v4232 = vpop.f32.mrf.mxu0
    %v4233 = vadd.f32 %v926, %v4232
    %v4234 = vpop.f32.mrf.mxu0
    %4235 = vdwg.mxu0
    %4236 = vmatpush.bf16.msra.mxu0 %v2598
    %4237 = vmatpush.bf16.msra.mxu0 %v2590
    %4238 = vmatpush.bf16.msra.mxu0 %v2582
    %4239 = vmatpush.bf16.msra.mxu0 %v2574
    %4240 = vmatpush.bf16.msra.mxu0 %v2566
    %4241 = vmatpush.bf16.msra.mxu0 %v2558
    %4242 = vmatpush.bf16.msra.mxu0 %v2550
    %4243 = vmatpush.bf16.msra.mxu0 %v2542
    %4244 = vmatmul.bf16.gmra.mxu0 %v398
    %v4245 = vpop.f32.mrf.mxu0
    %v4246 = vadd.f32 %v4233, %v4245
    %v4247 = vpop.f32.mrf.mxu0
    %4248 = vdwg.mxu0
    %4249 = vmatpush.bf16.msra.mxu0 %v2662
    %4250 = vmatpush.bf16.msra.mxu0 %v2654
    %4251 = vmatpush.bf16.msra.mxu0 %v2646
    %4252 = vmatpush.bf16.msra.mxu0 %v2638
    %4253 = vmatpush.bf16.msra.mxu0 %v2630
    %4254 = vmatpush.bf16.msra.mxu0 %v2622
    %4255 = vmatpush.bf16.msra.mxu0 %v2614
    %4256 = vmatpush.bf16.msra.mxu0 %v2606
    %4257 = vmatmul.bf16.gmra.mxu0 %v399
    %v4258 = vpop.f32.mrf.mxu0
    %v4259 = vadd.f32 %v4246, %v4258
    %v4260 = vpop.f32.mrf.mxu0
    %4261 = vdwg.mxu0
    %4262 = vmatpush.bf16.msra.mxu0 %v2726
    %4263 = vmatpush.bf16.msra.mxu0 %v2718
    %4264 = vmatpush.bf16.msra.mxu0 %v2710
    %4265 = vmatpush.bf16.msra.mxu0 %v2702
    %4266 = vmatpush.bf16.msra.mxu0 %v2694
    %4267 = vmatpush.bf16.msra.mxu0 %v2686
    %4268 = vmatpush.bf16.msra.mxu0 %v2678
    %4269 = vmatpush.bf16.msra.mxu0 %v2670
    %4270 = vmatmul.bf16.gmra.mxu0 %v400
    %v4271 = vpop.f32.mrf.mxu0
    %v4272 = vadd.f32 %v4259, %v4271
    %v4273 = vpop.f32.mrf.mxu0
    %4274 = vdwg.mxu0
    %4275 = vmatpush.bf16.msra.mxu0 %v2790
    %4276 = vmatpush.bf16.msra.mxu0 %v2782
    %4277 = vmatpush.bf16.msra.mxu0 %v2774
    %4278 = vmatpush.bf16.msra.mxu0 %v2766
    %4279 = vmatpush.bf16.msra.mxu0 %v2758
    %4280 = vmatpush.bf16.msra.mxu0 %v2750
    %4281 = vmatpush.bf16.msra.mxu0 %v2742
    %4282 = vmatpush.bf16.msra.mxu0 %v2734
    %4283 = vmatmul.bf16.gmra.mxu0 %v401
    %v4284 = vpop.f32.mrf.mxu0
    %v4285 = vadd.f32 %v4272, %v4284
    %v4286 = vpop.f32.mrf.mxu0
    %4287 = vdwg.mxu0
    %4288 = vmatpush.bf16.msra.mxu0 %v2854
    %4289 = vmatpush.bf16.msra.mxu0 %v2846
    %4290 = vmatpush.bf16.msra.mxu0 %v2838
    %4291 = vmatpush.bf16.msra.mxu0 %v2830
    %4292 = vmatpush.bf16.msra.mxu0 %v2822
    %4293 = vmatpush.bf16.msra.mxu0 %v2814
    %4294 = vmatpush.bf16.msra.mxu0 %v2806
    %4295 = vmatpush.bf16.msra.mxu0 %v2798
    %4296 = vmatmul.bf16.gmra.mxu0 %v402
    %v4297 = vpop.f32.mrf.mxu0
    %v4298 = vadd.f32 %v4285, %v4297
    %v4299 = vpop.f32.mrf.mxu0
    %4300 = vdwg.mxu0
    %4301 = vmatpush.bf16.msra.mxu0 %v2918
    %4302 = vmatpush.bf16.msra.mxu0 %v2910
    %4303 = vmatpush.bf16.msra.mxu0 %v2902
    %4304 = vmatpush.bf16.msra.mxu0 %v2894
    %4305 = vmatpush.bf16.msra.mxu0 %v2886
    %4306 = vmatpush.bf16.msra.mxu0 %v2878
    %4307 = vmatpush.bf16.msra.mxu0 %v2870
    %4308 = vmatpush.bf16.msra.mxu0 %v2862
    %4309 = vmatmul.bf16.gmra.mxu0 %v403
    %v4310 = vpop.f32.mrf.mxu0
    %v4311 = vadd.f32 %v4298, %v4310
    %v4312 = vpop.f32.mrf.mxu0
    %4313 = vdwg.mxu0
    %4314 = vmatpush.bf16.msra.mxu0 %v2982
    %4315 = vmatpush.bf16.msra.mxu0 %v2974
    %4316 = vmatpush.bf16.msra.mxu0 %v2966
    %4317 = vmatpush.bf16.msra.mxu0 %v2958
    %4318 = vmatpush.bf16.msra.mxu0 %v2950
    %4319 = vmatpush.bf16.msra.mxu0 %v2942
    %4320 = vmatpush.bf16.msra.mxu0 %v2934
    %4321 = vmatpush.bf16.msra.mxu0 %v2926
    %4322 = vmatmul.bf16.gmra.mxu0 %v404
    %v4323 = vpop.f32.mrf.mxu0
    %v4324 = vadd.f32 %v4311, %v4323
    %v4325 = vpop.f32.mrf.mxu0
    %4326 = vdwg.mxu0
    %v4327 = vmax.f32 %v3596, 0.0
    %v4328 = vmax.f32 %v3700, 0.0
    %v4329 = vmax.f32 %v3804, 0.0
    %v4330 = vmax.f32 %v3908, 0.0
    %v4331 = vmax.f32 %v4012, 0.0
    %v4332 = vmax.f32 %v4116, 0.0
    %v4333 = vmax.f32 %v4220, 0.0
    %v4334 = vmax.f32 %v4324, 0.0
    %v4335 = vpack.c.bf16 %v4327, %v4327
    %v4336 = vpack.c.bf16 %v4328, %v4328
    %v4337 = vpack.c.bf16 %v4329, %v4329
    %v4338 = vpack.c.bf16 %v4330, %v4330
    %v4339 = vpack.c.bf16 %v4331, %v4331
    %v4340 = vpack.c.bf16 %v4332, %v4332
    %v4341 = vpack.c.bf16 %v4333, %v4333
    %v4342 = vpack.c.bf16 %v4334, %v4334
    %v4343 = vld [vmem:[#allocation13] sm:$0xff]
    %v4344 = vld [vmem:[#allocation13 + $0x8] sm:$0xff]
    %v4345 = vld [vmem:[#allocation13 + $0x10] sm:$0xff]
    %v4346 = vld [vmem:[#allocation13 + $0x18] sm:$0xff]
    %v4347 = vld [vmem:[#allocation13 + $0x20] sm:$0xff]
    %v4348 = vld [vmem:[#allocation13 + $0x28] sm:$0xff]
    %v4349 = vld [vmem:[#allocation13 + $0x30] sm:$0xff]
    %v4350 = vld [vmem:[#allocation13 + $0x38] sm:$0xff]
    %v4351 = vld [vmem:[#allocation13 + $0x40] sm:$0xff]
    %v4352 = vld [vmem:[#allocation13 + $0x48] sm:$0xff]
    %v4353 = vld [vmem:[#allocation13 + $0x50] sm:$0xff]
    %v4354 = vld [vmem:[#allocation13 + $0x58] sm:$0xff]
    %v4355 = vld [vmem:[#allocation13 + $0x60] sm:$0xff]
    %v4356 = vld [vmem:[#allocation13 + $0x68] sm:$0xff]
    %v4357 = vld [vmem:[#allocation13 + $0x70] sm:$0xff]
    %v4358 = vld [vmem:[#allocation13 + $0x78] sm:$0xff]
    %v4359 = vld [vmem:[#allocation13 + $0x80] sm:$0xff]
    %v4360 = vld [vmem:[#allocation13 + $0x88] sm:$0xff]
    %v4361 = vld [vmem:[#allocation13 + $0x90] sm:$0xff]
    %v4362 = vld [vmem:[#allocation13 + $0x98] sm:$0xff]
    %v4363 = vld [vmem:[#allocation13 + $0xa0] sm:$0xff]
    %v4364 = vld [vmem:[#allocation13 + $0xa8] sm:$0xff]
    %v4365 = vld [vmem:[#allocation13 + $0xb0] sm:$0xff]
    %v4366 = vld [vmem:[#allocation13 + $0xb8] sm:$0xff]
    %v4367 = vld [vmem:[#allocation13 + $0xc0] sm:$0xff]
    %v4368 = vld [vmem:[#allocation13 + $0xc8] sm:$0xff]
    %v4369 = vld [vmem:[#allocation13 + $0xd0] sm:$0xff]
    %v4370 = vld [vmem:[#allocation13 + $0xd8] sm:$0xff]
    %v4371 = vld [vmem:[#allocation13 + $0xe0] sm:$0xff]
    %v4372 = vld [vmem:[#allocation13 + $0xe8] sm:$0xff]
    %v4373 = vld [vmem:[#allocation13 + $0xf0] sm:$0xff]
    %v4374 = vld [vmem:[#allocation13 + $0xf8] sm:$0xff]
    %v4375 = vld [vmem:[#allocation13 + $0x100] sm:$0xff]
    %v4376 = vld [vmem:[#allocation13 + $0x108] sm:$0xff]
    %v4377 = vld [vmem:[#allocation13 + $0x110] sm:$0xff]
    %v4378 = vld [vmem:[#allocation13 + $0x118] sm:$0xff]
    %v4379 = vld [vmem:[#allocation13 + $0x120] sm:$0xff]
    %v4380 = vld [vmem:[#allocation13 + $0x128] sm:$0xff]
    %v4381 = vld [vmem:[#allocation13 + $0x130] sm:$0xff]
    %v4382 = vld [vmem:[#allocation13 + $0x138] sm:$0xff]
    %v4383 = vld [vmem:[#allocation13 + $0x140] sm:$0xff]
    %v4384 = vld [vmem:[#allocation13 + $0x148] sm:$0xff]
    %v4385 = vld [vmem:[#allocation13 + $0x150] sm:$0xff]
    %v4386 = vld [vmem:[#allocation13 + $0x158] sm:$0xff]
    %v4387 = vld [vmem:[#allocation13 + $0x160] sm:$0xff]
    %v4388 = vld [vmem:[#allocation13 + $0x168] sm:$0xff]
    %v4389 = vld [vmem:[#allocation13 + $0x170] sm:$0xff]
    %v4390 = vld [vmem:[#allocation13 + $0x178] sm:$0xff]
    %v4391 = vld [vmem:[#allocation13 + $0x180] sm:$0xff]
    %v4392 = vld [vmem:[#allocation13 + $0x188] sm:$0xff]
    %v4393 = vld [vmem:[#allocation13 + $0x190] sm:$0xff]
    %v4394 = vld [vmem:[#allocation13 + $0x198] sm:$0xff]
    %v4395 = vld [vmem:[#allocation13 + $0x1a0] sm:$0xff]
    %v4396 = vld [vmem:[#allocation13 + $0x1a8] sm:$0xff]
    %v4397 = vld [vmem:[#allocation13 + $0x1b0] sm:$0xff]
    %v4398 = vld [vmem:[#allocation13 + $0x1b8] sm:$0xff]
    %v4399 = vld [vmem:[#allocation13 + $0x1c0] sm:$0xff]
    %v4400 = vld [vmem:[#allocation13 + $0x1c8] sm:$0xff]
    %v4401 = vld [vmem:[#allocation13 + $0x1d0] sm:$0xff]
    %v4402 = vld [vmem:[#allocation13 + $0x1d8] sm:$0xff]
    %v4403 = vld [vmem:[#allocation13 + $0x1e0] sm:$0xff]
    %v4404 = vld [vmem:[#allocation13 + $0x1e8] sm:$0xff]
    %v4405 = vld [vmem:[#allocation13 + $0x1f0] sm:$0xff]
    %v4406 = vld [vmem:[#allocation13 + $0x1f8] sm:$0xff]
    %v4407 = vld [vmem:[#allocation13 + $0x200] sm:$0xff]
    %v4408 = vld [vmem:[#allocation13 + $0x208] sm:$0xff]
    %v4409 = vld [vmem:[#allocation13 + $0x210] sm:$0xff]
    %v4410 = vld [vmem:[#allocation13 + $0x218] sm:$0xff]
    %v4411 = vld [vmem:[#allocation13 + $0x220] sm:$0xff]
    %v4412 = vld [vmem:[#allocation13 + $0x228] sm:$0xff]
    %v4413 = vld [vmem:[#allocation13 + $0x230] sm:$0xff]
    %v4414 = vld [vmem:[#allocation13 + $0x238] sm:$0xff]
    %v4415 = vld [vmem:[#allocation13 + $0x240] sm:$0xff]
    %v4416 = vld [vmem:[#allocation13 + $0x248] sm:$0xff]
    %v4417 = vld [vmem:[#allocation13 + $0x250] sm:$0xff]
    %v4418 = vld [vmem:[#allocation13 + $0x258] sm:$0xff]
    %v4419 = vld [vmem:[#allocation13 + $0x260] sm:$0xff]
    %v4420 = vld [vmem:[#allocation13 + $0x268] sm:$0xff]
    %v4421 = vld [vmem:[#allocation13 + $0x270] sm:$0xff]
    %v4422 = vld [vmem:[#allocation13 + $0x278] sm:$0xff]
    %v4423 = vld [vmem:[#allocation13 + $0x280] sm:$0xff]
    %v4424 = vld [vmem:[#allocation13 + $0x288] sm:$0xff]
    %v4425 = vld [vmem:[#allocation13 + $0x290] sm:$0xff]
    %v4426 = vld [vmem:[#allocation13 + $0x298] sm:$0xff]
    %v4427 = vld [vmem:[#allocation13 + $0x2a0] sm:$0xff]
    %v4428 = vld [vmem:[#allocation13 + $0x2a8] sm:$0xff]
    %v4429 = vld [vmem:[#allocation13 + $0x2b0] sm:$0xff]
    %v4430 = vld [vmem:[#allocation13 + $0x2b8] sm:$0xff]
    %v4431 = vld [vmem:[#allocation13 + $0x2c0] sm:$0xff]
    %v4432 = vld [vmem:[#allocation13 + $0x2c8] sm:$0xff]
    %v4433 = vld [vmem:[#allocation13 + $0x2d0] sm:$0xff]
    %v4434 = vld [vmem:[#allocation13 + $0x2d8] sm:$0xff]
    %v4435 = vld [vmem:[#allocation13 + $0x2e0] sm:$0xff]
    %v4436 = vld [vmem:[#allocation13 + $0x2e8] sm:$0xff]
    %v4437 = vld [vmem:[#allocation13 + $0x2f0] sm:$0xff]
    %v4438 = vld [vmem:[#allocation13 + $0x2f8] sm:$0xff]
    %v4439 = vld [vmem:[#allocation13 + $0x300] sm:$0xff]
    %v4440 = vld [vmem:[#allocation13 + $0x308] sm:$0xff]
    %v4441 = vld [vmem:[#allocation13 + $0x310] sm:$0xff]
    %v4442 = vld [vmem:[#allocation13 + $0x318] sm:$0xff]
    %v4443 = vld [vmem:[#allocation13 + $0x320] sm:$0xff]
    %v4444 = vld [vmem:[#allocation13 + $0x328] sm:$0xff]
    %v4445 = vld [vmem:[#allocation13 + $0x330] sm:$0xff]
    %v4446 = vld [vmem:[#allocation13 + $0x338] sm:$0xff]
    %v4447 = vld [vmem:[#allocation13 + $0x340] sm:$0xff]
    %v4448 = vld [vmem:[#allocation13 + $0x348] sm:$0xff]
    %v4449 = vld [vmem:[#allocation13 + $0x350] sm:$0xff]
    %v4450 = vld [vmem:[#allocation13 + $0x358] sm:$0xff]
    %v4451 = vld [vmem:[#allocation13 + $0x360] sm:$0xff]
    %v4452 = vld [vmem:[#allocation13 + $0x368] sm:$0xff]
    %v4453 = vld [vmem:[#allocation13 + $0x370] sm:$0xff]
    %v4454 = vld [vmem:[#allocation13 + $0x378] sm:$0xff]
    %v4455 = vld [vmem:[#allocation13 + $0x380] sm:$0xff]
    %v4456 = vld [vmem:[#allocation13 + $0x388] sm:$0xff]
    %v4457 = vld [vmem:[#allocation13 + $0x390] sm:$0xff]
    %v4458 = vld [vmem:[#allocation13 + $0x398] sm:$0xff]
    %v4459 = vld [vmem:[#allocation13 + $0x3a0] sm:$0xff]
    %v4460 = vld [vmem:[#allocation13 + $0x3a8] sm:$0xff]
    %v4461 = vld [vmem:[#allocation13 + $0x3b0] sm:$0xff]
    %v4462 = vld [vmem:[#allocation13 + $0x3b8] sm:$0xff]
    %v4463 = vld [vmem:[#allocation13 + $0x3c0] sm:$0xff]
    %v4464 = vld [vmem:[#allocation13 + $0x3c8] sm:$0xff]
    %v4465 = vld [vmem:[#allocation13 + $0x3d0] sm:$0xff]
    %v4466 = vld [vmem:[#allocation13 + $0x3d8] sm:$0xff]
    %v4467 = vld [vmem:[#allocation13 + $0x3e0] sm:$0xff]
    %v4468 = vld [vmem:[#allocation13 + $0x3e8] sm:$0xff]
    %v4469 = vld [vmem:[#allocation13 + $0x3f0] sm:$0xff]
    %v4470 = vld [vmem:[#allocation13 + $0x3f8] sm:$0xff]
    %v4471 = vld [vmem:[#allocation13 + $0x400] sm:$0xff]
    %v4472 = vld [vmem:[#allocation13 + $0x408] sm:$0xff]
    %v4473 = vld [vmem:[#allocation13 + $0x410] sm:$0xff]
    %v4474 = vld [vmem:[#allocation13 + $0x418] sm:$0xff]
    %v4475 = vld [vmem:[#allocation13 + $0x420] sm:$0xff]
    %v4476 = vld [vmem:[#allocation13 + $0x428] sm:$0xff]
    %v4477 = vld [vmem:[#allocation13 + $0x430] sm:$0xff]
    %v4478 = vld [vmem:[#allocation13 + $0x438] sm:$0xff]
    %v4479 = vld [vmem:[#allocation13 + $0x440] sm:$0xff]
    %v4480 = vld [vmem:[#allocation13 + $0x448] sm:$0xff]
    %v4481 = vld [vmem:[#allocation13 + $0x450] sm:$0xff]
    %v4482 = vld [vmem:[#allocation13 + $0x458] sm:$0xff]
    %v4483 = vld [vmem:[#allocation13 + $0x460] sm:$0xff]
    %v4484 = vld [vmem:[#allocation13 + $0x468] sm:$0xff]
    %v4485 = vld [vmem:[#allocation13 + $0x470] sm:$0xff]
    %v4486 = vld [vmem:[#allocation13 + $0x478] sm:$0xff]
    %v4487 = vld [vmem:[#allocation13 + $0x480] sm:$0xff]
    %v4488 = vld [vmem:[#allocation13 + $0x488] sm:$0xff]
    %v4489 = vld [vmem:[#allocation13 + $0x490] sm:$0xff]
    %v4490 = vld [vmem:[#allocation13 + $0x498] sm:$0xff]
    %v4491 = vld [vmem:[#allocation13 + $0x4a0] sm:$0xff]
    %v4492 = vld [vmem:[#allocation13 + $0x4a8] sm:$0xff]
    %v4493 = vld [vmem:[#allocation13 + $0x4b0] sm:$0xff]
    %v4494 = vld [vmem:[#allocation13 + $0x4b8] sm:$0xff]
    %v4495 = vld [vmem:[#allocation13 + $0x4c0] sm:$0xff]
    %v4496 = vld [vmem:[#allocation13 + $0x4c8] sm:$0xff]
    %v4497 = vld [vmem:[#allocation13 + $0x4d0] sm:$0xff]
    %v4498 = vld [vmem:[#allocation13 + $0x4d8] sm:$0xff]
    %v4499 = vld [vmem:[#allocation13 + $0x4e0] sm:$0xff]
    %v4500 = vld [vmem:[#allocation13 + $0x4e8] sm:$0xff]
    %v4501 = vld [vmem:[#allocation13 + $0x4f0] sm:$0xff]
    %v4502 = vld [vmem:[#allocation13 + $0x4f8] sm:$0xff]
    %v4503 = vld [vmem:[#allocation13 + $0x500] sm:$0xff]
    %v4504 = vld [vmem:[#allocation13 + $0x508] sm:$0xff]
    %v4505 = vld [vmem:[#allocation13 + $0x510] sm:$0xff]
    %v4506 = vld [vmem:[#allocation13 + $0x518] sm:$0xff]
    %v4507 = vld [vmem:[#allocation13 + $0x520] sm:$0xff]
    %v4508 = vld [vmem:[#allocation13 + $0x528] sm:$0xff]
    %v4509 = vld [vmem:[#allocation13 + $0x530] sm:$0xff]
    %v4510 = vld [vmem:[#allocation13 + $0x538] sm:$0xff]
    %v4511 = vld [vmem:[#allocation13 + $0x540] sm:$0xff]
    %v4512 = vld [vmem:[#allocation13 + $0x548] sm:$0xff]
    %v4513 = vld [vmem:[#allocation13 + $0x550] sm:$0xff]
    %v4514 = vld [vmem:[#allocation13 + $0x558] sm:$0xff]
    %v4515 = vld [vmem:[#allocation13 + $0x560] sm:$0xff]
    %v4516 = vld [vmem:[#allocation13 + $0x568] sm:$0xff]
    %v4517 = vld [vmem:[#allocation13 + $0x570] sm:$0xff]
    %v4518 = vld [vmem:[#allocation13 + $0x578] sm:$0xff]
    %v4519 = vld [vmem:[#allocation13 + $0x580] sm:$0xff]
    %v4520 = vld [vmem:[#allocation13 + $0x588] sm:$0xff]
    %v4521 = vld [vmem:[#allocation13 + $0x590] sm:$0xff]
    %v4522 = vld [vmem:[#allocation13 + $0x598] sm:$0xff]
    %v4523 = vld [vmem:[#allocation13 + $0x5a0] sm:$0xff]
    %v4524 = vld [vmem:[#allocation13 + $0x5a8] sm:$0xff]
    %v4525 = vld [vmem:[#allocation13 + $0x5b0] sm:$0xff]
    %v4526 = vld [vmem:[#allocation13 + $0x5b8] sm:$0xff]
    %v4527 = vld [vmem:[#allocation13 + $0x5c0] sm:$0xff]
    %v4528 = vld [vmem:[#allocation13 + $0x5c8] sm:$0xff]
    %v4529 = vld [vmem:[#allocation13 + $0x5d0] sm:$0xff]
    %v4530 = vld [vmem:[#allocation13 + $0x5d8] sm:$0xff]
    %v4531 = vld [vmem:[#allocation13 + $0x5e0] sm:$0xff]
    %v4532 = vld [vmem:[#allocation13 + $0x5e8] sm:$0xff]
    %v4533 = vld [vmem:[#allocation13 + $0x5f0] sm:$0xff]
    %v4534 = vld [vmem:[#allocation13 + $0x5f8] sm:$0xff]
    %v4535 = vld [vmem:[#allocation13 + $0x600] sm:$0xff]
    %v4536 = vld [vmem:[#allocation13 + $0x608] sm:$0xff]
    %v4537 = vld [vmem:[#allocation13 + $0x610] sm:$0xff]
    %v4538 = vld [vmem:[#allocation13 + $0x618] sm:$0xff]
    %v4539 = vld [vmem:[#allocation13 + $0x620] sm:$0xff]
    %v4540 = vld [vmem:[#allocation13 + $0x628] sm:$0xff]
    %v4541 = vld [vmem:[#allocation13 + $0x630] sm:$0xff]
    %v4542 = vld [vmem:[#allocation13 + $0x638] sm:$0xff]
    %v4543 = vld [vmem:[#allocation13 + $0x640] sm:$0xff]
    %v4544 = vld [vmem:[#allocation13 + $0x648] sm:$0xff]
    %v4545 = vld [vmem:[#allocation13 + $0x650] sm:$0xff]
    %v4546 = vld [vmem:[#allocation13 + $0x658] sm:$0xff]
    %v4547 = vld [vmem:[#allocation13 + $0x660] sm:$0xff]
    %v4548 = vld [vmem:[#allocation13 + $0x668] sm:$0xff]
    %v4549 = vld [vmem:[#allocation13 + $0x670] sm:$0xff]
    %v4550 = vld [vmem:[#allocation13 + $0x678] sm:$0xff]
    %v4551 = vld [vmem:[#allocation13 + $0x680] sm:$0xff]
    %v4552 = vld [vmem:[#allocation13 + $0x688] sm:$0xff]
    %v4553 = vld [vmem:[#allocation13 + $0x690] sm:$0xff]
    %v4554 = vld [vmem:[#allocation13 + $0x698] sm:$0xff]
    %v4555 = vld [vmem:[#allocation13 + $0x6a0] sm:$0xff]
    %v4556 = vld [vmem:[#allocation13 + $0x6a8] sm:$0xff]
    %v4557 = vld [vmem:[#allocation13 + $0x6b0] sm:$0xff]
    %v4558 = vld [vmem:[#allocation13 + $0x6b8] sm:$0xff]
    %v4559 = vld [vmem:[#allocation13 + $0x6c0] sm:$0xff]
    %v4560 = vld [vmem:[#allocation13 + $0x6c8] sm:$0xff]
    %v4561 = vld [vmem:[#allocation13 + $0x6d0] sm:$0xff]
    %v4562 = vld [vmem:[#allocation13 + $0x6d8] sm:$0xff]
    %v4563 = vld [vmem:[#allocation13 + $0x6e0] sm:$0xff]
    %v4564 = vld [vmem:[#allocation13 + $0x6e8] sm:$0xff]
    %v4565 = vld [vmem:[#allocation13 + $0x6f0] sm:$0xff]
    %v4566 = vld [vmem:[#allocation13 + $0x6f8] sm:$0xff]
    %v4567 = vld [vmem:[#allocation13 + $0x700] sm:$0xff]
    %v4568 = vld [vmem:[#allocation13 + $0x708] sm:$0xff]
    %v4569 = vld [vmem:[#allocation13 + $0x710] sm:$0xff]
    %v4570 = vld [vmem:[#allocation13 + $0x718] sm:$0xff]
    %v4571 = vld [vmem:[#allocation13 + $0x720] sm:$0xff]
    %v4572 = vld [vmem:[#allocation13 + $0x728] sm:$0xff]
    %v4573 = vld [vmem:[#allocation13 + $0x730] sm:$0xff]
    %v4574 = vld [vmem:[#allocation13 + $0x738] sm:$0xff]
    %v4575 = vld [vmem:[#allocation13 + $0x740] sm:$0xff]
    %v4576 = vld [vmem:[#allocation13 + $0x748] sm:$0xff]
    %v4577 = vld [vmem:[#allocation13 + $0x750] sm:$0xff]
    %v4578 = vld [vmem:[#allocation13 + $0x758] sm:$0xff]
    %v4579 = vld [vmem:[#allocation13 + $0x760] sm:$0xff]
    %v4580 = vld [vmem:[#allocation13 + $0x768] sm:$0xff]
    %v4581 = vld [vmem:[#allocation13 + $0x770] sm:$0xff]
    %v4582 = vld [vmem:[#allocation13 + $0x778] sm:$0xff]
    %v4583 = vld [vmem:[#allocation13 + $0x780] sm:$0xff]
    %v4584 = vld [vmem:[#allocation13 + $0x788] sm:$0xff]
    %v4585 = vld [vmem:[#allocation13 + $0x790] sm:$0xff]
    %v4586 = vld [vmem:[#allocation13 + $0x798] sm:$0xff]
    %v4587 = vld [vmem:[#allocation13 + $0x7a0] sm:$0xff]
    %v4588 = vld [vmem:[#allocation13 + $0x7a8] sm:$0xff]
    %v4589 = vld [vmem:[#allocation13 + $0x7b0] sm:$0xff]
    %v4590 = vld [vmem:[#allocation13 + $0x7b8] sm:$0xff]
    %v4591 = vld [vmem:[#allocation13 + $0x7c0] sm:$0xff]
    %v4592 = vld [vmem:[#allocation13 + $0x7c8] sm:$0xff]
    %v4593 = vld [vmem:[#allocation13 + $0x7d0] sm:$0xff]
    %v4594 = vld [vmem:[#allocation13 + $0x7d8] sm:$0xff]
    %v4595 = vld [vmem:[#allocation13 + $0x7e0] sm:$0xff]
    %v4596 = vld [vmem:[#allocation13 + $0x7e8] sm:$0xff]
    %v4597 = vld [vmem:[#allocation13 + $0x7f0] sm:$0xff]
    %v4598 = vld [vmem:[#allocation13 + $0x7f8] sm:$0xff]
    %v4599 = vld [vmem:[#allocation13 + $0x800] sm:$0xff]
    %v4600 = vld [vmem:[#allocation13 + $0x808] sm:$0xff]
    %v4601 = vld [vmem:[#allocation13 + $0x810] sm:$0xff]
    %v4602 = vld [vmem:[#allocation13 + $0x818] sm:$0xff]
    %v4603 = vld [vmem:[#allocation13 + $0x820] sm:$0xff]
    %v4604 = vld [vmem:[#allocation13 + $0x828] sm:$0xff]
    %v4605 = vld [vmem:[#allocation13 + $0x830] sm:$0xff]
    %v4606 = vld [vmem:[#allocation13 + $0x838] sm:$0xff]
    %v4607 = vld [vmem:[#allocation13 + $0x840] sm:$0xff]
    %v4608 = vld [vmem:[#allocation13 + $0x848] sm:$0xff]
    %v4609 = vld [vmem:[#allocation13 + $0x850] sm:$0xff]
    %v4610 = vld [vmem:[#allocation13 + $0x858] sm:$0xff]
    %v4611 = vld [vmem:[#allocation13 + $0x860] sm:$0xff]
    %v4612 = vld [vmem:[#allocation13 + $0x868] sm:$0xff]
    %v4613 = vld [vmem:[#allocation13 + $0x870] sm:$0xff]
    %v4614 = vld [vmem:[#allocation13 + $0x878] sm:$0xff]
    %v4615 = vld [vmem:[#allocation13 + $0x880] sm:$0xff]
    %v4616 = vld [vmem:[#allocation13 + $0x888] sm:$0xff]
    %v4617 = vld [vmem:[#allocation13 + $0x890] sm:$0xff]
    %v4618 = vld [vmem:[#allocation13 + $0x898] sm:$0xff]
    %v4619 = vld [vmem:[#allocation13 + $0x8a0] sm:$0xff]
    %v4620 = vld [vmem:[#allocation13 + $0x8a8] sm:$0xff]
    %v4621 = vld [vmem:[#allocation13 + $0x8b0] sm:$0xff]
    %v4622 = vld [vmem:[#allocation13 + $0x8b8] sm:$0xff]
    %v4623 = vld [vmem:[#allocation13 + $0x8c0] sm:$0xff]
    %v4624 = vld [vmem:[#allocation13 + $0x8c8] sm:$0xff]
    %v4625 = vld [vmem:[#allocation13 + $0x8d0] sm:$0xff]
    %v4626 = vld [vmem:[#allocation13 + $0x8d8] sm:$0xff]
    %v4627 = vld [vmem:[#allocation13 + $0x8e0] sm:$0xff]
    %v4628 = vld [vmem:[#allocation13 + $0x8e8] sm:$0xff]
    %v4629 = vld [vmem:[#allocation13 + $0x8f0] sm:$0xff]
    %v4630 = vld [vmem:[#allocation13 + $0x8f8] sm:$0xff]
    %v4631 = vld [vmem:[#allocation13 + $0x900] sm:$0xff]
    %v4632 = vld [vmem:[#allocation13 + $0x908] sm:$0xff]
    %v4633 = vld [vmem:[#allocation13 + $0x910] sm:$0xff]
    %v4634 = vld [vmem:[#allocation13 + $0x918] sm:$0xff]
    %v4635 = vld [vmem:[#allocation13 + $0x920] sm:$0xff]
    %v4636 = vld [vmem:[#allocation13 + $0x928] sm:$0xff]
    %v4637 = vld [vmem:[#allocation13 + $0x930] sm:$0xff]
    %v4638 = vld [vmem:[#allocation13 + $0x938] sm:$0xff]
    %v4639 = vld [vmem:[#allocation13 + $0x940] sm:$0xff]
    %v4640 = vld [vmem:[#allocation13 + $0x948] sm:$0xff]
    %v4641 = vld [vmem:[#allocation13 + $0x950] sm:$0xff]
    %v4642 = vld [vmem:[#allocation13 + $0x958] sm:$0xff]
    %v4643 = vld [vmem:[#allocation13 + $0x960] sm:$0xff]
    %v4644 = vld [vmem:[#allocation13 + $0x968] sm:$0xff]
    %v4645 = vld [vmem:[#allocation13 + $0x970] sm:$0xff]
    %v4646 = vld [vmem:[#allocation13 + $0x978] sm:$0xff]
    %v4647 = vld [vmem:[#allocation13 + $0x980] sm:$0xff]
    %v4648 = vld [vmem:[#allocation13 + $0x988] sm:$0xff]
    %v4649 = vld [vmem:[#allocation13 + $0x990] sm:$0xff]
    %v4650 = vld [vmem:[#allocation13 + $0x998] sm:$0xff]
    %v4651 = vld [vmem:[#allocation13 + $0x9a0] sm:$0xff]
    %v4652 = vld [vmem:[#allocation13 + $0x9a8] sm:$0xff]
    %v4653 = vld [vmem:[#allocation13 + $0x9b0] sm:$0xff]
    %v4654 = vld [vmem:[#allocation13 + $0x9b8] sm:$0xff]
    %v4655 = vld [vmem:[#allocation13 + $0x9c0] sm:$0xff]
    %v4656 = vld [vmem:[#allocation13 + $0x9c8] sm:$0xff]
    %v4657 = vld [vmem:[#allocation13 + $0x9d0] sm:$0xff]
    %v4658 = vld [vmem:[#allocation13 + $0x9d8] sm:$0xff]
    %v4659 = vld [vmem:[#allocation13 + $0x9e0] sm:$0xff]
    %v4660 = vld [vmem:[#allocation13 + $0x9e8] sm:$0xff]
    %v4661 = vld [vmem:[#allocation13 + $0x9f0] sm:$0xff]
    %v4662 = vld [vmem:[#allocation13 + $0x9f8] sm:$0xff]
    %v4663 = vld [vmem:[#allocation13 + $0xa00] sm:$0xff]
    %v4664 = vld [vmem:[#allocation13 + $0xa08] sm:$0xff]
    %v4665 = vld [vmem:[#allocation13 + $0xa10] sm:$0xff]
    %v4666 = vld [vmem:[#allocation13 + $0xa18] sm:$0xff]
    %v4667 = vld [vmem:[#allocation13 + $0xa20] sm:$0xff]
    %v4668 = vld [vmem:[#allocation13 + $0xa28] sm:$0xff]
    %v4669 = vld [vmem:[#allocation13 + $0xa30] sm:$0xff]
    %v4670 = vld [vmem:[#allocation13 + $0xa38] sm:$0xff]
    %v4671 = vld [vmem:[#allocation13 + $0xa40] sm:$0xff]
    %v4672 = vld [vmem:[#allocation13 + $0xa48] sm:$0xff]
    %v4673 = vld [vmem:[#allocation13 + $0xa50] sm:$0xff]
    %v4674 = vld [vmem:[#allocation13 + $0xa58] sm:$0xff]
    %v4675 = vld [vmem:[#allocation13 + $0xa60] sm:$0xff]
    %v4676 = vld [vmem:[#allocation13 + $0xa68] sm:$0xff]
    %v4677 = vld [vmem:[#allocation13 + $0xa70] sm:$0xff]
    %v4678 = vld [vmem:[#allocation13 + $0xa78] sm:$0xff]
    %v4679 = vld [vmem:[#allocation13 + $0xa80] sm:$0xff]
    %v4680 = vld [vmem:[#allocation13 + $0xa88] sm:$0xff]
    %v4681 = vld [vmem:[#allocation13 + $0xa90] sm:$0xff]
    %v4682 = vld [vmem:[#allocation13 + $0xa98] sm:$0xff]
    %v4683 = vld [vmem:[#allocation13 + $0xaa0] sm:$0xff]
    %v4684 = vld [vmem:[#allocation13 + $0xaa8] sm:$0xff]
    %v4685 = vld [vmem:[#allocation13 + $0xab0] sm:$0xff]
    %v4686 = vld [vmem:[#allocation13 + $0xab8] sm:$0xff]
    %v4687 = vld [vmem:[#allocation13 + $0xac0] sm:$0xff]
    %v4688 = vld [vmem:[#allocation13 + $0xac8] sm:$0xff]
    %v4689 = vld [vmem:[#allocation13 + $0xad0] sm:$0xff]
    %v4690 = vld [vmem:[#allocation13 + $0xad8] sm:$0xff]
    %v4691 = vld [vmem:[#allocation13 + $0xae0] sm:$0xff]
    %v4692 = vld [vmem:[#allocation13 + $0xae8] sm:$0xff]
    %v4693 = vld [vmem:[#allocation13 + $0xaf0] sm:$0xff]
    %v4694 = vld [vmem:[#allocation13 + $0xaf8] sm:$0xff]
    %v4695 = vld [vmem:[#allocation13 + $0xb00] sm:$0xff]
    %v4696 = vld [vmem:[#allocation13 + $0xb08] sm:$0xff]
    %v4697 = vld [vmem:[#allocation13 + $0xb10] sm:$0xff]
    %v4698 = vld [vmem:[#allocation13 + $0xb18] sm:$0xff]
    %v4699 = vld [vmem:[#allocation13 + $0xb20] sm:$0xff]
    %v4700 = vld [vmem:[#allocation13 + $0xb28] sm:$0xff]
    %v4701 = vld [vmem:[#allocation13 + $0xb30] sm:$0xff]
    %v4702 = vld [vmem:[#allocation13 + $0xb38] sm:$0xff]
    %v4703 = vld [vmem:[#allocation13 + $0xb40] sm:$0xff]
    %v4704 = vld [vmem:[#allocation13 + $0xb48] sm:$0xff]
    %v4705 = vld [vmem:[#allocation13 + $0xb50] sm:$0xff]
    %v4706 = vld [vmem:[#allocation13 + $0xb58] sm:$0xff]
    %v4707 = vld [vmem:[#allocation13 + $0xb60] sm:$0xff]
    %v4708 = vld [vmem:[#allocation13 + $0xb68] sm:$0xff]
    %v4709 = vld [vmem:[#allocation13 + $0xb70] sm:$0xff]
    %v4710 = vld [vmem:[#allocation13 + $0xb78] sm:$0xff]
    %v4711 = vld [vmem:[#allocation13 + $0xb80] sm:$0xff]
    %v4712 = vld [vmem:[#allocation13 + $0xb88] sm:$0xff]
    %v4713 = vld [vmem:[#allocation13 + $0xb90] sm:$0xff]
    %v4714 = vld [vmem:[#allocation13 + $0xb98] sm:$0xff]
    %v4715 = vld [vmem:[#allocation13 + $0xba0] sm:$0xff]
    %v4716 = vld [vmem:[#allocation13 + $0xba8] sm:$0xff]
    %v4717 = vld [vmem:[#allocation13 + $0xbb0] sm:$0xff]
    %v4718 = vld [vmem:[#allocation13 + $0xbb8] sm:$0xff]
    %v4719 = vld [vmem:[#allocation13 + $0xbc0] sm:$0xff]
    %v4720 = vld [vmem:[#allocation13 + $0xbc8] sm:$0xff]
    %v4721 = vld [vmem:[#allocation13 + $0xbd0] sm:$0xff]
    %v4722 = vld [vmem:[#allocation13 + $0xbd8] sm:$0xff]
    %v4723 = vld [vmem:[#allocation13 + $0xbe0] sm:$0xff]
    %v4724 = vld [vmem:[#allocation13 + $0xbe8] sm:$0xff]
    %v4725 = vld [vmem:[#allocation13 + $0xbf0] sm:$0xff]
    %v4726 = vld [vmem:[#allocation13 + $0xbf8] sm:$0xff]
    %v4727 = vld [vmem:[#allocation13 + $0xc00] sm:$0xff]
    %v4728 = vld [vmem:[#allocation13 + $0xc08] sm:$0xff]
    %v4729 = vld [vmem:[#allocation13 + $0xc10] sm:$0xff]
    %v4730 = vld [vmem:[#allocation13 + $0xc18] sm:$0xff]
    %v4731 = vld [vmem:[#allocation13 + $0xc20] sm:$0xff]
    %v4732 = vld [vmem:[#allocation13 + $0xc28] sm:$0xff]
    %v4733 = vld [vmem:[#allocation13 + $0xc30] sm:$0xff]
    %v4734 = vld [vmem:[#allocation13 + $0xc38] sm:$0xff]
    %v4735 = vld [vmem:[#allocation13 + $0xc40] sm:$0xff]
    %v4736 = vld [vmem:[#allocation13 + $0xc48] sm:$0xff]
    %v4737 = vld [vmem:[#allocation13 + $0xc50] sm:$0xff]
    %v4738 = vld [vmem:[#allocation13 + $0xc58] sm:$0xff]
    %v4739 = vld [vmem:[#allocation13 + $0xc60] sm:$0xff]
    %v4740 = vld [vmem:[#allocation13 + $0xc68] sm:$0xff]
    %v4741 = vld [vmem:[#allocation13 + $0xc70] sm:$0xff]
    %v4742 = vld [vmem:[#allocation13 + $0xc78] sm:$0xff]
    %v4743 = vld [vmem:[#allocation13 + $0xc80] sm:$0xff]
    %v4744 = vld [vmem:[#allocation13 + $0xc88] sm:$0xff]
    %v4745 = vld [vmem:[#allocation13 + $0xc90] sm:$0xff]
    %v4746 = vld [vmem:[#allocation13 + $0xc98] sm:$0xff]
    %v4747 = vld [vmem:[#allocation13 + $0xca0] sm:$0xff]
    %v4748 = vld [vmem:[#allocation13 + $0xca8] sm:$0xff]
    %v4749 = vld [vmem:[#allocation13 + $0xcb0] sm:$0xff]
    %v4750 = vld [vmem:[#allocation13 + $0xcb8] sm:$0xff]
    %v4751 = vld [vmem:[#allocation13 + $0xcc0] sm:$0xff]
    %v4752 = vld [vmem:[#allocation13 + $0xcc8] sm:$0xff]
    %v4753 = vld [vmem:[#allocation13 + $0xcd0] sm:$0xff]
    %v4754 = vld [vmem:[#allocation13 + $0xcd8] sm:$0xff]
    %v4755 = vld [vmem:[#allocation13 + $0xce0] sm:$0xff]
    %v4756 = vld [vmem:[#allocation13 + $0xce8] sm:$0xff]
    %v4757 = vld [vmem:[#allocation13 + $0xcf0] sm:$0xff]
    %v4758 = vld [vmem:[#allocation13 + $0xcf8] sm:$0xff]
    %v4759 = vld [vmem:[#allocation13 + $0xd00] sm:$0xff]
    %v4760 = vld [vmem:[#allocation13 + $0xd08] sm:$0xff]
    %v4761 = vld [vmem:[#allocation13 + $0xd10] sm:$0xff]
    %v4762 = vld [vmem:[#allocation13 + $0xd18] sm:$0xff]
    %v4763 = vld [vmem:[#allocation13 + $0xd20] sm:$0xff]
    %v4764 = vld [vmem:[#allocation13 + $0xd28] sm:$0xff]
    %v4765 = vld [vmem:[#allocation13 + $0xd30] sm:$0xff]
    %v4766 = vld [vmem:[#allocation13 + $0xd38] sm:$0xff]
    %v4767 = vld [vmem:[#allocation13 + $0xd40] sm:$0xff]
    %v4768 = vld [vmem:[#allocation13 + $0xd48] sm:$0xff]
    %v4769 = vld [vmem:[#allocation13 + $0xd50] sm:$0xff]
    %v4770 = vld [vmem:[#allocation13 + $0xd58] sm:$0xff]
    %v4771 = vld [vmem:[#allocation13 + $0xd60] sm:$0xff]
    %v4772 = vld [vmem:[#allocation13 + $0xd68] sm:$0xff]
    %v4773 = vld [vmem:[#allocation13 + $0xd70] sm:$0xff]
    %v4774 = vld [vmem:[#allocation13 + $0xd78] sm:$0xff]
    %v4775 = vld [vmem:[#allocation13 + $0xd80] sm:$0xff]
    %v4776 = vld [vmem:[#allocation13 + $0xd88] sm:$0xff]
    %v4777 = vld [vmem:[#allocation13 + $0xd90] sm:$0xff]
    %v4778 = vld [vmem:[#allocation13 + $0xd98] sm:$0xff]
    %v4779 = vld [vmem:[#allocation13 + $0xda0] sm:$0xff]
    %v4780 = vld [vmem:[#allocation13 + $0xda8] sm:$0xff]
    %v4781 = vld [vmem:[#allocation13 + $0xdb0] sm:$0xff]
    %v4782 = vld [vmem:[#allocation13 + $0xdb8] sm:$0xff]
    %v4783 = vld [vmem:[#allocation13 + $0xdc0] sm:$0xff]
    %v4784 = vld [vmem:[#allocation13 + $0xdc8] sm:$0xff]
    %v4785 = vld [vmem:[#allocation13 + $0xdd0] sm:$0xff]
    %v4786 = vld [vmem:[#allocation13 + $0xdd8] sm:$0xff]
    %v4787 = vld [vmem:[#allocation13 + $0xde0] sm:$0xff]
    %v4788 = vld [vmem:[#allocation13 + $0xde8] sm:$0xff]
    %v4789 = vld [vmem:[#allocation13 + $0xdf0] sm:$0xff]
    %v4790 = vld [vmem:[#allocation13 + $0xdf8] sm:$0xff]
    %v4791 = vld [vmem:[#allocation13 + $0xe00] sm:$0xff]
    %v4792 = vld [vmem:[#allocation13 + $0xe08] sm:$0xff]
    %v4793 = vld [vmem:[#allocation13 + $0xe10] sm:$0xff]
    %v4794 = vld [vmem:[#allocation13 + $0xe18] sm:$0xff]
    %v4795 = vld [vmem:[#allocation13 + $0xe20] sm:$0xff]
    %v4796 = vld [vmem:[#allocation13 + $0xe28] sm:$0xff]
    %v4797 = vld [vmem:[#allocation13 + $0xe30] sm:$0xff]
    %v4798 = vld [vmem:[#allocation13 + $0xe38] sm:$0xff]
    %v4799 = vld [vmem:[#allocation13 + $0xe40] sm:$0xff]
    %v4800 = vld [vmem:[#allocation13 + $0xe48] sm:$0xff]
    %v4801 = vld [vmem:[#allocation13 + $0xe50] sm:$0xff]
    %v4802 = vld [vmem:[#allocation13 + $0xe58] sm:$0xff]
    %v4803 = vld [vmem:[#allocation13 + $0xe60] sm:$0xff]
    %v4804 = vld [vmem:[#allocation13 + $0xe68] sm:$0xff]
    %v4805 = vld [vmem:[#allocation13 + $0xe70] sm:$0xff]
    %v4806 = vld [vmem:[#allocation13 + $0xe78] sm:$0xff]
    %v4807 = vld [vmem:[#allocation13 + $0xe80] sm:$0xff]
    %v4808 = vld [vmem:[#allocation13 + $0xe88] sm:$0xff]
    %v4809 = vld [vmem:[#allocation13 + $0xe90] sm:$0xff]
    %v4810 = vld [vmem:[#allocation13 + $0xe98] sm:$0xff]
    %v4811 = vld [vmem:[#allocation13 + $0xea0] sm:$0xff]
    %v4812 = vld [vmem:[#allocation13 + $0xea8] sm:$0xff]
    %v4813 = vld [vmem:[#allocation13 + $0xeb0] sm:$0xff]
    %v4814 = vld [vmem:[#allocation13 + $0xeb8] sm:$0xff]
    %v4815 = vld [vmem:[#allocation13 + $0xec0] sm:$0xff]
    %v4816 = vld [vmem:[#allocation13 + $0xec8] sm:$0xff]
    %v4817 = vld [vmem:[#allocation13 + $0xed0] sm:$0xff]
    %v4818 = vld [vmem:[#allocation13 + $0xed8] sm:$0xff]
    %v4819 = vld [vmem:[#allocation13 + $0xee0] sm:$0xff]
    %v4820 = vld [vmem:[#allocation13 + $0xee8] sm:$0xff]
    %v4821 = vld [vmem:[#allocation13 + $0xef0] sm:$0xff]
    %v4822 = vld [vmem:[#allocation13 + $0xef8] sm:$0xff]
    %v4823 = vld [vmem:[#allocation13 + $0xf00] sm:$0xff]
    %v4824 = vld [vmem:[#allocation13 + $0xf08] sm:$0xff]
    %v4825 = vld [vmem:[#allocation13 + $0xf10] sm:$0xff]
    %v4826 = vld [vmem:[#allocation13 + $0xf18] sm:$0xff]
    %v4827 = vld [vmem:[#allocation13 + $0xf20] sm:$0xff]
    %v4828 = vld [vmem:[#allocation13 + $0xf28] sm:$0xff]
    %v4829 = vld [vmem:[#allocation13 + $0xf30] sm:$0xff]
    %v4830 = vld [vmem:[#allocation13 + $0xf38] sm:$0xff]
    %v4831 = vld [vmem:[#allocation13 + $0xf40] sm:$0xff]
    %v4832 = vld [vmem:[#allocation13 + $0xf48] sm:$0xff]
    %v4833 = vld [vmem:[#allocation13 + $0xf50] sm:$0xff]
    %v4834 = vld [vmem:[#allocation13 + $0xf58] sm:$0xff]
    %v4835 = vld [vmem:[#allocation13 + $0xf60] sm:$0xff]
    %v4836 = vld [vmem:[#allocation13 + $0xf68] sm:$0xff]
    %v4837 = vld [vmem:[#allocation13 + $0xf70] sm:$0xff]
    %v4838 = vld [vmem:[#allocation13 + $0xf78] sm:$0xff]
    %v4839 = vld [vmem:[#allocation13 + $0xf80] sm:$0xff]
    %v4840 = vld [vmem:[#allocation13 + $0xf88] sm:$0xff]
    %v4841 = vld [vmem:[#allocation13 + $0xf90] sm:$0xff]
    %v4842 = vld [vmem:[#allocation13 + $0xf98] sm:$0xff]
    %v4843 = vld [vmem:[#allocation13 + $0xfa0] sm:$0xff]
    %v4844 = vld [vmem:[#allocation13 + $0xfa8] sm:$0xff]
    %v4845 = vld [vmem:[#allocation13 + $0xfb0] sm:$0xff]
    %v4846 = vld [vmem:[#allocation13 + $0xfb8] sm:$0xff]
    %v4847 = vld [vmem:[#allocation13 + $0xfc0] sm:$0xff]
    %v4848 = vld [vmem:[#allocation13 + $0xfc8] sm:$0xff]
    %v4849 = vld [vmem:[#allocation13 + $0xfd0] sm:$0xff]
    %v4850 = vld [vmem:[#allocation13 + $0xfd8] sm:$0xff]
    %v4851 = vld [vmem:[#allocation13 + $0xfe0] sm:$0xff]
    %v4852 = vld [vmem:[#allocation13 + $0xfe8] sm:$0xff]
    %v4853 = vld [vmem:[#allocation13 + $0xff0] sm:$0xff]
    %v4854 = vld [vmem:[#allocation13 + $0xff8] sm:$0xff]
    %v4855 = vld [vmem:[#allocation14] sm:$0xff]
    %v4857 = vperm.slane %v4855, 0
    %v4858 = vperm.slane %v4855, 1
    %v4859 = vperm.slane %v4855, 2
    %v4860 = vperm.slane %v4855, 3
    %v4861 = vperm.slane %v4855, 4
    %v4862 = vperm.slane %v4855, 5
    %v4863 = vperm.slane %v4855, 6
    %v4864 = vperm.slane %v4855, 7
    %v5385 = vunpack.c.l.b16 %v4343
    %v5386 = vunpack.c.h.b16 %v4343
    %v5387 = vunpack.c.l.b16 %v4344
    %v5388 = vunpack.c.h.b16 %v4344
    %v5389 = vunpack.c.l.b16 %v4345
    %v5390 = vunpack.c.h.b16 %v4345
    %v5391 = vunpack.c.l.b16 %v4346
    %v5392 = vunpack.c.h.b16 %v4346
    %v5393 = vunpack.c.l.b16 %v4347
    %v5394 = vunpack.c.h.b16 %v4347
    %v5395 = vunpack.c.l.b16 %v4348
    %v5396 = vunpack.c.h.b16 %v4348
    %v5397 = vunpack.c.l.b16 %v4349
    %v5398 = vunpack.c.h.b16 %v4349
    %v5399 = vunpack.c.l.b16 %v4350
    %v5400 = vunpack.c.h.b16 %v4350
    %v5401 = vunpack.c.l.b16 %v4351
    %v5402 = vunpack.c.h.b16 %v4351
    %v5403 = vunpack.c.l.b16 %v4352
    %v5404 = vunpack.c.h.b16 %v4352
    %v5405 = vunpack.c.l.b16 %v4353
    %v5406 = vunpack.c.h.b16 %v4353
    %v5407 = vunpack.c.l.b16 %v4354
    %v5408 = vunpack.c.h.b16 %v4354
    %v5409 = vunpack.c.l.b16 %v4355
    %v5410 = vunpack.c.h.b16 %v4355
    %v5411 = vunpack.c.l.b16 %v4356
    %v5412 = vunpack.c.h.b16 %v4356
    %v5413 = vunpack.c.l.b16 %v4357
    %v5414 = vunpack.c.h.b16 %v4357
    %v5415 = vunpack.c.l.b16 %v4358
    %v5416 = vunpack.c.h.b16 %v4358
    %v5417 = vunpack.c.l.b16 %v4359
    %v5418 = vunpack.c.h.b16 %v4359
    %v5419 = vunpack.c.l.b16 %v4360
    %v5420 = vunpack.c.h.b16 %v4360
    %v5421 = vunpack.c.l.b16 %v4361
    %v5422 = vunpack.c.h.b16 %v4361
    %v5423 = vunpack.c.l.b16 %v4362
    %v5424 = vunpack.c.h.b16 %v4362
    %v5425 = vunpack.c.l.b16 %v4363
    %v5426 = vunpack.c.h.b16 %v4363
    %v5427 = vunpack.c.l.b16 %v4364
    %v5428 = vunpack.c.h.b16 %v4364
    %v5429 = vunpack.c.l.b16 %v4365
    %v5430 = vunpack.c.h.b16 %v4365
    %v5431 = vunpack.c.l.b16 %v4366
    %v5432 = vunpack.c.h.b16 %v4366
    %v5433 = vunpack.c.l.b16 %v4367
    %v5434 = vunpack.c.h.b16 %v4367
    %v5435 = vunpack.c.l.b16 %v4368
    %v5436 = vunpack.c.h.b16 %v4368
    %v5437 = vunpack.c.l.b16 %v4369
    %v5438 = vunpack.c.h.b16 %v4369
    %v5439 = vunpack.c.l.b16 %v4370
    %v5440 = vunpack.c.h.b16 %v4370
    %v5441 = vunpack.c.l.b16 %v4371
    %v5442 = vunpack.c.h.b16 %v4371
    %v5443 = vunpack.c.l.b16 %v4372
    %v5444 = vunpack.c.h.b16 %v4372
    %v5445 = vunpack.c.l.b16 %v4373
    %v5446 = vunpack.c.h.b16 %v4373
    %v5447 = vunpack.c.l.b16 %v4374
    %v5448 = vunpack.c.h.b16 %v4374
    %v5449 = vunpack.c.l.b16 %v4375
    %v5450 = vunpack.c.h.b16 %v4375
    %v5451 = vunpack.c.l.b16 %v4376
    %v5452 = vunpack.c.h.b16 %v4376
    %v5453 = vunpack.c.l.b16 %v4377
    %v5454 = vunpack.c.h.b16 %v4377
    %v5455 = vunpack.c.l.b16 %v4378
    %v5456 = vunpack.c.h.b16 %v4378
    %v5457 = vunpack.c.l.b16 %v4379
    %v5458 = vunpack.c.h.b16 %v4379
    %v5459 = vunpack.c.l.b16 %v4380
    %v5460 = vunpack.c.h.b16 %v4380
    %v5461 = vunpack.c.l.b16 %v4381
    %v5462 = vunpack.c.h.b16 %v4381
    %v5463 = vunpack.c.l.b16 %v4382
    %v5464 = vunpack.c.h.b16 %v4382
    %v5465 = vunpack.c.l.b16 %v4383
    %v5466 = vunpack.c.h.b16 %v4383
    %v5467 = vunpack.c.l.b16 %v4384
    %v5468 = vunpack.c.h.b16 %v4384
    %v5469 = vunpack.c.l.b16 %v4385
    %v5470 = vunpack.c.h.b16 %v4385
    %v5471 = vunpack.c.l.b16 %v4386
    %v5472 = vunpack.c.h.b16 %v4386
    %v5473 = vunpack.c.l.b16 %v4387
    %v5474 = vunpack.c.h.b16 %v4387
    %v5475 = vunpack.c.l.b16 %v4388
    %v5476 = vunpack.c.h.b16 %v4388
    %v5477 = vunpack.c.l.b16 %v4389
    %v5478 = vunpack.c.h.b16 %v4389
    %v5479 = vunpack.c.l.b16 %v4390
    %v5480 = vunpack.c.h.b16 %v4390
    %v5481 = vunpack.c.l.b16 %v4391
    %v5482 = vunpack.c.h.b16 %v4391
    %v5483 = vunpack.c.l.b16 %v4392
    %v5484 = vunpack.c.h.b16 %v4392
    %v5485 = vunpack.c.l.b16 %v4393
    %v5486 = vunpack.c.h.b16 %v4393
    %v5487 = vunpack.c.l.b16 %v4394
    %v5488 = vunpack.c.h.b16 %v4394
    %v5489 = vunpack.c.l.b16 %v4395
    %v5490 = vunpack.c.h.b16 %v4395
    %v5491 = vunpack.c.l.b16 %v4396
    %v5492 = vunpack.c.h.b16 %v4396
    %v5493 = vunpack.c.l.b16 %v4397
    %v5494 = vunpack.c.h.b16 %v4397
    %v5495 = vunpack.c.l.b16 %v4398
    %v5496 = vunpack.c.h.b16 %v4398
    %v5497 = vunpack.c.l.b16 %v4399
    %v5498 = vunpack.c.h.b16 %v4399
    %v5499 = vunpack.c.l.b16 %v4400
    %v5500 = vunpack.c.h.b16 %v4400
    %v5501 = vunpack.c.l.b16 %v4401
    %v5502 = vunpack.c.h.b16 %v4401
    %v5503 = vunpack.c.l.b16 %v4402
    %v5504 = vunpack.c.h.b16 %v4402
    %v5505 = vunpack.c.l.b16 %v4403
    %v5506 = vunpack.c.h.b16 %v4403
    %v5507 = vunpack.c.l.b16 %v4404
    %v5508 = vunpack.c.h.b16 %v4404
    %v5509 = vunpack.c.l.b16 %v4405
    %v5510 = vunpack.c.h.b16 %v4405
    %v5511 = vunpack.c.l.b16 %v4406
    %v5512 = vunpack.c.h.b16 %v4406
    %v5513 = vunpack.c.l.b16 %v4407
    %v5514 = vunpack.c.h.b16 %v4407
    %v5515 = vunpack.c.l.b16 %v4408
    %v5516 = vunpack.c.h.b16 %v4408
    %v5517 = vunpack.c.l.b16 %v4409
    %v5518 = vunpack.c.h.b16 %v4409
    %v5519 = vunpack.c.l.b16 %v4410
    %v5520 = vunpack.c.h.b16 %v4410
    %v5521 = vunpack.c.l.b16 %v4411
    %v5522 = vunpack.c.h.b16 %v4411
    %v5523 = vunpack.c.l.b16 %v4412
    %v5524 = vunpack.c.h.b16 %v4412
    %v5525 = vunpack.c.l.b16 %v4413
    %v5526 = vunpack.c.h.b16 %v4413
    %v5527 = vunpack.c.l.b16 %v4414
    %v5528 = vunpack.c.h.b16 %v4414
    %v5529 = vunpack.c.l.b16 %v4415
    %v5530 = vunpack.c.h.b16 %v4415
    %v5531 = vunpack.c.l.b16 %v4416
    %v5532 = vunpack.c.h.b16 %v4416
    %v5533 = vunpack.c.l.b16 %v4417
    %v5534 = vunpack.c.h.b16 %v4417
    %v5535 = vunpack.c.l.b16 %v4418
    %v5536 = vunpack.c.h.b16 %v4418
    %v5537 = vunpack.c.l.b16 %v4419
    %v5538 = vunpack.c.h.b16 %v4419
    %v5539 = vunpack.c.l.b16 %v4420
    %v5540 = vunpack.c.h.b16 %v4420
    %v5541 = vunpack.c.l.b16 %v4421
    %v5542 = vunpack.c.h.b16 %v4421
    %v5543 = vunpack.c.l.b16 %v4422
    %v5544 = vunpack.c.h.b16 %v4422
    %v5545 = vunpack.c.l.b16 %v4423
    %v5546 = vunpack.c.h.b16 %v4423
    %v5547 = vunpack.c.l.b16 %v4424
    %v5548 = vunpack.c.h.b16 %v4424
    %v5549 = vunpack.c.l.b16 %v4425
    %v5550 = vunpack.c.h.b16 %v4425
    %v5551 = vunpack.c.l.b16 %v4426
    %v5552 = vunpack.c.h.b16 %v4426
    %v5553 = vunpack.c.l.b16 %v4427
    %v5554 = vunpack.c.h.b16 %v4427
    %v5555 = vunpack.c.l.b16 %v4428
    %v5556 = vunpack.c.h.b16 %v4428
    %v5557 = vunpack.c.l.b16 %v4429
    %v5558 = vunpack.c.h.b16 %v4429
    %v5559 = vunpack.c.l.b16 %v4430
    %v5560 = vunpack.c.h.b16 %v4430
    %v5561 = vunpack.c.l.b16 %v4431
    %v5562 = vunpack.c.h.b16 %v4431
    %v5563 = vunpack.c.l.b16 %v4432
    %v5564 = vunpack.c.h.b16 %v4432
    %v5565 = vunpack.c.l.b16 %v4433
    %v5566 = vunpack.c.h.b16 %v4433
    %v5567 = vunpack.c.l.b16 %v4434
    %v5568 = vunpack.c.h.b16 %v4434
    %v5569 = vunpack.c.l.b16 %v4435
    %v5570 = vunpack.c.h.b16 %v4435
    %v5571 = vunpack.c.l.b16 %v4436
    %v5572 = vunpack.c.h.b16 %v4436
    %v5573 = vunpack.c.l.b16 %v4437
    %v5574 = vunpack.c.h.b16 %v4437
    %v5575 = vunpack.c.l.b16 %v4438
    %v5576 = vunpack.c.h.b16 %v4438
    %v5577 = vunpack.c.l.b16 %v4439
    %v5578 = vunpack.c.h.b16 %v4439
    %v5579 = vunpack.c.l.b16 %v4440
    %v5580 = vunpack.c.h.b16 %v4440
    %v5581 = vunpack.c.l.b16 %v4441
    %v5582 = vunpack.c.h.b16 %v4441
    %v5583 = vunpack.c.l.b16 %v4442
    %v5584 = vunpack.c.h.b16 %v4442
    %v5585 = vunpack.c.l.b16 %v4443
    %v5586 = vunpack.c.h.b16 %v4443
    %v5587 = vunpack.c.l.b16 %v4444
    %v5588 = vunpack.c.h.b16 %v4444
    %v5589 = vunpack.c.l.b16 %v4445
    %v5590 = vunpack.c.h.b16 %v4445
    %v5591 = vunpack.c.l.b16 %v4446
    %v5592 = vunpack.c.h.b16 %v4446
    %v5593 = vunpack.c.l.b16 %v4447
    %v5594 = vunpack.c.h.b16 %v4447
    %v5595 = vunpack.c.l.b16 %v4448
    %v5596 = vunpack.c.h.b16 %v4448
    %v5597 = vunpack.c.l.b16 %v4449
    %v5598 = vunpack.c.h.b16 %v4449
    %v5599 = vunpack.c.l.b16 %v4450
    %v5600 = vunpack.c.h.b16 %v4450
    %v5601 = vunpack.c.l.b16 %v4451
    %v5602 = vunpack.c.h.b16 %v4451
    %v5603 = vunpack.c.l.b16 %v4452
    %v5604 = vunpack.c.h.b16 %v4452
    %v5605 = vunpack.c.l.b16 %v4453
    %v5606 = vunpack.c.h.b16 %v4453
    %v5607 = vunpack.c.l.b16 %v4454
    %v5608 = vunpack.c.h.b16 %v4454
    %v5609 = vunpack.c.l.b16 %v4455
    %v5610 = vunpack.c.h.b16 %v4455
    %v5611 = vunpack.c.l.b16 %v4456
    %v5612 = vunpack.c.h.b16 %v4456
    %v5613 = vunpack.c.l.b16 %v4457
    %v5614 = vunpack.c.h.b16 %v4457
    %v5615 = vunpack.c.l.b16 %v4458
    %v5616 = vunpack.c.h.b16 %v4458
    %v5617 = vunpack.c.l.b16 %v4459
    %v5618 = vunpack.c.h.b16 %v4459
    %v5619 = vunpack.c.l.b16 %v4460
    %v5620 = vunpack.c.h.b16 %v4460
    %v5621 = vunpack.c.l.b16 %v4461
    %v5622 = vunpack.c.h.b16 %v4461
    %v5623 = vunpack.c.l.b16 %v4462
    %v5624 = vunpack.c.h.b16 %v4462
    %v5625 = vunpack.c.l.b16 %v4463
    %v5626 = vunpack.c.h.b16 %v4463
    %v5627 = vunpack.c.l.b16 %v4464
    %v5628 = vunpack.c.h.b16 %v4464
    %v5629 = vunpack.c.l.b16 %v4465
    %v5630 = vunpack.c.h.b16 %v4465
    %v5631 = vunpack.c.l.b16 %v4466
    %v5632 = vunpack.c.h.b16 %v4466
    %v5633 = vunpack.c.l.b16 %v4467
    %v5634 = vunpack.c.h.b16 %v4467
    %v5635 = vunpack.c.l.b16 %v4468
    %v5636 = vunpack.c.h.b16 %v4468
    %v5637 = vunpack.c.l.b16 %v4469
    %v5638 = vunpack.c.h.b16 %v4469
    %v5639 = vunpack.c.l.b16 %v4470
    %v5640 = vunpack.c.h.b16 %v4470
    %v5641 = vunpack.c.l.b16 %v4471
    %v5642 = vunpack.c.h.b16 %v4471
    %v5643 = vunpack.c.l.b16 %v4472
    %v5644 = vunpack.c.h.b16 %v4472
    %v5645 = vunpack.c.l.b16 %v4473
    %v5646 = vunpack.c.h.b16 %v4473
    %v5647 = vunpack.c.l.b16 %v4474
    %v5648 = vunpack.c.h.b16 %v4474
    %v5649 = vunpack.c.l.b16 %v4475
    %v5650 = vunpack.c.h.b16 %v4475
    %v5651 = vunpack.c.l.b16 %v4476
    %v5652 = vunpack.c.h.b16 %v4476
    %v5653 = vunpack.c.l.b16 %v4477
    %v5654 = vunpack.c.h.b16 %v4477
    %v5655 = vunpack.c.l.b16 %v4478
    %v5656 = vunpack.c.h.b16 %v4478
    %v5657 = vunpack.c.l.b16 %v4479
    %v5658 = vunpack.c.h.b16 %v4479
    %v5659 = vunpack.c.l.b16 %v4480
    %v5660 = vunpack.c.h.b16 %v4480
    %v5661 = vunpack.c.l.b16 %v4481
    %v5662 = vunpack.c.h.b16 %v4481
    %v5663 = vunpack.c.l.b16 %v4482
    %v5664 = vunpack.c.h.b16 %v4482
    %v5665 = vunpack.c.l.b16 %v4483
    %v5666 = vunpack.c.h.b16 %v4483
    %v5667 = vunpack.c.l.b16 %v4484
    %v5668 = vunpack.c.h.b16 %v4484
    %v5669 = vunpack.c.l.b16 %v4485
    %v5670 = vunpack.c.h.b16 %v4485
    %v5671 = vunpack.c.l.b16 %v4486
    %v5672 = vunpack.c.h.b16 %v4486
    %v5673 = vunpack.c.l.b16 %v4487
    %v5674 = vunpack.c.h.b16 %v4487
    %v5675 = vunpack.c.l.b16 %v4488
    %v5676 = vunpack.c.h.b16 %v4488
    %v5677 = vunpack.c.l.b16 %v4489
    %v5678 = vunpack.c.h.b16 %v4489
    %v5679 = vunpack.c.l.b16 %v4490
    %v5680 = vunpack.c.h.b16 %v4490
    %v5681 = vunpack.c.l.b16 %v4491
    %v5682 = vunpack.c.h.b16 %v4491
    %v5683 = vunpack.c.l.b16 %v4492
    %v5684 = vunpack.c.h.b16 %v4492
    %v5685 = vunpack.c.l.b16 %v4493
    %v5686 = vunpack.c.h.b16 %v4493
    %v5687 = vunpack.c.l.b16 %v4494
    %v5688 = vunpack.c.h.b16 %v4494
    %v5689 = vunpack.c.l.b16 %v4495
    %v5690 = vunpack.c.h.b16 %v4495
    %v5691 = vunpack.c.l.b16 %v4496
    %v5692 = vunpack.c.h.b16 %v4496
    %v5693 = vunpack.c.l.b16 %v4497
    %v5694 = vunpack.c.h.b16 %v4497
    %v5695 = vunpack.c.l.b16 %v4498
    %v5696 = vunpack.c.h.b16 %v4498
    %v5697 = vunpack.c.l.b16 %v4499
    %v5698 = vunpack.c.h.b16 %v4499
    %v5699 = vunpack.c.l.b16 %v4500
    %v5700 = vunpack.c.h.b16 %v4500
    %v5701 = vunpack.c.l.b16 %v4501
    %v5702 = vunpack.c.h.b16 %v4501
    %v5703 = vunpack.c.l.b16 %v4502
    %v5704 = vunpack.c.h.b16 %v4502
    %v5705 = vunpack.c.l.b16 %v4503
    %v5706 = vunpack.c.h.b16 %v4503
    %v5707 = vunpack.c.l.b16 %v4504
    %v5708 = vunpack.c.h.b16 %v4504
    %v5709 = vunpack.c.l.b16 %v4505
    %v5710 = vunpack.c.h.b16 %v4505
    %v5711 = vunpack.c.l.b16 %v4506
    %v5712 = vunpack.c.h.b16 %v4506
    %v5713 = vunpack.c.l.b16 %v4507
    %v5714 = vunpack.c.h.b16 %v4507
    %v5715 = vunpack.c.l.b16 %v4508
    %v5716 = vunpack.c.h.b16 %v4508
    %v5717 = vunpack.c.l.b16 %v4509
    %v5718 = vunpack.c.h.b16 %v4509
    %v5719 = vunpack.c.l.b16 %v4510
    %v5720 = vunpack.c.h.b16 %v4510
    %v5721 = vunpack.c.l.b16 %v4511
    %v5722 = vunpack.c.h.b16 %v4511
    %v5723 = vunpack.c.l.b16 %v4512
    %v5724 = vunpack.c.h.b16 %v4512
    %v5725 = vunpack.c.l.b16 %v4513
    %v5726 = vunpack.c.h.b16 %v4513
    %v5727 = vunpack.c.l.b16 %v4514
    %v5728 = vunpack.c.h.b16 %v4514
    %v5729 = vunpack.c.l.b16 %v4515
    %v5730 = vunpack.c.h.b16 %v4515
    %v5731 = vunpack.c.l.b16 %v4516
    %v5732 = vunpack.c.h.b16 %v4516
    %v5733 = vunpack.c.l.b16 %v4517
    %v5734 = vunpack.c.h.b16 %v4517
    %v5735 = vunpack.c.l.b16 %v4518
    %v5736 = vunpack.c.h.b16 %v4518
    %v5737 = vunpack.c.l.b16 %v4519
    %v5738 = vunpack.c.h.b16 %v4519
    %v5739 = vunpack.c.l.b16 %v4520
    %v5740 = vunpack.c.h.b16 %v4520
    %v5741 = vunpack.c.l.b16 %v4521
    %v5742 = vunpack.c.h.b16 %v4521
    %v5743 = vunpack.c.l.b16 %v4522
    %v5744 = vunpack.c.h.b16 %v4522
    %v5745 = vunpack.c.l.b16 %v4523
    %v5746 = vunpack.c.h.b16 %v4523
    %v5747 = vunpack.c.l.b16 %v4524
    %v5748 = vunpack.c.h.b16 %v4524
    %v5749 = vunpack.c.l.b16 %v4525
    %v5750 = vunpack.c.h.b16 %v4525
    %v5751 = vunpack.c.l.b16 %v4526
    %v5752 = vunpack.c.h.b16 %v4526
    %v5753 = vunpack.c.l.b16 %v4527
    %v5754 = vunpack.c.h.b16 %v4527
    %v5755 = vunpack.c.l.b16 %v4528
    %v5756 = vunpack.c.h.b16 %v4528
    %v5757 = vunpack.c.l.b16 %v4529
    %v5758 = vunpack.c.h.b16 %v4529
    %v5759 = vunpack.c.l.b16 %v4530
    %v5760 = vunpack.c.h.b16 %v4530
    %v5761 = vunpack.c.l.b16 %v4531
    %v5762 = vunpack.c.h.b16 %v4531
    %v5763 = vunpack.c.l.b16 %v4532
    %v5764 = vunpack.c.h.b16 %v4532
    %v5765 = vunpack.c.l.b16 %v4533
    %v5766 = vunpack.c.h.b16 %v4533
    %v5767 = vunpack.c.l.b16 %v4534
    %v5768 = vunpack.c.h.b16 %v4534
    %v5769 = vunpack.c.l.b16 %v4535
    %v5770 = vunpack.c.h.b16 %v4535
    %v5771 = vunpack.c.l.b16 %v4536
    %v5772 = vunpack.c.h.b16 %v4536
    %v5773 = vunpack.c.l.b16 %v4537
    %v5774 = vunpack.c.h.b16 %v4537
    %v5775 = vunpack.c.l.b16 %v4538
    %v5776 = vunpack.c.h.b16 %v4538
    %v5777 = vunpack.c.l.b16 %v4539
    %v5778 = vunpack.c.h.b16 %v4539
    %v5779 = vunpack.c.l.b16 %v4540
    %v5780 = vunpack.c.h.b16 %v4540
    %v5781 = vunpack.c.l.b16 %v4541
    %v5782 = vunpack.c.h.b16 %v4541
    %v5783 = vunpack.c.l.b16 %v4542
    %v5784 = vunpack.c.h.b16 %v4542
    %v5785 = vunpack.c.l.b16 %v4543
    %v5786 = vunpack.c.h.b16 %v4543
    %v5787 = vunpack.c.l.b16 %v4544
    %v5788 = vunpack.c.h.b16 %v4544
    %v5789 = vunpack.c.l.b16 %v4545
    %v5790 = vunpack.c.h.b16 %v4545
    %v5791 = vunpack.c.l.b16 %v4546
    %v5792 = vunpack.c.h.b16 %v4546
    %v5793 = vunpack.c.l.b16 %v4547
    %v5794 = vunpack.c.h.b16 %v4547
    %v5795 = vunpack.c.l.b16 %v4548
    %v5796 = vunpack.c.h.b16 %v4548
    %v5797 = vunpack.c.l.b16 %v4549
    %v5798 = vunpack.c.h.b16 %v4549
    %v5799 = vunpack.c.l.b16 %v4550
    %v5800 = vunpack.c.h.b16 %v4550
    %v5801 = vunpack.c.l.b16 %v4551
    %v5802 = vunpack.c.h.b16 %v4551
    %v5803 = vunpack.c.l.b16 %v4552
    %v5804 = vunpack.c.h.b16 %v4552
    %v5805 = vunpack.c.l.b16 %v4553
    %v5806 = vunpack.c.h.b16 %v4553
    %v5807 = vunpack.c.l.b16 %v4554
    %v5808 = vunpack.c.h.b16 %v4554
    %v5809 = vunpack.c.l.b16 %v4555
    %v5810 = vunpack.c.h.b16 %v4555
    %v5811 = vunpack.c.l.b16 %v4556
    %v5812 = vunpack.c.h.b16 %v4556
    %v5813 = vunpack.c.l.b16 %v4557
    %v5814 = vunpack.c.h.b16 %v4557
    %v5815 = vunpack.c.l.b16 %v4558
    %v5816 = vunpack.c.h.b16 %v4558
    %v5817 = vunpack.c.l.b16 %v4559
    %v5818 = vunpack.c.h.b16 %v4559
    %v5819 = vunpack.c.l.b16 %v4560
    %v5820 = vunpack.c.h.b16 %v4560
    %v5821 = vunpack.c.l.b16 %v4561
    %v5822 = vunpack.c.h.b16 %v4561
    %v5823 = vunpack.c.l.b16 %v4562
    %v5824 = vunpack.c.h.b16 %v4562
    %v5825 = vunpack.c.l.b16 %v4563
    %v5826 = vunpack.c.h.b16 %v4563
    %v5827 = vunpack.c.l.b16 %v4564
    %v5828 = vunpack.c.h.b16 %v4564
    %v5829 = vunpack.c.l.b16 %v4565
    %v5830 = vunpack.c.h.b16 %v4565
    %v5831 = vunpack.c.l.b16 %v4566
    %v5832 = vunpack.c.h.b16 %v4566
    %v5833 = vunpack.c.l.b16 %v4567
    %v5834 = vunpack.c.h.b16 %v4567
    %v5835 = vunpack.c.l.b16 %v4568
    %v5836 = vunpack.c.h.b16 %v4568
    %v5837 = vunpack.c.l.b16 %v4569
    %v5838 = vunpack.c.h.b16 %v4569
    %v5839 = vunpack.c.l.b16 %v4570
    %v5840 = vunpack.c.h.b16 %v4570
    %v5841 = vunpack.c.l.b16 %v4571
    %v5842 = vunpack.c.h.b16 %v4571
    %v5843 = vunpack.c.l.b16 %v4572
    %v5844 = vunpack.c.h.b16 %v4572
    %v5845 = vunpack.c.l.b16 %v4573
    %v5846 = vunpack.c.h.b16 %v4573
    %v5847 = vunpack.c.l.b16 %v4574
    %v5848 = vunpack.c.h.b16 %v4574
    %v5849 = vunpack.c.l.b16 %v4575
    %v5850 = vunpack.c.h.b16 %v4575
    %v5851 = vunpack.c.l.b16 %v4576
    %v5852 = vunpack.c.h.b16 %v4576
    %v5853 = vunpack.c.l.b16 %v4577
    %v5854 = vunpack.c.h.b16 %v4577
    %v5855 = vunpack.c.l.b16 %v4578
    %v5856 = vunpack.c.h.b16 %v4578
    %v5857 = vunpack.c.l.b16 %v4579
    %v5858 = vunpack.c.h.b16 %v4579
    %v5859 = vunpack.c.l.b16 %v4580
    %v5860 = vunpack.c.h.b16 %v4580
    %v5861 = vunpack.c.l.b16 %v4581
    %v5862 = vunpack.c.h.b16 %v4581
    %v5863 = vunpack.c.l.b16 %v4582
    %v5864 = vunpack.c.h.b16 %v4582
    %v5865 = vunpack.c.l.b16 %v4583
    %v5866 = vunpack.c.h.b16 %v4583
    %v5867 = vunpack.c.l.b16 %v4584
    %v5868 = vunpack.c.h.b16 %v4584
    %v5869 = vunpack.c.l.b16 %v4585
    %v5870 = vunpack.c.h.b16 %v4585
    %v5871 = vunpack.c.l.b16 %v4586
    %v5872 = vunpack.c.h.b16 %v4586
    %v5873 = vunpack.c.l.b16 %v4587
    %v5874 = vunpack.c.h.b16 %v4587
    %v5875 = vunpack.c.l.b16 %v4588
    %v5876 = vunpack.c.h.b16 %v4588
    %v5877 = vunpack.c.l.b16 %v4589
    %v5878 = vunpack.c.h.b16 %v4589
    %v5879 = vunpack.c.l.b16 %v4590
    %v5880 = vunpack.c.h.b16 %v4590
    %v5881 = vunpack.c.l.b16 %v4591
    %v5882 = vunpack.c.h.b16 %v4591
    %v5883 = vunpack.c.l.b16 %v4592
    %v5884 = vunpack.c.h.b16 %v4592
    %v5885 = vunpack.c.l.b16 %v4593
    %v5886 = vunpack.c.h.b16 %v4593
    %v5887 = vunpack.c.l.b16 %v4594
    %v5888 = vunpack.c.h.b16 %v4594
    %v5889 = vunpack.c.l.b16 %v4595
    %v5890 = vunpack.c.h.b16 %v4595
    %v5891 = vunpack.c.l.b16 %v4596
    %v5892 = vunpack.c.h.b16 %v4596
    %v5893 = vunpack.c.l.b16 %v4597
    %v5894 = vunpack.c.h.b16 %v4597
    %v5895 = vunpack.c.l.b16 %v4598
    %v5896 = vunpack.c.h.b16 %v4598
    %v5897 = vunpack.c.l.b16 %v4599
    %v5898 = vunpack.c.h.b16 %v4599
    %v5899 = vunpack.c.l.b16 %v4600
    %v5900 = vunpack.c.h.b16 %v4600
    %v5901 = vunpack.c.l.b16 %v4601
    %v5902 = vunpack.c.h.b16 %v4601
    %v5903 = vunpack.c.l.b16 %v4602
    %v5904 = vunpack.c.h.b16 %v4602
    %v5905 = vunpack.c.l.b16 %v4603
    %v5906 = vunpack.c.h.b16 %v4603
    %v5907 = vunpack.c.l.b16 %v4604
    %v5908 = vunpack.c.h.b16 %v4604
    %v5909 = vunpack.c.l.b16 %v4605
    %v5910 = vunpack.c.h.b16 %v4605
    %v5911 = vunpack.c.l.b16 %v4606
    %v5912 = vunpack.c.h.b16 %v4606
    %v5913 = vunpack.c.l.b16 %v4607
    %v5914 = vunpack.c.h.b16 %v4607
    %v5915 = vunpack.c.l.b16 %v4608
    %v5916 = vunpack.c.h.b16 %v4608
    %v5917 = vunpack.c.l.b16 %v4609
    %v5918 = vunpack.c.h.b16 %v4609
    %v5919 = vunpack.c.l.b16 %v4610
    %v5920 = vunpack.c.h.b16 %v4610
    %v5921 = vunpack.c.l.b16 %v4611
    %v5922 = vunpack.c.h.b16 %v4611
    %v5923 = vunpack.c.l.b16 %v4612
    %v5924 = vunpack.c.h.b16 %v4612
    %v5925 = vunpack.c.l.b16 %v4613
    %v5926 = vunpack.c.h.b16 %v4613
    %v5927 = vunpack.c.l.b16 %v4614
    %v5928 = vunpack.c.h.b16 %v4614
    %v5929 = vunpack.c.l.b16 %v4615
    %v5930 = vunpack.c.h.b16 %v4615
    %v5931 = vunpack.c.l.b16 %v4616
    %v5932 = vunpack.c.h.b16 %v4616
    %v5933 = vunpack.c.l.b16 %v4617
    %v5934 = vunpack.c.h.b16 %v4617
    %v5935 = vunpack.c.l.b16 %v4618
    %v5936 = vunpack.c.h.b16 %v4618
    %v5937 = vunpack.c.l.b16 %v4619
    %v5938 = vunpack.c.h.b16 %v4619
    %v5939 = vunpack.c.l.b16 %v4620
    %v5940 = vunpack.c.h.b16 %v4620
    %v5941 = vunpack.c.l.b16 %v4621
    %v5942 = vunpack.c.h.b16 %v4621
    %v5943 = vunpack.c.l.b16 %v4622
    %v5944 = vunpack.c.h.b16 %v4622
    %v5945 = vunpack.c.l.b16 %v4623
    %v5946 = vunpack.c.h.b16 %v4623
    %v5947 = vunpack.c.l.b16 %v4624
    %v5948 = vunpack.c.h.b16 %v4624
    %v5949 = vunpack.c.l.b16 %v4625
    %v5950 = vunpack.c.h.b16 %v4625
    %v5951 = vunpack.c.l.b16 %v4626
    %v5952 = vunpack.c.h.b16 %v4626
    %v5953 = vunpack.c.l.b16 %v4627
    %v5954 = vunpack.c.h.b16 %v4627
    %v5955 = vunpack.c.l.b16 %v4628
    %v5956 = vunpack.c.h.b16 %v4628
    %v5957 = vunpack.c.l.b16 %v4629
    %v5958 = vunpack.c.h.b16 %v4629
    %v5959 = vunpack.c.l.b16 %v4630
    %v5960 = vunpack.c.h.b16 %v4630
    %v5961 = vunpack.c.l.b16 %v4631
    %v5962 = vunpack.c.h.b16 %v4631
    %v5963 = vunpack.c.l.b16 %v4632
    %v5964 = vunpack.c.h.b16 %v4632
    %v5965 = vunpack.c.l.b16 %v4633
    %v5966 = vunpack.c.h.b16 %v4633
    %v5967 = vunpack.c.l.b16 %v4634
    %v5968 = vunpack.c.h.b16 %v4634
    %v5969 = vunpack.c.l.b16 %v4635
    %v5970 = vunpack.c.h.b16 %v4635
    %v5971 = vunpack.c.l.b16 %v4636
    %v5972 = vunpack.c.h.b16 %v4636
    %v5973 = vunpack.c.l.b16 %v4637
    %v5974 = vunpack.c.h.b16 %v4637
    %v5975 = vunpack.c.l.b16 %v4638
    %v5976 = vunpack.c.h.b16 %v4638
    %v5977 = vunpack.c.l.b16 %v4639
    %v5978 = vunpack.c.h.b16 %v4639
    %v5979 = vunpack.c.l.b16 %v4640
    %v5980 = vunpack.c.h.b16 %v4640
    %v5981 = vunpack.c.l.b16 %v4641
    %v5982 = vunpack.c.h.b16 %v4641
    %v5983 = vunpack.c.l.b16 %v4642
    %v5984 = vunpack.c.h.b16 %v4642
    %v5985 = vunpack.c.l.b16 %v4643
    %v5986 = vunpack.c.h.b16 %v4643
    %v5987 = vunpack.c.l.b16 %v4644
    %v5988 = vunpack.c.h.b16 %v4644
    %v5989 = vunpack.c.l.b16 %v4645
    %v5990 = vunpack.c.h.b16 %v4645
    %v5991 = vunpack.c.l.b16 %v4646
    %v5992 = vunpack.c.h.b16 %v4646
    %v5993 = vunpack.c.l.b16 %v4647
    %v5994 = vunpack.c.h.b16 %v4647
    %v5995 = vunpack.c.l.b16 %v4648
    %v5996 = vunpack.c.h.b16 %v4648
    %v5997 = vunpack.c.l.b16 %v4649
    %v5998 = vunpack.c.h.b16 %v4649
    %v5999 = vunpack.c.l.b16 %v4650
    %v6000 = vunpack.c.h.b16 %v4650
    %v6001 = vunpack.c.l.b16 %v4651
    %v6002 = vunpack.c.h.b16 %v4651
    %v6003 = vunpack.c.l.b16 %v4652
    %v6004 = vunpack.c.h.b16 %v4652
    %v6005 = vunpack.c.l.b16 %v4653
    %v6006 = vunpack.c.h.b16 %v4653
    %v6007 = vunpack.c.l.b16 %v4654
    %v6008 = vunpack.c.h.b16 %v4654
    %v6009 = vunpack.c.l.b16 %v4655
    %v6010 = vunpack.c.h.b16 %v4655
    %v6011 = vunpack.c.l.b16 %v4656
    %v6012 = vunpack.c.h.b16 %v4656
    %v6013 = vunpack.c.l.b16 %v4657
    %v6014 = vunpack.c.h.b16 %v4657
    %v6015 = vunpack.c.l.b16 %v4658
    %v6016 = vunpack.c.h.b16 %v4658
    %v6017 = vunpack.c.l.b16 %v4659
    %v6018 = vunpack.c.h.b16 %v4659
    %v6019 = vunpack.c.l.b16 %v4660
    %v6020 = vunpack.c.h.b16 %v4660
    %v6021 = vunpack.c.l.b16 %v4661
    %v6022 = vunpack.c.h.b16 %v4661
    %v6023 = vunpack.c.l.b16 %v4662
    %v6024 = vunpack.c.h.b16 %v4662
    %v6025 = vunpack.c.l.b16 %v4663
    %v6026 = vunpack.c.h.b16 %v4663
    %v6027 = vunpack.c.l.b16 %v4664
    %v6028 = vunpack.c.h.b16 %v4664
    %v6029 = vunpack.c.l.b16 %v4665
    %v6030 = vunpack.c.h.b16 %v4665
    %v6031 = vunpack.c.l.b16 %v4666
    %v6032 = vunpack.c.h.b16 %v4666
    %v6033 = vunpack.c.l.b16 %v4667
    %v6034 = vunpack.c.h.b16 %v4667
    %v6035 = vunpack.c.l.b16 %v4668
    %v6036 = vunpack.c.h.b16 %v4668
    %v6037 = vunpack.c.l.b16 %v4669
    %v6038 = vunpack.c.h.b16 %v4669
    %v6039 = vunpack.c.l.b16 %v4670
    %v6040 = vunpack.c.h.b16 %v4670
    %v6041 = vunpack.c.l.b16 %v4671
    %v6042 = vunpack.c.h.b16 %v4671
    %v6043 = vunpack.c.l.b16 %v4672
    %v6044 = vunpack.c.h.b16 %v4672
    %v6045 = vunpack.c.l.b16 %v4673
    %v6046 = vunpack.c.h.b16 %v4673
    %v6047 = vunpack.c.l.b16 %v4674
    %v6048 = vunpack.c.h.b16 %v4674
    %v6049 = vunpack.c.l.b16 %v4675
    %v6050 = vunpack.c.h.b16 %v4675
    %v6051 = vunpack.c.l.b16 %v4676
    %v6052 = vunpack.c.h.b16 %v4676
    %v6053 = vunpack.c.l.b16 %v4677
    %v6054 = vunpack.c.h.b16 %v4677
    %v6055 = vunpack.c.l.b16 %v4678
    %v6056 = vunpack.c.h.b16 %v4678
    %v6057 = vunpack.c.l.b16 %v4679
    %v6058 = vunpack.c.h.b16 %v4679
    %v6059 = vunpack.c.l.b16 %v4680
    %v6060 = vunpack.c.h.b16 %v4680
    %v6061 = vunpack.c.l.b16 %v4681
    %v6062 = vunpack.c.h.b16 %v4681
    %v6063 = vunpack.c.l.b16 %v4682
    %v6064 = vunpack.c.h.b16 %v4682
    %v6065 = vunpack.c.l.b16 %v4683
    %v6066 = vunpack.c.h.b16 %v4683
    %v6067 = vunpack.c.l.b16 %v4684
    %v6068 = vunpack.c.h.b16 %v4684
    %v6069 = vunpack.c.l.b16 %v4685
    %v6070 = vunpack.c.h.b16 %v4685
    %v6071 = vunpack.c.l.b16 %v4686
    %v6072 = vunpack.c.h.b16 %v4686
    %v6073 = vunpack.c.l.b16 %v4687
    %v6074 = vunpack.c.h.b16 %v4687
    %v6075 = vunpack.c.l.b16 %v4688
    %v6076 = vunpack.c.h.b16 %v4688
    %v6077 = vunpack.c.l.b16 %v4689
    %v6078 = vunpack.c.h.b16 %v4689
    %v6079 = vunpack.c.l.b16 %v4690
    %v6080 = vunpack.c.h.b16 %v4690
    %v6081 = vunpack.c.l.b16 %v4691
    %v6082 = vunpack.c.h.b16 %v4691
    %v6083 = vunpack.c.l.b16 %v4692
    %v6084 = vunpack.c.h.b16 %v4692
    %v6085 = vunpack.c.l.b16 %v4693
    %v6086 = vunpack.c.h.b16 %v4693
    %v6087 = vunpack.c.l.b16 %v4694
    %v6088 = vunpack.c.h.b16 %v4694
    %v6089 = vunpack.c.l.b16 %v4695
    %v6090 = vunpack.c.h.b16 %v4695
    %v6091 = vunpack.c.l.b16 %v4696
    %v6092 = vunpack.c.h.b16 %v4696
    %v6093 = vunpack.c.l.b16 %v4697
    %v6094 = vunpack.c.h.b16 %v4697
    %v6095 = vunpack.c.l.b16 %v4698
    %v6096 = vunpack.c.h.b16 %v4698
    %v6097 = vunpack.c.l.b16 %v4699
    %v6098 = vunpack.c.h.b16 %v4699
    %v6099 = vunpack.c.l.b16 %v4700
    %v6100 = vunpack.c.h.b16 %v4700
    %v6101 = vunpack.c.l.b16 %v4701
    %v6102 = vunpack.c.h.b16 %v4701
    %v6103 = vunpack.c.l.b16 %v4702
    %v6104 = vunpack.c.h.b16 %v4702
    %v6105 = vunpack.c.l.b16 %v4703
    %v6106 = vunpack.c.h.b16 %v4703
    %v6107 = vunpack.c.l.b16 %v4704
    %v6108 = vunpack.c.h.b16 %v4704
    %v6109 = vunpack.c.l.b16 %v4705
    %v6110 = vunpack.c.h.b16 %v4705
    %v6111 = vunpack.c.l.b16 %v4706
    %v6112 = vunpack.c.h.b16 %v4706
    %v6113 = vunpack.c.l.b16 %v4707
    %v6114 = vunpack.c.h.b16 %v4707
    %v6115 = vunpack.c.l.b16 %v4708
    %v6116 = vunpack.c.h.b16 %v4708
    %v6117 = vunpack.c.l.b16 %v4709
    %v6118 = vunpack.c.h.b16 %v4709
    %v6119 = vunpack.c.l.b16 %v4710
    %v6120 = vunpack.c.h.b16 %v4710
    %v6121 = vunpack.c.l.b16 %v4711
    %v6122 = vunpack.c.h.b16 %v4711
    %v6123 = vunpack.c.l.b16 %v4712
    %v6124 = vunpack.c.h.b16 %v4712
    %v6125 = vunpack.c.l.b16 %v4713
    %v6126 = vunpack.c.h.b16 %v4713
    %v6127 = vunpack.c.l.b16 %v4714
    %v6128 = vunpack.c.h.b16 %v4714
    %v6129 = vunpack.c.l.b16 %v4715
    %v6130 = vunpack.c.h.b16 %v4715
    %v6131 = vunpack.c.l.b16 %v4716
    %v6132 = vunpack.c.h.b16 %v4716
    %v6133 = vunpack.c.l.b16 %v4717
    %v6134 = vunpack.c.h.b16 %v4717
    %v6135 = vunpack.c.l.b16 %v4718
    %v6136 = vunpack.c.h.b16 %v4718
    %v6137 = vunpack.c.l.b16 %v4719
    %v6138 = vunpack.c.h.b16 %v4719
    %v6139 = vunpack.c.l.b16 %v4720
    %v6140 = vunpack.c.h.b16 %v4720
    %v6141 = vunpack.c.l.b16 %v4721
    %v6142 = vunpack.c.h.b16 %v4721
    %v6143 = vunpack.c.l.b16 %v4722
    %v6144 = vunpack.c.h.b16 %v4722
    %v6145 = vunpack.c.l.b16 %v4723
    %v6146 = vunpack.c.h.b16 %v4723
    %v6147 = vunpack.c.l.b16 %v4724
    %v6148 = vunpack.c.h.b16 %v4724
    %v6149 = vunpack.c.l.b16 %v4725
    %v6150 = vunpack.c.h.b16 %v4725
    %v6151 = vunpack.c.l.b16 %v4726
    %v6152 = vunpack.c.h.b16 %v4726
    %v6153 = vunpack.c.l.b16 %v4727
    %v6154 = vunpack.c.h.b16 %v4727
    %v6155 = vunpack.c.l.b16 %v4728
    %v6156 = vunpack.c.h.b16 %v4728
    %v6157 = vunpack.c.l.b16 %v4729
    %v6158 = vunpack.c.h.b16 %v4729
    %v6159 = vunpack.c.l.b16 %v4730
    %v6160 = vunpack.c.h.b16 %v4730
    %v6161 = vunpack.c.l.b16 %v4731
    %v6162 = vunpack.c.h.b16 %v4731
    %v6163 = vunpack.c.l.b16 %v4732
    %v6164 = vunpack.c.h.b16 %v4732
    %v6165 = vunpack.c.l.b16 %v4733
    %v6166 = vunpack.c.h.b16 %v4733
    %v6167 = vunpack.c.l.b16 %v4734
    %v6168 = vunpack.c.h.b16 %v4734
    %v6169 = vunpack.c.l.b16 %v4735
    %v6170 = vunpack.c.h.b16 %v4735
    %v6171 = vunpack.c.l.b16 %v4736
    %v6172 = vunpack.c.h.b16 %v4736
    %v6173 = vunpack.c.l.b16 %v4737
    %v6174 = vunpack.c.h.b16 %v4737
    %v6175 = vunpack.c.l.b16 %v4738
    %v6176 = vunpack.c.h.b16 %v4738
    %v6177 = vunpack.c.l.b16 %v4739
    %v6178 = vunpack.c.h.b16 %v4739
    %v6179 = vunpack.c.l.b16 %v4740
    %v6180 = vunpack.c.h.b16 %v4740
    %v6181 = vunpack.c.l.b16 %v4741
    %v6182 = vunpack.c.h.b16 %v4741
    %v6183 = vunpack.c.l.b16 %v4742
    %v6184 = vunpack.c.h.b16 %v4742
    %v6185 = vunpack.c.l.b16 %v4743
    %v6186 = vunpack.c.h.b16 %v4743
    %v6187 = vunpack.c.l.b16 %v4744
    %v6188 = vunpack.c.h.b16 %v4744
    %v6189 = vunpack.c.l.b16 %v4745
    %v6190 = vunpack.c.h.b16 %v4745
    %v6191 = vunpack.c.l.b16 %v4746
    %v6192 = vunpack.c.h.b16 %v4746
    %v6193 = vunpack.c.l.b16 %v4747
    %v6194 = vunpack.c.h.b16 %v4747
    %v6195 = vunpack.c.l.b16 %v4748
    %v6196 = vunpack.c.h.b16 %v4748
    %v6197 = vunpack.c.l.b16 %v4749
    %v6198 = vunpack.c.h.b16 %v4749
    %v6199 = vunpack.c.l.b16 %v4750
    %v6200 = vunpack.c.h.b16 %v4750
    %v6201 = vunpack.c.l.b16 %v4751
    %v6202 = vunpack.c.h.b16 %v4751
    %v6203 = vunpack.c.l.b16 %v4752
    %v6204 = vunpack.c.h.b16 %v4752
    %v6205 = vunpack.c.l.b16 %v4753
    %v6206 = vunpack.c.h.b16 %v4753
    %v6207 = vunpack.c.l.b16 %v4754
    %v6208 = vunpack.c.h.b16 %v4754
    %v6209 = vunpack.c.l.b16 %v4755
    %v6210 = vunpack.c.h.b16 %v4755
    %v6211 = vunpack.c.l.b16 %v4756
    %v6212 = vunpack.c.h.b16 %v4756
    %v6213 = vunpack.c.l.b16 %v4757
    %v6214 = vunpack.c.h.b16 %v4757
    %v6215 = vunpack.c.l.b16 %v4758
    %v6216 = vunpack.c.h.b16 %v4758
    %v6217 = vunpack.c.l.b16 %v4759
    %v6218 = vunpack.c.h.b16 %v4759
    %v6219 = vunpack.c.l.b16 %v4760
    %v6220 = vunpack.c.h.b16 %v4760
    %v6221 = vunpack.c.l.b16 %v4761
    %v6222 = vunpack.c.h.b16 %v4761
    %v6223 = vunpack.c.l.b16 %v4762
    %v6224 = vunpack.c.h.b16 %v4762
    %v6225 = vunpack.c.l.b16 %v4763
    %v6226 = vunpack.c.h.b16 %v4763
    %v6227 = vunpack.c.l.b16 %v4764
    %v6228 = vunpack.c.h.b16 %v4764
    %v6229 = vunpack.c.l.b16 %v4765
    %v6230 = vunpack.c.h.b16 %v4765
    %v6231 = vunpack.c.l.b16 %v4766
    %v6232 = vunpack.c.h.b16 %v4766
    %v6233 = vunpack.c.l.b16 %v4767
    %v6234 = vunpack.c.h.b16 %v4767
    %v6235 = vunpack.c.l.b16 %v4768
    %v6236 = vunpack.c.h.b16 %v4768
    %v6237 = vunpack.c.l.b16 %v4769
    %v6238 = vunpack.c.h.b16 %v4769
    %v6239 = vunpack.c.l.b16 %v4770
    %v6240 = vunpack.c.h.b16 %v4770
    %v6241 = vunpack.c.l.b16 %v4771
    %v6242 = vunpack.c.h.b16 %v4771
    %v6243 = vunpack.c.l.b16 %v4772
    %v6244 = vunpack.c.h.b16 %v4772
    %v6245 = vunpack.c.l.b16 %v4773
    %v6246 = vunpack.c.h.b16 %v4773
    %v6247 = vunpack.c.l.b16 %v4774
    %v6248 = vunpack.c.h.b16 %v4774
    %v6249 = vunpack.c.l.b16 %v4775
    %v6250 = vunpack.c.h.b16 %v4775
    %v6251 = vunpack.c.l.b16 %v4776
    %v6252 = vunpack.c.h.b16 %v4776
    %v6253 = vunpack.c.l.b16 %v4777
    %v6254 = vunpack.c.h.b16 %v4777
    %v6255 = vunpack.c.l.b16 %v4778
    %v6256 = vunpack.c.h.b16 %v4778
    %v6257 = vunpack.c.l.b16 %v4779
    %v6258 = vunpack.c.h.b16 %v4779
    %v6259 = vunpack.c.l.b16 %v4780
    %v6260 = vunpack.c.h.b16 %v4780
    %v6261 = vunpack.c.l.b16 %v4781
    %v6262 = vunpack.c.h.b16 %v4781
    %v6263 = vunpack.c.l.b16 %v4782
    %v6264 = vunpack.c.h.b16 %v4782
    %v6265 = vunpack.c.l.b16 %v4783
    %v6266 = vunpack.c.h.b16 %v4783
    %v6267 = vunpack.c.l.b16 %v4784
    %v6268 = vunpack.c.h.b16 %v4784
    %v6269 = vunpack.c.l.b16 %v4785
    %v6270 = vunpack.c.h.b16 %v4785
    %v6271 = vunpack.c.l.b16 %v4786
    %v6272 = vunpack.c.h.b16 %v4786
    %v6273 = vunpack.c.l.b16 %v4787
    %v6274 = vunpack.c.h.b16 %v4787
    %v6275 = vunpack.c.l.b16 %v4788
    %v6276 = vunpack.c.h.b16 %v4788
    %v6277 = vunpack.c.l.b16 %v4789
    %v6278 = vunpack.c.h.b16 %v4789
    %v6279 = vunpack.c.l.b16 %v4790
    %v6280 = vunpack.c.h.b16 %v4790
    %v6281 = vunpack.c.l.b16 %v4791
    %v6282 = vunpack.c.h.b16 %v4791
    %v6283 = vunpack.c.l.b16 %v4792
    %v6284 = vunpack.c.h.b16 %v4792
    %v6285 = vunpack.c.l.b16 %v4793
    %v6286 = vunpack.c.h.b16 %v4793
    %v6287 = vunpack.c.l.b16 %v4794
    %v6288 = vunpack.c.h.b16 %v4794
    %v6289 = vunpack.c.l.b16 %v4795
    %v6290 = vunpack.c.h.b16 %v4795
    %v6291 = vunpack.c.l.b16 %v4796
    %v6292 = vunpack.c.h.b16 %v4796
    %v6293 = vunpack.c.l.b16 %v4797
    %v6294 = vunpack.c.h.b16 %v4797
    %v6295 = vunpack.c.l.b16 %v4798
    %v6296 = vunpack.c.h.b16 %v4798
    %v6297 = vunpack.c.l.b16 %v4799
    %v6298 = vunpack.c.h.b16 %v4799
    %v6299 = vunpack.c.l.b16 %v4800
    %v6300 = vunpack.c.h.b16 %v4800
    %v6301 = vunpack.c.l.b16 %v4801
    %v6302 = vunpack.c.h.b16 %v4801
    %v6303 = vunpack.c.l.b16 %v4802
    %v6304 = vunpack.c.h.b16 %v4802
    %v6305 = vunpack.c.l.b16 %v4803
    %v6306 = vunpack.c.h.b16 %v4803
    %v6307 = vunpack.c.l.b16 %v4804
    %v6308 = vunpack.c.h.b16 %v4804
    %v6309 = vunpack.c.l.b16 %v4805
    %v6310 = vunpack.c.h.b16 %v4805
    %v6311 = vunpack.c.l.b16 %v4806
    %v6312 = vunpack.c.h.b16 %v4806
    %v6313 = vunpack.c.l.b16 %v4807
    %v6314 = vunpack.c.h.b16 %v4807
    %v6315 = vunpack.c.l.b16 %v4808
    %v6316 = vunpack.c.h.b16 %v4808
    %v6317 = vunpack.c.l.b16 %v4809
    %v6318 = vunpack.c.h.b16 %v4809
    %v6319 = vunpack.c.l.b16 %v4810
    %v6320 = vunpack.c.h.b16 %v4810
    %v6321 = vunpack.c.l.b16 %v4811
    %v6322 = vunpack.c.h.b16 %v4811
    %v6323 = vunpack.c.l.b16 %v4812
    %v6324 = vunpack.c.h.b16 %v4812
    %v6325 = vunpack.c.l.b16 %v4813
    %v6326 = vunpack.c.h.b16 %v4813
    %v6327 = vunpack.c.l.b16 %v4814
    %v6328 = vunpack.c.h.b16 %v4814
    %v6329 = vunpack.c.l.b16 %v4815
    %v6330 = vunpack.c.h.b16 %v4815
    %v6331 = vunpack.c.l.b16 %v4816
    %v6332 = vunpack.c.h.b16 %v4816
    %v6333 = vunpack.c.l.b16 %v4817
    %v6334 = vunpack.c.h.b16 %v4817
    %v6335 = vunpack.c.l.b16 %v4818
    %v6336 = vunpack.c.h.b16 %v4818
    %v6337 = vunpack.c.l.b16 %v4819
    %v6338 = vunpack.c.h.b16 %v4819
    %v6339 = vunpack.c.l.b16 %v4820
    %v6340 = vunpack.c.h.b16 %v4820
    %v6341 = vunpack.c.l.b16 %v4821
    %v6342 = vunpack.c.h.b16 %v4821
    %v6343 = vunpack.c.l.b16 %v4822
    %v6344 = vunpack.c.h.b16 %v4822
    %v6345 = vunpack.c.l.b16 %v4823
    %v6346 = vunpack.c.h.b16 %v4823
    %v6347 = vunpack.c.l.b16 %v4824
    %v6348 = vunpack.c.h.b16 %v4824
    %v6349 = vunpack.c.l.b16 %v4825
    %v6350 = vunpack.c.h.b16 %v4825
    %v6351 = vunpack.c.l.b16 %v4826
    %v6352 = vunpack.c.h.b16 %v4826
    %v6353 = vunpack.c.l.b16 %v4827
    %v6354 = vunpack.c.h.b16 %v4827
    %v6355 = vunpack.c.l.b16 %v4828
    %v6356 = vunpack.c.h.b16 %v4828
    %v6357 = vunpack.c.l.b16 %v4829
    %v6358 = vunpack.c.h.b16 %v4829
    %v6359 = vunpack.c.l.b16 %v4830
    %v6360 = vunpack.c.h.b16 %v4830
    %v6361 = vunpack.c.l.b16 %v4831
    %v6362 = vunpack.c.h.b16 %v4831
    %v6363 = vunpack.c.l.b16 %v4832
    %v6364 = vunpack.c.h.b16 %v4832
    %v6365 = vunpack.c.l.b16 %v4833
    %v6366 = vunpack.c.h.b16 %v4833
    %v6367 = vunpack.c.l.b16 %v4834
    %v6368 = vunpack.c.h.b16 %v4834
    %v6369 = vunpack.c.l.b16 %v4835
    %v6370 = vunpack.c.h.b16 %v4835
    %v6371 = vunpack.c.l.b16 %v4836
    %v6372 = vunpack.c.h.b16 %v4836
    %v6373 = vunpack.c.l.b16 %v4837
    %v6374 = vunpack.c.h.b16 %v4837
    %v6375 = vunpack.c.l.b16 %v4838
    %v6376 = vunpack.c.h.b16 %v4838
    %v6377 = vunpack.c.l.b16 %v4839
    %v6378 = vunpack.c.h.b16 %v4839
    %v6379 = vunpack.c.l.b16 %v4840
    %v6380 = vunpack.c.h.b16 %v4840
    %v6381 = vunpack.c.l.b16 %v4841
    %v6382 = vunpack.c.h.b16 %v4841
    %v6383 = vunpack.c.l.b16 %v4842
    %v6384 = vunpack.c.h.b16 %v4842
    %v6385 = vunpack.c.l.b16 %v4843
    %v6386 = vunpack.c.h.b16 %v4843
    %v6387 = vunpack.c.l.b16 %v4844
    %v6388 = vunpack.c.h.b16 %v4844
    %v6389 = vunpack.c.l.b16 %v4845
    %v6390 = vunpack.c.h.b16 %v4845
    %v6391 = vunpack.c.l.b16 %v4846
    %v6392 = vunpack.c.h.b16 %v4846
    %v6393 = vunpack.c.l.b16 %v4847
    %v6394 = vunpack.c.h.b16 %v4847
    %v6395 = vunpack.c.l.b16 %v4848
    %v6396 = vunpack.c.h.b16 %v4848
    %v6397 = vunpack.c.l.b16 %v4849
    %v6398 = vunpack.c.h.b16 %v4849
    %v6399 = vunpack.c.l.b16 %v4850
    %v6400 = vunpack.c.h.b16 %v4850
    %v6401 = vunpack.c.l.b16 %v4851
    %v6402 = vunpack.c.h.b16 %v4851
    %v6403 = vunpack.c.l.b16 %v4852
    %v6404 = vunpack.c.h.b16 %v4852
    %v6405 = vunpack.c.l.b16 %v4853
    %v6406 = vunpack.c.h.b16 %v4853
    %v6407 = vunpack.c.l.b16 %v4854
    %v6408 = vunpack.c.h.b16 %v4854
    %v6409 = vpack.c.b16 %v5393, %v5385
    %v6410 = vpack.c.b16 %v5394, %v5386
    %v6411 = vpack.c.b16 %v5395, %v5387
    %v6412 = vpack.c.b16 %v5396, %v5388
    %v6413 = vpack.c.b16 %v5397, %v5389
    %v6414 = vpack.c.b16 %v5398, %v5390
    %v6415 = vpack.c.b16 %v5399, %v5391
    %v6416 = vpack.c.b16 %v5400, %v5392
    %v6417 = vpack.c.b16 %v5409, %v5401
    %v6418 = vpack.c.b16 %v5410, %v5402
    %v6419 = vpack.c.b16 %v5411, %v5403
    %v6420 = vpack.c.b16 %v5412, %v5404
    %v6421 = vpack.c.b16 %v5413, %v5405
    %v6422 = vpack.c.b16 %v5414, %v5406
    %v6423 = vpack.c.b16 %v5415, %v5407
    %v6424 = vpack.c.b16 %v5416, %v5408
    %v6425 = vpack.c.b16 %v5425, %v5417
    %v6426 = vpack.c.b16 %v5426, %v5418
    %v6427 = vpack.c.b16 %v5427, %v5419
    %v6428 = vpack.c.b16 %v5428, %v5420
    %v6429 = vpack.c.b16 %v5429, %v5421
    %v6430 = vpack.c.b16 %v5430, %v5422
    %v6431 = vpack.c.b16 %v5431, %v5423
    %v6432 = vpack.c.b16 %v5432, %v5424
    %v6433 = vpack.c.b16 %v5441, %v5433
    %v6434 = vpack.c.b16 %v5442, %v5434
    %v6435 = vpack.c.b16 %v5443, %v5435
    %v6436 = vpack.c.b16 %v5444, %v5436
    %v6437 = vpack.c.b16 %v5445, %v5437
    %v6438 = vpack.c.b16 %v5446, %v5438
    %v6439 = vpack.c.b16 %v5447, %v5439
    %v6440 = vpack.c.b16 %v5448, %v5440
    %v6441 = vpack.c.b16 %v5457, %v5449
    %v6442 = vpack.c.b16 %v5458, %v5450
    %v6443 = vpack.c.b16 %v5459, %v5451
    %v6444 = vpack.c.b16 %v5460, %v5452
    %v6445 = vpack.c.b16 %v5461, %v5453
    %v6446 = vpack.c.b16 %v5462, %v5454
    %v6447 = vpack.c.b16 %v5463, %v5455
    %v6448 = vpack.c.b16 %v5464, %v5456
    %v6449 = vpack.c.b16 %v5473, %v5465
    %v6450 = vpack.c.b16 %v5474, %v5466
    %v6451 = vpack.c.b16 %v5475, %v5467
    %v6452 = vpack.c.b16 %v5476, %v5468
    %v6453 = vpack.c.b16 %v5477, %v5469
    %v6454 = vpack.c.b16 %v5478, %v5470
    %v6455 = vpack.c.b16 %v5479, %v5471
    %v6456 = vpack.c.b16 %v5480, %v5472
    %v6457 = vpack.c.b16 %v5489, %v5481
    %v6458 = vpack.c.b16 %v5490, %v5482
    %v6459 = vpack.c.b16 %v5491, %v5483
    %v6460 = vpack.c.b16 %v5492, %v5484
    %v6461 = vpack.c.b16 %v5493, %v5485
    %v6462 = vpack.c.b16 %v5494, %v5486
    %v6463 = vpack.c.b16 %v5495, %v5487
    %v6464 = vpack.c.b16 %v5496, %v5488
    %v6465 = vpack.c.b16 %v5505, %v5497
    %v6466 = vpack.c.b16 %v5506, %v5498
    %v6467 = vpack.c.b16 %v5507, %v5499
    %v6468 = vpack.c.b16 %v5508, %v5500
    %v6469 = vpack.c.b16 %v5509, %v5501
    %v6470 = vpack.c.b16 %v5510, %v5502
    %v6471 = vpack.c.b16 %v5511, %v5503
    %v6472 = vpack.c.b16 %v5512, %v5504
    %v6473 = vpack.c.b16 %v5521, %v5513
    %v6474 = vpack.c.b16 %v5522, %v5514
    %v6475 = vpack.c.b16 %v5523, %v5515
    %v6476 = vpack.c.b16 %v5524, %v5516
    %v6477 = vpack.c.b16 %v5525, %v5517
    %v6478 = vpack.c.b16 %v5526, %v5518
    %v6479 = vpack.c.b16 %v5527, %v5519
    %v6480 = vpack.c.b16 %v5528, %v5520
    %v6481 = vpack.c.b16 %v5537, %v5529
    %v6482 = vpack.c.b16 %v5538, %v5530
    %v6483 = vpack.c.b16 %v5539, %v5531
    %v6484 = vpack.c.b16 %v5540, %v5532
    %v6485 = vpack.c.b16 %v5541, %v5533
    %v6486 = vpack.c.b16 %v5542, %v5534
    %v6487 = vpack.c.b16 %v5543, %v5535
    %v6488 = vpack.c.b16 %v5544, %v5536
    %v6489 = vpack.c.b16 %v5553, %v5545
    %v6490 = vpack.c.b16 %v5554, %v5546
    %v6491 = vpack.c.b16 %v5555, %v5547
    %v6492 = vpack.c.b16 %v5556, %v5548
    %v6493 = vpack.c.b16 %v5557, %v5549
    %v6494 = vpack.c.b16 %v5558, %v5550
    %v6495 = vpack.c.b16 %v5559, %v5551
    %v6496 = vpack.c.b16 %v5560, %v5552
    %v6497 = vpack.c.b16 %v5569, %v5561
    %v6498 = vpack.c.b16 %v5570, %v5562
    %v6499 = vpack.c.b16 %v5571, %v5563
    %v6500 = vpack.c.b16 %v5572, %v5564
    %v6501 = vpack.c.b16 %v5573, %v5565
    %v6502 = vpack.c.b16 %v5574, %v5566
    %v6503 = vpack.c.b16 %v5575, %v5567
    %v6504 = vpack.c.b16 %v5576, %v5568
    %v6505 = vpack.c.b16 %v5585, %v5577
    %v6506 = vpack.c.b16 %v5586, %v5578
    %v6507 = vpack.c.b16 %v5587, %v5579
    %v6508 = vpack.c.b16 %v5588, %v5580
    %v6509 = vpack.c.b16 %v5589, %v5581
    %v6510 = vpack.c.b16 %v5590, %v5582
    %v6511 = vpack.c.b16 %v5591, %v5583
    %v6512 = vpack.c.b16 %v5592, %v5584
    %v6513 = vpack.c.b16 %v5601, %v5593
    %v6514 = vpack.c.b16 %v5602, %v5594
    %v6515 = vpack.c.b16 %v5603, %v5595
    %v6516 = vpack.c.b16 %v5604, %v5596
    %v6517 = vpack.c.b16 %v5605, %v5597
    %v6518 = vpack.c.b16 %v5606, %v5598
    %v6519 = vpack.c.b16 %v5607, %v5599
    %v6520 = vpack.c.b16 %v5608, %v5600
    %v6521 = vpack.c.b16 %v5617, %v5609
    %v6522 = vpack.c.b16 %v5618, %v5610
    %v6523 = vpack.c.b16 %v5619, %v5611
    %v6524 = vpack.c.b16 %v5620, %v5612
    %v6525 = vpack.c.b16 %v5621, %v5613
    %v6526 = vpack.c.b16 %v5622, %v5614
    %v6527 = vpack.c.b16 %v5623, %v5615
    %v6528 = vpack.c.b16 %v5624, %v5616
    %v6529 = vpack.c.b16 %v5633, %v5625
    %v6530 = vpack.c.b16 %v5634, %v5626
    %v6531 = vpack.c.b16 %v5635, %v5627
    %v6532 = vpack.c.b16 %v5636, %v5628
    %v6533 = vpack.c.b16 %v5637, %v5629
    %v6534 = vpack.c.b16 %v5638, %v5630
    %v6535 = vpack.c.b16 %v5639, %v5631
    %v6536 = vpack.c.b16 %v5640, %v5632
    %v6537 = vpack.c.b16 %v5649, %v5641
    %v6538 = vpack.c.b16 %v5650, %v5642
    %v6539 = vpack.c.b16 %v5651, %v5643
    %v6540 = vpack.c.b16 %v5652, %v5644
    %v6541 = vpack.c.b16 %v5653, %v5645
    %v6542 = vpack.c.b16 %v5654, %v5646
    %v6543 = vpack.c.b16 %v5655, %v5647
    %v6544 = vpack.c.b16 %v5656, %v5648
    %v6545 = vpack.c.b16 %v5665, %v5657
    %v6546 = vpack.c.b16 %v5666, %v5658
    %v6547 = vpack.c.b16 %v5667, %v5659
    %v6548 = vpack.c.b16 %v5668, %v5660
    %v6549 = vpack.c.b16 %v5669, %v5661
    %v6550 = vpack.c.b16 %v5670, %v5662
    %v6551 = vpack.c.b16 %v5671, %v5663
    %v6552 = vpack.c.b16 %v5672, %v5664
    %v6553 = vpack.c.b16 %v5681, %v5673
    %v6554 = vpack.c.b16 %v5682, %v5674
    %v6555 = vpack.c.b16 %v5683, %v5675
    %v6556 = vpack.c.b16 %v5684, %v5676
    %v6557 = vpack.c.b16 %v5685, %v5677
    %v6558 = vpack.c.b16 %v5686, %v5678
    %v6559 = vpack.c.b16 %v5687, %v5679
    %v6560 = vpack.c.b16 %v5688, %v5680
    %v6561 = vpack.c.b16 %v5697, %v5689
    %v6562 = vpack.c.b16 %v5698, %v5690
    %v6563 = vpack.c.b16 %v5699, %v5691
    %v6564 = vpack.c.b16 %v5700, %v5692
    %v6565 = vpack.c.b16 %v5701, %v5693
    %v6566 = vpack.c.b16 %v5702, %v5694
    %v6567 = vpack.c.b16 %v5703, %v5695
    %v6568 = vpack.c.b16 %v5704, %v5696
    %v6569 = vpack.c.b16 %v5713, %v5705
    %v6570 = vpack.c.b16 %v5714, %v5706
    %v6571 = vpack.c.b16 %v5715, %v5707
    %v6572 = vpack.c.b16 %v5716, %v5708
    %v6573 = vpack.c.b16 %v5717, %v5709
    %v6574 = vpack.c.b16 %v5718, %v5710
    %v6575 = vpack.c.b16 %v5719, %v5711
    %v6576 = vpack.c.b16 %v5720, %v5712
    %v6577 = vpack.c.b16 %v5729, %v5721
    %v6578 = vpack.c.b16 %v5730, %v5722
    %v6579 = vpack.c.b16 %v5731, %v5723
    %v6580 = vpack.c.b16 %v5732, %v5724
    %v6581 = vpack.c.b16 %v5733, %v5725
    %v6582 = vpack.c.b16 %v5734, %v5726
    %v6583 = vpack.c.b16 %v5735, %v5727
    %v6584 = vpack.c.b16 %v5736, %v5728
    %v6585 = vpack.c.b16 %v5745, %v5737
    %v6586 = vpack.c.b16 %v5746, %v5738
    %v6587 = vpack.c.b16 %v5747, %v5739
    %v6588 = vpack.c.b16 %v5748, %v5740
    %v6589 = vpack.c.b16 %v5749, %v5741
    %v6590 = vpack.c.b16 %v5750, %v5742
    %v6591 = vpack.c.b16 %v5751, %v5743
    %v6592 = vpack.c.b16 %v5752, %v5744
    %v6593 = vpack.c.b16 %v5761, %v5753
    %v6594 = vpack.c.b16 %v5762, %v5754
    %v6595 = vpack.c.b16 %v5763, %v5755
    %v6596 = vpack.c.b16 %v5764, %v5756
    %v6597 = vpack.c.b16 %v5765, %v5757
    %v6598 = vpack.c.b16 %v5766, %v5758
    %v6599 = vpack.c.b16 %v5767, %v5759
    %v6600 = vpack.c.b16 %v5768, %v5760
    %v6601 = vpack.c.b16 %v5777, %v5769
    %v6602 = vpack.c.b16 %v5778, %v5770
    %v6603 = vpack.c.b16 %v5779, %v5771
    %v6604 = vpack.c.b16 %v5780, %v5772
    %v6605 = vpack.c.b16 %v5781, %v5773
    %v6606 = vpack.c.b16 %v5782, %v5774
    %v6607 = vpack.c.b16 %v5783, %v5775
    %v6608 = vpack.c.b16 %v5784, %v5776
    %v6609 = vpack.c.b16 %v5793, %v5785
    %v6610 = vpack.c.b16 %v5794, %v5786
    %v6611 = vpack.c.b16 %v5795, %v5787
    %v6612 = vpack.c.b16 %v5796, %v5788
    %v6613 = vpack.c.b16 %v5797, %v5789
    %v6614 = vpack.c.b16 %v5798, %v5790
    %v6615 = vpack.c.b16 %v5799, %v5791
    %v6616 = vpack.c.b16 %v5800, %v5792
    %v6617 = vpack.c.b16 %v5809, %v5801
    %v6618 = vpack.c.b16 %v5810, %v5802
    %v6619 = vpack.c.b16 %v5811, %v5803
    %v6620 = vpack.c.b16 %v5812, %v5804
    %v6621 = vpack.c.b16 %v5813, %v5805
    %v6622 = vpack.c.b16 %v5814, %v5806
    %v6623 = vpack.c.b16 %v5815, %v5807
    %v6624 = vpack.c.b16 %v5816, %v5808
    %v6625 = vpack.c.b16 %v5825, %v5817
    %v6626 = vpack.c.b16 %v5826, %v5818
    %v6627 = vpack.c.b16 %v5827, %v5819
    %v6628 = vpack.c.b16 %v5828, %v5820
    %v6629 = vpack.c.b16 %v5829, %v5821
    %v6630 = vpack.c.b16 %v5830, %v5822
    %v6631 = vpack.c.b16 %v5831, %v5823
    %v6632 = vpack.c.b16 %v5832, %v5824
    %v6633 = vpack.c.b16 %v5841, %v5833
    %v6634 = vpack.c.b16 %v5842, %v5834
    %v6635 = vpack.c.b16 %v5843, %v5835
    %v6636 = vpack.c.b16 %v5844, %v5836
    %v6637 = vpack.c.b16 %v5845, %v5837
    %v6638 = vpack.c.b16 %v5846, %v5838
    %v6639 = vpack.c.b16 %v5847, %v5839
    %v6640 = vpack.c.b16 %v5848, %v5840
    %v6641 = vpack.c.b16 %v5857, %v5849
    %v6642 = vpack.c.b16 %v5858, %v5850
    %v6643 = vpack.c.b16 %v5859, %v5851
    %v6644 = vpack.c.b16 %v5860, %v5852
    %v6645 = vpack.c.b16 %v5861, %v5853
    %v6646 = vpack.c.b16 %v5862, %v5854
    %v6647 = vpack.c.b16 %v5863, %v5855
    %v6648 = vpack.c.b16 %v5864, %v5856
    %v6649 = vpack.c.b16 %v5873, %v5865
    %v6650 = vpack.c.b16 %v5874, %v5866
    %v6651 = vpack.c.b16 %v5875, %v5867
    %v6652 = vpack.c.b16 %v5876, %v5868
    %v6653 = vpack.c.b16 %v5877, %v5869
    %v6654 = vpack.c.b16 %v5878, %v5870
    %v6655 = vpack.c.b16 %v5879, %v5871
    %v6656 = vpack.c.b16 %v5880, %v5872
    %v6657 = vpack.c.b16 %v5889, %v5881
    %v6658 = vpack.c.b16 %v5890, %v5882
    %v6659 = vpack.c.b16 %v5891, %v5883
    %v6660 = vpack.c.b16 %v5892, %v5884
    %v6661 = vpack.c.b16 %v5893, %v5885
    %v6662 = vpack.c.b16 %v5894, %v5886
    %v6663 = vpack.c.b16 %v5895, %v5887
    %v6664 = vpack.c.b16 %v5896, %v5888
    %v6665 = vpack.c.b16 %v5905, %v5897
    %v6666 = vpack.c.b16 %v5906, %v5898
    %v6667 = vpack.c.b16 %v5907, %v5899
    %v6668 = vpack.c.b16 %v5908, %v5900
    %v6669 = vpack.c.b16 %v5909, %v5901
    %v6670 = vpack.c.b16 %v5910, %v5902
    %v6671 = vpack.c.b16 %v5911, %v5903
    %v6672 = vpack.c.b16 %v5912, %v5904
    %v6673 = vpack.c.b16 %v5921, %v5913
    %v6674 = vpack.c.b16 %v5922, %v5914
    %v6675 = vpack.c.b16 %v5923, %v5915
    %v6676 = vpack.c.b16 %v5924, %v5916
    %v6677 = vpack.c.b16 %v5925, %v5917
    %v6678 = vpack.c.b16 %v5926, %v5918
    %v6679 = vpack.c.b16 %v5927, %v5919
    %v6680 = vpack.c.b16 %v5928, %v5920
    %v6681 = vpack.c.b16 %v5937, %v5929
    %v6682 = vpack.c.b16 %v5938, %v5930
    %v6683 = vpack.c.b16 %v5939, %v5931
    %v6684 = vpack.c.b16 %v5940, %v5932
    %v6685 = vpack.c.b16 %v5941, %v5933
    %v6686 = vpack.c.b16 %v5942, %v5934
    %v6687 = vpack.c.b16 %v5943, %v5935
    %v6688 = vpack.c.b16 %v5944, %v5936
    %v6689 = vpack.c.b16 %v5953, %v5945
    %v6690 = vpack.c.b16 %v5954, %v5946
    %v6691 = vpack.c.b16 %v5955, %v5947
    %v6692 = vpack.c.b16 %v5956, %v5948
    %v6693 = vpack.c.b16 %v5957, %v5949
    %v6694 = vpack.c.b16 %v5958, %v5950
    %v6695 = vpack.c.b16 %v5959, %v5951
    %v6696 = vpack.c.b16 %v5960, %v5952
    %v6697 = vpack.c.b16 %v5969, %v5961
    %v6698 = vpack.c.b16 %v5970, %v5962
    %v6699 = vpack.c.b16 %v5971, %v5963
    %v6700 = vpack.c.b16 %v5972, %v5964
    %v6701 = vpack.c.b16 %v5973, %v5965
    %v6702 = vpack.c.b16 %v5974, %v5966
    %v6703 = vpack.c.b16 %v5975, %v5967
    %v6704 = vpack.c.b16 %v5976, %v5968
    %v6705 = vpack.c.b16 %v5985, %v5977
    %v6706 = vpack.c.b16 %v5986, %v5978
    %v6707 = vpack.c.b16 %v5987, %v5979
    %v6708 = vpack.c.b16 %v5988, %v5980
    %v6709 = vpack.c.b16 %v5989, %v5981
    %v6710 = vpack.c.b16 %v5990, %v5982
    %v6711 = vpack.c.b16 %v5991, %v5983
    %v6712 = vpack.c.b16 %v5992, %v5984
    %v6713 = vpack.c.b16 %v6001, %v5993
    %v6714 = vpack.c.b16 %v6002, %v5994
    %v6715 = vpack.c.b16 %v6003, %v5995
    %v6716 = vpack.c.b16 %v6004, %v5996
    %v6717 = vpack.c.b16 %v6005, %v5997
    %v6718 = vpack.c.b16 %v6006, %v5998
    %v6719 = vpack.c.b16 %v6007, %v5999
    %v6720 = vpack.c.b16 %v6008, %v6000
    %v6721 = vpack.c.b16 %v6017, %v6009
    %v6722 = vpack.c.b16 %v6018, %v6010
    %v6723 = vpack.c.b16 %v6019, %v6011
    %v6724 = vpack.c.b16 %v6020, %v6012
    %v6725 = vpack.c.b16 %v6021, %v6013
    %v6726 = vpack.c.b16 %v6022, %v6014
    %v6727 = vpack.c.b16 %v6023, %v6015
    %v6728 = vpack.c.b16 %v6024, %v6016
    %v6729 = vpack.c.b16 %v6033, %v6025
    %v6730 = vpack.c.b16 %v6034, %v6026
    %v6731 = vpack.c.b16 %v6035, %v6027
    %v6732 = vpack.c.b16 %v6036, %v6028
    %v6733 = vpack.c.b16 %v6037, %v6029
    %v6734 = vpack.c.b16 %v6038, %v6030
    %v6735 = vpack.c.b16 %v6039, %v6031
    %v6736 = vpack.c.b16 %v6040, %v6032
    %v6737 = vpack.c.b16 %v6049, %v6041
    %v6738 = vpack.c.b16 %v6050, %v6042
    %v6739 = vpack.c.b16 %v6051, %v6043
    %v6740 = vpack.c.b16 %v6052, %v6044
    %v6741 = vpack.c.b16 %v6053, %v6045
    %v6742 = vpack.c.b16 %v6054, %v6046
    %v6743 = vpack.c.b16 %v6055, %v6047
    %v6744 = vpack.c.b16 %v6056, %v6048
    %v6745 = vpack.c.b16 %v6065, %v6057
    %v6746 = vpack.c.b16 %v6066, %v6058
    %v6747 = vpack.c.b16 %v6067, %v6059
    %v6748 = vpack.c.b16 %v6068, %v6060
    %v6749 = vpack.c.b16 %v6069, %v6061
    %v6750 = vpack.c.b16 %v6070, %v6062
    %v6751 = vpack.c.b16 %v6071, %v6063
    %v6752 = vpack.c.b16 %v6072, %v6064
    %v6753 = vpack.c.b16 %v6081, %v6073
    %v6754 = vpack.c.b16 %v6082, %v6074
    %v6755 = vpack.c.b16 %v6083, %v6075
    %v6756 = vpack.c.b16 %v6084, %v6076
    %v6757 = vpack.c.b16 %v6085, %v6077
    %v6758 = vpack.c.b16 %v6086, %v6078
    %v6759 = vpack.c.b16 %v6087, %v6079
    %v6760 = vpack.c.b16 %v6088, %v6080
    %v6761 = vpack.c.b16 %v6097, %v6089
    %v6762 = vpack.c.b16 %v6098, %v6090
    %v6763 = vpack.c.b16 %v6099, %v6091
    %v6764 = vpack.c.b16 %v6100, %v6092
    %v6765 = vpack.c.b16 %v6101, %v6093
    %v6766 = vpack.c.b16 %v6102, %v6094
    %v6767 = vpack.c.b16 %v6103, %v6095
    %v6768 = vpack.c.b16 %v6104, %v6096
    %v6769 = vpack.c.b16 %v6113, %v6105
    %v6770 = vpack.c.b16 %v6114, %v6106
    %v6771 = vpack.c.b16 %v6115, %v6107
    %v6772 = vpack.c.b16 %v6116, %v6108
    %v6773 = vpack.c.b16 %v6117, %v6109
    %v6774 = vpack.c.b16 %v6118, %v6110
    %v6775 = vpack.c.b16 %v6119, %v6111
    %v6776 = vpack.c.b16 %v6120, %v6112
    %v6777 = vpack.c.b16 %v6129, %v6121
    %v6778 = vpack.c.b16 %v6130, %v6122
    %v6779 = vpack.c.b16 %v6131, %v6123
    %v6780 = vpack.c.b16 %v6132, %v6124
    %v6781 = vpack.c.b16 %v6133, %v6125
    %v6782 = vpack.c.b16 %v6134, %v6126
    %v6783 = vpack.c.b16 %v6135, %v6127
    %v6784 = vpack.c.b16 %v6136, %v6128
    %v6785 = vpack.c.b16 %v6145, %v6137
    %v6786 = vpack.c.b16 %v6146, %v6138
    %v6787 = vpack.c.b16 %v6147, %v6139
    %v6788 = vpack.c.b16 %v6148, %v6140
    %v6789 = vpack.c.b16 %v6149, %v6141
    %v6790 = vpack.c.b16 %v6150, %v6142
    %v6791 = vpack.c.b16 %v6151, %v6143
    %v6792 = vpack.c.b16 %v6152, %v6144
    %v6793 = vpack.c.b16 %v6161, %v6153
    %v6794 = vpack.c.b16 %v6162, %v6154
    %v6795 = vpack.c.b16 %v6163, %v6155
    %v6796 = vpack.c.b16 %v6164, %v6156
    %v6797 = vpack.c.b16 %v6165, %v6157
    %v6798 = vpack.c.b16 %v6166, %v6158
    %v6799 = vpack.c.b16 %v6167, %v6159
    %v6800 = vpack.c.b16 %v6168, %v6160
    %v6801 = vpack.c.b16 %v6177, %v6169
    %v6802 = vpack.c.b16 %v6178, %v6170
    %v6803 = vpack.c.b16 %v6179, %v6171
    %v6804 = vpack.c.b16 %v6180, %v6172
    %v6805 = vpack.c.b16 %v6181, %v6173
    %v6806 = vpack.c.b16 %v6182, %v6174
    %v6807 = vpack.c.b16 %v6183, %v6175
    %v6808 = vpack.c.b16 %v6184, %v6176
    %v6809 = vpack.c.b16 %v6193, %v6185
    %v6810 = vpack.c.b16 %v6194, %v6186
    %v6811 = vpack.c.b16 %v6195, %v6187
    %v6812 = vpack.c.b16 %v6196, %v6188
    %v6813 = vpack.c.b16 %v6197, %v6189
    %v6814 = vpack.c.b16 %v6198, %v6190
    %v6815 = vpack.c.b16 %v6199, %v6191
    %v6816 = vpack.c.b16 %v6200, %v6192
    %v6817 = vpack.c.b16 %v6209, %v6201
    %v6818 = vpack.c.b16 %v6210, %v6202
    %v6819 = vpack.c.b16 %v6211, %v6203
    %v6820 = vpack.c.b16 %v6212, %v6204
    %v6821 = vpack.c.b16 %v6213, %v6205
    %v6822 = vpack.c.b16 %v6214, %v6206
    %v6823 = vpack.c.b16 %v6215, %v6207
    %v6824 = vpack.c.b16 %v6216, %v6208
    %v6825 = vpack.c.b16 %v6225, %v6217
    %v6826 = vpack.c.b16 %v6226, %v6218
    %v6827 = vpack.c.b16 %v6227, %v6219
    %v6828 = vpack.c.b16 %v6228, %v6220
    %v6829 = vpack.c.b16 %v6229, %v6221
    %v6830 = vpack.c.b16 %v6230, %v6222
    %v6831 = vpack.c.b16 %v6231, %v6223
    %v6832 = vpack.c.b16 %v6232, %v6224
    %v6833 = vpack.c.b16 %v6241, %v6233
    %v6834 = vpack.c.b16 %v6242, %v6234
    %v6835 = vpack.c.b16 %v6243, %v6235
    %v6836 = vpack.c.b16 %v6244, %v6236
    %v6837 = vpack.c.b16 %v6245, %v6237
    %v6838 = vpack.c.b16 %v6246, %v6238
    %v6839 = vpack.c.b16 %v6247, %v6239
    %v6840 = vpack.c.b16 %v6248, %v6240
    %v6841 = vpack.c.b16 %v6257, %v6249
    %v6842 = vpack.c.b16 %v6258, %v6250
    %v6843 = vpack.c.b16 %v6259, %v6251
    %v6844 = vpack.c.b16 %v6260, %v6252
    %v6845 = vpack.c.b16 %v6261, %v6253
    %v6846 = vpack.c.b16 %v6262, %v6254
    %v6847 = vpack.c.b16 %v6263, %v6255
    %v6848 = vpack.c.b16 %v6264, %v6256
    %v6849 = vpack.c.b16 %v6273, %v6265
    %v6850 = vpack.c.b16 %v6274, %v6266
    %v6851 = vpack.c.b16 %v6275, %v6267
    %v6852 = vpack.c.b16 %v6276, %v6268
    %v6853 = vpack.c.b16 %v6277, %v6269
    %v6854 = vpack.c.b16 %v6278, %v6270
    %v6855 = vpack.c.b16 %v6279, %v6271
    %v6856 = vpack.c.b16 %v6280, %v6272
    %v6857 = vpack.c.b16 %v6289, %v6281
    %v6858 = vpack.c.b16 %v6290, %v6282
    %v6859 = vpack.c.b16 %v6291, %v6283
    %v6860 = vpack.c.b16 %v6292, %v6284
    %v6861 = vpack.c.b16 %v6293, %v6285
    %v6862 = vpack.c.b16 %v6294, %v6286
    %v6863 = vpack.c.b16 %v6295, %v6287
    %v6864 = vpack.c.b16 %v6296, %v6288
    %v6865 = vpack.c.b16 %v6305, %v6297
    %v6866 = vpack.c.b16 %v6306, %v6298
    %v6867 = vpack.c.b16 %v6307, %v6299
    %v6868 = vpack.c.b16 %v6308, %v6300
    %v6869 = vpack.c.b16 %v6309, %v6301
    %v6870 = vpack.c.b16 %v6310, %v6302
    %v6871 = vpack.c.b16 %v6311, %v6303
    %v6872 = vpack.c.b16 %v6312, %v6304
    %v6873 = vpack.c.b16 %v6321, %v6313
    %v6874 = vpack.c.b16 %v6322, %v6314
    %v6875 = vpack.c.b16 %v6323, %v6315
    %v6876 = vpack.c.b16 %v6324, %v6316
    %v6877 = vpack.c.b16 %v6325, %v6317
    %v6878 = vpack.c.b16 %v6326, %v6318
    %v6879 = vpack.c.b16 %v6327, %v6319
    %v6880 = vpack.c.b16 %v6328, %v6320
    %v6881 = vpack.c.b16 %v6337, %v6329
    %v6882 = vpack.c.b16 %v6338, %v6330
    %v6883 = vpack.c.b16 %v6339, %v6331
    %v6884 = vpack.c.b16 %v6340, %v6332
    %v6885 = vpack.c.b16 %v6341, %v6333
    %v6886 = vpack.c.b16 %v6342, %v6334
    %v6887 = vpack.c.b16 %v6343, %v6335
    %v6888 = vpack.c.b16 %v6344, %v6336
    %v6889 = vpack.c.b16 %v6353, %v6345
    %v6890 = vpack.c.b16 %v6354, %v6346
    %v6891 = vpack.c.b16 %v6355, %v6347
    %v6892 = vpack.c.b16 %v6356, %v6348
    %v6893 = vpack.c.b16 %v6357, %v6349
    %v6894 = vpack.c.b16 %v6358, %v6350
    %v6895 = vpack.c.b16 %v6359, %v6351
    %v6896 = vpack.c.b16 %v6360, %v6352
    %v6897 = vpack.c.b16 %v6369, %v6361
    %v6898 = vpack.c.b16 %v6370, %v6362
    %v6899 = vpack.c.b16 %v6371, %v6363
    %v6900 = vpack.c.b16 %v6372, %v6364
    %v6901 = vpack.c.b16 %v6373, %v6365
    %v6902 = vpack.c.b16 %v6374, %v6366
    %v6903 = vpack.c.b16 %v6375, %v6367
    %v6904 = vpack.c.b16 %v6376, %v6368
    %v6905 = vpack.c.b16 %v6385, %v6377
    %v6906 = vpack.c.b16 %v6386, %v6378
    %v6907 = vpack.c.b16 %v6387, %v6379
    %v6908 = vpack.c.b16 %v6388, %v6380
    %v6909 = vpack.c.b16 %v6389, %v6381
    %v6910 = vpack.c.b16 %v6390, %v6382
    %v6911 = vpack.c.b16 %v6391, %v6383
    %v6912 = vpack.c.b16 %v6392, %v6384
    %v6913 = vpack.c.b16 %v6401, %v6393
    %v6914 = vpack.c.b16 %v6402, %v6394
    %v6915 = vpack.c.b16 %v6403, %v6395
    %v6916 = vpack.c.b16 %v6404, %v6396
    %v6917 = vpack.c.b16 %v6405, %v6397
    %v6918 = vpack.c.b16 %v6406, %v6398
    %v6919 = vpack.c.b16 %v6407, %v6399
    %v6920 = vpack.c.b16 %v6408, %v6400
    %7433 = vmatpush.bf16.msra.mxu0 %v6465
    %7434 = vmatpush.bf16.msra.mxu0 %v6457
    %7435 = vmatpush.bf16.msra.mxu0 %v6449
    %7436 = vmatpush.bf16.msra.mxu0 %v6441
    %7437 = vmatpush.bf16.msra.mxu0 %v6433
    %7438 = vmatpush.bf16.msra.mxu0 %v6425
    %7439 = vmatpush.bf16.msra.mxu0 %v6417
    %7440 = vmatpush.bf16.msra.mxu0 %v6409
    %7441 = vmatmul.bf16.gmra.mxu0 %v4335
    %v7442 = vpop.f32.mrf.mxu0
    %v7443 = vadd.f32 %v4857, %v7442
    %v7444 = vpop.f32.mrf.mxu0
    %7445 = vdwg.mxu0
    %7446 = vmatpush.bf16.msra.mxu0 %v6529
    %7447 = vmatpush.bf16.msra.mxu0 %v6521
    %7448 = vmatpush.bf16.msra.mxu0 %v6513
    %7449 = vmatpush.bf16.msra.mxu0 %v6505
    %7450 = vmatpush.bf16.msra.mxu0 %v6497
    %7451 = vmatpush.bf16.msra.mxu0 %v6489
    %7452 = vmatpush.bf16.msra.mxu0 %v6481
    %7453 = vmatpush.bf16.msra.mxu0 %v6473
    %7454 = vmatmul.bf16.gmra.mxu0 %v4336
    %v7455 = vpop.f32.mrf.mxu0
    %v7456 = vadd.f32 %v7443, %v7455
    %v7457 = vpop.f32.mrf.mxu0
    %7458 = vdwg.mxu0
    %7459 = vmatpush.bf16.msra.mxu0 %v6593
    %7460 = vmatpush.bf16.msra.mxu0 %v6585
    %7461 = vmatpush.bf16.msra.mxu0 %v6577
    %7462 = vmatpush.bf16.msra.mxu0 %v6569
    %7463 = vmatpush.bf16.msra.mxu0 %v6561
    %7464 = vmatpush.bf16.msra.mxu0 %v6553
    %7465 = vmatpush.bf16.msra.mxu0 %v6545
    %7466 = vmatpush.bf16.msra.mxu0 %v6537
    %7467 = vmatmul.bf16.gmra.mxu0 %v4337
    %v7468 = vpop.f32.mrf.mxu0
    %v7469 = vadd.f32 %v7456, %v7468
    %v7470 = vpop.f32.mrf.mxu0
    %7471 = vdwg.mxu0
    %7472 = vmatpush.bf16.msra.mxu0 %v6657
    %7473 = vmatpush.bf16.msra.mxu0 %v6649
    %7474 = vmatpush.bf16.msra.mxu0 %v6641
    %7475 = vmatpush.bf16.msra.mxu0 %v6633
    %7476 = vmatpush.bf16.msra.mxu0 %v6625
    %7477 = vmatpush.bf16.msra.mxu0 %v6617
    %7478 = vmatpush.bf16.msra.mxu0 %v6609
    %7479 = vmatpush.bf16.msra.mxu0 %v6601
    %7480 = vmatmul.bf16.gmra.mxu0 %v4338
    %v7481 = vpop.f32.mrf.mxu0
    %v7482 = vadd.f32 %v7469, %v7481
    %v7483 = vpop.f32.mrf.mxu0
    %7484 = vdwg.mxu0
    %7485 = vmatpush.bf16.msra.mxu0 %v6721
    %7486 = vmatpush.bf16.msra.mxu0 %v6713
    %7487 = vmatpush.bf16.msra.mxu0 %v6705
    %7488 = vmatpush.bf16.msra.mxu0 %v6697
    %7489 = vmatpush.bf16.msra.mxu0 %v6689
    %7490 = vmatpush.bf16.msra.mxu0 %v6681
    %7491 = vmatpush.bf16.msra.mxu0 %v6673
    %7492 = vmatpush.bf16.msra.mxu0 %v6665
    %7493 = vmatmul.bf16.gmra.mxu0 %v4339
    %v7494 = vpop.f32.mrf.mxu0
    %v7495 = vadd.f32 %v7482, %v7494
    %v7496 = vpop.f32.mrf.mxu0
    %7497 = vdwg.mxu0
    %7498 = vmatpush.bf16.msra.mxu0 %v6785
    %7499 = vmatpush.bf16.msra.mxu0 %v6777
    %7500 = vmatpush.bf16.msra.mxu0 %v6769
    %7501 = vmatpush.bf16.msra.mxu0 %v6761
    %7502 = vmatpush.bf16.msra.mxu0 %v6753
    %7503 = vmatpush.bf16.msra.mxu0 %v6745
    %7504 = vmatpush.bf16.msra.mxu0 %v6737
    %7505 = vmatpush.bf16.msra.mxu0 %v6729
    %7506 = vmatmul.bf16.gmra.mxu0 %v4340
    %v7507 = vpop.f32.mrf.mxu0
    %v7508 = vadd.f32 %v7495, %v7507
    %v7509 = vpop.f32.mrf.mxu0
    %7510 = vdwg.mxu0
    %7511 = vmatpush.bf16.msra.mxu0 %v6849
    %7512 = vmatpush.bf16.msra.mxu0 %v6841
    %7513 = vmatpush.bf16.msra.mxu0 %v6833
    %7514 = vmatpush.bf16.msra.mxu0 %v6825
    %7515 = vmatpush.bf16.msra.mxu0 %v6817
    %7516 = vmatpush.bf16.msra.mxu0 %v6809
    %7517 = vmatpush.bf16.msra.mxu0 %v6801
    %7518 = vmatpush.bf16.msra.mxu0 %v6793
    %7519 = vmatmul.bf16.gmra.mxu0 %v4341
    %v7520 = vpop.f32.mrf.mxu0
    %v7521 = vadd.f32 %v7508, %v7520
    %v7522 = vpop.f32.mrf.mxu0
    %7523 = vdwg.mxu0
    %7524 = vmatpush.bf16.msra.mxu0 %v6913
    %7525 = vmatpush.bf16.msra.mxu0 %v6905
    %7526 = vmatpush.bf16.msra.mxu0 %v6897
    %7527 = vmatpush.bf16.msra.mxu0 %v6889
    %7528 = vmatpush.bf16.msra.mxu0 %v6881
    %7529 = vmatpush.bf16.msra.mxu0 %v6873
    %7530 = vmatpush.bf16.msra.mxu0 %v6865
    %7531 = vmatpush.bf16.msra.mxu0 %v6857
    %7532 = vmatmul.bf16.gmra.mxu0 %v4342
    %v7533 = vpop.f32.mrf.mxu0
    %v7534 = vadd.f32 %v7521, %v7533
    %v7535 = vpop.f32.mrf.mxu0
    %7536 = vdwg.mxu0
    %7537 = vmatpush.bf16.msra.mxu0 %v6466
    %7538 = vmatpush.bf16.msra.mxu0 %v6458
    %7539 = vmatpush.bf16.msra.mxu0 %v6450
    %7540 = vmatpush.bf16.msra.mxu0 %v6442
    %7541 = vmatpush.bf16.msra.mxu0 %v6434
    %7542 = vmatpush.bf16.msra.mxu0 %v6426
    %7543 = vmatpush.bf16.msra.mxu0 %v6418
    %7544 = vmatpush.bf16.msra.mxu0 %v6410
    %7545 = vmatmul.bf16.gmra.mxu0 %v4335
    %v7546 = vpop.f32.mrf.mxu0
    %v7547 = vadd.f32 %v4858, %v7546
    %v7548 = vpop.f32.mrf.mxu0
    %7549 = vdwg.mxu0
    %7550 = vmatpush.bf16.msra.mxu0 %v6530
    %7551 = vmatpush.bf16.msra.mxu0 %v6522
    %7552 = vmatpush.bf16.msra.mxu0 %v6514
    %7553 = vmatpush.bf16.msra.mxu0 %v6506
    %7554 = vmatpush.bf16.msra.mxu0 %v6498
    %7555 = vmatpush.bf16.msra.mxu0 %v6490
    %7556 = vmatpush.bf16.msra.mxu0 %v6482
    %7557 = vmatpush.bf16.msra.mxu0 %v6474
    %7558 = vmatmul.bf16.gmra.mxu0 %v4336
    %v7559 = vpop.f32.mrf.mxu0
    %v7560 = vadd.f32 %v7547, %v7559
    %v7561 = vpop.f32.mrf.mxu0
    %7562 = vdwg.mxu0
    %7563 = vmatpush.bf16.msra.mxu0 %v6594
    %7564 = vmatpush.bf16.msra.mxu0 %v6586
    %7565 = vmatpush.bf16.msra.mxu0 %v6578
    %7566 = vmatpush.bf16.msra.mxu0 %v6570
    %7567 = vmatpush.bf16.msra.mxu0 %v6562
    %7568 = vmatpush.bf16.msra.mxu0 %v6554
    %7569 = vmatpush.bf16.msra.mxu0 %v6546
    %7570 = vmatpush.bf16.msra.mxu0 %v6538
    %7571 = vmatmul.bf16.gmra.mxu0 %v4337
    %v7572 = vpop.f32.mrf.mxu0
    %v7573 = vadd.f32 %v7560, %v7572
    %v7574 = vpop.f32.mrf.mxu0
    %7575 = vdwg.mxu0
    %7576 = vmatpush.bf16.msra.mxu0 %v6658
    %7577 = vmatpush.bf16.msra.mxu0 %v6650
    %7578 = vmatpush.bf16.msra.mxu0 %v6642
    %7579 = vmatpush.bf16.msra.mxu0 %v6634
    %7580 = vmatpush.bf16.msra.mxu0 %v6626
    %7581 = vmatpush.bf16.msra.mxu0 %v6618
    %7582 = vmatpush.bf16.msra.mxu0 %v6610
    %7583 = vmatpush.bf16.msra.mxu0 %v6602
    %7584 = vmatmul.bf16.gmra.mxu0 %v4338
    %v7585 = vpop.f32.mrf.mxu0
    %v7586 = vadd.f32 %v7573, %v7585
    %v7587 = vpop.f32.mrf.mxu0
    %7588 = vdwg.mxu0
    %7589 = vmatpush.bf16.msra.mxu0 %v6722
    %7590 = vmatpush.bf16.msra.mxu0 %v6714
    %7591 = vmatpush.bf16.msra.mxu0 %v6706
    %7592 = vmatpush.bf16.msra.mxu0 %v6698
    %7593 = vmatpush.bf16.msra.mxu0 %v6690
    %7594 = vmatpush.bf16.msra.mxu0 %v6682
    %7595 = vmatpush.bf16.msra.mxu0 %v6674
    %7596 = vmatpush.bf16.msra.mxu0 %v6666
    %7597 = vmatmul.bf16.gmra.mxu0 %v4339
    %v7598 = vpop.f32.mrf.mxu0
    %v7599 = vadd.f32 %v7586, %v7598
    %v7600 = vpop.f32.mrf.mxu0
    %7601 = vdwg.mxu0
    %7602 = vmatpush.bf16.msra.mxu0 %v6786
    %7603 = vmatpush.bf16.msra.mxu0 %v6778
    %7604 = vmatpush.bf16.msra.mxu0 %v6770
    %7605 = vmatpush.bf16.msra.mxu0 %v6762
    %7606 = vmatpush.bf16.msra.mxu0 %v6754
    %7607 = vmatpush.bf16.msra.mxu0 %v6746
    %7608 = vmatpush.bf16.msra.mxu0 %v6738
    %7609 = vmatpush.bf16.msra.mxu0 %v6730
    %7610 = vmatmul.bf16.gmra.mxu0 %v4340
    %v7611 = vpop.f32.mrf.mxu0
    %v7612 = vadd.f32 %v7599, %v7611
    %v7613 = vpop.f32.mrf.mxu0
    %7614 = vdwg.mxu0
    %7615 = vmatpush.bf16.msra.mxu0 %v6850
    %7616 = vmatpush.bf16.msra.mxu0 %v6842
    %7617 = vmatpush.bf16.msra.mxu0 %v6834
    %7618 = vmatpush.bf16.msra.mxu0 %v6826
    %7619 = vmatpush.bf16.msra.mxu0 %v6818
    %7620 = vmatpush.bf16.msra.mxu0 %v6810
    %7621 = vmatpush.bf16.msra.mxu0 %v6802
    %7622 = vmatpush.bf16.msra.mxu0 %v6794
    %7623 = vmatmul.bf16.gmra.mxu0 %v4341
    %v7624 = vpop.f32.mrf.mxu0
    %v7625 = vadd.f32 %v7612, %v7624
    %v7626 = vpop.f32.mrf.mxu0
    %7627 = vdwg.mxu0
    %7628 = vmatpush.bf16.msra.mxu0 %v6914
    %7629 = vmatpush.bf16.msra.mxu0 %v6906
    %7630 = vmatpush.bf16.msra.mxu0 %v6898
    %7631 = vmatpush.bf16.msra.mxu0 %v6890
    %7632 = vmatpush.bf16.msra.mxu0 %v6882
    %7633 = vmatpush.bf16.msra.mxu0 %v6874
    %7634 = vmatpush.bf16.msra.mxu0 %v6866
    %7635 = vmatpush.bf16.msra.mxu0 %v6858
    %7636 = vmatmul.bf16.gmra.mxu0 %v4342
    %v7637 = vpop.f32.mrf.mxu0
    %v7638 = vadd.f32 %v7625, %v7637
    %v7639 = vpop.f32.mrf.mxu0
    %7640 = vdwg.mxu0
    %7641 = vmatpush.bf16.msra.mxu0 %v6467
    %7642 = vmatpush.bf16.msra.mxu0 %v6459
    %7643 = vmatpush.bf16.msra.mxu0 %v6451
    %7644 = vmatpush.bf16.msra.mxu0 %v6443
    %7645 = vmatpush.bf16.msra.mxu0 %v6435
    %7646 = vmatpush.bf16.msra.mxu0 %v6427
    %7647 = vmatpush.bf16.msra.mxu0 %v6419
    %7648 = vmatpush.bf16.msra.mxu0 %v6411
    %7649 = vmatmul.bf16.gmra.mxu0 %v4335
    %v7650 = vpop.f32.mrf.mxu0
    %v7651 = vadd.f32 %v4859, %v7650
    %v7652 = vpop.f32.mrf.mxu0
    %7653 = vdwg.mxu0
    %7654 = vmatpush.bf16.msra.mxu0 %v6531
    %7655 = vmatpush.bf16.msra.mxu0 %v6523
    %7656 = vmatpush.bf16.msra.mxu0 %v6515
    %7657 = vmatpush.bf16.msra.mxu0 %v6507
    %7658 = vmatpush.bf16.msra.mxu0 %v6499
    %7659 = vmatpush.bf16.msra.mxu0 %v6491
    %7660 = vmatpush.bf16.msra.mxu0 %v6483
    %7661 = vmatpush.bf16.msra.mxu0 %v6475
    %7662 = vmatmul.bf16.gmra.mxu0 %v4336
    %v7663 = vpop.f32.mrf.mxu0
    %v7664 = vadd.f32 %v7651, %v7663
    %v7665 = vpop.f32.mrf.mxu0
    %7666 = vdwg.mxu0
    %7667 = vmatpush.bf16.msra.mxu0 %v6595
    %7668 = vmatpush.bf16.msra.mxu0 %v6587
    %7669 = vmatpush.bf16.msra.mxu0 %v6579
    %7670 = vmatpush.bf16.msra.mxu0 %v6571
    %7671 = vmatpush.bf16.msra.mxu0 %v6563
    %7672 = vmatpush.bf16.msra.mxu0 %v6555
    %7673 = vmatpush.bf16.msra.mxu0 %v6547
    %7674 = vmatpush.bf16.msra.mxu0 %v6539
    %7675 = vmatmul.bf16.gmra.mxu0 %v4337
    %v7676 = vpop.f32.mrf.mxu0
    %v7677 = vadd.f32 %v7664, %v7676
    %v7678 = vpop.f32.mrf.mxu0
    %7679 = vdwg.mxu0
    %7680 = vmatpush.bf16.msra.mxu0 %v6659
    %7681 = vmatpush.bf16.msra.mxu0 %v6651
    %7682 = vmatpush.bf16.msra.mxu0 %v6643
    %7683 = vmatpush.bf16.msra.mxu0 %v6635
    %7684 = vmatpush.bf16.msra.mxu0 %v6627
    %7685 = vmatpush.bf16.msra.mxu0 %v6619
    %7686 = vmatpush.bf16.msra.mxu0 %v6611
    %7687 = vmatpush.bf16.msra.mxu0 %v6603
    %7688 = vmatmul.bf16.gmra.mxu0 %v4338
    %v7689 = vpop.f32.mrf.mxu0
    %v7690 = vadd.f32 %v7677, %v7689
    %v7691 = vpop.f32.mrf.mxu0
    %7692 = vdwg.mxu0
    %7693 = vmatpush.bf16.msra.mxu0 %v6723
    %7694 = vmatpush.bf16.msra.mxu0 %v6715
    %7695 = vmatpush.bf16.msra.mxu0 %v6707
    %7696 = vmatpush.bf16.msra.mxu0 %v6699
    %7697 = vmatpush.bf16.msra.mxu0 %v6691
    %7698 = vmatpush.bf16.msra.mxu0 %v6683
    %7699 = vmatpush.bf16.msra.mxu0 %v6675
    %7700 = vmatpush.bf16.msra.mxu0 %v6667
    %7701 = vmatmul.bf16.gmra.mxu0 %v4339
    %v7702 = vpop.f32.mrf.mxu0
    %v7703 = vadd.f32 %v7690, %v7702
    %v7704 = vpop.f32.mrf.mxu0
    %7705 = vdwg.mxu0
    %7706 = vmatpush.bf16.msra.mxu0 %v6787
    %7707 = vmatpush.bf16.msra.mxu0 %v6779
    %7708 = vmatpush.bf16.msra.mxu0 %v6771
    %7709 = vmatpush.bf16.msra.mxu0 %v6763
    %7710 = vmatpush.bf16.msra.mxu0 %v6755
    %7711 = vmatpush.bf16.msra.mxu0 %v6747
    %7712 = vmatpush.bf16.msra.mxu0 %v6739
    %7713 = vmatpush.bf16.msra.mxu0 %v6731
    %7714 = vmatmul.bf16.gmra.mxu0 %v4340
    %v7715 = vpop.f32.mrf.mxu0
    %v7716 = vadd.f32 %v7703, %v7715
    %v7717 = vpop.f32.mrf.mxu0
    %7718 = vdwg.mxu0
    %7719 = vmatpush.bf16.msra.mxu0 %v6851
    %7720 = vmatpush.bf16.msra.mxu0 %v6843
    %7721 = vmatpush.bf16.msra.mxu0 %v6835
    %7722 = vmatpush.bf16.msra.mxu0 %v6827
    %7723 = vmatpush.bf16.msra.mxu0 %v6819
    %7724 = vmatpush.bf16.msra.mxu0 %v6811
    %7725 = vmatpush.bf16.msra.mxu0 %v6803
    %7726 = vmatpush.bf16.msra.mxu0 %v6795
    %7727 = vmatmul.bf16.gmra.mxu0 %v4341
    %v7728 = vpop.f32.mrf.mxu0
    %v7729 = vadd.f32 %v7716, %v7728
    %v7730 = vpop.f32.mrf.mxu0
    %7731 = vdwg.mxu0
    %7732 = vmatpush.bf16.msra.mxu0 %v6915
    %7733 = vmatpush.bf16.msra.mxu0 %v6907
    %7734 = vmatpush.bf16.msra.mxu0 %v6899
    %7735 = vmatpush.bf16.msra.mxu0 %v6891
    %7736 = vmatpush.bf16.msra.mxu0 %v6883
    %7737 = vmatpush.bf16.msra.mxu0 %v6875
    %7738 = vmatpush.bf16.msra.mxu0 %v6867
    %7739 = vmatpush.bf16.msra.mxu0 %v6859
    %7740 = vmatmul.bf16.gmra.mxu0 %v4342
    %v7741 = vpop.f32.mrf.mxu0
    %v7742 = vadd.f32 %v7729, %v7741
    %v7743 = vpop.f32.mrf.mxu0
    %7744 = vdwg.mxu0
    %7745 = vmatpush.bf16.msra.mxu0 %v6468
    %7746 = vmatpush.bf16.msra.mxu0 %v6460
    %7747 = vmatpush.bf16.msra.mxu0 %v6452
    %7748 = vmatpush.bf16.msra.mxu0 %v6444
    %7749 = vmatpush.bf16.msra.mxu0 %v6436
    %7750 = vmatpush.bf16.msra.mxu0 %v6428
    %7751 = vmatpush.bf16.msra.mxu0 %v6420
    %7752 = vmatpush.bf16.msra.mxu0 %v6412
    %7753 = vmatmul.bf16.gmra.mxu0 %v4335
    %v7754 = vpop.f32.mrf.mxu0
    %v7755 = vadd.f32 %v4860, %v7754
    %v7756 = vpop.f32.mrf.mxu0
    %7757 = vdwg.mxu0
    %7758 = vmatpush.bf16.msra.mxu0 %v6532
    %7759 = vmatpush.bf16.msra.mxu0 %v6524
    %7760 = vmatpush.bf16.msra.mxu0 %v6516
    %7761 = vmatpush.bf16.msra.mxu0 %v6508
    %7762 = vmatpush.bf16.msra.mxu0 %v6500
    %7763 = vmatpush.bf16.msra.mxu0 %v6492
    %7764 = vmatpush.bf16.msra.mxu0 %v6484
    %7765 = vmatpush.bf16.msra.mxu0 %v6476
    %7766 = vmatmul.bf16.gmra.mxu0 %v4336
    %v7767 = vpop.f32.mrf.mxu0
    %v7768 = vadd.f32 %v7755, %v7767
    %v7769 = vpop.f32.mrf.mxu0
    %7770 = vdwg.mxu0
    %7771 = vmatpush.bf16.msra.mxu0 %v6596
    %7772 = vmatpush.bf16.msra.mxu0 %v6588
    %7773 = vmatpush.bf16.msra.mxu0 %v6580
    %7774 = vmatpush.bf16.msra.mxu0 %v6572
    %7775 = vmatpush.bf16.msra.mxu0 %v6564
    %7776 = vmatpush.bf16.msra.mxu0 %v6556
    %7777 = vmatpush.bf16.msra.mxu0 %v6548
    %7778 = vmatpush.bf16.msra.mxu0 %v6540
    %7779 = vmatmul.bf16.gmra.mxu0 %v4337
    %v7780 = vpop.f32.mrf.mxu0
    %v7781 = vadd.f32 %v7768, %v7780
    %v7782 = vpop.f32.mrf.mxu0
    %7783 = vdwg.mxu0
    %7784 = vmatpush.bf16.msra.mxu0 %v6660
    %7785 = vmatpush.bf16.msra.mxu0 %v6652
    %7786 = vmatpush.bf16.msra.mxu0 %v6644
    %7787 = vmatpush.bf16.msra.mxu0 %v6636
    %7788 = vmatpush.bf16.msra.mxu0 %v6628
    %7789 = vmatpush.bf16.msra.mxu0 %v6620
    %7790 = vmatpush.bf16.msra.mxu0 %v6612
    %7791 = vmatpush.bf16.msra.mxu0 %v6604
    %7792 = vmatmul.bf16.gmra.mxu0 %v4338
    %v7793 = vpop.f32.mrf.mxu0
    %v7794 = vadd.f32 %v7781, %v7793
    %v7795 = vpop.f32.mrf.mxu0
    %7796 = vdwg.mxu0
    %7797 = vmatpush.bf16.msra.mxu0 %v6724
    %7798 = vmatpush.bf16.msra.mxu0 %v6716
    %7799 = vmatpush.bf16.msra.mxu0 %v6708
    %7800 = vmatpush.bf16.msra.mxu0 %v6700
    %7801 = vmatpush.bf16.msra.mxu0 %v6692
    %7802 = vmatpush.bf16.msra.mxu0 %v6684
    %7803 = vmatpush.bf16.msra.mxu0 %v6676
    %7804 = vmatpush.bf16.msra.mxu0 %v6668
    %7805 = vmatmul.bf16.gmra.mxu0 %v4339
    %v7806 = vpop.f32.mrf.mxu0
    %v7807 = vadd.f32 %v7794, %v7806
    %v7808 = vpop.f32.mrf.mxu0
    %7809 = vdwg.mxu0
    %7810 = vmatpush.bf16.msra.mxu0 %v6788
    %7811 = vmatpush.bf16.msra.mxu0 %v6780
    %7812 = vmatpush.bf16.msra.mxu0 %v6772
    %7813 = vmatpush.bf16.msra.mxu0 %v6764
    %7814 = vmatpush.bf16.msra.mxu0 %v6756
    %7815 = vmatpush.bf16.msra.mxu0 %v6748
    %7816 = vmatpush.bf16.msra.mxu0 %v6740
    %7817 = vmatpush.bf16.msra.mxu0 %v6732
    %7818 = vmatmul.bf16.gmra.mxu0 %v4340
    %v7819 = vpop.f32.mrf.mxu0
    %v7820 = vadd.f32 %v7807, %v7819
    %v7821 = vpop.f32.mrf.mxu0
    %7822 = vdwg.mxu0
    %7823 = vmatpush.bf16.msra.mxu0 %v6852
    %7824 = vmatpush.bf16.msra.mxu0 %v6844
    %7825 = vmatpush.bf16.msra.mxu0 %v6836
    %7826 = vmatpush.bf16.msra.mxu0 %v6828
    %7827 = vmatpush.bf16.msra.mxu0 %v6820
    %7828 = vmatpush.bf16.msra.mxu0 %v6812
    %7829 = vmatpush.bf16.msra.mxu0 %v6804
    %7830 = vmatpush.bf16.msra.mxu0 %v6796
    %7831 = vmatmul.bf16.gmra.mxu0 %v4341
    %v7832 = vpop.f32.mrf.mxu0
    %v7833 = vadd.f32 %v7820, %v7832
    %v7834 = vpop.f32.mrf.mxu0
    %7835 = vdwg.mxu0
    %7836 = vmatpush.bf16.msra.mxu0 %v6916
    %7837 = vmatpush.bf16.msra.mxu0 %v6908
    %7838 = vmatpush.bf16.msra.mxu0 %v6900
    %7839 = vmatpush.bf16.msra.mxu0 %v6892
    %7840 = vmatpush.bf16.msra.mxu0 %v6884
    %7841 = vmatpush.bf16.msra.mxu0 %v6876
    %7842 = vmatpush.bf16.msra.mxu0 %v6868
    %7843 = vmatpush.bf16.msra.mxu0 %v6860
    %7844 = vmatmul.bf16.gmra.mxu0 %v4342
    %v7845 = vpop.f32.mrf.mxu0
    %v7846 = vadd.f32 %v7833, %v7845
    %v7847 = vpop.f32.mrf.mxu0
    %7848 = vdwg.mxu0
    %7849 = vmatpush.bf16.msra.mxu0 %v6469
    %7850 = vmatpush.bf16.msra.mxu0 %v6461
    %7851 = vmatpush.bf16.msra.mxu0 %v6453
    %7852 = vmatpush.bf16.msra.mxu0 %v6445
    %7853 = vmatpush.bf16.msra.mxu0 %v6437
    %7854 = vmatpush.bf16.msra.mxu0 %v6429
    %7855 = vmatpush.bf16.msra.mxu0 %v6421
    %7856 = vmatpush.bf16.msra.mxu0 %v6413
    %7857 = vmatmul.bf16.gmra.mxu0 %v4335
    %v7858 = vpop.f32.mrf.mxu0
    %v7859 = vadd.f32 %v4861, %v7858
    %v7860 = vpop.f32.mrf.mxu0
    %7861 = vdwg.mxu0
    %7862 = vmatpush.bf16.msra.mxu0 %v6533
    %7863 = vmatpush.bf16.msra.mxu0 %v6525
    %7864 = vmatpush.bf16.msra.mxu0 %v6517
    %7865 = vmatpush.bf16.msra.mxu0 %v6509
    %7866 = vmatpush.bf16.msra.mxu0 %v6501
    %7867 = vmatpush.bf16.msra.mxu0 %v6493
    %7868 = vmatpush.bf16.msra.mxu0 %v6485
    %7869 = vmatpush.bf16.msra.mxu0 %v6477
    %7870 = vmatmul.bf16.gmra.mxu0 %v4336
    %v7871 = vpop.f32.mrf.mxu0
    %v7872 = vadd.f32 %v7859, %v7871
    %v7873 = vpop.f32.mrf.mxu0
    %7874 = vdwg.mxu0
    %7875 = vmatpush.bf16.msra.mxu0 %v6597
    %7876 = vmatpush.bf16.msra.mxu0 %v6589
    %7877 = vmatpush.bf16.msra.mxu0 %v6581
    %7878 = vmatpush.bf16.msra.mxu0 %v6573
    %7879 = vmatpush.bf16.msra.mxu0 %v6565
    %7880 = vmatpush.bf16.msra.mxu0 %v6557
    %7881 = vmatpush.bf16.msra.mxu0 %v6549
    %7882 = vmatpush.bf16.msra.mxu0 %v6541
    %7883 = vmatmul.bf16.gmra.mxu0 %v4337
    %v7884 = vpop.f32.mrf.mxu0
    %v7885 = vadd.f32 %v7872, %v7884
    %v7886 = vpop.f32.mrf.mxu0
    %7887 = vdwg.mxu0
    %7888 = vmatpush.bf16.msra.mxu0 %v6661
    %7889 = vmatpush.bf16.msra.mxu0 %v6653
    %7890 = vmatpush.bf16.msra.mxu0 %v6645
    %7891 = vmatpush.bf16.msra.mxu0 %v6637
    %7892 = vmatpush.bf16.msra.mxu0 %v6629
    %7893 = vmatpush.bf16.msra.mxu0 %v6621
    %7894 = vmatpush.bf16.msra.mxu0 %v6613
    %7895 = vmatpush.bf16.msra.mxu0 %v6605
    %7896 = vmatmul.bf16.gmra.mxu0 %v4338
    %v7897 = vpop.f32.mrf.mxu0
    %v7898 = vadd.f32 %v7885, %v7897
    %v7899 = vpop.f32.mrf.mxu0
    %7900 = vdwg.mxu0
    %7901 = vmatpush.bf16.msra.mxu0 %v6725
    %7902 = vmatpush.bf16.msra.mxu0 %v6717
    %7903 = vmatpush.bf16.msra.mxu0 %v6709
    %7904 = vmatpush.bf16.msra.mxu0 %v6701
    %7905 = vmatpush.bf16.msra.mxu0 %v6693
    %7906 = vmatpush.bf16.msra.mxu0 %v6685
    %7907 = vmatpush.bf16.msra.mxu0 %v6677
    %7908 = vmatpush.bf16.msra.mxu0 %v6669
    %7909 = vmatmul.bf16.gmra.mxu0 %v4339
    %v7910 = vpop.f32.mrf.mxu0
    %v7911 = vadd.f32 %v7898, %v7910
    %v7912 = vpop.f32.mrf.mxu0
    %7913 = vdwg.mxu0
    %7914 = vmatpush.bf16.msra.mxu0 %v6789
    %7915 = vmatpush.bf16.msra.mxu0 %v6781
    %7916 = vmatpush.bf16.msra.mxu0 %v6773
    %7917 = vmatpush.bf16.msra.mxu0 %v6765
    %7918 = vmatpush.bf16.msra.mxu0 %v6757
    %7919 = vmatpush.bf16.msra.mxu0 %v6749
    %7920 = vmatpush.bf16.msra.mxu0 %v6741
    %7921 = vmatpush.bf16.msra.mxu0 %v6733
    %7922 = vmatmul.bf16.gmra.mxu0 %v4340
    %v7923 = vpop.f32.mrf.mxu0
    %v7924 = vadd.f32 %v7911, %v7923
    %v7925 = vpop.f32.mrf.mxu0
    %7926 = vdwg.mxu0
    %7927 = vmatpush.bf16.msra.mxu0 %v6853
    %7928 = vmatpush.bf16.msra.mxu0 %v6845
    %7929 = vmatpush.bf16.msra.mxu0 %v6837
    %7930 = vmatpush.bf16.msra.mxu0 %v6829
    %7931 = vmatpush.bf16.msra.mxu0 %v6821
    %7932 = vmatpush.bf16.msra.mxu0 %v6813
    %7933 = vmatpush.bf16.msra.mxu0 %v6805
    %7934 = vmatpush.bf16.msra.mxu0 %v6797
    %7935 = vmatmul.bf16.gmra.mxu0 %v4341
    %v7936 = vpop.f32.mrf.mxu0
    %v7937 = vadd.f32 %v7924, %v7936
    %v7938 = vpop.f32.mrf.mxu0
    %7939 = vdwg.mxu0
    %7940 = vmatpush.bf16.msra.mxu0 %v6917
    %7941 = vmatpush.bf16.msra.mxu0 %v6909
    %7942 = vmatpush.bf16.msra.mxu0 %v6901
    %7943 = vmatpush.bf16.msra.mxu0 %v6893
    %7944 = vmatpush.bf16.msra.mxu0 %v6885
    %7945 = vmatpush.bf16.msra.mxu0 %v6877
    %7946 = vmatpush.bf16.msra.mxu0 %v6869
    %7947 = vmatpush.bf16.msra.mxu0 %v6861
    %7948 = vmatmul.bf16.gmra.mxu0 %v4342
    %v7949 = vpop.f32.mrf.mxu0
    %v7950 = vadd.f32 %v7937, %v7949
    %v7951 = vpop.f32.mrf.mxu0
    %7952 = vdwg.mxu0
    %7953 = vmatpush.bf16.msra.mxu0 %v6470
    %7954 = vmatpush.bf16.msra.mxu0 %v6462
    %7955 = vmatpush.bf16.msra.mxu0 %v6454
    %7956 = vmatpush.bf16.msra.mxu0 %v6446
    %7957 = vmatpush.bf16.msra.mxu0 %v6438
    %7958 = vmatpush.bf16.msra.mxu0 %v6430
    %7959 = vmatpush.bf16.msra.mxu0 %v6422
    %7960 = vmatpush.bf16.msra.mxu0 %v6414
    %7961 = vmatmul.bf16.gmra.mxu0 %v4335
    %v7962 = vpop.f32.mrf.mxu0
    %v7963 = vadd.f32 %v4862, %v7962
    %v7964 = vpop.f32.mrf.mxu0
    %7965 = vdwg.mxu0
    %7966 = vmatpush.bf16.msra.mxu0 %v6534
    %7967 = vmatpush.bf16.msra.mxu0 %v6526
    %7968 = vmatpush.bf16.msra.mxu0 %v6518
    %7969 = vmatpush.bf16.msra.mxu0 %v6510
    %7970 = vmatpush.bf16.msra.mxu0 %v6502
    %7971 = vmatpush.bf16.msra.mxu0 %v6494
    %7972 = vmatpush.bf16.msra.mxu0 %v6486
    %7973 = vmatpush.bf16.msra.mxu0 %v6478
    %7974 = vmatmul.bf16.gmra.mxu0 %v4336
    %v7975 = vpop.f32.mrf.mxu0
    %v7976 = vadd.f32 %v7963, %v7975
    %v7977 = vpop.f32.mrf.mxu0
    %7978 = vdwg.mxu0
    %7979 = vmatpush.bf16.msra.mxu0 %v6598
    %7980 = vmatpush.bf16.msra.mxu0 %v6590
    %7981 = vmatpush.bf16.msra.mxu0 %v6582
    %7982 = vmatpush.bf16.msra.mxu0 %v6574
    %7983 = vmatpush.bf16.msra.mxu0 %v6566
    %7984 = vmatpush.bf16.msra.mxu0 %v6558
    %7985 = vmatpush.bf16.msra.mxu0 %v6550
    %7986 = vmatpush.bf16.msra.mxu0 %v6542
    %7987 = vmatmul.bf16.gmra.mxu0 %v4337
    %v7988 = vpop.f32.mrf.mxu0
    %v7989 = vadd.f32 %v7976, %v7988
    %v7990 = vpop.f32.mrf.mxu0
    %7991 = vdwg.mxu0
    %7992 = vmatpush.bf16.msra.mxu0 %v6662
    %7993 = vmatpush.bf16.msra.mxu0 %v6654
    %7994 = vmatpush.bf16.msra.mxu0 %v6646
    %7995 = vmatpush.bf16.msra.mxu0 %v6638
    %7996 = vmatpush.bf16.msra.mxu0 %v6630
    %7997 = vmatpush.bf16.msra.mxu0 %v6622
    %7998 = vmatpush.bf16.msra.mxu0 %v6614
    %7999 = vmatpush.bf16.msra.mxu0 %v6606
    %8000 = vmatmul.bf16.gmra.mxu0 %v4338
    %v8001 = vpop.f32.mrf.mxu0
    %v8002 = vadd.f32 %v7989, %v8001
    %v8003 = vpop.f32.mrf.mxu0
    %8004 = vdwg.mxu0
    %8005 = vmatpush.bf16.msra.mxu0 %v6726
    %8006 = vmatpush.bf16.msra.mxu0 %v6718
    %8007 = vmatpush.bf16.msra.mxu0 %v6710
    %8008 = vmatpush.bf16.msra.mxu0 %v6702
    %8009 = vmatpush.bf16.msra.mxu0 %v6694
    %8010 = vmatpush.bf16.msra.mxu0 %v6686
    %8011 = vmatpush.bf16.msra.mxu0 %v6678
    %8012 = vmatpush.bf16.msra.mxu0 %v6670
    %8013 = vmatmul.bf16.gmra.mxu0 %v4339
    %v8014 = vpop.f32.mrf.mxu0
    %v8015 = vadd.f32 %v8002, %v8014
    %v8016 = vpop.f32.mrf.mxu0
    %8017 = vdwg.mxu0
    %8018 = vmatpush.bf16.msra.mxu0 %v6790
    %8019 = vmatpush.bf16.msra.mxu0 %v6782
    %8020 = vmatpush.bf16.msra.mxu0 %v6774
    %8021 = vmatpush.bf16.msra.mxu0 %v6766
    %8022 = vmatpush.bf16.msra.mxu0 %v6758
    %8023 = vmatpush.bf16.msra.mxu0 %v6750
    %8024 = vmatpush.bf16.msra.mxu0 %v6742
    %8025 = vmatpush.bf16.msra.mxu0 %v6734
    %8026 = vmatmul.bf16.gmra.mxu0 %v4340
    %v8027 = vpop.f32.mrf.mxu0
    %v8028 = vadd.f32 %v8015, %v8027
    %v8029 = vpop.f32.mrf.mxu0
    %8030 = vdwg.mxu0
    %8031 = vmatpush.bf16.msra.mxu0 %v6854
    %8032 = vmatpush.bf16.msra.mxu0 %v6846
    %8033 = vmatpush.bf16.msra.mxu0 %v6838
    %8034 = vmatpush.bf16.msra.mxu0 %v6830
    %8035 = vmatpush.bf16.msra.mxu0 %v6822
    %8036 = vmatpush.bf16.msra.mxu0 %v6814
    %8037 = vmatpush.bf16.msra.mxu0 %v6806
    %8038 = vmatpush.bf16.msra.mxu0 %v6798
    %8039 = vmatmul.bf16.gmra.mxu0 %v4341
    %v8040 = vpop.f32.mrf.mxu0
    %v8041 = vadd.f32 %v8028, %v8040
    %v8042 = vpop.f32.mrf.mxu0
    %8043 = vdwg.mxu0
    %8044 = vmatpush.bf16.msra.mxu0 %v6918
    %8045 = vmatpush.bf16.msra.mxu0 %v6910
    %8046 = vmatpush.bf16.msra.mxu0 %v6902
    %8047 = vmatpush.bf16.msra.mxu0 %v6894
    %8048 = vmatpush.bf16.msra.mxu0 %v6886
    %8049 = vmatpush.bf16.msra.mxu0 %v6878
    %8050 = vmatpush.bf16.msra.mxu0 %v6870
    %8051 = vmatpush.bf16.msra.mxu0 %v6862
    %8052 = vmatmul.bf16.gmra.mxu0 %v4342
    %v8053 = vpop.f32.mrf.mxu0
    %v8054 = vadd.f32 %v8041, %v8053
    %v8055 = vpop.f32.mrf.mxu0
    %8056 = vdwg.mxu0
    %8057 = vmatpush.bf16.msra.mxu0 %v6471
    %8058 = vmatpush.bf16.msra.mxu0 %v6463
    %8059 = vmatpush.bf16.msra.mxu0 %v6455
    %8060 = vmatpush.bf16.msra.mxu0 %v6447
    %8061 = vmatpush.bf16.msra.mxu0 %v6439
    %8062 = vmatpush.bf16.msra.mxu0 %v6431
    %8063 = vmatpush.bf16.msra.mxu0 %v6423
    %8064 = vmatpush.bf16.msra.mxu0 %v6415
    %8065 = vmatmul.bf16.gmra.mxu0 %v4335
    %v8066 = vpop.f32.mrf.mxu0
    %v8067 = vadd.f32 %v4863, %v8066
    %v8068 = vpop.f32.mrf.mxu0
    %8069 = vdwg.mxu0
    %8070 = vmatpush.bf16.msra.mxu0 %v6535
    %8071 = vmatpush.bf16.msra.mxu0 %v6527
    %8072 = vmatpush.bf16.msra.mxu0 %v6519
    %8073 = vmatpush.bf16.msra.mxu0 %v6511
    %8074 = vmatpush.bf16.msra.mxu0 %v6503
    %8075 = vmatpush.bf16.msra.mxu0 %v6495
    %8076 = vmatpush.bf16.msra.mxu0 %v6487
    %8077 = vmatpush.bf16.msra.mxu0 %v6479
    %8078 = vmatmul.bf16.gmra.mxu0 %v4336
    %v8079 = vpop.f32.mrf.mxu0
    %v8080 = vadd.f32 %v8067, %v8079
    %v8081 = vpop.f32.mrf.mxu0
    %8082 = vdwg.mxu0
    %8083 = vmatpush.bf16.msra.mxu0 %v6599
    %8084 = vmatpush.bf16.msra.mxu0 %v6591
    %8085 = vmatpush.bf16.msra.mxu0 %v6583
    %8086 = vmatpush.bf16.msra.mxu0 %v6575
    %8087 = vmatpush.bf16.msra.mxu0 %v6567
    %8088 = vmatpush.bf16.msra.mxu0 %v6559
    %8089 = vmatpush.bf16.msra.mxu0 %v6551
    %8090 = vmatpush.bf16.msra.mxu0 %v6543
    %8091 = vmatmul.bf16.gmra.mxu0 %v4337
    %v8092 = vpop.f32.mrf.mxu0
    %v8093 = vadd.f32 %v8080, %v8092
    %v8094 = vpop.f32.mrf.mxu0
    %8095 = vdwg.mxu0
    %8096 = vmatpush.bf16.msra.mxu0 %v6663
    %8097 = vmatpush.bf16.msra.mxu0 %v6655
    %8098 = vmatpush.bf16.msra.mxu0 %v6647
    %8099 = vmatpush.bf16.msra.mxu0 %v6639
    %8100 = vmatpush.bf16.msra.mxu0 %v6631
    %8101 = vmatpush.bf16.msra.mxu0 %v6623
    %8102 = vmatpush.bf16.msra.mxu0 %v6615
    %8103 = vmatpush.bf16.msra.mxu0 %v6607
    %8104 = vmatmul.bf16.gmra.mxu0 %v4338
    %v8105 = vpop.f32.mrf.mxu0
    %v8106 = vadd.f32 %v8093, %v8105
    %v8107 = vpop.f32.mrf.mxu0
    %8108 = vdwg.mxu0
    %8109 = vmatpush.bf16.msra.mxu0 %v6727
    %8110 = vmatpush.bf16.msra.mxu0 %v6719
    %8111 = vmatpush.bf16.msra.mxu0 %v6711
    %8112 = vmatpush.bf16.msra.mxu0 %v6703
    %8113 = vmatpush.bf16.msra.mxu0 %v6695
    %8114 = vmatpush.bf16.msra.mxu0 %v6687
    %8115 = vmatpush.bf16.msra.mxu0 %v6679
    %8116 = vmatpush.bf16.msra.mxu0 %v6671
    %8117 = vmatmul.bf16.gmra.mxu0 %v4339
    %v8118 = vpop.f32.mrf.mxu0
    %v8119 = vadd.f32 %v8106, %v8118
    %v8120 = vpop.f32.mrf.mxu0
    %8121 = vdwg.mxu0
    %8122 = vmatpush.bf16.msra.mxu0 %v6791
    %8123 = vmatpush.bf16.msra.mxu0 %v6783
    %8124 = vmatpush.bf16.msra.mxu0 %v6775
    %8125 = vmatpush.bf16.msra.mxu0 %v6767
    %8126 = vmatpush.bf16.msra.mxu0 %v6759
    %8127 = vmatpush.bf16.msra.mxu0 %v6751
    %8128 = vmatpush.bf16.msra.mxu0 %v6743
    %8129 = vmatpush.bf16.msra.mxu0 %v6735
    %8130 = vmatmul.bf16.gmra.mxu0 %v4340
    %v8131 = vpop.f32.mrf.mxu0
    %v8132 = vadd.f32 %v8119, %v8131
    %v8133 = vpop.f32.mrf.mxu0
    %8134 = vdwg.mxu0
    %8135 = vmatpush.bf16.msra.mxu0 %v6855
    %8136 = vmatpush.bf16.msra.mxu0 %v6847
    %8137 = vmatpush.bf16.msra.mxu0 %v6839
    %8138 = vmatpush.bf16.msra.mxu0 %v6831
    %8139 = vmatpush.bf16.msra.mxu0 %v6823
    %8140 = vmatpush.bf16.msra.mxu0 %v6815
    %8141 = vmatpush.bf16.msra.mxu0 %v6807
    %8142 = vmatpush.bf16.msra.mxu0 %v6799
    %8143 = vmatmul.bf16.gmra.mxu0 %v4341
    %v8144 = vpop.f32.mrf.mxu0
    %v8145 = vadd.f32 %v8132, %v8144
    %v8146 = vpop.f32.mrf.mxu0
    %8147 = vdwg.mxu0
    %8148 = vmatpush.bf16.msra.mxu0 %v6919
    %8149 = vmatpush.bf16.msra.mxu0 %v6911
    %8150 = vmatpush.bf16.msra.mxu0 %v6903
    %8151 = vmatpush.bf16.msra.mxu0 %v6895
    %8152 = vmatpush.bf16.msra.mxu0 %v6887
    %8153 = vmatpush.bf16.msra.mxu0 %v6879
    %8154 = vmatpush.bf16.msra.mxu0 %v6871
    %8155 = vmatpush.bf16.msra.mxu0 %v6863
    %8156 = vmatmul.bf16.gmra.mxu0 %v4342
    %v8157 = vpop.f32.mrf.mxu0
    %v8158 = vadd.f32 %v8145, %v8157
    %v8159 = vpop.f32.mrf.mxu0
    %8160 = vdwg.mxu0
    %8161 = vmatpush.bf16.msra.mxu0 %v6472
    %8162 = vmatpush.bf16.msra.mxu0 %v6464
    %8163 = vmatpush.bf16.msra.mxu0 %v6456
    %8164 = vmatpush.bf16.msra.mxu0 %v6448
    %8165 = vmatpush.bf16.msra.mxu0 %v6440
    %8166 = vmatpush.bf16.msra.mxu0 %v6432
    %8167 = vmatpush.bf16.msra.mxu0 %v6424
    %8168 = vmatpush.bf16.msra.mxu0 %v6416
    %8169 = vmatmul.bf16.gmra.mxu0 %v4335
    %v8170 = vpop.f32.mrf.mxu0
    %v8171 = vadd.f32 %v4864, %v8170
    %v8172 = vpop.f32.mrf.mxu0
    %8173 = vdwg.mxu0
    %8174 = vmatpush.bf16.msra.mxu0 %v6536
    %8175 = vmatpush.bf16.msra.mxu0 %v6528
    %8176 = vmatpush.bf16.msra.mxu0 %v6520
    %8177 = vmatpush.bf16.msra.mxu0 %v6512
    %8178 = vmatpush.bf16.msra.mxu0 %v6504
    %8179 = vmatpush.bf16.msra.mxu0 %v6496
    %8180 = vmatpush.bf16.msra.mxu0 %v6488
    %8181 = vmatpush.bf16.msra.mxu0 %v6480
    %8182 = vmatmul.bf16.gmra.mxu0 %v4336
    %v8183 = vpop.f32.mrf.mxu0
    %v8184 = vadd.f32 %v8171, %v8183
    %v8185 = vpop.f32.mrf.mxu0
    %8186 = vdwg.mxu0
    %8187 = vmatpush.bf16.msra.mxu0 %v6600
    %8188 = vmatpush.bf16.msra.mxu0 %v6592
    %8189 = vmatpush.bf16.msra.mxu0 %v6584
    %8190 = vmatpush.bf16.msra.mxu0 %v6576
    %8191 = vmatpush.bf16.msra.mxu0 %v6568
    %8192 = vmatpush.bf16.msra.mxu0 %v6560
    %8193 = vmatpush.bf16.msra.mxu0 %v6552
    %8194 = vmatpush.bf16.msra.mxu0 %v6544
    %8195 = vmatmul.bf16.gmra.mxu0 %v4337
    %v8196 = vpop.f32.mrf.mxu0
    %v8197 = vadd.f32 %v8184, %v8196
    %v8198 = vpop.f32.mrf.mxu0
    %8199 = vdwg.mxu0
    %8200 = vmatpush.bf16.msra.mxu0 %v6664
    %8201 = vmatpush.bf16.msra.mxu0 %v6656
    %8202 = vmatpush.bf16.msra.mxu0 %v6648
    %8203 = vmatpush.bf16.msra.mxu0 %v6640
    %8204 = vmatpush.bf16.msra.mxu0 %v6632
    %8205 = vmatpush.bf16.msra.mxu0 %v6624
    %8206 = vmatpush.bf16.msra.mxu0 %v6616
    %8207 = vmatpush.bf16.msra.mxu0 %v6608
    %8208 = vmatmul.bf16.gmra.mxu0 %v4338
    %v8209 = vpop.f32.mrf.mxu0
    %v8210 = vadd.f32 %v8197, %v8209
    %v8211 = vpop.f32.mrf.mxu0
    %8212 = vdwg.mxu0
    %8213 = vmatpush.bf16.msra.mxu0 %v6728
    %8214 = vmatpush.bf16.msra.mxu0 %v6720
    %8215 = vmatpush.bf16.msra.mxu0 %v6712
    %8216 = vmatpush.bf16.msra.mxu0 %v6704
    %8217 = vmatpush.bf16.msra.mxu0 %v6696
    %8218 = vmatpush.bf16.msra.mxu0 %v6688
    %8219 = vmatpush.bf16.msra.mxu0 %v6680
    %8220 = vmatpush.bf16.msra.mxu0 %v6672
    %8221 = vmatmul.bf16.gmra.mxu0 %v4339
    %v8222 = vpop.f32.mrf.mxu0
    %v8223 = vadd.f32 %v8210, %v8222
    %v8224 = vpop.f32.mrf.mxu0
    %8225 = vdwg.mxu0
    %8226 = vmatpush.bf16.msra.mxu0 %v6792
    %8227 = vmatpush.bf16.msra.mxu0 %v6784
    %8228 = vmatpush.bf16.msra.mxu0 %v6776
    %8229 = vmatpush.bf16.msra.mxu0 %v6768
    %8230 = vmatpush.bf16.msra.mxu0 %v6760
    %8231 = vmatpush.bf16.msra.mxu0 %v6752
    %8232 = vmatpush.bf16.msra.mxu0 %v6744
    %8233 = vmatpush.bf16.msra.mxu0 %v6736
    %8234 = vmatmul.bf16.gmra.mxu0 %v4340
    %v8235 = vpop.f32.mrf.mxu0
    %v8236 = vadd.f32 %v8223, %v8235
    %v8237 = vpop.f32.mrf.mxu0
    %8238 = vdwg.mxu0
    %8239 = vmatpush.bf16.msra.mxu0 %v6856
    %8240 = vmatpush.bf16.msra.mxu0 %v6848
    %8241 = vmatpush.bf16.msra.mxu0 %v6840
    %8242 = vmatpush.bf16.msra.mxu0 %v6832
    %8243 = vmatpush.bf16.msra.mxu0 %v6824
    %8244 = vmatpush.bf16.msra.mxu0 %v6816
    %8245 = vmatpush.bf16.msra.mxu0 %v6808
    %8246 = vmatpush.bf16.msra.mxu0 %v6800
    %8247 = vmatmul.bf16.gmra.mxu0 %v4341
    %v8248 = vpop.f32.mrf.mxu0
    %v8249 = vadd.f32 %v8236, %v8248
    %v8250 = vpop.f32.mrf.mxu0
    %8251 = vdwg.mxu0
    %8252 = vmatpush.bf16.msra.mxu0 %v6920
    %8253 = vmatpush.bf16.msra.mxu0 %v6912
    %8254 = vmatpush.bf16.msra.mxu0 %v6904
    %8255 = vmatpush.bf16.msra.mxu0 %v6896
    %8256 = vmatpush.bf16.msra.mxu0 %v6888
    %8257 = vmatpush.bf16.msra.mxu0 %v6880
    %8258 = vmatpush.bf16.msra.mxu0 %v6872
    %8259 = vmatpush.bf16.msra.mxu0 %v6864
    %8260 = vmatmul.bf16.gmra.mxu0 %v4342
    %v8261 = vpop.f32.mrf.mxu0
    %v8262 = vadd.f32 %v8249, %v8261
    %v8263 = vpop.f32.mrf.mxu0
    %8264 = vdwg.mxu0
    %v8265 = vmax.f32 %v7534, 0.0
    %v8266 = vmax.f32 %v7638, 0.0
    %v8267 = vmax.f32 %v7742, 0.0
    %v8268 = vmax.f32 %v7846, 0.0
    %v8269 = vmax.f32 %v7950, 0.0
    %v8270 = vmax.f32 %v8054, 0.0
    %v8271 = vmax.f32 %v8158, 0.0
    %v8272 = vmax.f32 %v8262, 0.0
    %v8273 = vld [vmem:[#allocation16] sm:$0xff]
    %v8274 = vunpack.c.l.bf16 %v8273
    %v8275 = vunpack.c.h.bf16 %v8273
    %v8276 = vld [vmem:[#allocation5] sm:$0xff]
    %v8277 = vld [vmem:[#allocation5 + $0x8] sm:$0xff]
    %v8278 = vld [vmem:[#allocation5 + $0x10] sm:$0xff]
    %v8279 = vld [vmem:[#allocation5 + $0x18] sm:$0xff]
    %v8280 = vld [vmem:[#allocation5 + $0x20] sm:$0xff]
    %v8281 = vld [vmem:[#allocation5 + $0x28] sm:$0xff]
    %v8282 = vld [vmem:[#allocation5 + $0x30] sm:$0xff]
    %v8283 = vld [vmem:[#allocation5 + $0x38] sm:$0xff]
    %v8284 = vmul.f32 %v8265, %v8276
    %v8285 = vmul.f32 %v8266, %v8277
    %v8286 = vmul.f32 %v8267, %v8278
    %v8287 = vmul.f32 %v8268, %v8279
    %v8288 = vmul.f32 %v8269, %v8280
    %v8289 = vmul.f32 %v8270, %v8281
    %v8290 = vmul.f32 %v8271, %v8282
    %v8291 = vmul.f32 %v8272, %v8283
    %v8294 = vperm.slane %v8274, 0
    %v8295 = vperm.slane %v8274, 2
    %v8296 = vperm.slane %v8274, 4
    %v8297 = vperm.slane %v8274, 6
    %v8298 = vperm.slane %v8275, 0
    %v8299 = vperm.slane %v8275, 2
    %v8300 = vperm.slane %v8275, 4
    %v8301 = vperm.slane %v8275, 6
    %v8310 = vperm.slane %v8294, 0
    %v8311 = vperm.slane %v8295, 0
    %v8312 = vperm.slane %v8296, 0
    %v8313 = vperm.slane %v8297, 0
    %v8314 = vperm.slane %v8298, 0
    %v8315 = vperm.slane %v8299, 0
    %v8316 = vperm.slane %v8300, 0
    %v8317 = vperm.slane %v8301, 0
    %v8318 = vmul.f32 %v8284, %v8310
    %v8319 = vmul.f32 %v8285, %v8311
    %v8320 = vmul.f32 %v8286, %v8312
    %v8321 = vmul.f32 %v8287, %v8313
    %v8322 = vmul.f32 %v8288, %v8314
    %v8323 = vmul.f32 %v8289, %v8315
    %v8324 = vmul.f32 %v8290, %v8316
    %v8325 = vmul.f32 %v8291, %v8317
    %v8326 = vadd.f32 %v8318, %v8319
    %v8327 = vadd.f32 %v8326, %v8320
    %v8328 = vadd.f32 %v8327, %v8321
    %v8329 = vadd.f32 %v8328, %v8322
    %v8330 = vadd.f32 %v8329, %v8323
    %v8331 = vadd.f32 %v8330, %v8324
    %v8332 = vadd.f32 %v8331, %v8325
    %8333 = vadd.xlane.f32.xlu0 %v8332
    %v8334 = vpop.xlane.xlu0 %8333
    %v8335 = vmul.f32 %v8334, 1.1111112
    %s8336 = sld [smem:[#allocation2]]
    %v8337 = vstv %s8336
    %v8338 = vadd.f32 %v8335, %v8337
    %vm8339 = vcmask 7168
    %8340 = vst.msk [vmem:[%s10] sm:$0xff] %vm8339, %v8338
    // Predicated region
    $region78: #{tpu_custom_call.1} parent=1 // pred_check
      _
    $region79: #{tpu_custom_call.1} parent=1 // pred_check_branch
      %8342 = sbr.rel (0) target = $region81
    $region80: #{tpu_custom_call.1} parent=1 // pred_region
      _
    $region81: #{tpu_custom_call.1} parent=1 // pred_fallthru
      _
    // Predicated region
    $region82: #{tpu_custom_call.1} parent=1 // pred_check
      _
    $region83: #{tpu_custom_call.1} parent=1 // pred_check_branch
      %8344 = sbr.rel (0) target = $region85
    $region84: #{tpu_custom_call.1} parent=1 // pred_region
      _
    $region85: #{tpu_custom_call.1} parent=1 // pred_fallthru
      _
    %8345 = vsyncpa [#allocation4], 1
    %8346 = vsyncpa [#allocation6], 1
    %8347 = vsyncpa [#allocation9], 1
    %8348 = vsyncpa [#allocation12], 1
    %8349 = vsyncpa [#allocation15], 1

</llo_original>
